<compile_context>
chip_gen: v7x
topology: tpu7x:2x2x1
jax: 0.10.0
libtpu: 0.0.40
codegen_flags: <defaults>
</compile_context>

<pallas_src>
import jax
import jax.numpy as jnp
from jax.experimental import pallas as pl
from jax.experimental.pallas import tpu as pltpu


# ---------------------------------------------------------------------------
# Encoder: single program, in-kernel time loop, fused [E,3H]/[H,3H] matmuls
# ---------------------------------------------------------------------------
def _encoder_kernel(emb_ref,      # (S, B, E) time-major source embeddings
                    mask_ref,     # (S, B, 1) padding mask
                    wih_ref,      # (E, 3H)
                    bih_ref,      # (1, 3H)
                    whh_ref,      # (H, 3H)
                    bhh_ref,      # (1, 3H)
                    eo_ref,       # out: (S, B, H) encoder outputs (time-major)
                    hN_ref,       # out: (B, H) final hidden
                    gi_scr):      # scratch: (S, B, 3H)
    S, B, E = emb_ref.shape
    H = whh_ref.shape[0]

    # Whole-sequence non-recurrent input projection: one [S*B, E] @ [E, 3H] MXU call.
    gi_scr[...] = (jnp.dot(emb_ref[...].reshape(S * B, E), wih_ref[...],
                           preferred_element_type=jnp.float32)
                   + bih_ref[...]).reshape(S, B, 3 * H)

    def step(t, h):
        gi = gi_scr[t]                                                  # [B, 3H]
        gh = (jnp.dot(h, whh_ref[...], preferred_element_type=jnp.float32)
              + bhh_ref[...])                                           # [B, 3H]
        r = jax.nn.sigmoid(gi[:, :H] + gh[:, :H])
        z = jax.nn.sigmoid(gi[:, H:2 * H] + gh[:, H:2 * H])
        n = jnp.tanh(gi[:, 2 * H:] + r * gh[:, 2 * H:])
        h_new = (1.0 - z) * n + z * h
        m = mask_ref[t]                                                 # [B, 1]
        h_next = m * h_new + (1.0 - m) * h      # pack_padded: freeze hidden on pads
        eo_ref[t] = h_new * m                   # pad_packed: zeros at padded steps
        return h_next

    hN_ref[...] = jax.lax.fori_loop(0, S, step,
                                    jnp.zeros((B, H), jnp.float32), unroll=True)


def encoder_forward(params, src):
    """src: [B, S] int32 -> enc_out [S, B, H] (time-major), final hidden [B, H], mask [S, B]."""
    B, S = src.shape
    H = params["enc_whh"].shape[0]

    src_t = src.T                                          # tiny int32 transpose
    mask_sb = (src_t != 0).astype(jnp.float32)             # [S, B]
    emb_t = params["src_emb"][src_t]                       # [S, B, E] time-major gather

    vmem = pl.BlockSpec(memory_space=pltpu.MemorySpace.VMEM)

    enc_sbh, h_final = pl.pallas_call(
        _encoder_kernel,
        out_shape=(jax.ShapeDtypeStruct((S, B, H), jnp.float32),
                   jax.ShapeDtypeStruct((B, H), jnp.float32)),
        in_specs=[vmem] * 6,
        out_specs=(vmem, vmem),
        scratch_shapes=[pltpu.VMEM((S, B, 3 * H), jnp.float32)],
    )(emb_t, mask_sb[:, :, None],
      params["enc_wih_t"], params["enc_bih"], params["enc_whh"], params["enc_bhh"])

    return enc_sbh, h_final, mask_sb


# ---------------------------------------------------------------------------
# Decoder: single program, in-kernel loop: attention + GRU cell + fc_out
# ---------------------------------------------------------------------------
def _decoder_kernel(tf_ref,       # SMEM (T-1,) int32: 1 = teacher-forced input
                    temb_ref,     # (T-1, B, E) teacher-forced input embeddings
                    h0_ref,       # (B, H)
                    enc_ref,      # (S, B, H) encoder outputs (time-major)
                    mask_ref,     # (S, B)
                    wq_ref, wk_ref, ab_ref, v_ref,          # attention
                    we_ref, wc_ref, wh_ref, bi_ref, bh_ref, # decoder GRU (fused [*,3H])
                    fwh_ref, fwc_ref, fwe_ref, fb_ref,      # fc_out (vocab padded to Vp)
                    etab_ref,     # (Vp, E) padded target embedding table (greedy feedback)
                    out_ref,      # out: (T-1, B, Vp) logits (time-major)
                    keys_scr):    # scratch: (S, B, H) attention keys
    S, B, H = enc_ref.shape
    E = temb_ref.shape[-1]
    Tm1 = out_ref.shape[0]

    # Timestep-invariant attention keys: one [S*B, H] @ [H, H] MXU call, kept in VMEM.
    keys_scr[...] = (jnp.dot(enc_ref[...].reshape(S * B, H), wk_ref[...],
                             preferred_element_type=jnp.float32)
                     + ab_ref[...]).reshape(S, B, H)

    def step(i, carry):
        h, efb = carry
        fm = tf_ref[i].astype(jnp.float32)                              # scalar 0/1
        emb = fm * temb_ref[i] + (1.0 - fm) * efb                       # [B, E]

        # ---- Bahdanau attention (time-major) ----
        q = jnp.dot(h, wq_ref[...], preferred_element_type=jnp.float32)  # [B, H]
        energy = jnp.tanh(q[None, :, :] + keys_scr[...])                 # [S, B, H]
        scores = jnp.sum(energy * v_ref[...], axis=-1)                   # [S, B]
        scores = jnp.where(mask_ref[...] > 0.5, scores, -1e10)
        scores = scores - jnp.max(scores, axis=0, keepdims=True)
        p = jnp.exp(scores)
        attn = p / jnp.sum(p, axis=0, keepdims=True)                     # exact softmax
        # context: VPU broadcast-mul + major-axis reduce (no degenerate M=1 matmul)
        ctx = jnp.sum(attn[:, :, None] * enc_ref[...], axis=0)           # [B, H]

        # ---- decoder GRU cell: fused [*, 3H] matmuls, static lane-slice gates ----
        gi = (jnp.dot(emb, we_ref[...], preferred_element_type=jnp.float32)
              + jnp.dot(ctx, wc_ref[...], preferred_element_type=jnp.float32)
              + bi_ref[...])                                             # [B, 3H]
        gh = (jnp.dot(h, wh_ref[...], preferred_element_type=jnp.float32)
              + bh_ref[...])                                             # [B, 3H]
        r = jax.nn.sigmoid(gi[:, :H] + gh[:, :H])
        z = jax.nn.sigmoid(gi[:, H:2 * H] + gh[:, H:2 * H])
        n = jnp.tanh(gi[:, 2 * H:] + r * gh[:, 2 * H:])
        h_new = (1.0 - z) * n + z * h

        # ---- output projection (lane-dense padded vocab) ----
        logits = (jnp.dot(h_new, fwh_ref[...], preferred_element_type=jnp.float32)
                  + jnp.dot(ctx, fwc_ref[...], preferred_element_type=jnp.float32)
                  + jnp.dot(emb, fwe_ref[...], preferred_element_type=jnp.float32)
                  + fb_ref[...])                                         # [B, Vp]
        out_ref[i] = logits

        # ---- greedy (first-argmax) feedback embedding; pad columns carry -1e9 bias ----
        Vp = logits.shape[-1]
        col = jax.lax.broadcasted_iota(jnp.int32, logits.shape, 1)
        mx = jnp.max(logits, axis=-1, keepdims=True)
        idx = jnp.min(jnp.where(logits == mx, col, Vp), axis=-1, keepdims=True)
        onehot = (col == idx).astype(jnp.float32)                        # [B, Vp]
        efb_new = jnp.dot(onehot, etab_ref[...], preferred_element_type=jnp.float32)
        return h_new, efb_new

    jax.lax.fori_loop(0, Tm1, step,
                      (h0_ref[...], jnp.zeros((B, E), jnp.float32)), unroll=True)


def decoder_forward(params, tgt, hidden0, enc_sbh, mask_sb, use_tf):
    S, B, H = enc_sbh.shape
    Tm1 = tgt.shape[1] - 1
    V = params["tgt_emb"].shape[0]
    Vp = params["fc_b"].shape[1]

    # Teacher-forced input embeddings, time-major (tiny int32 transpose only).
    temb = params["tgt_emb"][tgt[:, :Tm1].T]                             # [T-1, B, E]

    vmem = pl.BlockSpec(memory_space=pltpu.MemorySpace.VMEM)
    smem = pl.BlockSpec(memory_space=pltpu.MemorySpace.SMEM)

    logits_t = pl.pallas_call(
        _decoder_kernel,
        out_shape=jax.ShapeDtypeStruct((Tm1, B, Vp), jnp.float32),
        in_specs=[smem] + [vmem] * 18,
        out_specs=vmem,
        scratch_shapes=[pltpu.VMEM((S, B, H), jnp.float32)],
    )(use_tf, temb, hidden0, enc_sbh, mask_sb,
      params["attn_wq_t"], params["attn_wk_t"], params["attn_b"], params["attn_v"],
      params["dec_we"], params["dec_wc"], params["dec_wh"],
      params["dec_bi"], params["dec_bh"],
      params["fc_wh"], params["fc_wc"], params["fc_we"], params["fc_b"],
      params["tgt_emb_pad"])

    logits = jnp.swapaxes(logits_t, 0, 1)[:, :, :V]                      # [B, T-1, V] (tiny)
    zeros0 = jnp.zeros((B, 1, V), jnp.float32)
    return jnp.concatenate([zeros0, logits], axis=1)                     # [B, T, V]


# ---------------------------------------------------------------------------
# Seq2Seq glue (jitted end to end)
# ---------------------------------------------------------------------------
@jax.jit
def _seq2seq_apply(params, src, tgt, use_tf):
    enc_sbh, hidden0, mask_sb = encoder_forward(params, src)
    return decoder_forward(params, tgt, hidden0, enc_sbh, mask_sb, use_tf)


def seq2seq_forward(params, src, tgt, teacher_forcing_ratio=0.5, key=None):
    Tm1 = tgt.shape[1] - 1
    if key is None:
        key = jax.random.PRNGKey(0)
    draws = jax.random.uniform(key, (Tm1,)) < teacher_forcing_ratio
    use_tf = draws.at[0].set(True).astype(jnp.int32)   # first decoder input is always tgt[:,0]
    return _seq2seq_apply(params, src, tgt, use_tf)


# ---------------------------------------------------------------------------
# Deterministic parameter init (fused-gate layout, lane-padded vocab) + demo
# ---------------------------------------------------------------------------
def init_params(key, src_vocab, tgt_vocab, emb_dim, hidden, lane=128):
    def u(k, shape, scale=0.1):
        return jax.random.uniform(k, shape, jnp.float32, -scale, scale)

    H, E, V = hidden, emb_dim, tgt_vocab
    Vp = ((V + lane - 1) // lane) * lane
    Vp = max(Vp, lane)
    ks = jax.random.split(key, 19)

    pad_cols = lambda w: jnp.pad(w, ((0, 0), (0, Vp - V)))
    tgt_emb = u(ks[1], (V, E)).at[0].set(0.0)

    return {
        "src_emb":     u(ks[0], (src_vocab, E)).at[0].set(0.0),          # padding_idx=0
        "tgt_emb":     tgt_emb,
        "tgt_emb_pad": jnp.pad(tgt_emb, ((0, Vp - V), (0, 0))),
        # encoder GRU (gate order r, z, n as in PyTorch), fused [*, 3H] layout
        "enc_wih_t":   u(ks[2], (E, 3 * H)),
        "enc_bih":     u(ks[3], (1, 3 * H)),
        "enc_whh":     u(ks[4], (H, 3 * H)),
        "enc_bhh":     u(ks[5], (1, 3 * H)),
        # attention nn.Linear(2H, H) split into query/key halves (+ shared bias) and v
        "attn_wq_t":   u(ks[6], (H, H)),
        "attn_wk_t":   u(ks[7], (H, H)),
        "attn_b":      u(ks[8], (1, H)),
        "attn_v":      u(ks[9], (1, H)),
        # decoder GRU W_ih [E+H, 3H] split by operand (emb / ctx), fused gates
        "dec_we":      u(ks[10], (E, 3 * H)),
        "dec_wc":      u(ks[11], (H, 3 * H)),
        "dec_wh":      u(ks[12], (H, 3 * H)),
        "dec_bi":      u(ks[13], (1, 3 * H)),
        "dec_bh":      u(ks[14], (1, 3 * H)),
        # fc_out nn.Linear(2H + E, V) split by operand, vocab padded to Vp lanes
        # (pad weights = 0, pad bias = -1e9 so greedy argmax never picks a pad column)
        "fc_wh":       pad_cols(u(ks[15], (H, V))),
        "fc_wc":       pad_cols(u(ks[16], (H, V))),
        "fc_we":       pad_cols(u(ks[17], (E, V))),
        "fc_b":        jnp.concatenate(
            [u(ks[18], (1, V)), jnp.full((1, Vp - V), -1e9, jnp.float32)], axis=1),
    }


if __name__ == "__main__":
    # Lane/sublane-dense demo shapes: batch fills the 8 sublanes, hidden fills 128 lanes.
    B, S, T = 8, 8, 6
    SRC_V, TGT_V, EMB, HID = 32, 32, 32, 128

    key = jax.random.PRNGKey(0)
    kp, ks_, kt, kf = jax.random.split(key, 4)
    params = init_params(kp, SRC_V, TGT_V, EMB, HID)

    src = jax.random.randint(ks_, (B, S), 1, SRC_V, dtype=jnp.int32)
    src = src.at[1, 6:].set(0)                            # padded tails
    src = src.at[3, 4:].set(0)
    tgt = jax.random.randint(kt, (B, T), 1, TGT_V, dtype=jnp.int32)

    outputs = seq2seq_forward(params, src, tgt, teacher_forcing_ratio=1.0, key=kf)
    outputs = jax.block_until_ready(outputs)

    assert outputs.shape == (B, T, TGT_V)
    assert outputs.dtype == jnp.float32
    assert bool(jnp.all(outputs[:, 0] == 0.0))            # first timestep left zero
    assert bool(jnp.all(jnp.isfinite(outputs)))
    print("KERNEL_OK")
</pallas_src>

<mosaic_0001>
module attributes {stable_mosaic.version = 11 : i64} {
  func.func @_encoder_kernel(%arg0: memref<8x8x32xf32, #tpu.memory_space<vmem>>, %arg1: memref<8x8x1xf32, #tpu.memory_space<vmem>>, %arg2: memref<32x384xf32, #tpu.memory_space<vmem>>, %arg3: memref<1x384xf32, #tpu.memory_space<vmem>>, %arg4: memref<128x384xf32, #tpu.memory_space<vmem>>, %arg5: memref<1x384xf32, #tpu.memory_space<vmem>>, %arg6: memref<8x8x128xf32, #tpu.memory_space<vmem>>, %arg7: memref<8x128xf32, #tpu.memory_space<vmem>>, %arg8: memref<8x8x384xf32, #tpu.memory_space<vmem>>) attributes {dimension_semantics = [], scalar_prefetch = 0 : i64, scratch_operands = 1 : i64, tpu.core_type = #tpu.core_type<tc>} {
    %c0 = arith.constant 0 : index
    %c0_0 = arith.constant 0 : index
    %c0_1 = arith.constant 0 : index
    %0 = vector.load %arg0[%c0, %c0_0, %c0_1] : memref<8x8x32xf32, #tpu.memory_space<vmem>>, vector<8x8x32xf32>
    %1 = vector.shape_cast %0 : vector<8x8x32xf32> to vector<64x32xf32>
    %c0_2 = arith.constant 0 : index
    %c0_3 = arith.constant 0 : index
    %2 = vector.load %arg2[%c0_2, %c0_3] : memref<32x384xf32, #tpu.memory_space<vmem>>, vector<32x384xf32>
    %cst = arith.constant dense<0.000000e+00> : vector<64x384xf32>
    %3 = tpu.matmul %1, %2, %cst {dimension_numbers = #tpu.dot_dimension_numbers<[1], [0], [0], [1], [0, 0, 1, 1], [], []>} : vector<64x32xf32>, vector<32x384xf32>, vector<64x384xf32> -> vector<64x384xf32>
    %c0_4 = arith.constant 0 : index
    %c0_5 = arith.constant 0 : index
    %4 = vector.load %arg3[%c0_4, %c0_5] : memref<1x384xf32, #tpu.memory_space<vmem>>, vector<1x384xf32>
    %5 = vector.broadcast %4 : vector<1x384xf32> to vector<64x384xf32>
    %6 = arith.addf %3, %5 : vector<64x384xf32>
    %7 = vector.shape_cast %6 : vector<64x384xf32> to vector<8x8x384xf32>
    %c0_6 = arith.constant 0 : index
    %c0_7 = arith.constant 0 : index
    %c0_8 = arith.constant 0 : index
    %8 = vector.load %arg8[%c0_6, %c0_7, %c0_8] : memref<8x8x384xf32, #tpu.memory_space<vmem>>, vector<8x8x384xf32>
    tpu.vector_store %arg8[%c0_6, %c0_7, %c0_8], %7 {strides = array<i32>} : memref<8x8x384xf32, #tpu.memory_space<vmem>>, vector<8x8x384xf32>,
    %cst_9 = arith.constant 0.000000e+00 : f32
    %9 = vector.broadcast %cst_9 : f32 to vector<8x128xf32>
    %c0_i32 = arith.constant 0 : i32
    %10 = arith.index_cast %c0_i32 : i32 to index
    %c0_10 = arith.constant 0 : index
    %c0_11 = arith.constant 0 : index
    %11 = vector.load %arg8[%10, %c0_10, %c0_11] : memref<8x8x384xf32, #tpu.memory_space<vmem>>, vector<1x8x384xf32>
    %12 = vector.shape_cast %11 : vector<1x8x384xf32> to vector<8x384xf32>
    %c0_12 = arith.constant 0 : index
    %c0_13 = arith.constant 0 : index
    %13 = vector.load %arg4[%c0_12, %c0_13] : memref<128x384xf32, #tpu.memory_space<vmem>>, vector<128x384xf32>
    %cst_14 = arith.constant dense<0.000000e+00> : vector<8x384xf32>
    %14 = tpu.matmul %9, %13, %cst_14 {dimension_numbers = #tpu.dot_dimension_numbers<[1], [0], [0], [1], [0, 0, 1, 1], [], []>} : vector<8x128xf32>, vector<128x384xf32>, vector<8x384xf32> -> vector<8x384xf32>
    %c0_15 = arith.constant 0 : index
    %c0_16 = arith.constant 0 : index
    %15 = vector.load %arg5[%c0_15, %c0_16] : memref<1x384xf32, #tpu.memory_space<vmem>>, vector<1x384xf32>
    %16 = vector.broadcast %15 : vector<1x384xf32> to vector<8x384xf32>
    %17 = arith.addf %14, %16 : vector<8x384xf32>
    %18 = vector.extract_strided_slice %12 {offsets = [0, 0], sizes = [8, 128], strides = [1, 1]} : vector<8x384xf32> to vector<8x128xf32>
    %19 = vector.extract_strided_slice %17 {offsets = [0, 0], sizes = [8, 128], strides = [1, 1]} : vector<8x384xf32> to vector<8x128xf32>
    %20 = arith.addf %18, %19 : vector<8x128xf32>
    %21 = arith.negf %20 : vector<8x128xf32>
    %22 = math.exp %21 : vector<8x128xf32>
    %cst_17 = arith.constant 1.000000e+00 : f32
    %23 = vector.broadcast %cst_17 : f32 to vector<8x128xf32>
    %24 = arith.addf %23, %22 : vector<8x128xf32>
    %25 = arith.divf %23, %24 : vector<8x128xf32>
    %26 = vector.extract_strided_slice %12 {offsets = [0, 128], sizes = [8, 128], strides = [1, 1]} : vector<8x384xf32> to vector<8x128xf32>
    %27 = vector.extract_strided_slice %17 {offsets = [0, 128], sizes = [8, 128], strides = [1, 1]} : vector<8x384xf32> to vector<8x128xf32>
    %28 = arith.addf %26, %27 : vector<8x128xf32>
    %29 = arith.negf %28 : vector<8x128xf32>
    %30 = math.exp %29 : vector<8x128xf32>
    %cst_18 = arith.constant 1.000000e+00 : f32
    %31 = vector.broadcast %cst_18 : f32 to vector<8x128xf32>
    %32 = arith.addf %31, %30 : vector<8x128xf32>
    %33 = arith.divf %31, %32 : vector<8x128xf32>
    %34 = vector.extract_strided_slice %12 {offsets = [0, 256], sizes = [8, 128], strides = [1, 1]} : vector<8x384xf32> to vector<8x128xf32>
    %35 = vector.extract_strided_slice %17 {offsets = [0, 256], sizes = [8, 128], strides = [1, 1]} : vector<8x384xf32> to vector<8x128xf32>
    %36 = arith.mulf %25, %35 : vector<8x128xf32>
    %37 = arith.addf %34, %36 : vector<8x128xf32>
    %38 = math.tanh %37 : vector<8x128xf32>
    %cst_19 = arith.constant 1.000000e+00 : f32
    %39 = vector.broadcast %cst_19 : f32 to vector<8x128xf32>
    %40 = arith.subf %39, %33 : vector<8x128xf32>
    %41 = arith.mulf %40, %38 : vector<8x128xf32>
    %42 = arith.mulf %33, %9 : vector<8x128xf32>
    %43 = arith.addf %41, %42 : vector<8x128xf32>
    %44 = arith.index_cast %c0_i32 : i32 to index
    %c0_20 = arith.constant 0 : index
    %c0_21 = arith.constant 0 : index
    %45 = vector.load %arg1[%44, %c0_20, %c0_21] : memref<8x8x1xf32, #tpu.memory_space<vmem>>, vector<1x8x1xf32>
    %46 = vector.shape_cast %45 : vector<1x8x1xf32> to vector<8x1xf32>
    %47 = vector.broadcast %46 : vector<8x1xf32> to vector<8x128xf32>
    %48 = arith.mulf %47, %43 : vector<8x128xf32>
    %cst_22 = arith.constant 1.000000e+00 : f32
    %49 = vector.broadcast %cst_22 : f32 to vector<8x1xf32>
    %50 = arith.subf %49, %46 : vector<8x1xf32>
    %51 = vector.broadcast %50 : vector<8x1xf32> to vector<8x128xf32>
    %52 = arith.mulf %51, %9 : vector<8x128xf32>
    %53 = arith.addf %48, %52 : vector<8x128xf32>
    %54 = vector.broadcast %46 : vector<8x1xf32> to vector<8x128xf32>
    %55 = arith.mulf %43, %54 : vector<8x128xf32>
    %56 = arith.index_cast %c0_i32 : i32 to index
    %c0_23 = arith.constant 0 : index
    %c0_24 = arith.constant 0 : index
    %57 = vector.load %arg6[%56, %c0_23, %c0_24] : memref<8x8x128xf32, #tpu.memory_space<vmem>>, vector<1x8x128xf32>
    %58 = vector.shape_cast %57 : vector<1x8x128xf32> to vector<8x128xf32>
    %59 = vector.shape_cast %55 : vector<8x128xf32> to vector<1x8x128xf32>
    tpu.vector_store %arg6[%56, %c0_23, %c0_24], %59 {strides = array<i32>} : memref<8x8x128xf32, #tpu.memory_space<vmem>>, vector<1x8x128xf32>,
    %c1_i32 = arith.constant 1 : i32
    %60 = arith.index_cast %c1_i32 : i32 to index
    %c0_25 = arith.constant 0 : index
    %c0_26 = arith.constant 0 : index
    %61 = vector.load %arg8[%60, %c0_25, %c0_26] : memref<8x8x384xf32, #tpu.memory_space<vmem>>, vector<1x8x384xf32>
    %62 = vector.shape_cast %61 : vector<1x8x384xf32> to vector<8x384xf32>
    %c0_27 = arith.constant 0 : index
    %c0_28 = arith.constant 0 : index
    %63 = vector.load %arg4[%c0_27, %c0_28] : memref<128x384xf32, #tpu.memory_space<vmem>>, vector<128x384xf32>
    %cst_29 = arith.constant dense<0.000000e+00> : vector<8x384xf32>
    %64 = tpu.matmul %53, %63, %cst_29 {dimension_numbers = #tpu.dot_dimension_numbers<[1], [0], [0], [1], [0, 0, 1, 1], [], []>} : vector<8x128xf32>, vector<128x384xf32>, vector<8x384xf32> -> vector<8x384xf32>
    %c0_30 = arith.constant 0 : index
    %c0_31 = arith.constant 0 : index
    %65 = vector.load %arg5[%c0_30, %c0_31] : memref<1x384xf32, #tpu.memory_space<vmem>>, vector<1x384xf32>
    %66 = vector.broadcast %65 : vector<1x384xf32> to vector<8x384xf32>
    %67 = arith.addf %64, %66 : vector<8x384xf32>
    %68 = vector.extract_strided_slice %62 {offsets = [0, 0], sizes = [8, 128], strides = [1, 1]} : vector<8x384xf32> to vector<8x128xf32>
    %69 = vector.extract_strided_slice %67 {offsets = [0, 0], sizes = [8, 128], strides = [1, 1]} : vector<8x384xf32> to vector<8x128xf32>
    %70 = arith.addf %68, %69 : vector<8x128xf32>
    %71 = arith.negf %70 : vector<8x128xf32>
    %72 = math.exp %71 : vector<8x128xf32>
    %cst_32 = arith.constant 1.000000e+00 : f32
    %73 = vector.broadcast %cst_32 : f32 to vector<8x128xf32>
    %74 = arith.addf %73, %72 : vector<8x128xf32>
    %75 = arith.divf %73, %74 : vector<8x128xf32>
    %76 = vector.extract_strided_slice %62 {offsets = [0, 128], sizes = [8, 128], strides = [1, 1]} : vector<8x384xf32> to vector<8x128xf32>
    %77 = vector.extract_strided_slice %67 {offsets = [0, 128], sizes = [8, 128], strides = [1, 1]} : vector<8x384xf32> to vector<8x128xf32>
    %78 = arith.addf %76, %77 : vector<8x128xf32>
    %79 = arith.negf %78 : vector<8x128xf32>
    %80 = math.exp %79 : vector<8x128xf32>
    %cst_33 = arith.constant 1.000000e+00 : f32
    %81 = vector.broadcast %cst_33 : f32 to vector<8x128xf32>
    %82 = arith.addf %81, %80 : vector<8x128xf32>
    %83 = arith.divf %81, %82 : vector<8x128xf32>
    %84 = vector.extract_strided_slice %62 {offsets = [0, 256], sizes = [8, 128], strides = [1, 1]} : vector<8x384xf32> to vector<8x128xf32>
    %85 = vector.extract_strided_slice %67 {offsets = [0, 256], sizes = [8, 128], strides = [1, 1]} : vector<8x384xf32> to vector<8x128xf32>
    %86 = arith.mulf %75, %85 : vector<8x128xf32>
    %87 = arith.addf %84, %86 : vector<8x128xf32>
    %88 = math.tanh %87 : vector<8x128xf32>
    %cst_34 = arith.constant 1.000000e+00 : f32
    %89 = vector.broadcast %cst_34 : f32 to vector<8x128xf32>
    %90 = arith.subf %89, %83 : vector<8x128xf32>
    %91 = arith.mulf %90, %88 : vector<8x128xf32>
    %92 = arith.mulf %83, %53 : vector<8x128xf32>
    %93 = arith.addf %91, %92 : vector<8x128xf32>
    %94 = arith.index_cast %c1_i32 : i32 to index
    %c0_35 = arith.constant 0 : index
    %c0_36 = arith.constant 0 : index
    %95 = vector.load %arg1[%94, %c0_35, %c0_36] : memref<8x8x1xf32, #tpu.memory_space<vmem>>, vector<1x8x1xf32>
    %96 = vector.shape_cast %95 : vector<1x8x1xf32> to vector<8x1xf32>
    %97 = vector.broadcast %96 : vector<8x1xf32> to vector<8x128xf32>
    %98 = arith.mulf %97, %93 : vector<8x128xf32>
    %cst_37 = arith.constant 1.000000e+00 : f32
    %99 = vector.broadcast %cst_37 : f32 to vector<8x1xf32>
    %100 = arith.subf %99, %96 : vector<8x1xf32>
    %101 = vector.broadcast %100 : vector<8x1xf32> to vector<8x128xf32>
    %102 = arith.mulf %101, %53 : vector<8x128xf32>
    %103 = arith.addf %98, %102 : vector<8x128xf32>
    %104 = vector.broadcast %96 : vector<8x1xf32> to vector<8x128xf32>
    %105 = arith.mulf %93, %104 : vector<8x128xf32>
    %106 = arith.index_cast %c1_i32 : i32 to index
    %c0_38 = arith.constant 0 : index
    %c0_39 = arith.constant 0 : index
    %107 = vector.load %arg6[%106, %c0_38, %c0_39] : memref<8x8x128xf32, #tpu.memory_space<vmem>>, vector<1x8x128xf32>
    %108 = vector.shape_cast %107 : vector<1x8x128xf32> to vector<8x128xf32>
    %109 = vector.shape_cast %105 : vector<8x128xf32> to vector<1x8x128xf32>
    tpu.vector_store %arg6[%106, %c0_38, %c0_39], %109 {strides = array<i32>} : memref<8x8x128xf32, #tpu.memory_space<vmem>>, vector<1x8x128xf32>,
    %c2_i32 = arith.constant 2 : i32
    %110 = arith.index_cast %c2_i32 : i32 to index
    %c0_40 = arith.constant 0 : index
    %c0_41 = arith.constant 0 : index
    %111 = vector.load %arg8[%110, %c0_40, %c0_41] : memref<8x8x384xf32, #tpu.memory_space<vmem>>, vector<1x8x384xf32>
    %112 = vector.shape_cast %111 : vector<1x8x384xf32> to vector<8x384xf32>
    %c0_42 = arith.constant 0 : index
    %c0_43 = arith.constant 0 : index
    %113 = vector.load %arg4[%c0_42, %c0_43] : memref<128x384xf32, #tpu.memory_space<vmem>>, vector<128x384xf32>
    %cst_44 = arith.constant dense<0.000000e+00> : vector<8x384xf32>
    %114 = tpu.matmul %103, %113, %cst_44 {dimension_numbers = #tpu.dot_dimension_numbers<[1], [0], [0], [1], [0, 0, 1, 1], [], []>} : vector<8x128xf32>, vector<128x384xf32>, vector<8x384xf32> -> vector<8x384xf32>
    %c0_45 = arith.constant 0 : index
    %c0_46 = arith.constant 0 : index
    %115 = vector.load %arg5[%c0_45, %c0_46] : memref<1x384xf32, #tpu.memory_space<vmem>>, vector<1x384xf32>
    %116 = vector.broadcast %115 : vector<1x384xf32> to vector<8x384xf32>
    %117 = arith.addf %114, %116 : vector<8x384xf32>
    %118 = vector.extract_strided_slice %112 {offsets = [0, 0], sizes = [8, 128], strides = [1, 1]} : vector<8x384xf32> to vector<8x128xf32>
    %119 = vector.extract_strided_slice %117 {offsets = [0, 0], sizes = [8, 128], strides = [1, 1]} : vector<8x384xf32> to vector<8x128xf32>
    %120 = arith.addf %118, %119 : vector<8x128xf32>
    %121 = arith.negf %120 : vector<8x128xf32>
    %122 = math.exp %121 : vector<8x128xf32>
    %cst_47 = arith.constant 1.000000e+00 : f32
    %123 = vector.broadcast %cst_47 : f32 to vector<8x128xf32>
    %124 = arith.addf %123, %122 : vector<8x128xf32>
    %125 = arith.divf %123, %124 : vector<8x128xf32>
    %126 = vector.extract_strided_slice %112 {offsets = [0, 128], sizes = [8, 128], strides = [1, 1]} : vector<8x384xf32> to vector<8x128xf32>
    %127 = vector.extract_strided_slice %117 {offsets = [0, 128], sizes = [8, 128], strides = [1, 1]} : vector<8x384xf32> to vector<8x128xf32>
    %128 = arith.addf %126, %127 : vector<8x128xf32>
    %129 = arith.negf %128 : vector<8x128xf32>
    %130 = math.exp %129 : vector<8x128xf32>
    %cst_48 = arith.constant 1.000000e+00 : f32
    %131 = vector.broadcast %cst_48 : f32 to vector<8x128xf32>
    %132 = arith.addf %131, %130 : vector<8x128xf32>
    %133 = arith.divf %131, %132 : vector<8x128xf32>
    %134 = vector.extract_strided_slice %112 {offsets = [0, 256], sizes = [8, 128], strides = [1, 1]} : vector<8x384xf32> to vector<8x128xf32>
    %135 = vector.extract_strided_slice %117 {offsets = [0, 256], sizes = [8, 128], strides = [1, 1]} : vector<8x384xf32> to vector<8x128xf32>
    %136 = arith.mulf %125, %135 : vector<8x128xf32>
    %137 = arith.addf %134, %136 : vector<8x128xf32>
    %138 = math.tanh %137 : vector<8x128xf32>
    %cst_49 = arith.constant 1.000000e+00 : f32
    %139 = vector.broadcast %cst_49 : f32 to vector<8x128xf32>
    %140 = arith.subf %139, %133 : vector<8x128xf32>
    %141 = arith.mulf %140, %138 : vector<8x128xf32>
    %142 = arith.mulf %133, %103 : vector<8x128xf32>
    %143 = arith.addf %141, %142 : vector<8x128xf32>
    %144 = arith.index_cast %c2_i32 : i32 to index
    %c0_50 = arith.constant 0 : index
    %c0_51 = arith.constant 0 : index
    %145 = vector.load %arg1[%144, %c0_50, %c0_51] : memref<8x8x1xf32, #tpu.memory_space<vmem>>, vector<1x8x1xf32>
    %146 = vector.shape_cast %145 : vector<1x8x1xf32> to vector<8x1xf32>
    %147 = vector.broadcast %146 : vector<8x1xf32> to vector<8x128xf32>
    %148 = arith.mulf %147, %143 : vector<8x128xf32>
    %cst_52 = arith.constant 1.000000e+00 : f32
    %149 = vector.broadcast %cst_52 : f32 to vector<8x1xf32>
    %150 = arith.subf %149, %146 : vector<8x1xf32>
    %151 = vector.broadcast %150 : vector<8x1xf32> to vector<8x128xf32>
    %152 = arith.mulf %151, %103 : vector<8x128xf32>
    %153 = arith.addf %148, %152 : vector<8x128xf32>
    %154 = vector.broadcast %146 : vector<8x1xf32> to vector<8x128xf32>
    %155 = arith.mulf %143, %154 : vector<8x128xf32>
    %156 = arith.index_cast %c2_i32 : i32 to index
    %c0_53 = arith.constant 0 : index
    %c0_54 = arith.constant 0 : index
    %157 = vector.load %arg6[%156, %c0_53, %c0_54] : memref<8x8x128xf32, #tpu.memory_space<vmem>>, vector<1x8x128xf32>
    %158 = vector.shape_cast %157 : vector<1x8x128xf32> to vector<8x128xf32>
    %159 = vector.shape_cast %155 : vector<8x128xf32> to vector<1x8x128xf32>
    tpu.vector_store %arg6[%156, %c0_53, %c0_54], %159 {strides = array<i32>} : memref<8x8x128xf32, #tpu.memory_space<vmem>>, vector<1x8x128xf32>,
    %c3_i32 = arith.constant 3 : i32
    %160 = arith.index_cast %c3_i32 : i32 to index
    %c0_55 = arith.constant 0 : index
    %c0_56 = arith.constant 0 : index
    %161 = vector.load %arg8[%160, %c0_55, %c0_56] : memref<8x8x384xf32, #tpu.memory_space<vmem>>, vector<1x8x384xf32>
    %162 = vector.shape_cast %161 : vector<1x8x384xf32> to vector<8x384xf32>
    %c0_57 = arith.constant 0 : index
    %c0_58 = arith.constant 0 : index
    %163 = vector.load %arg4[%c0_57, %c0_58] : memref<128x384xf32, #tpu.memory_space<vmem>>, vector<128x384xf32>
    %cst_59 = arith.constant dense<0.000000e+00> : vector<8x384xf32>
    %164 = tpu.matmul %153, %163, %cst_59 {dimension_numbers = #tpu.dot_dimension_numbers<[1], [0], [0], [1], [0, 0, 1, 1], [], []>} : vector<8x128xf32>, vector<128x384xf32>, vector<8x384xf32> -> vector<8x384xf32>
    %c0_60 = arith.constant 0 : index
    %c0_61 = arith.constant 0 : index
    %165 = vector.load %arg5[%c0_60, %c0_61] : memref<1x384xf32, #tpu.memory_space<vmem>>, vector<1x384xf32>
    %166 = vector.broadcast %165 : vector<1x384xf32> to vector<8x384xf32>
    %167 = arith.addf %164, %166 : vector<8x384xf32>
    %168 = vector.extract_strided_slice %162 {offsets = [0, 0], sizes = [8, 128], strides = [1, 1]} : vector<8x384xf32> to vector<8x128xf32>
    %169 = vector.extract_strided_slice %167 {offsets = [0, 0], sizes = [8, 128], strides = [1, 1]} : vector<8x384xf32> to vector<8x128xf32>
    %170 = arith.addf %168, %169 : vector<8x128xf32>
    %171 = arith.negf %170 : vector<8x128xf32>
    %172 = math.exp %171 : vector<8x128xf32>
    %cst_62 = arith.constant 1.000000e+00 : f32
    %173 = vector.broadcast %cst_62 : f32 to vector<8x128xf32>
    %174 = arith.addf %173, %172 : vector<8x128xf32>
    %175 = arith.divf %173, %174 : vector<8x128xf32>
    %176 = vector.extract_strided_slice %162 {offsets = [0, 128], sizes = [8, 128], strides = [1, 1]} : vector<8x384xf32> to vector<8x128xf32>
    %177 = vector.extract_strided_slice %167 {offsets = [0, 128], sizes = [8, 128], strides = [1, 1]} : vector<8x384xf32> to vector<8x128xf32>
    %178 = arith.addf %176, %177 : vector<8x128xf32>
    %179 = arith.negf %178 : vector<8x128xf32>
    %180 = math.exp %179 : vector<8x128xf32>
    %cst_63 = arith.constant 1.000000e+00 : f32
    %181 = vector.broadcast %cst_63 : f32 to vector<8x128xf32>
    %182 = arith.addf %181, %180 : vector<8x128xf32>
    %183 = arith.divf %181, %182 : vector<8x128xf32>
    %184 = vector.extract_strided_slice %162 {offsets = [0, 256], sizes = [8, 128], strides = [1, 1]} : vector<8x384xf32> to vector<8x128xf32>
    %185 = vector.extract_strided_slice %167 {offsets = [0, 256], sizes = [8, 128], strides = [1, 1]} : vector<8x384xf32> to vector<8x128xf32>
    %186 = arith.mulf %175, %185 : vector<8x128xf32>
    %187 = arith.addf %184, %186 : vector<8x128xf32>
    %188 = math.tanh %187 : vector<8x128xf32>
    %cst_64 = arith.constant 1.000000e+00 : f32
    %189 = vector.broadcast %cst_64 : f32 to vector<8x128xf32>
    %190 = arith.subf %189, %183 : vector<8x128xf32>
    %191 = arith.mulf %190, %188 : vector<8x128xf32>
    %192 = arith.mulf %183, %153 : vector<8x128xf32>
    %193 = arith.addf %191, %192 : vector<8x128xf32>
    %194 = arith.index_cast %c3_i32 : i32 to index
    %c0_65 = arith.constant 0 : index
    %c0_66 = arith.constant 0 : index
    %195 = vector.load %arg1[%194, %c0_65, %c0_66] : memref<8x8x1xf32, #tpu.memory_space<vmem>>, vector<1x8x1xf32>
    %196 = vector.shape_cast %195 : vector<1x8x1xf32> to vector<8x1xf32>
    %197 = vector.broadcast %196 : vector<8x1xf32> to vector<8x128xf32>
    %198 = arith.mulf %197, %193 : vector<8x128xf32>
    %cst_67 = arith.constant 1.000000e+00 : f32
    %199 = vector.broadcast %cst_67 : f32 to vector<8x1xf32>
    %200 = arith.subf %199, %196 : vector<8x1xf32>
    %201 = vector.broadcast %200 : vector<8x1xf32> to vector<8x128xf32>
    %202 = arith.mulf %201, %153 : vector<8x128xf32>
    %203 = arith.addf %198, %202 : vector<8x128xf32>
    %204 = vector.broadcast %196 : vector<8x1xf32> to vector<8x128xf32>
    %205 = arith.mulf %193, %204 : vector<8x128xf32>
    %206 = arith.index_cast %c3_i32 : i32 to index
    %c0_68 = arith.constant 0 : index
    %c0_69 = arith.constant 0 : index
    %207 = vector.load %arg6[%206, %c0_68, %c0_69] : memref<8x8x128xf32, #tpu.memory_space<vmem>>, vector<1x8x128xf32>
    %208 = vector.shape_cast %207 : vector<1x8x128xf32> to vector<8x128xf32>
    %209 = vector.shape_cast %205 : vector<8x128xf32> to vector<1x8x128xf32>
    tpu.vector_store %arg6[%206, %c0_68, %c0_69], %209 {strides = array<i32>} : memref<8x8x128xf32, #tpu.memory_space<vmem>>, vector<1x8x128xf32>,
    %c4_i32 = arith.constant 4 : i32
    %210 = arith.index_cast %c4_i32 : i32 to index
    %c0_70 = arith.constant 0 : index
    %c0_71 = arith.constant 0 : index
    %211 = vector.load %arg8[%210, %c0_70, %c0_71] : memref<8x8x384xf32, #tpu.memory_space<vmem>>, vector<1x8x384xf32>
    %212 = vector.shape_cast %211 : vector<1x8x384xf32> to vector<8x384xf32>
    %c0_72 = arith.constant 0 : index
    %c0_73 = arith.constant 0 : index
    %213 = vector.load %arg4[%c0_72, %c0_73] : memref<128x384xf32, #tpu.memory_space<vmem>>, vector<128x384xf32>
    %cst_74 = arith.constant dense<0.000000e+00> : vector<8x384xf32>
    %214 = tpu.matmul %203, %213, %cst_74 {dimension_numbers = #tpu.dot_dimension_numbers<[1], [0], [0], [1], [0, 0, 1, 1], [], []>} : vector<8x128xf32>, vector<128x384xf32>, vector<8x384xf32> -> vector<8x384xf32>
    %c0_75 = arith.constant 0 : index
    %c0_76 = arith.constant 0 : index
    %215 = vector.load %arg5[%c0_75, %c0_76] : memref<1x384xf32, #tpu.memory_space<vmem>>, vector<1x384xf32>
    %216 = vector.broadcast %215 : vector<1x384xf32> to vector<8x384xf32>
    %217 = arith.addf %214, %216 : vector<8x384xf32>
    %218 = vector.extract_strided_slice %212 {offsets = [0, 0], sizes = [8, 128], strides = [1, 1]} : vector<8x384xf32> to vector<8x128xf32>
    %219 = vector.extract_strided_slice %217 {offsets = [0, 0], sizes = [8, 128], strides = [1, 1]} : vector<8x384xf32> to vector<8x128xf32>
    %220 = arith.addf %218, %219 : vector<8x128xf32>
    %221 = arith.negf %220 : vector<8x128xf32>
    %222 = math.exp %221 : vector<8x128xf32>
    %cst_77 = arith.constant 1.000000e+00 : f32
    %223 = vector.broadcast %cst_77 : f32 to vector<8x128xf32>
    %224 = arith.addf %223, %222 : vector<8x128xf32>
    %225 = arith.divf %223, %224 : vector<8x128xf32>
    %226 = vector.extract_strided_slice %212 {offsets = [0, 128], sizes = [8, 128], strides = [1, 1]} : vector<8x384xf32> to vector<8x128xf32>
    %227 = vector.extract_strided_slice %217 {offsets = [0, 128], sizes = [8, 128], strides = [1, 1]} : vector<8x384xf32> to vector<8x128xf32>
    %228 = arith.addf %226, %227 : vector<8x128xf32>
    %229 = arith.negf %228 : vector<8x128xf32>
    %230 = math.exp %229 : vector<8x128xf32>
    %cst_78 = arith.constant 1.000000e+00 : f32
    %231 = vector.broadcast %cst_78 : f32 to vector<8x128xf32>
    %232 = arith.addf %231, %230 : vector<8x128xf32>
    %233 = arith.divf %231, %232 : vector<8x128xf32>
    %234 = vector.extract_strided_slice %212 {offsets = [0, 256], sizes = [8, 128], strides = [1, 1]} : vector<8x384xf32> to vector<8x128xf32>
    %235 = vector.extract_strided_slice %217 {offsets = [0, 256], sizes = [8, 128], strides = [1, 1]} : vector<8x384xf32> to vector<8x128xf32>
    %236 = arith.mulf %225, %235 : vector<8x128xf32>
    %237 = arith.addf %234, %236 : vector<8x128xf32>
    %238 = math.tanh %237 : vector<8x128xf32>
    %cst_79 = arith.constant 1.000000e+00 : f32
    %239 = vector.broadcast %cst_79 : f32 to vector<8x128xf32>
    %240 = arith.subf %239, %233 : vector<8x128xf32>
    %241 = arith.mulf %240, %238 : vector<8x128xf32>
    %242 = arith.mulf %233, %203 : vector<8x128xf32>
    %243 = arith.addf %241, %242 : vector<8x128xf32>
    %244 = arith.index_cast %c4_i32 : i32 to index
    %c0_80 = arith.constant 0 : index
    %c0_81 = arith.constant 0 : index
    %245 = vector.load %arg1[%244, %c0_80, %c0_81] : memref<8x8x1xf32, #tpu.memory_space<vmem>>, vector<1x8x1xf32>
    %246 = vector.shape_cast %245 : vector<1x8x1xf32> to vector<8x1xf32>
    %247 = vector.broadcast %246 : vector<8x1xf32> to vector<8x128xf32>
    %248 = arith.mulf %247, %243 : vector<8x128xf32>
    %cst_82 = arith.constant 1.000000e+00 : f32
    %249 = vector.broadcast %cst_82 : f32 to vector<8x1xf32>
    %250 = arith.subf %249, %246 : vector<8x1xf32>
    %251 = vector.broadcast %250 : vector<8x1xf32> to vector<8x128xf32>
    %252 = arith.mulf %251, %203 : vector<8x128xf32>
    %253 = arith.addf %248, %252 : vector<8x128xf32>
    %254 = vector.broadcast %246 : vector<8x1xf32> to vector<8x128xf32>
    %255 = arith.mulf %243, %254 : vector<8x128xf32>
    %256 = arith.index_cast %c4_i32 : i32 to index
    %c0_83 = arith.constant 0 : index
    %c0_84 = arith.constant 0 : index
    %257 = vector.load %arg6[%256, %c0_83, %c0_84] : memref<8x8x128xf32, #tpu.memory_space<vmem>>, vector<1x8x128xf32>
    %258 = vector.shape_cast %257 : vector<1x8x128xf32> to vector<8x128xf32>
    %259 = vector.shape_cast %255 : vector<8x128xf32> to vector<1x8x128xf32>
    tpu.vector_store %arg6[%256, %c0_83, %c0_84], %259 {strides = array<i32>} : memref<8x8x128xf32, #tpu.memory_space<vmem>>, vector<1x8x128xf32>,
    %c5_i32 = arith.constant 5 : i32
    %260 = arith.index_cast %c5_i32 : i32 to index
    %c0_85 = arith.constant 0 : index
    %c0_86 = arith.constant 0 : index
    %261 = vector.load %arg8[%260, %c0_85, %c0_86] : memref<8x8x384xf32, #tpu.memory_space<vmem>>, vector<1x8x384xf32>
    %262 = vector.shape_cast %261 : vector<1x8x384xf32> to vector<8x384xf32>
    %c0_87 = arith.constant 0 : index
    %c0_88 = arith.constant 0 : index
    %263 = vector.load %arg4[%c0_87, %c0_88] : memref<128x384xf32, #tpu.memory_space<vmem>>, vector<128x384xf32>
    %cst_89 = arith.constant dense<0.000000e+00> : vector<8x384xf32>
    %264 = tpu.matmul %253, %263, %cst_89 {dimension_numbers = #tpu.dot_dimension_numbers<[1], [0], [0], [1], [0, 0, 1, 1], [], []>} : vector<8x128xf32>, vector<128x384xf32>, vector<8x384xf32> -> vector<8x384xf32>
    %c0_90 = arith.constant 0 : index
    %c0_91 = arith.constant 0 : index
    %265 = vector.load %arg5[%c0_90, %c0_91] : memref<1x384xf32, #tpu.memory_space<vmem>>, vector<1x384xf32>
    %266 = vector.broadcast %265 : vector<1x384xf32> to vector<8x384xf32>
    %267 = arith.addf %264, %266 : vector<8x384xf32>
    %268 = vector.extract_strided_slice %262 {offsets = [0, 0], sizes = [8, 128], strides = [1, 1]} : vector<8x384xf32> to vector<8x128xf32>
    %269 = vector.extract_strided_slice %267 {offsets = [0, 0], sizes = [8, 128], strides = [1, 1]} : vector<8x384xf32> to vector<8x128xf32>
    %270 = arith.addf %268, %269 : vector<8x128xf32>
    %271 = arith.negf %270 : vector<8x128xf32>
    %272 = math.exp %271 : vector<8x128xf32>
    %cst_92 = arith.constant 1.000000e+00 : f32
    %273 = vector.broadcast %cst_92 : f32 to vector<8x128xf32>
    %274 = arith.addf %273, %272 : vector<8x128xf32>
    %275 = arith.divf %273, %274 : vector<8x128xf32>
    %276 = vector.extract_strided_slice %262 {offsets = [0, 128], sizes = [8, 128], strides = [1, 1]} : vector<8x384xf32> to vector<8x128xf32>
    %277 = vector.extract_strided_slice %267 {offsets = [0, 128], sizes = [8, 128], strides = [1, 1]} : vector<8x384xf32> to vector<8x128xf32>
    %278 = arith.addf %276, %277 : vector<8x128xf32>
    %279 = arith.negf %278 : vector<8x128xf32>
    %280 = math.exp %279 : vector<8x128xf32>
    %cst_93 = arith.constant 1.000000e+00 : f32
    %281 = vector.broadcast %cst_93 : f32 to vector<8x128xf32>
    %282 = arith.addf %281, %280 : vector<8x128xf32>
    %283 = arith.divf %281, %282 : vector<8x128xf32>
    %284 = vector.extract_strided_slice %262 {offsets = [0, 256], sizes = [8, 128], strides = [1, 1]} : vector<8x384xf32> to vector<8x128xf32>
    %285 = vector.extract_strided_slice %267 {offsets = [0, 256], sizes = [8, 128], strides = [1, 1]} : vector<8x384xf32> to vector<8x128xf32>
    %286 = arith.mulf %275, %285 : vector<8x128xf32>
    %287 = arith.addf %284, %286 : vector<8x128xf32>
    %288 = math.tanh %287 : vector<8x128xf32>
    %cst_94 = arith.constant 1.000000e+00 : f32
    %289 = vector.broadcast %cst_94 : f32 to vector<8x128xf32>
    %290 = arith.subf %289, %283 : vector<8x128xf32>
    %291 = arith.mulf %290, %288 : vector<8x128xf32>
    %292 = arith.mulf %283, %253 : vector<8x128xf32>
    %293 = arith.addf %291, %292 : vector<8x128xf32>
    %294 = arith.index_cast %c5_i32 : i32 to index
    %c0_95 = arith.constant 0 : index
    %c0_96 = arith.constant 0 : index
    %295 = vector.load %arg1[%294, %c0_95, %c0_96] : memref<8x8x1xf32, #tpu.memory_space<vmem>>, vector<1x8x1xf32>
    %296 = vector.shape_cast %295 : vector<1x8x1xf32> to vector<8x1xf32>
    %297 = vector.broadcast %296 : vector<8x1xf32> to vector<8x128xf32>
    %298 = arith.mulf %297, %293 : vector<8x128xf32>
    %cst_97 = arith.constant 1.000000e+00 : f32
    %299 = vector.broadcast %cst_97 : f32 to vector<8x1xf32>
    %300 = arith.subf %299, %296 : vector<8x1xf32>
    %301 = vector.broadcast %300 : vector<8x1xf32> to vector<8x128xf32>
    %302 = arith.mulf %301, %253 : vector<8x128xf32>
    %303 = arith.addf %298, %302 : vector<8x128xf32>
    %304 = vector.broadcast %296 : vector<8x1xf32> to vector<8x128xf32>
    %305 = arith.mulf %293, %304 : vector<8x128xf32>
    %306 = arith.index_cast %c5_i32 : i32 to index
    %c0_98 = arith.constant 0 : index
    %c0_99 = arith.constant 0 : index
    %307 = vector.load %arg6[%306, %c0_98, %c0_99] : memref<8x8x128xf32, #tpu.memory_space<vmem>>, vector<1x8x128xf32>
    %308 = vector.shape_cast %307 : vector<1x8x128xf32> to vector<8x128xf32>
    %309 = vector.shape_cast %305 : vector<8x128xf32> to vector<1x8x128xf32>
    tpu.vector_store %arg6[%306, %c0_98, %c0_99], %309 {strides = array<i32>} : memref<8x8x128xf32, #tpu.memory_space<vmem>>, vector<1x8x128xf32>,
    %c6_i32 = arith.constant 6 : i32
    %310 = arith.index_cast %c6_i32 : i32 to index
    %c0_100 = arith.constant 0 : index
    %c0_101 = arith.constant 0 : index
    %311 = vector.load %arg8[%310, %c0_100, %c0_101] : memref<8x8x384xf32, #tpu.memory_space<vmem>>, vector<1x8x384xf32>
    %312 = vector.shape_cast %311 : vector<1x8x384xf32> to vector<8x384xf32>
    %c0_102 = arith.constant 0 : index
    %c0_103 = arith.constant 0 : index
    %313 = vector.load %arg4[%c0_102, %c0_103] : memref<128x384xf32, #tpu.memory_space<vmem>>, vector<128x384xf32>
    %cst_104 = arith.constant dense<0.000000e+00> : vector<8x384xf32>
    %314 = tpu.matmul %303, %313, %cst_104 {dimension_numbers = #tpu.dot_dimension_numbers<[1], [0], [0], [1], [0, 0, 1, 1], [], []>} : vector<8x128xf32>, vector<128x384xf32>, vector<8x384xf32> -> vector<8x384xf32>
    %c0_105 = arith.constant 0 : index
    %c0_106 = arith.constant 0 : index
    %315 = vector.load %arg5[%c0_105, %c0_106] : memref<1x384xf32, #tpu.memory_space<vmem>>, vector<1x384xf32>
    %316 = vector.broadcast %315 : vector<1x384xf32> to vector<8x384xf32>
    %317 = arith.addf %314, %316 : vector<8x384xf32>
    %318 = vector.extract_strided_slice %312 {offsets = [0, 0], sizes = [8, 128], strides = [1, 1]} : vector<8x384xf32> to vector<8x128xf32>
    %319 = vector.extract_strided_slice %317 {offsets = [0, 0], sizes = [8, 128], strides = [1, 1]} : vector<8x384xf32> to vector<8x128xf32>
    %320 = arith.addf %318, %319 : vector<8x128xf32>
    %321 = arith.negf %320 : vector<8x128xf32>
    %322 = math.exp %321 : vector<8x128xf32>
    %cst_107 = arith.constant 1.000000e+00 : f32
    %323 = vector.broadcast %cst_107 : f32 to vector<8x128xf32>
    %324 = arith.addf %323, %322 : vector<8x128xf32>
    %325 = arith.divf %323, %324 : vector<8x128xf32>
    %326 = vector.extract_strided_slice %312 {offsets = [0, 128], sizes = [8, 128], strides = [1, 1]} : vector<8x384xf32> to vector<8x128xf32>
    %327 = vector.extract_strided_slice %317 {offsets = [0, 128], sizes = [8, 128], strides = [1, 1]} : vector<8x384xf32> to vector<8x128xf32>
    %328 = arith.addf %326, %327 : vector<8x128xf32>
    %329 = arith.negf %328 : vector<8x128xf32>
    %330 = math.exp %329 : vector<8x128xf32>
    %cst_108 = arith.constant 1.000000e+00 : f32
    %331 = vector.broadcast %cst_108 : f32 to vector<8x128xf32>
    %332 = arith.addf %331, %330 : vector<8x128xf32>
    %333 = arith.divf %331, %332 : vector<8x128xf32>
    %334 = vector.extract_strided_slice %312 {offsets = [0, 256], sizes = [8, 128], strides = [1, 1]} : vector<8x384xf32> to vector<8x128xf32>
    %335 = vector.extract_strided_slice %317 {offsets = [0, 256], sizes = [8, 128], strides = [1, 1]} : vector<8x384xf32> to vector<8x128xf32>
    %336 = arith.mulf %325, %335 : vector<8x128xf32>
    %337 = arith.addf %334, %336 : vector<8x128xf32>
    %338 = math.tanh %337 : vector<8x128xf32>
    %cst_109 = arith.constant 1.000000e+00 : f32
    %339 = vector.broadcast %cst_109 : f32 to vector<8x128xf32>
    %340 = arith.subf %339, %333 : vector<8x128xf32>
    %341 = arith.mulf %340, %338 : vector<8x128xf32>
    %342 = arith.mulf %333, %303 : vector<8x128xf32>
    %343 = arith.addf %341, %342 : vector<8x128xf32>
    %344 = arith.index_cast %c6_i32 : i32 to index
    %c0_110 = arith.constant 0 : index
    %c0_111 = arith.constant 0 : index
    %345 = vector.load %arg1[%344, %c0_110, %c0_111] : memref<8x8x1xf32, #tpu.memory_space<vmem>>, vector<1x8x1xf32>
    %346 = vector.shape_cast %345 : vector<1x8x1xf32> to vector<8x1xf32>
    %347 = vector.broadcast %346 : vector<8x1xf32> to vector<8x128xf32>
    %348 = arith.mulf %347, %343 : vector<8x128xf32>
    %cst_112 = arith.constant 1.000000e+00 : f32
    %349 = vector.broadcast %cst_112 : f32 to vector<8x1xf32>
    %350 = arith.subf %349, %346 : vector<8x1xf32>
    %351 = vector.broadcast %350 : vector<8x1xf32> to vector<8x128xf32>
    %352 = arith.mulf %351, %303 : vector<8x128xf32>
    %353 = arith.addf %348, %352 : vector<8x128xf32>
    %354 = vector.broadcast %346 : vector<8x1xf32> to vector<8x128xf32>
    %355 = arith.mulf %343, %354 : vector<8x128xf32>
    %356 = arith.index_cast %c6_i32 : i32 to index
    %c0_113 = arith.constant 0 : index
    %c0_114 = arith.constant 0 : index
    %357 = vector.load %arg6[%356, %c0_113, %c0_114] : memref<8x8x128xf32, #tpu.memory_space<vmem>>, vector<1x8x128xf32>
    %358 = vector.shape_cast %357 : vector<1x8x128xf32> to vector<8x128xf32>
    %359 = vector.shape_cast %355 : vector<8x128xf32> to vector<1x8x128xf32>
    tpu.vector_store %arg6[%356, %c0_113, %c0_114], %359 {strides = array<i32>} : memref<8x8x128xf32, #tpu.memory_space<vmem>>, vector<1x8x128xf32>,
    %c7_i32 = arith.constant 7 : i32
    %360 = arith.index_cast %c7_i32 : i32 to index
    %c0_115 = arith.constant 0 : index
    %c0_116 = arith.constant 0 : index
    %361 = vector.load %arg8[%360, %c0_115, %c0_116] : memref<8x8x384xf32, #tpu.memory_space<vmem>>, vector<1x8x384xf32>
    %362 = vector.shape_cast %361 : vector<1x8x384xf32> to vector<8x384xf32>
    %c0_117 = arith.constant 0 : index
    %c0_118 = arith.constant 0 : index
    %363 = vector.load %arg4[%c0_117, %c0_118] : memref<128x384xf32, #tpu.memory_space<vmem>>, vector<128x384xf32>
    %cst_119 = arith.constant dense<0.000000e+00> : vector<8x384xf32>
    %364 = tpu.matmul %353, %363, %cst_119 {dimension_numbers = #tpu.dot_dimension_numbers<[1], [0], [0], [1], [0, 0, 1, 1], [], []>} : vector<8x128xf32>, vector<128x384xf32>, vector<8x384xf32> -> vector<8x384xf32>
    %c0_120 = arith.constant 0 : index
    %c0_121 = arith.constant 0 : index
    %365 = vector.load %arg5[%c0_120, %c0_121] : memref<1x384xf32, #tpu.memory_space<vmem>>, vector<1x384xf32>
    %366 = vector.broadcast %365 : vector<1x384xf32> to vector<8x384xf32>
    %367 = arith.addf %364, %366 : vector<8x384xf32>
    %368 = vector.extract_strided_slice %362 {offsets = [0, 0], sizes = [8, 128], strides = [1, 1]} : vector<8x384xf32> to vector<8x128xf32>
    %369 = vector.extract_strided_slice %367 {offsets = [0, 0], sizes = [8, 128], strides = [1, 1]} : vector<8x384xf32> to vector<8x128xf32>
    %370 = arith.addf %368, %369 : vector<8x128xf32>
    %371 = arith.negf %370 : vector<8x128xf32>
    %372 = math.exp %371 : vector<8x128xf32>
    %cst_122 = arith.constant 1.000000e+00 : f32
    %373 = vector.broadcast %cst_122 : f32 to vector<8x128xf32>
    %374 = arith.addf %373, %372 : vector<8x128xf32>
    %375 = arith.divf %373, %374 : vector<8x128xf32>
    %376 = vector.extract_strided_slice %362 {offsets = [0, 128], sizes = [8, 128], strides = [1, 1]} : vector<8x384xf32> to vector<8x128xf32>
    %377 = vector.extract_strided_slice %367 {offsets = [0, 128], sizes = [8, 128], strides = [1, 1]} : vector<8x384xf32> to vector<8x128xf32>
    %378 = arith.addf %376, %377 : vector<8x128xf32>
    %379 = arith.negf %378 : vector<8x128xf32>
    %380 = math.exp %379 : vector<8x128xf32>
    %cst_123 = arith.constant 1.000000e+00 : f32
    %381 = vector.broadcast %cst_123 : f32 to vector<8x128xf32>
    %382 = arith.addf %381, %380 : vector<8x128xf32>
    %383 = arith.divf %381, %382 : vector<8x128xf32>
    %384 = vector.extract_strided_slice %362 {offsets = [0, 256], sizes = [8, 128], strides = [1, 1]} : vector<8x384xf32> to vector<8x128xf32>
    %385 = vector.extract_strided_slice %367 {offsets = [0, 256], sizes = [8, 128], strides = [1, 1]} : vector<8x384xf32> to vector<8x128xf32>
    %386 = arith.mulf %375, %385 : vector<8x128xf32>
    %387 = arith.addf %384, %386 : vector<8x128xf32>
    %388 = math.tanh %387 : vector<8x128xf32>
    %cst_124 = arith.constant 1.000000e+00 : f32
    %389 = vector.broadcast %cst_124 : f32 to vector<8x128xf32>
    %390 = arith.subf %389, %383 : vector<8x128xf32>
    %391 = arith.mulf %390, %388 : vector<8x128xf32>
    %392 = arith.mulf %383, %353 : vector<8x128xf32>
    %393 = arith.addf %391, %392 : vector<8x128xf32>
    %394 = arith.index_cast %c7_i32 : i32 to index
    %c0_125 = arith.constant 0 : index
    %c0_126 = arith.constant 0 : index
    %395 = vector.load %arg1[%394, %c0_125, %c0_126] : memref<8x8x1xf32, #tpu.memory_space<vmem>>, vector<1x8x1xf32>
    %396 = vector.shape_cast %395 : vector<1x8x1xf32> to vector<8x1xf32>
    %397 = vector.broadcast %396 : vector<8x1xf32> to vector<8x128xf32>
    %398 = arith.mulf %397, %393 : vector<8x128xf32>
    %cst_127 = arith.constant 1.000000e+00 : f32
    %399 = vector.broadcast %cst_127 : f32 to vector<8x1xf32>
    %400 = arith.subf %399, %396 : vector<8x1xf32>
    %401 = vector.broadcast %400 : vector<8x1xf32> to vector<8x128xf32>
    %402 = arith.mulf %401, %353 : vector<8x128xf32>
    %403 = arith.addf %398, %402 : vector<8x128xf32>
    %404 = vector.broadcast %396 : vector<8x1xf32> to vector<8x128xf32>
    %405 = arith.mulf %393, %404 : vector<8x128xf32>
    %406 = arith.index_cast %c7_i32 : i32 to index
    %c0_128 = arith.constant 0 : index
    %c0_129 = arith.constant 0 : index
    %407 = vector.load %arg6[%406, %c0_128, %c0_129] : memref<8x8x128xf32, #tpu.memory_space<vmem>>, vector<1x8x128xf32>
    %408 = vector.shape_cast %407 : vector<1x8x128xf32> to vector<8x128xf32>
    %409 = vector.shape_cast %405 : vector<8x128xf32> to vector<1x8x128xf32>
    tpu.vector_store %arg6[%406, %c0_128, %c0_129], %409 {strides = array<i32>} : memref<8x8x128xf32, #tpu.memory_space<vmem>>, vector<1x8x128xf32>,
    %c8_i32 = arith.constant 8 : i32
    %c0_130 = arith.constant 0 : index
    %c0_131 = arith.constant 0 : index
    %410 = vector.load %arg7[%c0_130, %c0_131] : memref<8x128xf32, #tpu.memory_space<vmem>>, vector<8x128xf32>
    tpu.vector_store %arg7[%c0_130, %c0_131], %403 {strides = array<i32>} : memref<8x128xf32, #tpu.memory_space<vmem>>, vector<8x128xf32>,
    return
  }
}

module attributes {stable_mosaic.version = 11 : i64} {
  func.func @_decoder_kernel(%arg0: memref<5xi32, #tpu.memory_space<smem>>, %arg1: memref<5x8x32xf32, #tpu.memory_space<vmem>>, %arg2: memref<8x128xf32, #tpu.memory_space<vmem>>, %arg3: memref<8x8x128xf32, #tpu.memory_space<vmem>>, %arg4: memref<8x8xf32, #tpu.memory_space<vmem>>, %arg5: memref<128x128xf32, #tpu.memory_space<vmem>>, %arg6: memref<128x128xf32, #tpu.memory_space<vmem>>, %arg7: memref<1x128xf32, #tpu.memory_space<vmem>>, %arg8: memref<1x128xf32, #tpu.memory_space<vmem>>, %arg9: memref<32x384xf32, #tpu.memory_space<vmem>>, %arg10: memref<128x384xf32, #tpu.memory_space<vmem>>, %arg11: memref<128x384xf32, #tpu.memory_space<vmem>>, %arg12: memref<1x384xf32, #tpu.memory_space<vmem>>, %arg13: memref<1x384xf32, #tpu.memory_space<vmem>>, %arg14: memref<128x128xf32, #tpu.memory_space<vmem>>, %arg15: memref<128x128xf32, #tpu.memory_space<vmem>>, %arg16: memref<32x128xf32, #tpu.memory_space<vmem>>, %arg17: memref<1x128xf32, #tpu.memory_space<vmem>>, %arg18: memref<128x32xf32, #tpu.memory_space<vmem>>, %arg19: memref<5x8x128xf32, #tpu.memory_space<vmem>>, %arg20: memref<8x8x128xf32, #tpu.memory_space<vmem>>) attributes {dimension_semantics = [], scalar_prefetch = 0 : i64, scratch_operands = 1 : i64, tpu.core_type = #tpu.core_type<tc>} {
    %c0 = arith.constant 0 : index
    %c0_0 = arith.constant 0 : index
    %c0_1 = arith.constant 0 : index
    %0 = vector.load %arg3[%c0, %c0_0, %c0_1] : memref<8x8x128xf32, #tpu.memory_space<vmem>>, vector<8x8x128xf32>
    %1 = vector.shape_cast %0 : vector<8x8x128xf32> to vector<64x128xf32>
    %c0_2 = arith.constant 0 : index
    %c0_3 = arith.constant 0 : index
    %2 = vector.load %arg6[%c0_2, %c0_3] : memref<128x128xf32, #tpu.memory_space<vmem>>, vector<128x128xf32>
    %cst = arith.constant dense<0.000000e+00> : vector<64x128xf32>
    %3 = tpu.matmul %1, %2, %cst {dimension_numbers = #tpu.dot_dimension_numbers<[1], [0], [0], [1], [0, 0, 1, 1], [], []>} : vector<64x128xf32>, vector<128x128xf32>, vector<64x128xf32> -> vector<64x128xf32>
    %c0_4 = arith.constant 0 : index
    %c0_5 = arith.constant 0 : index
    %4 = vector.load %arg7[%c0_4, %c0_5] : memref<1x128xf32, #tpu.memory_space<vmem>>, vector<1x128xf32>
    %5 = vector.broadcast %4 : vector<1x128xf32> to vector<64x128xf32>
    %6 = arith.addf %3, %5 : vector<64x128xf32>
    %7 = vector.shape_cast %6 : vector<64x128xf32> to vector<8x8x128xf32>
    %c0_6 = arith.constant 0 : index
    %c0_7 = arith.constant 0 : index
    %c0_8 = arith.constant 0 : index
    %8 = vector.load %arg20[%c0_6, %c0_7, %c0_8] : memref<8x8x128xf32, #tpu.memory_space<vmem>>, vector<8x8x128xf32>
    tpu.vector_store %arg20[%c0_6, %c0_7, %c0_8], %7 {strides = array<i32>} : memref<8x8x128xf32, #tpu.memory_space<vmem>>, vector<8x8x128xf32>,
    %c0_9 = arith.constant 0 : index
    %c0_10 = arith.constant 0 : index
    %9 = vector.load %arg2[%c0_9, %c0_10] : memref<8x128xf32, #tpu.memory_space<vmem>>, vector<8x128xf32>
    %cst_11 = arith.constant 0.000000e+00 : f32
    %10 = vector.broadcast %cst_11 : f32 to vector<8x32xf32>
    %c0_i32 = arith.constant 0 : i32
    %11 = arith.index_cast %c0_i32 : i32 to index
    %12 = memref.load %arg0[%11] : memref<5xi32, #tpu.memory_space<smem>>
    %13 = arith.sitofp %12 : i32 to f32
    %14 = arith.index_cast %c0_i32 : i32 to index
    %c0_12 = arith.constant 0 : index
    %c0_13 = arith.constant 0 : index
    %15 = vector.load %arg1[%14, %c0_12, %c0_13] : memref<5x8x32xf32, #tpu.memory_space<vmem>>, vector<1x8x32xf32>
    %16 = vector.shape_cast %15 : vector<1x8x32xf32> to vector<8x32xf32>
    %17 = vector.broadcast %13 : f32 to vector<8x32xf32>
    %18 = arith.mulf %17, %16 : vector<8x32xf32>
    %cst_14 = arith.constant 1.000000e+00 : f32
    %19 = arith.subf %cst_14, %13 : f32
    %20 = vector.broadcast %19 : f32 to vector<8x32xf32>
    %21 = arith.mulf %20, %10 : vector<8x32xf32>
    %22 = arith.addf %18, %21 : vector<8x32xf32>
    %c0_15 = arith.constant 0 : index
    %c0_16 = arith.constant 0 : index
    %23 = vector.load %arg5[%c0_15, %c0_16] : memref<128x128xf32, #tpu.memory_space<vmem>>, vector<128x128xf32>
    %cst_17 = arith.constant dense<0.000000e+00> : vector<8x128xf32>
    %24 = tpu.matmul %9, %23, %cst_17 {dimension_numbers = #tpu.dot_dimension_numbers<[1], [0], [0], [1], [0, 0, 1, 1], [], []>} : vector<8x128xf32>, vector<128x128xf32>, vector<8x128xf32> -> vector<8x128xf32>
    %25 = vector.shape_cast %24 : vector<8x128xf32> to vector<1x8x128xf32>
    %c0_18 = arith.constant 0 : index
    %c0_19 = arith.constant 0 : index
    %c0_20 = arith.constant 0 : index
    %26 = vector.load %arg20[%c0_18, %c0_19, %c0_20] : memref<8x8x128xf32, #tpu.memory_space<vmem>>, vector<8x8x128xf32>
    %27 = vector.broadcast %25 : vector<1x8x128xf32> to vector<8x8x128xf32>
    %28 = arith.addf %27, %26 : vector<8x8x128xf32>
    %29 = math.tanh %28 : vector<8x8x128xf32>
    %c0_21 = arith.constant 0 : index
    %c0_22 = arith.constant 0 : index
    %30 = vector.load %arg8[%c0_21, %c0_22] : memref<1x128xf32, #tpu.memory_space<vmem>>, vector<1x128xf32>
    %31 = vector.shape_cast %30 : vector<1x128xf32> to vector<1x1x128xf32>
    %32 = vector.broadcast %31 : vector<1x1x128xf32> to vector<8x8x128xf32>
    %33 = arith.mulf %29, %32 : vector<8x8x128xf32>
    %cst_23 = arith.constant dense<0.000000e+00> : vector<8x8xf32>
    %34 = vector.multi_reduction <add>, %33, %cst_23 [2] : vector<8x8x128xf32> to vector<8x8xf32>
    %c0_24 = arith.constant 0 : index
    %c0_25 = arith.constant 0 : index
    %35 = vector.load %arg4[%c0_24, %c0_25] : memref<8x8xf32, #tpu.memory_space<vmem>>, vector<8x8xf32>
    %cst_26 = arith.constant 5.000000e-01 : f32
    %36 = vector.broadcast %cst_26 : f32 to vector<8x8xf32>
    %37 = arith.cmpf ogt, %35, %36 : vector<8x8xf32>
    %cst_27 = arith.constant -1.000000e+10 : f32
    %38 = vector.broadcast %cst_27 : f32 to vector<8x8xf32>
    %39 = arith.select %37, %34, %38 : vector<8x8xi1>, vector<8x8xf32>
    %cst_28 = arith.constant dense<0xFF800000> : vector<8xf32>
    %40 = vector.multi_reduction <maximumf>, %39, %cst_28 [0] : vector<8x8xf32> to vector<8xf32>
    %41 = vector.shape_cast %40 : vector<8xf32> to vector<1x8xf32>
    %42 = vector.broadcast %41 : vector<1x8xf32> to vector<8x8xf32>
    %43 = arith.subf %39, %42 : vector<8x8xf32>
    %44 = math.exp %43 : vector<8x8xf32>
    %cst_29 = arith.constant dense<0.000000e+00> : vector<8xf32>
    %45 = vector.multi_reduction <add>, %44, %cst_29 [0] : vector<8x8xf32> to vector<8xf32>
    %46 = vector.shape_cast %45 : vector<8xf32> to vector<1x8xf32>
    %47 = vector.broadcast %46 : vector<1x8xf32> to vector<8x8xf32>
    %48 = arith.divf %44, %47 : vector<8x8xf32>
    %49 = vector.shape_cast %48 : vector<8x8xf32> to vector<8x8x1xf32>
    %c0_30 = arith.constant 0 : index
    %c0_31 = arith.constant 0 : index
    %c0_32 = arith.constant 0 : index
    %50 = vector.load %arg3[%c0_30, %c0_31, %c0_32] : memref<8x8x128xf32, #tpu.memory_space<vmem>>, vector<8x8x128xf32>
    %51 = vector.broadcast %49 : vector<8x8x1xf32> to vector<8x8x128xf32>
    %52 = arith.mulf %51, %50 : vector<8x8x128xf32>
    %cst_33 = arith.constant dense<0.000000e+00> : vector<8x128xf32>
    %53 = vector.multi_reduction <add>, %52, %cst_33 [0] : vector<8x8x128xf32> to vector<8x128xf32>
    %c0_34 = arith.constant 0 : index
    %c0_35 = arith.constant 0 : index
    %54 = vector.load %arg9[%c0_34, %c0_35] : memref<32x384xf32, #tpu.memory_space<vmem>>, vector<32x384xf32>
    %cst_36 = arith.constant dense<0.000000e+00> : vector<8x384xf32>
    %55 = tpu.matmul %22, %54, %cst_36 {dimension_numbers = #tpu.dot_dimension_numbers<[1], [0], [0], [1], [0, 0, 1, 1], [], []>} : vector<8x32xf32>, vector<32x384xf32>, vector<8x384xf32> -> vector<8x384xf32>
    %c0_37 = arith.constant 0 : index
    %c0_38 = arith.constant 0 : index
    %56 = vector.load %arg10[%c0_37, %c0_38] : memref<128x384xf32, #tpu.memory_space<vmem>>, vector<128x384xf32>
    %cst_39 = arith.constant dense<0.000000e+00> : vector<8x384xf32>
    %57 = tpu.matmul %53, %56, %cst_39 {dimension_numbers = #tpu.dot_dimension_numbers<[1], [0], [0], [1], [0, 0, 1, 1], [], []>} : vector<8x128xf32>, vector<128x384xf32>, vector<8x384xf32> -> vector<8x384xf32>
    %58 = arith.addf %55, %57 : vector<8x384xf32>
    %c0_40 = arith.constant 0 : index
    %c0_41 = arith.constant 0 : index
    %59 = vector.load %arg12[%c0_40, %c0_41] : memref<1x384xf32, #tpu.memory_space<vmem>>, vector<1x384xf32>
    %60 = vector.broadcast %59 : vector<1x384xf32> to vector<8x384xf32>
    %61 = arith.addf %58, %60 : vector<8x384xf32>
    %c0_42 = arith.constant 0 : index
    %c0_43 = arith.constant 0 : index
    %62 = vector.load %arg11[%c0_42, %c0_43] : memref<128x384xf32, #tpu.memory_space<vmem>>, vector<128x384xf32>
    %cst_44 = arith.constant dense<0.000000e+00> : vector<8x384xf32>
    %63 = tpu.matmul %9, %62, %cst_44 {dimension_numbers = #tpu.dot_dimension_numbers<[1], [0], [0], [1], [0, 0, 1, 1], [], []>} : vector<8x128xf32>, vector<128x384xf32>, vector<8x384xf32> -> vector<8x384xf32>
    %c0_45 = arith.constant 0 : index
    %c0_46 = arith.constant 0 : index
    %64 = vector.load %arg13[%c0_45, %c0_46] : memref<1x384xf32, #tpu.memory_space<vmem>>, vector<1x384xf32>
    %65 = vector.broadcast %64 : vector<1x384xf32> to vector<8x384xf32>
    %66 = arith.addf %63, %65 : vector<8x384xf32>
    %67 = vector.extract_strided_slice %61 {offsets = [0, 0], sizes = [8, 128], strides = [1, 1]} : vector<8x384xf32> to vector<8x128xf32>
    %68 = vector.extract_strided_slice %66 {offsets = [0, 0], sizes = [8, 128], strides = [1, 1]} : vector<8x384xf32> to vector<8x128xf32>
    %69 = arith.addf %67, %68 : vector<8x128xf32>
    %70 = arith.negf %69 : vector<8x128xf32>
    %71 = math.exp %70 : vector<8x128xf32>
    %cst_47 = arith.constant 1.000000e+00 : f32
    %72 = vector.broadcast %cst_47 : f32 to vector<8x128xf32>
    %73 = arith.addf %72, %71 : vector<8x128xf32>
    %74 = arith.divf %72, %73 : vector<8x128xf32>
    %75 = vector.extract_strided_slice %61 {offsets = [0, 128], sizes = [8, 128], strides = [1, 1]} : vector<8x384xf32> to vector<8x128xf32>
    %76 = vector.extract_strided_slice %66 {offsets = [0, 128], sizes = [8, 128], strides = [1, 1]} : vector<8x384xf32> to vector<8x128xf32>
    %77 = arith.addf %75, %76 : vector<8x128xf32>
    %78 = arith.negf %77 : vector<8x128xf32>
    %79 = math.exp %78 : vector<8x128xf32>
    %cst_48 = arith.constant 1.000000e+00 : f32
    %80 = vector.broadcast %cst_48 : f32 to vector<8x128xf32>
    %81 = arith.addf %80, %79 : vector<8x128xf32>
    %82 = arith.divf %80, %81 : vector<8x128xf32>
    %83 = vector.extract_strided_slice %61 {offsets = [0, 256], sizes = [8, 128], strides = [1, 1]} : vector<8x384xf32> to vector<8x128xf32>
    %84 = vector.extract_strided_slice %66 {offsets = [0, 256], sizes = [8, 128], strides = [1, 1]} : vector<8x384xf32> to vector<8x128xf32>
    %85 = arith.mulf %74, %84 : vector<8x128xf32>
    %86 = arith.addf %83, %85 : vector<8x128xf32>
    %87 = math.tanh %86 : vector<8x128xf32>
    %cst_49 = arith.constant 1.000000e+00 : f32
    %88 = vector.broadcast %cst_49 : f32 to vector<8x128xf32>
    %89 = arith.subf %88, %82 : vector<8x128xf32>
    %90 = arith.mulf %89, %87 : vector<8x128xf32>
    %91 = arith.mulf %82, %9 : vector<8x128xf32>
    %92 = arith.addf %90, %91 : vector<8x128xf32>
    %c0_50 = arith.constant 0 : index
    %c0_51 = arith.constant 0 : index
    %93 = vector.load %arg14[%c0_50, %c0_51] : memref<128x128xf32, #tpu.memory_space<vmem>>, vector<128x128xf32>
    %cst_52 = arith.constant dense<0.000000e+00> : vector<8x128xf32>
    %94 = tpu.matmul %92, %93, %cst_52 {dimension_numbers = #tpu.dot_dimension_numbers<[1], [0], [0], [1], [0, 0, 1, 1], [], []>} : vector<8x128xf32>, vector<128x128xf32>, vector<8x128xf32> -> vector<8x128xf32>
    %c0_53 = arith.constant 0 : index
    %c0_54 = arith.constant 0 : index
    %95 = vector.load %arg15[%c0_53, %c0_54] : memref<128x128xf32, #tpu.memory_space<vmem>>, vector<128x128xf32>
    %cst_55 = arith.constant dense<0.000000e+00> : vector<8x128xf32>
    %96 = tpu.matmul %53, %95, %cst_55 {dimension_numbers = #tpu.dot_dimension_numbers<[1], [0], [0], [1], [0, 0, 1, 1], [], []>} : vector<8x128xf32>, vector<128x128xf32>, vector<8x128xf32> -> vector<8x128xf32>
    %97 = arith.addf %94, %96 : vector<8x128xf32>
    %c0_56 = arith.constant 0 : index
    %c0_57 = arith.constant 0 : index
    %98 = vector.load %arg16[%c0_56, %c0_57] : memref<32x128xf32, #tpu.memory_space<vmem>>, vector<32x128xf32>
    %cst_58 = arith.constant dense<0.000000e+00> : vector<8x128xf32>
    %99 = tpu.matmul %22, %98, %cst_58 {dimension_numbers = #tpu.dot_dimension_numbers<[1], [0], [0], [1], [0, 0, 1, 1], [], []>} : vector<8x32xf32>, vector<32x128xf32>, vector<8x128xf32> -> vector<8x128xf32>
    %100 = arith.addf %97, %99 : vector<8x128xf32>
    %c0_59 = arith.constant 0 : index
    %c0_60 = arith.constant 0 : index
    %101 = vector.load %arg17[%c0_59, %c0_60] : memref<1x128xf32, #tpu.memory_space<vmem>>, vector<1x128xf32>
    %102 = vector.broadcast %101 : vector<1x128xf32> to vector<8x128xf32>
    %103 = arith.addf %100, %102 : vector<8x128xf32>
    %104 = arith.index_cast %c0_i32 : i32 to index
    %c0_61 = arith.constant 0 : index
    %c0_62 = arith.constant 0 : index
    %105 = vector.load %arg19[%104, %c0_61, %c0_62] : memref<5x8x128xf32, #tpu.memory_space<vmem>>, vector<1x8x128xf32>
    %106 = vector.shape_cast %105 : vector<1x8x128xf32> to vector<8x128xf32>
    %107 = vector.shape_cast %103 : vector<8x128xf32> to vector<1x8x128xf32>
    tpu.vector_store %arg19[%104, %c0_61, %c0_62], %107 {strides = array<i32>} : memref<5x8x128xf32, #tpu.memory_space<vmem>>, vector<1x8x128xf32>,
    %108 = tpu.iota {dimensions = array<i32: 1>} : vector<8x128xi32>
    %cst_63 = arith.constant dense<0xFF800000> : vector<8xf32>
    %109 = vector.multi_reduction <maximumf>, %103, %cst_63 [1] : vector<8x128xf32> to vector<8xf32>
    %110 = vector.shape_cast %109 : vector<8xf32> to vector<8x1xf32>
    %111 = vector.broadcast %110 : vector<8x1xf32> to vector<8x128xf32>
    %112 = arith.cmpf oeq, %103, %111 : vector<8x128xf32>
    %c128_i32 = arith.constant 128 : i32
    %113 = vector.broadcast %c128_i32 : i32 to vector<8x128xi32>
    %114 = arith.select %112, %108, %113 : vector<8x128xi1>, vector<8x128xi32>
    %cst_64 = arith.constant dense<2147483647> : vector<8xi32>
    %115 = vector.multi_reduction <minsi>, %114, %cst_64 [1] : vector<8x128xi32> to vector<8xi32>
    %116 = vector.shape_cast %115 : vector<8xi32> to vector<8x1xi32>
    %117 = vector.broadcast %116 : vector<8x1xi32> to vector<8x128xi32>
    %118 = arith.cmpi eq, %108, %117 : vector<8x128xi32>
    %119 = arith.extui %118 : vector<8x128xi1> to vector<8x128xi32>
    %120 = arith.sitofp %119 : vector<8x128xi32> to vector<8x128xf32>
    %c0_65 = arith.constant 0 : index
    %c0_66 = arith.constant 0 : index
    %121 = vector.load %arg18[%c0_65, %c0_66] : memref<128x32xf32, #tpu.memory_space<vmem>>, vector<128x32xf32>
    %cst_67 = arith.constant dense<0.000000e+00> : vector<8x32xf32>
    %122 = tpu.matmul %120, %121, %cst_67 {dimension_numbers = #tpu.dot_dimension_numbers<[1], [0], [0], [1], [0, 0, 1, 1], [], []>} : vector<8x128xf32>, vector<128x32xf32>, vector<8x32xf32> -> vector<8x32xf32>
    %c1_i32 = arith.constant 1 : i32
    %123 = arith.index_cast %c1_i32 : i32 to index
    %124 = memref.load %arg0[%123] : memref<5xi32, #tpu.memory_space<smem>>
    %125 = arith.sitofp %124 : i32 to f32
    %126 = arith.index_cast %c1_i32 : i32 to index
    %c0_68 = arith.constant 0 : index
    %c0_69 = arith.constant 0 : index
    %127 = vector.load %arg1[%126, %c0_68, %c0_69] : memref<5x8x32xf32, #tpu.memory_space<vmem>>, vector<1x8x32xf32>
    %128 = vector.shape_cast %127 : vector<1x8x32xf32> to vector<8x32xf32>
    %129 = vector.broadcast %125 : f32 to vector<8x32xf32>
    %130 = arith.mulf %129, %128 : vector<8x32xf32>
    %cst_70 = arith.constant 1.000000e+00 : f32
    %131 = arith.subf %cst_70, %125 : f32
    %132 = vector.broadcast %131 : f32 to vector<8x32xf32>
    %133 = arith.mulf %132, %122 : vector<8x32xf32>
    %134 = arith.addf %130, %133 : vector<8x32xf32>
    %c0_71 = arith.constant 0 : index
    %c0_72 = arith.constant 0 : index
    %135 = vector.load %arg5[%c0_71, %c0_72] : memref<128x128xf32, #tpu.memory_space<vmem>>, vector<128x128xf32>
    %cst_73 = arith.constant dense<0.000000e+00> : vector<8x128xf32>
    %136 = tpu.matmul %92, %135, %cst_73 {dimension_numbers = #tpu.dot_dimension_numbers<[1], [0], [0], [1], [0, 0, 1, 1], [], []>} : vector<8x128xf32>, vector<128x128xf32>, vector<8x128xf32> -> vector<8x128xf32>
    %137 = vector.shape_cast %136 : vector<8x128xf32> to vector<1x8x128xf32>
    %c0_74 = arith.constant 0 : index
    %c0_75 = arith.constant 0 : index
    %c0_76 = arith.constant 0 : index
    %138 = vector.load %arg20[%c0_74, %c0_75, %c0_76] : memref<8x8x128xf32, #tpu.memory_space<vmem>>, vector<8x8x128xf32>
    %139 = vector.broadcast %137 : vector<1x8x128xf32> to vector<8x8x128xf32>
    %140 = arith.addf %139, %138 : vector<8x8x128xf32>
    %141 = math.tanh %140 : vector<8x8x128xf32>
    %c0_77 = arith.constant 0 : index
    %c0_78 = arith.constant 0 : index
    %142 = vector.load %arg8[%c0_77, %c0_78] : memref<1x128xf32, #tpu.memory_space<vmem>>, vector<1x128xf32>
    %143 = vector.shape_cast %142 : vector<1x128xf32> to vector<1x1x128xf32>
    %144 = vector.broadcast %143 : vector<1x1x128xf32> to vector<8x8x128xf32>
    %145 = arith.mulf %141, %144 : vector<8x8x128xf32>
    %cst_79 = arith.constant dense<0.000000e+00> : vector<8x8xf32>
    %146 = vector.multi_reduction <add>, %145, %cst_79 [2] : vector<8x8x128xf32> to vector<8x8xf32>
    %c0_80 = arith.constant 0 : index
    %c0_81 = arith.constant 0 : index
    %147 = vector.load %arg4[%c0_80, %c0_81] : memref<8x8xf32, #tpu.memory_space<vmem>>, vector<8x8xf32>
    %cst_82 = arith.constant 5.000000e-01 : f32
    %148 = vector.broadcast %cst_82 : f32 to vector<8x8xf32>
    %149 = arith.cmpf ogt, %147, %148 : vector<8x8xf32>
    %cst_83 = arith.constant -1.000000e+10 : f32
    %150 = vector.broadcast %cst_83 : f32 to vector<8x8xf32>
    %151 = arith.select %149, %146, %150 : vector<8x8xi1>, vector<8x8xf32>
    %cst_84 = arith.constant dense<0xFF800000> : vector<8xf32>
    %152 = vector.multi_reduction <maximumf>, %151, %cst_84 [0] : vector<8x8xf32> to vector<8xf32>
    %153 = vector.shape_cast %152 : vector<8xf32> to vector<1x8xf32>
    %154 = vector.broadcast %153 : vector<1x8xf32> to vector<8x8xf32>
    %155 = arith.subf %151, %154 : vector<8x8xf32>
    %156 = math.exp %155 : vector<8x8xf32>
    %cst_85 = arith.constant dense<0.000000e+00> : vector<8xf32>
    %157 = vector.multi_reduction <add>, %156, %cst_85 [0] : vector<8x8xf32> to vector<8xf32>
    %158 = vector.shape_cast %157 : vector<8xf32> to vector<1x8xf32>
    %159 = vector.broadcast %158 : vector<1x8xf32> to vector<8x8xf32>
    %160 = arith.divf %156, %159 : vector<8x8xf32>
    %161 = vector.shape_cast %160 : vector<8x8xf32> to vector<8x8x1xf32>
    %c0_86 = arith.constant 0 : index
    %c0_87 = arith.constant 0 : index
    %c0_88 = arith.constant 0 : index
    %162 = vector.load %arg3[%c0_86, %c0_87, %c0_88] : memref<8x8x128xf32, #tpu.memory_space<vmem>>, vector<8x8x128xf32>
    %163 = vector.broadcast %161 : vector<8x8x1xf32> to vector<8x8x128xf32>
    %164 = arith.mulf %163, %162 : vector<8x8x128xf32>
    %cst_89 = arith.constant dense<0.000000e+00> : vector<8x128xf32>
    %165 = vector.multi_reduction <add>, %164, %cst_89 [0] : vector<8x8x128xf32> to vector<8x128xf32>
    %c0_90 = arith.constant 0 : index
    %c0_91 = arith.constant 0 : index
    %166 = vector.load %arg9[%c0_90, %c0_91] : memref<32x384xf32, #tpu.memory_space<vmem>>, vector<32x384xf32>
    %cst_92 = arith.constant dense<0.000000e+00> : vector<8x384xf32>
    %167 = tpu.matmul %134, %166, %cst_92 {dimension_numbers = #tpu.dot_dimension_numbers<[1], [0], [0], [1], [0, 0, 1, 1], [], []>} : vector<8x32xf32>, vector<32x384xf32>, vector<8x384xf32> -> vector<8x384xf32>
    %c0_93 = arith.constant 0 : index
    %c0_94 = arith.constant 0 : index
    %168 = vector.load %arg10[%c0_93, %c0_94] : memref<128x384xf32, #tpu.memory_space<vmem>>, vector<128x384xf32>
    %cst_95 = arith.constant dense<0.000000e+00> : vector<8x384xf32>
    %169 = tpu.matmul %165, %168, %cst_95 {dimension_numbers = #tpu.dot_dimension_numbers<[1], [0], [0], [1], [0, 0, 1, 1], [], []>} : vector<8x128xf32>, vector<128x384xf32>, vector<8x384xf32> -> vector<8x384xf32>
    %170 = arith.addf %167, %169 : vector<8x384xf32>
    %c0_96 = arith.constant 0 : index
    %c0_97 = arith.constant 0 : index
    %171 = vector.load %arg12[%c0_96, %c0_97] : memref<1x384xf32, #tpu.memory_space<vmem>>, vector<1x384xf32>
    %172 = vector.broadcast %171 : vector<1x384xf32> to vector<8x384xf32>
    %173 = arith.addf %170, %172 : vector<8x384xf32>
    %c0_98 = arith.constant 0 : index
    %c0_99 = arith.constant 0 : index
    %174 = vector.load %arg11[%c0_98, %c0_99] : memref<128x384xf32, #tpu.memory_space<vmem>>, vector<128x384xf32>
    %cst_100 = arith.constant dense<0.000000e+00> : vector<8x384xf32>
    %175 = tpu.matmul %92, %174, %cst_100 {dimension_numbers = #tpu.dot_dimension_numbers<[1], [0], [0], [1], [0, 0, 1, 1], [], []>} : vector<8x128xf32>, vector<128x384xf32>, vector<8x384xf32> -> vector<8x384xf32>
    %c0_101 = arith.constant 0 : index
    %c0_102 = arith.constant 0 : index
    %176 = vector.load %arg13[%c0_101, %c0_102] : memref<1x384xf32, #tpu.memory_space<vmem>>, vector<1x384xf32>
    %177 = vector.broadcast %176 : vector<1x384xf32> to vector<8x384xf32>
    %178 = arith.addf %175, %177 : vector<8x384xf32>
    %179 = vector.extract_strided_slice %173 {offsets = [0, 0], sizes = [8, 128], strides = [1, 1]} : vector<8x384xf32> to vector<8x128xf32>
    %180 = vector.extract_strided_slice %178 {offsets = [0, 0], sizes = [8, 128], strides = [1, 1]} : vector<8x384xf32> to vector<8x128xf32>
    %181 = arith.addf %179, %180 : vector<8x128xf32>
    %182 = arith.negf %181 : vector<8x128xf32>
    %183 = math.exp %182 : vector<8x128xf32>
    %cst_103 = arith.constant 1.000000e+00 : f32
    %184 = vector.broadcast %cst_103 : f32 to vector<8x128xf32>
    %185 = arith.addf %184, %183 : vector<8x128xf32>
    %186 = arith.divf %184, %185 : vector<8x128xf32>
    %187 = vector.extract_strided_slice %173 {offsets = [0, 128], sizes = [8, 128], strides = [1, 1]} : vector<8x384xf32> to vector<8x128xf32>
    %188 = vector.extract_strided_slice %178 {offsets = [0, 128], sizes = [8, 128], strides = [1, 1]} : vector<8x384xf32> to vector<8x128xf32>
    %189 = arith.addf %187, %188 : vector<8x128xf32>
    %190 = arith.negf %189 : vector<8x128xf32>
    %191 = math.exp %190 : vector<8x128xf32>
    %cst_104 = arith.constant 1.000000e+00 : f32
    %192 = vector.broadcast %cst_104 : f32 to vector<8x128xf32>
    %193 = arith.addf %192, %191 : vector<8x128xf32>
    %194 = arith.divf %192, %193 : vector<8x128xf32>
    %195 = vector.extract_strided_slice %173 {offsets = [0, 256], sizes = [8, 128], strides = [1, 1]} : vector<8x384xf32> to vector<8x128xf32>
    %196 = vector.extract_strided_slice %178 {offsets = [0, 256], sizes = [8, 128], strides = [1, 1]} : vector<8x384xf32> to vector<8x128xf32>
    %197 = arith.mulf %186, %196 : vector<8x128xf32>
    %198 = arith.addf %195, %197 : vector<8x128xf32>
    %199 = math.tanh %198 : vector<8x128xf32>
    %cst_105 = arith.constant 1.000000e+00 : f32
    %200 = vector.broadcast %cst_105 : f32 to vector<8x128xf32>
    %201 = arith.subf %200, %194 : vector<8x128xf32>
    %202 = arith.mulf %201, %199 : vector<8x128xf32>
    %203 = arith.mulf %194, %92 : vector<8x128xf32>
    %204 = arith.addf %202, %203 : vector<8x128xf32>
    %c0_106 = arith.constant 0 : index
    %c0_107 = arith.constant 0 : index
    %205 = vector.load %arg14[%c0_106, %c0_107] : memref<128x128xf32, #tpu.memory_space<vmem>>, vector<128x128xf32>
    %cst_108 = arith.constant dense<0.000000e+00> : vector<8x128xf32>
    %206 = tpu.matmul %204, %205, %cst_108 {dimension_numbers = #tpu.dot_dimension_numbers<[1], [0], [0], [1], [0, 0, 1, 1], [], []>} : vector<8x128xf32>, vector<128x128xf32>, vector<8x128xf32> -> vector<8x128xf32>
    %c0_109 = arith.constant 0 : index
    %c0_110 = arith.constant 0 : index
    %207 = vector.load %arg15[%c0_109, %c0_110] : memref<128x128xf32, #tpu.memory_space<vmem>>, vector<128x128xf32>
    %cst_111 = arith.constant dense<0.000000e+00> : vector<8x128xf32>
    %208 = tpu.matmul %165, %207, %cst_111 {dimension_numbers = #tpu.dot_dimension_numbers<[1], [0], [0], [1], [0, 0, 1, 1], [], []>} : vector<8x128xf32>, vector<128x128xf32>, vector<8x128xf32> -> vector<8x128xf32>
    %209 = arith.addf %206, %208 : vector<8x128xf32>
    %c0_112 = arith.constant 0 : index
    %c0_113 = arith.constant 0 : index
    %210 = vector.load %arg16[%c0_112, %c0_113] : memref<32x128xf32, #tpu.memory_space<vmem>>, vector<32x128xf32>
    %cst_114 = arith.constant dense<0.000000e+00> : vector<8x128xf32>
    %211 = tpu.matmul %134, %210, %cst_114 {dimension_numbers = #tpu.dot_dimension_numbers<[1], [0], [0], [1], [0, 0, 1, 1], [], []>} : vector<8x32xf32>, vector<32x128xf32>, vector<8x128xf32> -> vector<8x128xf32>
    %212 = arith.addf %209, %211 : vector<8x128xf32>
    %c0_115 = arith.constant 0 : index
    %c0_116 = arith.constant 0 : index
    %213 = vector.load %arg17[%c0_115, %c0_116] : memref<1x128xf32, #tpu.memory_space<vmem>>, vector<1x128xf32>
    %214 = vector.broadcast %213 : vector<1x128xf32> to vector<8x128xf32>
    %215 = arith.addf %212, %214 : vector<8x128xf32>
    %216 = arith.index_cast %c1_i32 : i32 to index
    %c0_117 = arith.constant 0 : index
    %c0_118 = arith.constant 0 : index
    %217 = vector.load %arg19[%216, %c0_117, %c0_118] : memref<5x8x128xf32, #tpu.memory_space<vmem>>, vector<1x8x128xf32>
    %218 = vector.shape_cast %217 : vector<1x8x128xf32> to vector<8x128xf32>
    %219 = vector.shape_cast %215 : vector<8x128xf32> to vector<1x8x128xf32>
    tpu.vector_store %arg19[%216, %c0_117, %c0_118], %219 {strides = array<i32>} : memref<5x8x128xf32, #tpu.memory_space<vmem>>, vector<1x8x128xf32>,
    %220 = tpu.iota {dimensions = array<i32: 1>} : vector<8x128xi32>
    %cst_119 = arith.constant dense<0xFF800000> : vector<8xf32>
    %221 = vector.multi_reduction <maximumf>, %215, %cst_119 [1] : vector<8x128xf32> to vector<8xf32>
    %222 = vector.shape_cast %221 : vector<8xf32> to vector<8x1xf32>
    %223 = vector.broadcast %222 : vector<8x1xf32> to vector<8x128xf32>
    %224 = arith.cmpf oeq, %215, %223 : vector<8x128xf32>
    %c128_i32_120 = arith.constant 128 : i32
    %225 = vector.broadcast %c128_i32_120 : i32 to vector<8x128xi32>
    %226 = arith.select %224, %220, %225 : vector<8x128xi1>, vector<8x128xi32>
    %cst_121 = arith.constant dense<2147483647> : vector<8xi32>
    %227 = vector.multi_reduction <minsi>, %226, %cst_121 [1] : vector<8x128xi32> to vector<8xi32>
    %228 = vector.shape_cast %227 : vector<8xi32> to vector<8x1xi32>
    %229 = vector.broadcast %228 : vector<8x1xi32> to vector<8x128xi32>
    %230 = arith.cmpi eq, %220, %229 : vector<8x128xi32>
    %231 = arith.extui %230 : vector<8x128xi1> to vector<8x128xi32>
    %232 = arith.sitofp %231 : vector<8x128xi32> to vector<8x128xf32>
    %c0_122 = arith.constant 0 : index
    %c0_123 = arith.constant 0 : index
    %233 = vector.load %arg18[%c0_122, %c0_123] : memref<128x32xf32, #tpu.memory_space<vmem>>, vector<128x32xf32>
    %cst_124 = arith.constant dense<0.000000e+00> : vector<8x32xf32>
    %234 = tpu.matmul %232, %233, %cst_124 {dimension_numbers = #tpu.dot_dimension_numbers<[1], [0], [0], [1], [0, 0, 1, 1], [], []>} : vector<8x128xf32>, vector<128x32xf32>, vector<8x32xf32> -> vector<8x32xf32>
    %c2_i32 = arith.constant 2 : i32
    %235 = arith.index_cast %c2_i32 : i32 to index
    %236 = memref.load %arg0[%235] : memref<5xi32, #tpu.memory_space<smem>>
    %237 = arith.sitofp %236 : i32 to f32
    %238 = arith.index_cast %c2_i32 : i32 to index
    %c0_125 = arith.constant 0 : index
    %c0_126 = arith.constant 0 : index
    %239 = vector.load %arg1[%238, %c0_125, %c0_126] : memref<5x8x32xf32, #tpu.memory_space<vmem>>, vector<1x8x32xf32>
    %240 = vector.shape_cast %239 : vector<1x8x32xf32> to vector<8x32xf32>
    %241 = vector.broadcast %237 : f32 to vector<8x32xf32>
    %242 = arith.mulf %241, %240 : vector<8x32xf32>
    %cst_127 = arith.constant 1.000000e+00 : f32
    %243 = arith.subf %cst_127, %237 : f32
    %244 = vector.broadcast %243 : f32 to vector<8x32xf32>
    %245 = arith.mulf %244, %234 : vector<8x32xf32>
    %246 = arith.addf %242, %245 : vector<8x32xf32>
    %c0_128 = arith.constant 0 : index
    %c0_129 = arith.constant 0 : index
    %247 = vector.load %arg5[%c0_128, %c0_129] : memref<128x128xf32, #tpu.memory_space<vmem>>, vector<128x128xf32>
    %cst_130 = arith.constant dense<0.000000e+00> : vector<8x128xf32>
    %248 = tpu.matmul %204, %247, %cst_130 {dimension_numbers = #tpu.dot_dimension_numbers<[1], [0], [0], [1], [0, 0, 1, 1], [], []>} : vector<8x128xf32>, vector<128x128xf32>, vector<8x128xf32> -> vector<8x128xf32>
    %249 = vector.shape_cast %248 : vector<8x128xf32> to vector<1x8x128xf32>
    %c0_131 = arith.constant 0 : index
    %c0_132 = arith.constant 0 : index
    %c0_133 = arith.constant 0 : index
    %250 = vector.load %arg20[%c0_131, %c0_132, %c0_133] : memref<8x8x128xf32, #tpu.memory_space<vmem>>, vector<8x8x128xf32>
    %251 = vector.broadcast %249 : vector<1x8x128xf32> to vector<8x8x128xf32>
    %252 = arith.addf %251, %250 : vector<8x8x128xf32>
    %253 = math.tanh %252 : vector<8x8x128xf32>
    %c0_134 = arith.constant 0 : index
    %c0_135 = arith.constant 0 : index
    %254 = vector.load %arg8[%c0_134, %c0_135] : memref<1x128xf32, #tpu.memory_space<vmem>>, vector<1x128xf32>
    %255 = vector.shape_cast %254 : vector<1x128xf32> to vector<1x1x128xf32>
    %256 = vector.broadcast %255 : vector<1x1x128xf32> to vector<8x8x128xf32>
    %257 = arith.mulf %253, %256 : vector<8x8x128xf32>
    %cst_136 = arith.constant dense<0.000000e+00> : vector<8x8xf32>
    %258 = vector.multi_reduction <add>, %257, %cst_136 [2] : vector<8x8x128xf32> to vector<8x8xf32>
    %c0_137 = arith.constant 0 : index
    %c0_138 = arith.constant 0 : index
    %259 = vector.load %arg4[%c0_137, %c0_138] : memref<8x8xf32, #tpu.memory_space<vmem>>, vector<8x8xf32>
    %cst_139 = arith.constant 5.000000e-01 : f32
    %260 = vector.broadcast %cst_139 : f32 to vector<8x8xf32>
    %261 = arith.cmpf ogt, %259, %260 : vector<8x8xf32>
    %cst_140 = arith.constant -1.000000e+10 : f32
    %262 = vector.broadcast %cst_140 : f32 to vector<8x8xf32>
    %263 = arith.select %261, %258, %262 : vector<8x8xi1>, vector<8x8xf32>
    %cst_141 = arith.constant dense<0xFF800000> : vector<8xf32>
    %264 = vector.multi_reduction <maximumf>, %263, %cst_141 [0] : vector<8x8xf32> to vector<8xf32>
    %265 = vector.shape_cast %264 : vector<8xf32> to vector<1x8xf32>
    %266 = vector.broadcast %265 : vector<1x8xf32> to vector<8x8xf32>
    %267 = arith.subf %263, %266 : vector<8x8xf32>
    %268 = math.exp %267 : vector<8x8xf32>
    %cst_142 = arith.constant dense<0.000000e+00> : vector<8xf32>
    %269 = vector.multi_reduction <add>, %268, %cst_142 [0] : vector<8x8xf32> to vector<8xf32>
    %270 = vector.shape_cast %269 : vector<8xf32> to vector<1x8xf32>
    %271 = vector.broadcast %270 : vector<1x8xf32> to vector<8x8xf32>
    %272 = arith.divf %268, %271 : vector<8x8xf32>
    %273 = vector.shape_cast %272 : vector<8x8xf32> to vector<8x8x1xf32>
    %c0_143 = arith.constant 0 : index
    %c0_144 = arith.constant 0 : index
    %c0_145 = arith.constant 0 : index
    %274 = vector.load %arg3[%c0_143, %c0_144, %c0_145] : memref<8x8x128xf32, #tpu.memory_space<vmem>>, vector<8x8x128xf32>
    %275 = vector.broadcast %273 : vector<8x8x1xf32> to vector<8x8x128xf32>
    %276 = arith.mulf %275, %274 : vector<8x8x128xf32>
    %cst_146 = arith.constant dense<0.000000e+00> : vector<8x128xf32>
    %277 = vector.multi_reduction <add>, %276, %cst_146 [0] : vector<8x8x128xf32> to vector<8x128xf32>
    %c0_147 = arith.constant 0 : index
    %c0_148 = arith.constant 0 : index
    %278 = vector.load %arg9[%c0_147, %c0_148] : memref<32x384xf32, #tpu.memory_space<vmem>>, vector<32x384xf32>
    %cst_149 = arith.constant dense<0.000000e+00> : vector<8x384xf32>
    %279 = tpu.matmul %246, %278, %cst_149 {dimension_numbers = #tpu.dot_dimension_numbers<[1], [0], [0], [1], [0, 0, 1, 1], [], []>} : vector<8x32xf32>, vector<32x384xf32>, vector<8x384xf32> -> vector<8x384xf32>
    %c0_150 = arith.constant 0 : index
    %c0_151 = arith.constant 0 : index
    %280 = vector.load %arg10[%c0_150, %c0_151] : memref<128x384xf32, #tpu.memory_space<vmem>>, vector<128x384xf32>
    %cst_152 = arith.constant dense<0.000000e+00> : vector<8x384xf32>
    %281 = tpu.matmul %277, %280, %cst_152 {dimension_numbers = #tpu.dot_dimension_numbers<[1], [0], [0], [1], [0, 0, 1, 1], [], []>} : vector<8x128xf32>, vector<128x384xf32>, vector<8x384xf32> -> vector<8x384xf32>
    %282 = arith.addf %279, %281 : vector<8x384xf32>
    %c0_153 = arith.constant 0 : index
    %c0_154 = arith.constant 0 : index
    %283 = vector.load %arg12[%c0_153, %c0_154] : memref<1x384xf32, #tpu.memory_space<vmem>>, vector<1x384xf32>
    %284 = vector.broadcast %283 : vector<1x384xf32> to vector<8x384xf32>
    %285 = arith.addf %282, %284 : vector<8x384xf32>
    %c0_155 = arith.constant 0 : index
    %c0_156 = arith.constant 0 : index
    %286 = vector.load %arg11[%c0_155, %c0_156] : memref<128x384xf32, #tpu.memory_space<vmem>>, vector<128x384xf32>
    %cst_157 = arith.constant dense<0.000000e+00> : vector<8x384xf32>
    %287 = tpu.matmul %204, %286, %cst_157 {dimension_numbers = #tpu.dot_dimension_numbers<[1], [0], [0], [1], [0, 0, 1, 1], [], []>} : vector<8x128xf32>, vector<128x384xf32>, vector<8x384xf32> -> vector<8x384xf32>
    %c0_158 = arith.constant 0 : index
    %c0_159 = arith.constant 0 : index
    %288 = vector.load %arg13[%c0_158, %c0_159] : memref<1x384xf32, #tpu.memory_space<vmem>>, vector<1x384xf32>
    %289 = vector.broadcast %288 : vector<1x384xf32> to vector<8x384xf32>
    %290 = arith.addf %287, %289 : vector<8x384xf32>
    %291 = vector.extract_strided_slice %285 {offsets = [0, 0], sizes = [8, 128], strides = [1, 1]} : vector<8x384xf32> to vector<8x128xf32>
    %292 = vector.extract_strided_slice %290 {offsets = [0, 0], sizes = [8, 128], strides = [1, 1]} : vector<8x384xf32> to vector<8x128xf32>
    %293 = arith.addf %291, %292 : vector<8x128xf32>
    %294 = arith.negf %293 : vector<8x128xf32>
    %295 = math.exp %294 : vector<8x128xf32>
    %cst_160 = arith.constant 1.000000e+00 : f32
    %296 = vector.broadcast %cst_160 : f32 to vector<8x128xf32>
    %297 = arith.addf %296, %295 : vector<8x128xf32>
    %298 = arith.divf %296, %297 : vector<8x128xf32>
    %299 = vector.extract_strided_slice %285 {offsets = [0, 128], sizes = [8, 128], strides = [1, 1]} : vector<8x384xf32> to vector<8x128xf32>
    %300 = vector.extract_strided_slice %290 {offsets = [0, 128], sizes = [8, 128], strides = [1, 1]} : vector<8x384xf32> to vector<8x128xf32>
    %301 = arith.addf %299, %300 : vector<8x128xf32>
    %302 = arith.negf %301 : vector<8x128xf32>
    %303 = math.exp %302 : vector<8x128xf32>
    %cst_161 = arith.constant 1.000000e+00 : f32
    %304 = vector.broadcast %cst_161 : f32 to vector<8x128xf32>
    %305 = arith.addf %304, %303 : vector<8x128xf32>
    %306 = arith.divf %304, %305 : vector<8x128xf32>
    %307 = vector.extract_strided_slice %285 {offsets = [0, 256], sizes = [8, 128], strides = [1, 1]} : vector<8x384xf32> to vector<8x128xf32>
    %308 = vector.extract_strided_slice %290 {offsets = [0, 256], sizes = [8, 128], strides = [1, 1]} : vector<8x384xf32> to vector<8x128xf32>
    %309 = arith.mulf %298, %308 : vector<8x128xf32>
    %310 = arith.addf %307, %309 : vector<8x128xf32>
    %311 = math.tanh %310 : vector<8x128xf32>
    %cst_162 = arith.constant 1.000000e+00 : f32
    %312 = vector.broadcast %cst_162 : f32 to vector<8x128xf32>
    %313 = arith.subf %312, %306 : vector<8x128xf32>
    %314 = arith.mulf %313, %311 : vector<8x128xf32>
    %315 = arith.mulf %306, %204 : vector<8x128xf32>
    %316 = arith.addf %314, %315 : vector<8x128xf32>
    %c0_163 = arith.constant 0 : index
    %c0_164 = arith.constant 0 : index
    %317 = vector.load %arg14[%c0_163, %c0_164] : memref<128x128xf32, #tpu.memory_space<vmem>>, vector<128x128xf32>
    %cst_165 = arith.constant dense<0.000000e+00> : vector<8x128xf32>
    %318 = tpu.matmul %316, %317, %cst_165 {dimension_numbers = #tpu.dot_dimension_numbers<[1], [0], [0], [1], [0, 0, 1, 1], [], []>} : vector<8x128xf32>, vector<128x128xf32>, vector<8x128xf32> -> vector<8x128xf32>
    %c0_166 = arith.constant 0 : index
    %c0_167 = arith.constant 0 : index
    %319 = vector.load %arg15[%c0_166, %c0_167] : memref<128x128xf32, #tpu.memory_space<vmem>>, vector<128x128xf32>
    %cst_168 = arith.constant dense<0.000000e+00> : vector<8x128xf32>
    %320 = tpu.matmul %277, %319, %cst_168 {dimension_numbers = #tpu.dot_dimension_numbers<[1], [0], [0], [1], [0, 0, 1, 1], [], []>} : vector<8x128xf32>, vector<128x128xf32>, vector<8x128xf32> -> vector<8x128xf32>
    %321 = arith.addf %318, %320 : vector<8x128xf32>
    %c0_169 = arith.constant 0 : index
    %c0_170 = arith.constant 0 : index
    %322 = vector.load %arg16[%c0_169, %c0_170] : memref<32x128xf32, #tpu.memory_space<vmem>>, vector<32x128xf32>
    %cst_171 = arith.constant dense<0.000000e+00> : vector<8x128xf32>
    %323 = tpu.matmul %246, %322, %cst_171 {dimension_numbers = #tpu.dot_dimension_numbers<[1], [0], [0], [1], [0, 0, 1, 1], [], []>} : vector<8x32xf32>, vector<32x128xf32>, vector<8x128xf32> -> vector<8x128xf32>
    %324 = arith.addf %321, %323 : vector<8x128xf32>
    %c0_172 = arith.constant 0 : index
    %c0_173 = arith.constant 0 : index
    %325 = vector.load %arg17[%c0_172, %c0_173] : memref<1x128xf32, #tpu.memory_space<vmem>>, vector<1x128xf32>
    %326 = vector.broadcast %325 : vector<1x128xf32> to vector<8x128xf32>
    %327 = arith.addf %324, %326 : vector<8x128xf32>
    %328 = arith.index_cast %c2_i32 : i32 to index
    %c0_174 = arith.constant 0 : index
    %c0_175 = arith.constant 0 : index
    %329 = vector.load %arg19[%328, %c0_174, %c0_175] : memref<5x8x128xf32, #tpu.memory_space<vmem>>, vector<1x8x128xf32>
    %330 = vector.shape_cast %329 : vector<1x8x128xf32> to vector<8x128xf32>
    %331 = vector.shape_cast %327 : vector<8x128xf32> to vector<1x8x128xf32>
    tpu.vector_store %arg19[%328, %c0_174, %c0_175], %331 {strides = array<i32>} : memref<5x8x128xf32, #tpu.memory_space<vmem>>, vector<1x8x128xf32>,
    %332 = tpu.iota {dimensions = array<i32: 1>} : vector<8x128xi32>
    %cst_176 = arith.constant dense<0xFF800000> : vector<8xf32>
    %333 = vector.multi_reduction <maximumf>, %327, %cst_176 [1] : vector<8x128xf32> to vector<8xf32>
    %334 = vector.shape_cast %333 : vector<8xf32> to vector<8x1xf32>
    %335 = vector.broadcast %334 : vector<8x1xf32> to vector<8x128xf32>
    %336 = arith.cmpf oeq, %327, %335 : vector<8x128xf32>
    %c128_i32_177 = arith.constant 128 : i32
    %337 = vector.broadcast %c128_i32_177 : i32 to vector<8x128xi32>
    %338 = arith.select %336, %332, %337 : vector<8x128xi1>, vector<8x128xi32>
    %cst_178 = arith.constant dense<2147483647> : vector<8xi32>
    %339 = vector.multi_reduction <minsi>, %338, %cst_178 [1] : vector<8x128xi32> to vector<8xi32>
    %340 = vector.shape_cast %339 : vector<8xi32> to vector<8x1xi32>
    %341 = vector.broadcast %340 : vector<8x1xi32> to vector<8x128xi32>
    %342 = arith.cmpi eq, %332, %341 : vector<8x128xi32>
    %343 = arith.extui %342 : vector<8x128xi1> to vector<8x128xi32>
    %344 = arith.sitofp %343 : vector<8x128xi32> to vector<8x128xf32>
    %c0_179 = arith.constant 0 : index
    %c0_180 = arith.constant 0 : index
    %345 = vector.load %arg18[%c0_179, %c0_180] : memref<128x32xf32, #tpu.memory_space<vmem>>, vector<128x32xf32>
    %cst_181 = arith.constant dense<0.000000e+00> : vector<8x32xf32>
    %346 = tpu.matmul %344, %345, %cst_181 {dimension_numbers = #tpu.dot_dimension_numbers<[1], [0], [0], [1], [0, 0, 1, 1], [], []>} : vector<8x128xf32>, vector<128x32xf32>, vector<8x32xf32> -> vector<8x32xf32>
    %c3_i32 = arith.constant 3 : i32
    %347 = arith.index_cast %c3_i32 : i32 to index
    %348 = memref.load %arg0[%347] : memref<5xi32, #tpu.memory_space<smem>>
    %349 = arith.sitofp %348 : i32 to f32
    %350 = arith.index_cast %c3_i32 : i32 to index
    %c0_182 = arith.constant 0 : index
    %c0_183 = arith.constant 0 : index
    %351 = vector.load %arg1[%350, %c0_182, %c0_183] : memref<5x8x32xf32, #tpu.memory_space<vmem>>, vector<1x8x32xf32>
    %352 = vector.shape_cast %351 : vector<1x8x32xf32> to vector<8x32xf32>
    %353 = vector.broadcast %349 : f32 to vector<8x32xf32>
    %354 = arith.mulf %353, %352 : vector<8x32xf32>
    %cst_184 = arith.constant 1.000000e+00 : f32
    %355 = arith.subf %cst_184, %349 : f32
    %356 = vector.broadcast %355 : f32 to vector<8x32xf32>
    %357 = arith.mulf %356, %346 : vector<8x32xf32>
    %358 = arith.addf %354, %357 : vector<8x32xf32>
    %c0_185 = arith.constant 0 : index
    %c0_186 = arith.constant 0 : index
    %359 = vector.load %arg5[%c0_185, %c0_186] : memref<128x128xf32, #tpu.memory_space<vmem>>, vector<128x128xf32>
    %cst_187 = arith.constant dense<0.000000e+00> : vector<8x128xf32>
    %360 = tpu.matmul %316, %359, %cst_187 {dimension_numbers = #tpu.dot_dimension_numbers<[1], [0], [0], [1], [0, 0, 1, 1], [], []>} : vector<8x128xf32>, vector<128x128xf32>, vector<8x128xf32> -> vector<8x128xf32>
    %361 = vector.shape_cast %360 : vector<8x128xf32> to vector<1x8x128xf32>
    %c0_188 = arith.constant 0 : index
    %c0_189 = arith.constant 0 : index
    %c0_190 = arith.constant 0 : index
    %362 = vector.load %arg20[%c0_188, %c0_189, %c0_190] : memref<8x8x128xf32, #tpu.memory_space<vmem>>, vector<8x8x128xf32>
    %363 = vector.broadcast %361 : vector<1x8x128xf32> to vector<8x8x128xf32>
    %364 = arith.addf %363, %362 : vector<8x8x128xf32>
    %365 = math.tanh %364 : vector<8x8x128xf32>
    %c0_191 = arith.constant 0 : index
    %c0_192 = arith.constant 0 : index
    %366 = vector.load %arg8[%c0_191, %c0_192] : memref<1x128xf32, #tpu.memory_space<vmem>>, vector<1x128xf32>
    %367 = vector.shape_cast %366 : vector<1x128xf32> to vector<1x1x128xf32>
    %368 = vector.broadcast %367 : vector<1x1x128xf32> to vector<8x8x128xf32>
    %369 = arith.mulf %365, %368 : vector<8x8x128xf32>
    %cst_193 = arith.constant dense<0.000000e+00> : vector<8x8xf32>
    %370 = vector.multi_reduction <add>, %369, %cst_193 [2] : vector<8x8x128xf32> to vector<8x8xf32>
    %c0_194 = arith.constant 0 : index
    %c0_195 = arith.constant 0 : index
    %371 = vector.load %arg4[%c0_194, %c0_195] : memref<8x8xf32, #tpu.memory_space<vmem>>, vector<8x8xf32>
    %cst_196 = arith.constant 5.000000e-01 : f32
    %372 = vector.broadcast %cst_196 : f32 to vector<8x8xf32>
    %373 = arith.cmpf ogt, %371, %372 : vector<8x8xf32>
    %cst_197 = arith.constant -1.000000e+10 : f32
    %374 = vector.broadcast %cst_197 : f32 to vector<8x8xf32>
    %375 = arith.select %373, %370, %374 : vector<8x8xi1>, vector<8x8xf32>
    %cst_198 = arith.constant dense<0xFF800000> : vector<8xf32>
    %376 = vector.multi_reduction <maximumf>, %375, %cst_198 [0] : vector<8x8xf32> to vector<8xf32>
    %377 = vector.shape_cast %376 : vector<8xf32> to vector<1x8xf32>
    %378 = vector.broadcast %377 : vector<1x8xf32> to vector<8x8xf32>
    %379 = arith.subf %375, %378 : vector<8x8xf32>
    %380 = math.exp %379 : vector<8x8xf32>
    %cst_199 = arith.constant dense<0.000000e+00> : vector<8xf32>
    %381 = vector.multi_reduction <add>, %380, %cst_199 [0] : vector<8x8xf32> to vector<8xf32>
    %382 = vector.shape_cast %381 : vector<8xf32> to vector<1x8xf32>
    %383 = vector.broadcast %382 : vector<1x8xf32> to vector<8x8xf32>
    %384 = arith.divf %380, %383 : vector<8x8xf32>
    %385 = vector.shape_cast %384 : vector<8x8xf32> to vector<8x8x1xf32>
    %c0_200 = arith.constant 0 : index
    %c0_201 = arith.constant 0 : index
    %c0_202 = arith.constant 0 : index
    %386 = vector.load %arg3[%c0_200, %c0_201, %c0_202] : memref<8x8x128xf32, #tpu.memory_space<vmem>>, vector<8x8x128xf32>
    %387 = vector.broadcast %385 : vector<8x8x1xf32> to vector<8x8x128xf32>
    %388 = arith.mulf %387, %386 : vector<8x8x128xf32>
    %cst_203 = arith.constant dense<0.000000e+00> : vector<8x128xf32>
    %389 = vector.multi_reduction <add>, %388, %cst_203 [0] : vector<8x8x128xf32> to vector<8x128xf32>
    %c0_204 = arith.constant 0 : index
    %c0_205 = arith.constant 0 : index
    %390 = vector.load %arg9[%c0_204, %c0_205] : memref<32x384xf32, #tpu.memory_space<vmem>>, vector<32x384xf32>
    %cst_206 = arith.constant dense<0.000000e+00> : vector<8x384xf32>
    %391 = tpu.matmul %358, %390, %cst_206 {dimension_numbers = #tpu.dot_dimension_numbers<[1], [0], [0], [1], [0, 0, 1, 1], [], []>} : vector<8x32xf32>, vector<32x384xf32>, vector<8x384xf32> -> vector<8x384xf32>
    %c0_207 = arith.constant 0 : index
    %c0_208 = arith.constant 0 : index
    %392 = vector.load %arg10[%c0_207, %c0_208] : memref<128x384xf32, #tpu.memory_space<vmem>>, vector<128x384xf32>
    %cst_209 = arith.constant dense<0.000000e+00> : vector<8x384xf32>
    %393 = tpu.matmul %389, %392, %cst_209 {dimension_numbers = #tpu.dot_dimension_numbers<[1], [0], [0], [1], [0, 0, 1, 1], [], []>} : vector<8x128xf32>, vector<128x384xf32>, vector<8x384xf32> -> vector<8x384xf32>
    %394 = arith.addf %391, %393 : vector<8x384xf32>
    %c0_210 = arith.constant 0 : index
    %c0_211 = arith.constant 0 : index
    %395 = vector.load %arg12[%c0_210, %c0_211] : memref<1x384xf32, #tpu.memory_space<vmem>>, vector<1x384xf32>
    %396 = vector.broadcast %395 : vector<1x384xf32> to vector<8x384xf32>
    %397 = arith.addf %394, %396 : vector<8x384xf32>
    %c0_212 = arith.constant 0 : index
    %c0_213 = arith.constant 0 : index
    %398 = vector.load %arg11[%c0_212, %c0_213] : memref<128x384xf32, #tpu.memory_space<vmem>>, vector<128x384xf32>
    %cst_214 = arith.constant dense<0.000000e+00> : vector<8x384xf32>
    %399 = tpu.matmul %316, %398, %cst_214 {dimension_numbers = #tpu.dot_dimension_numbers<[1], [0], [0], [1], [0, 0, 1, 1], [], []>} : vector<8x128xf32>, vector<128x384xf32>, vector<8x384xf32> -> vector<8x384xf32>
    %c0_215 = arith.constant 0 : index
    %c0_216 = arith.constant 0 : index
    %400 = vector.load %arg13[%c0_215, %c0_216] : memref<1x384xf32, #tpu.memory_space<vmem>>, vector<1x384xf32>
    %401 = vector.broadcast %400 : vector<1x384xf32> to vector<8x384xf32>
    %402 = arith.addf %399, %401 : vector<8x384xf32>
    %403 = vector.extract_strided_slice %397 {offsets = [0, 0], sizes = [8, 128], strides = [1, 1]} : vector<8x384xf32> to vector<8x128xf32>
    %404 = vector.extract_strided_slice %402 {offsets = [0, 0], sizes = [8, 128], strides = [1, 1]} : vector<8x384xf32> to vector<8x128xf32>
    %405 = arith.addf %403, %404 : vector<8x128xf32>
    %406 = arith.negf %405 : vector<8x128xf32>
    %407 = math.exp %406 : vector<8x128xf32>
    %cst_217 = arith.constant 1.000000e+00 : f32
    %408 = vector.broadcast %cst_217 : f32 to vector<8x128xf32>
    %409 = arith.addf %408, %407 : vector<8x128xf32>
    %410 = arith.divf %408, %409 : vector<8x128xf32>
    %411 = vector.extract_strided_slice %397 {offsets = [0, 128], sizes = [8, 128], strides = [1, 1]} : vector<8x384xf32> to vector<8x128xf32>
    %412 = vector.extract_strided_slice %402 {offsets = [0, 128], sizes = [8, 128], strides = [1, 1]} : vector<8x384xf32> to vector<8x128xf32>
    %413 = arith.addf %411, %412 : vector<8x128xf32>
    %414 = arith.negf %413 : vector<8x128xf32>
    %415 = math.exp %414 : vector<8x128xf32>
    %cst_218 = arith.constant 1.000000e+00 : f32
    %416 = vector.broadcast %cst_218 : f32 to vector<8x128xf32>
    %417 = arith.addf %416, %415 : vector<8x128xf32>
    %418 = arith.divf %416, %417 : vector<8x128xf32>
    %419 = vector.extract_strided_slice %397 {offsets = [0, 256], sizes = [8, 128], strides = [1, 1]} : vector<8x384xf32> to vector<8x128xf32>
    %420 = vector.extract_strided_slice %402 {offsets = [0, 256], sizes = [8, 128], strides = [1, 1]} : vector<8x384xf32> to vector<8x128xf32>
    %421 = arith.mulf %410, %420 : vector<8x128xf32>
    %422 = arith.addf %419, %421 : vector<8x128xf32>
    %423 = math.tanh %422 : vector<8x128xf32>
    %cst_219 = arith.constant 1.000000e+00 : f32
    %424 = vector.broadcast %cst_219 : f32 to vector<8x128xf32>
    %425 = arith.subf %424, %418 : vector<8x128xf32>
    %426 = arith.mulf %425, %423 : vector<8x128xf32>
    %427 = arith.mulf %418, %316 : vector<8x128xf32>
    %428 = arith.addf %426, %427 : vector<8x128xf32>
    %c0_220 = arith.constant 0 : index
    %c0_221 = arith.constant 0 : index
    %429 = vector.load %arg14[%c0_220, %c0_221] : memref<128x128xf32, #tpu.memory_space<vmem>>, vector<128x128xf32>
    %cst_222 = arith.constant dense<0.000000e+00> : vector<8x128xf32>
    %430 = tpu.matmul %428, %429, %cst_222 {dimension_numbers = #tpu.dot_dimension_numbers<[1], [0], [0], [1], [0, 0, 1, 1], [], []>} : vector<8x128xf32>, vector<128x128xf32>, vector<8x128xf32> -> vector<8x128xf32>
    %c0_223 = arith.constant 0 : index
    %c0_224 = arith.constant 0 : index
    %431 = vector.load %arg15[%c0_223, %c0_224] : memref<128x128xf32, #tpu.memory_space<vmem>>, vector<128x128xf32>
    %cst_225 = arith.constant dense<0.000000e+00> : vector<8x128xf32>
    %432 = tpu.matmul %389, %431, %cst_225 {dimension_numbers = #tpu.dot_dimension_numbers<[1], [0], [0], [1], [0, 0, 1, 1], [], []>} : vector<8x128xf32>, vector<128x128xf32>, vector<8x128xf32> -> vector<8x128xf32>
    %433 = arith.addf %430, %432 : vector<8x128xf32>
    %c0_226 = arith.constant 0 : index
    %c0_227 = arith.constant 0 : index
    %434 = vector.load %arg16[%c0_226, %c0_227] : memref<32x128xf32, #tpu.memory_space<vmem>>, vector<32x128xf32>
    %cst_228 = arith.constant dense<0.000000e+00> : vector<8x128xf32>
    %435 = tpu.matmul %358, %434, %cst_228 {dimension_numbers = #tpu.dot_dimension_numbers<[1], [0], [0], [1], [0, 0, 1, 1], [], []>} : vector<8x32xf32>, vector<32x128xf32>, vector<8x128xf32> -> vector<8x128xf32>
    %436 = arith.addf %433, %435 : vector<8x128xf32>
    %c0_229 = arith.constant 0 : index
    %c0_230 = arith.constant 0 : index
    %437 = vector.load %arg17[%c0_229, %c0_230] : memref<1x128xf32, #tpu.memory_space<vmem>>, vector<1x128xf32>
    %438 = vector.broadcast %437 : vector<1x128xf32> to vector<8x128xf32>
    %439 = arith.addf %436, %438 : vector<8x128xf32>
    %440 = arith.index_cast %c3_i32 : i32 to index
    %c0_231 = arith.constant 0 : index
    %c0_232 = arith.constant 0 : index
    %441 = vector.load %arg19[%440, %c0_231, %c0_232] : memref<5x8x128xf32, #tpu.memory_space<vmem>>, vector<1x8x128xf32>
    %442 = vector.shape_cast %441 : vector<1x8x128xf32> to vector<8x128xf32>
    %443 = vector.shape_cast %439 : vector<8x128xf32> to vector<1x8x128xf32>
    tpu.vector_store %arg19[%440, %c0_231, %c0_232], %443 {strides = array<i32>} : memref<5x8x128xf32, #tpu.memory_space<vmem>>, vector<1x8x128xf32>,
    %444 = tpu.iota {dimensions = array<i32: 1>} : vector<8x128xi32>
    %cst_233 = arith.constant dense<0xFF800000> : vector<8xf32>
    %445 = vector.multi_reduction <maximumf>, %439, %cst_233 [1] : vector<8x128xf32> to vector<8xf32>
    %446 = vector.shape_cast %445 : vector<8xf32> to vector<8x1xf32>
    %447 = vector.broadcast %446 : vector<8x1xf32> to vector<8x128xf32>
    %448 = arith.cmpf oeq, %439, %447 : vector<8x128xf32>
    %c128_i32_234 = arith.constant 128 : i32
    %449 = vector.broadcast %c128_i32_234 : i32 to vector<8x128xi32>
    %450 = arith.select %448, %444, %449 : vector<8x128xi1>, vector<8x128xi32>
    %cst_235 = arith.constant dense<2147483647> : vector<8xi32>
    %451 = vector.multi_reduction <minsi>, %450, %cst_235 [1] : vector<8x128xi32> to vector<8xi32>
    %452 = vector.shape_cast %451 : vector<8xi32> to vector<8x1xi32>
    %453 = vector.broadcast %452 : vector<8x1xi32> to vector<8x128xi32>
    %454 = arith.cmpi eq, %444, %453 : vector<8x128xi32>
    %455 = arith.extui %454 : vector<8x128xi1> to vector<8x128xi32>
    %456 = arith.sitofp %455 : vector<8x128xi32> to vector<8x128xf32>
    %c0_236 = arith.constant 0 : index
    %c0_237 = arith.constant 0 : index
    %457 = vector.load %arg18[%c0_236, %c0_237] : memref<128x32xf32, #tpu.memory_space<vmem>>, vector<128x32xf32>
    %cst_238 = arith.constant dense<0.000000e+00> : vector<8x32xf32>
    %458 = tpu.matmul %456, %457, %cst_238 {dimension_numbers = #tpu.dot_dimension_numbers<[1], [0], [0], [1], [0, 0, 1, 1], [], []>} : vector<8x128xf32>, vector<128x32xf32>, vector<8x32xf32> -> vector<8x32xf32>
    %c4_i32 = arith.constant 4 : i32
    %459 = arith.index_cast %c4_i32 : i32 to index
    %460 = memref.load %arg0[%459] : memref<5xi32, #tpu.memory_space<smem>>
    %461 = arith.sitofp %460 : i32 to f32
    %462 = arith.index_cast %c4_i32 : i32 to index
    %c0_239 = arith.constant 0 : index
    %c0_240 = arith.constant 0 : index
    %463 = vector.load %arg1[%462, %c0_239, %c0_240] : memref<5x8x32xf32, #tpu.memory_space<vmem>>, vector<1x8x32xf32>
    %464 = vector.shape_cast %463 : vector<1x8x32xf32> to vector<8x32xf32>
    %465 = vector.broadcast %461 : f32 to vector<8x32xf32>
    %466 = arith.mulf %465, %464 : vector<8x32xf32>
    %cst_241 = arith.constant 1.000000e+00 : f32
    %467 = arith.subf %cst_241, %461 : f32
    %468 = vector.broadcast %467 : f32 to vector<8x32xf32>
    %469 = arith.mulf %468, %458 : vector<8x32xf32>
    %470 = arith.addf %466, %469 : vector<8x32xf32>
    %c0_242 = arith.constant 0 : index
    %c0_243 = arith.constant 0 : index
    %471 = vector.load %arg5[%c0_242, %c0_243] : memref<128x128xf32, #tpu.memory_space<vmem>>, vector<128x128xf32>
    %cst_244 = arith.constant dense<0.000000e+00> : vector<8x128xf32>
    %472 = tpu.matmul %428, %471, %cst_244 {dimension_numbers = #tpu.dot_dimension_numbers<[1], [0], [0], [1], [0, 0, 1, 1], [], []>} : vector<8x128xf32>, vector<128x128xf32>, vector<8x128xf32> -> vector<8x128xf32>
    %473 = vector.shape_cast %472 : vector<8x128xf32> to vector<1x8x128xf32>
    %c0_245 = arith.constant 0 : index
    %c0_246 = arith.constant 0 : index
    %c0_247 = arith.constant 0 : index
    %474 = vector.load %arg20[%c0_245, %c0_246, %c0_247] : memref<8x8x128xf32, #tpu.memory_space<vmem>>, vector<8x8x128xf32>
    %475 = vector.broadcast %473 : vector<1x8x128xf32> to vector<8x8x128xf32>
    %476 = arith.addf %475, %474 : vector<8x8x128xf32>
    %477 = math.tanh %476 : vector<8x8x128xf32>
    %c0_248 = arith.constant 0 : index
    %c0_249 = arith.constant 0 : index
    %478 = vector.load %arg8[%c0_248, %c0_249] : memref<1x128xf32, #tpu.memory_space<vmem>>, vector<1x128xf32>
    %479 = vector.shape_cast %478 : vector<1x128xf32> to vector<1x1x128xf32>
    %480 = vector.broadcast %479 : vector<1x1x128xf32> to vector<8x8x128xf32>
    %481 = arith.mulf %477, %480 : vector<8x8x128xf32>
    %cst_250 = arith.constant dense<0.000000e+00> : vector<8x8xf32>
    %482 = vector.multi_reduction <add>, %481, %cst_250 [2] : vector<8x8x128xf32> to vector<8x8xf32>
    %c0_251 = arith.constant 0 : index
    %c0_252 = arith.constant 0 : index
    %483 = vector.load %arg4[%c0_251, %c0_252] : memref<8x8xf32, #tpu.memory_space<vmem>>, vector<8x8xf32>
    %cst_253 = arith.constant 5.000000e-01 : f32
    %484 = vector.broadcast %cst_253 : f32 to vector<8x8xf32>
    %485 = arith.cmpf ogt, %483, %484 : vector<8x8xf32>
    %cst_254 = arith.constant -1.000000e+10 : f32
    %486 = vector.broadcast %cst_254 : f32 to vector<8x8xf32>
    %487 = arith.select %485, %482, %486 : vector<8x8xi1>, vector<8x8xf32>
    %cst_255 = arith.constant dense<0xFF800000> : vector<8xf32>
    %488 = vector.multi_reduction <maximumf>, %487, %cst_255 [0] : vector<8x8xf32> to vector<8xf32>
    %489 = vector.shape_cast %488 : vector<8xf32> to vector<1x8xf32>
    %490 = vector.broadcast %489 : vector<1x8xf32> to vector<8x8xf32>
    %491 = arith.subf %487, %490 : vector<8x8xf32>
    %492 = math.exp %491 : vector<8x8xf32>
    %cst_256 = arith.constant dense<0.000000e+00> : vector<8xf32>
    %493 = vector.multi_reduction <add>, %492, %cst_256 [0] : vector<8x8xf32> to vector<8xf32>
    %494 = vector.shape_cast %493 : vector<8xf32> to vector<1x8xf32>
    %495 = vector.broadcast %494 : vector<1x8xf32> to vector<8x8xf32>
    %496 = arith.divf %492, %495 : vector<8x8xf32>
    %497 = vector.shape_cast %496 : vector<8x8xf32> to vector<8x8x1xf32>
    %c0_257 = arith.constant 0 : index
    %c0_258 = arith.constant 0 : index
    %c0_259 = arith.constant 0 : index
    %498 = vector.load %arg3[%c0_257, %c0_258, %c0_259] : memref<8x8x128xf32, #tpu.memory_space<vmem>>, vector<8x8x128xf32>
    %499 = vector.broadcast %497 : vector<8x8x1xf32> to vector<8x8x128xf32>
    %500 = arith.mulf %499, %498 : vector<8x8x128xf32>
    %cst_260 = arith.constant dense<0.000000e+00> : vector<8x128xf32>
    %501 = vector.multi_reduction <add>, %500, %cst_260 [0] : vector<8x8x128xf32> to vector<8x128xf32>
    %c0_261 = arith.constant 0 : index
    %c0_262 = arith.constant 0 : index
    %502 = vector.load %arg9[%c0_261, %c0_262] : memref<32x384xf32, #tpu.memory_space<vmem>>, vector<32x384xf32>
    %cst_263 = arith.constant dense<0.000000e+00> : vector<8x384xf32>
    %503 = tpu.matmul %470, %502, %cst_263 {dimension_numbers = #tpu.dot_dimension_numbers<[1], [0], [0], [1], [0, 0, 1, 1], [], []>} : vector<8x32xf32>, vector<32x384xf32>, vector<8x384xf32> -> vector<8x384xf32>
    %c0_264 = arith.constant 0 : index
    %c0_265 = arith.constant 0 : index
    %504 = vector.load %arg10[%c0_264, %c0_265] : memref<128x384xf32, #tpu.memory_space<vmem>>, vector<128x384xf32>
    %cst_266 = arith.constant dense<0.000000e+00> : vector<8x384xf32>
    %505 = tpu.matmul %501, %504, %cst_266 {dimension_numbers = #tpu.dot_dimension_numbers<[1], [0], [0], [1], [0, 0, 1, 1], [], []>} : vector<8x128xf32>, vector<128x384xf32>, vector<8x384xf32> -> vector<8x384xf32>
    %506 = arith.addf %503, %505 : vector<8x384xf32>
    %c0_267 = arith.constant 0 : index
    %c0_268 = arith.constant 0 : index
    %507 = vector.load %arg12[%c0_267, %c0_268] : memref<1x384xf32, #tpu.memory_space<vmem>>, vector<1x384xf32>
    %508 = vector.broadcast %507 : vector<1x384xf32> to vector<8x384xf32>
    %509 = arith.addf %506, %508 : vector<8x384xf32>
    %c0_269 = arith.constant 0 : index
    %c0_270 = arith.constant 0 : index
    %510 = vector.load %arg11[%c0_269, %c0_270] : memref<128x384xf32, #tpu.memory_space<vmem>>, vector<128x384xf32>
    %cst_271 = arith.constant dense<0.000000e+00> : vector<8x384xf32>
    %511 = tpu.matmul %428, %510, %cst_271 {dimension_numbers = #tpu.dot_dimension_numbers<[1], [0], [0], [1], [0, 0, 1, 1], [], []>} : vector<8x128xf32>, vector<128x384xf32>, vector<8x384xf32> -> vector<8x384xf32>
    %c0_272 = arith.constant 0 : index
    %c0_273 = arith.constant 0 : index
    %512 = vector.load %arg13[%c0_272, %c0_273] : memref<1x384xf32, #tpu.memory_space<vmem>>, vector<1x384xf32>
    %513 = vector.broadcast %512 : vector<1x384xf32> to vector<8x384xf32>
    %514 = arith.addf %511, %513 : vector<8x384xf32>
    %515 = vector.extract_strided_slice %509 {offsets = [0, 0], sizes = [8, 128], strides = [1, 1]} : vector<8x384xf32> to vector<8x128xf32>
    %516 = vector.extract_strided_slice %514 {offsets = [0, 0], sizes = [8, 128], strides = [1, 1]} : vector<8x384xf32> to vector<8x128xf32>
    %517 = arith.addf %515, %516 : vector<8x128xf32>
    %518 = arith.negf %517 : vector<8x128xf32>
    %519 = math.exp %518 : vector<8x128xf32>
    %cst_274 = arith.constant 1.000000e+00 : f32
    %520 = vector.broadcast %cst_274 : f32 to vector<8x128xf32>
    %521 = arith.addf %520, %519 : vector<8x128xf32>
    %522 = arith.divf %520, %521 : vector<8x128xf32>
    %523 = vector.extract_strided_slice %509 {offsets = [0, 128], sizes = [8, 128], strides = [1, 1]} : vector<8x384xf32> to vector<8x128xf32>
    %524 = vector.extract_strided_slice %514 {offsets = [0, 128], sizes = [8, 128], strides = [1, 1]} : vector<8x384xf32> to vector<8x128xf32>
    %525 = arith.addf %523, %524 : vector<8x128xf32>
    %526 = arith.negf %525 : vector<8x128xf32>
    %527 = math.exp %526 : vector<8x128xf32>
    %cst_275 = arith.constant 1.000000e+00 : f32
    %528 = vector.broadcast %cst_275 : f32 to vector<8x128xf32>
    %529 = arith.addf %528, %527 : vector<8x128xf32>
    %530 = arith.divf %528, %529 : vector<8x128xf32>
    %531 = vector.extract_strided_slice %509 {offsets = [0, 256], sizes = [8, 128], strides = [1, 1]} : vector<8x384xf32> to vector<8x128xf32>
    %532 = vector.extract_strided_slice %514 {offsets = [0, 256], sizes = [8, 128], strides = [1, 1]} : vector<8x384xf32> to vector<8x128xf32>
    %533 = arith.mulf %522, %532 : vector<8x128xf32>
    %534 = arith.addf %531, %533 : vector<8x128xf32>
    %535 = math.tanh %534 : vector<8x128xf32>
    %cst_276 = arith.constant 1.000000e+00 : f32
    %536 = vector.broadcast %cst_276 : f32 to vector<8x128xf32>
    %537 = arith.subf %536, %530 : vector<8x128xf32>
    %538 = arith.mulf %537, %535 : vector<8x128xf32>
    %539 = arith.mulf %530, %428 : vector<8x128xf32>
    %540 = arith.addf %538, %539 : vector<8x128xf32>
    %c0_277 = arith.constant 0 : index
    %c0_278 = arith.constant 0 : index
    %541 = vector.load %arg14[%c0_277, %c0_278] : memref<128x128xf32, #tpu.memory_space<vmem>>, vector<128x128xf32>
    %cst_279 = arith.constant dense<0.000000e+00> : vector<8x128xf32>
    %542 = tpu.matmul %540, %541, %cst_279 {dimension_numbers = #tpu.dot_dimension_numbers<[1], [0], [0], [1], [0, 0, 1, 1], [], []>} : vector<8x128xf32>, vector<128x128xf32>, vector<8x128xf32> -> vector<8x128xf32>
    %c0_280 = arith.constant 0 : index
    %c0_281 = arith.constant 0 : index
    %543 = vector.load %arg15[%c0_280, %c0_281] : memref<128x128xf32, #tpu.memory_space<vmem>>, vector<128x128xf32>
    %cst_282 = arith.constant dense<0.000000e+00> : vector<8x128xf32>
    %544 = tpu.matmul %501, %543, %cst_282 {dimension_numbers = #tpu.dot_dimension_numbers<[1], [0], [0], [1], [0, 0, 1, 1], [], []>} : vector<8x128xf32>, vector<128x128xf32>, vector<8x128xf32> -> vector<8x128xf32>
    %545 = arith.addf %542, %544 : vector<8x128xf32>
    %c0_283 = arith.constant 0 : index
    %c0_284 = arith.constant 0 : index
    %546 = vector.load %arg16[%c0_283, %c0_284] : memref<32x128xf32, #tpu.memory_space<vmem>>, vector<32x128xf32>
    %cst_285 = arith.constant dense<0.000000e+00> : vector<8x128xf32>
    %547 = tpu.matmul %470, %546, %cst_285 {dimension_numbers = #tpu.dot_dimension_numbers<[1], [0], [0], [1], [0, 0, 1, 1], [], []>} : vector<8x32xf32>, vector<32x128xf32>, vector<8x128xf32> -> vector<8x128xf32>
    %548 = arith.addf %545, %547 : vector<8x128xf32>
    %c0_286 = arith.constant 0 : index
    %c0_287 = arith.constant 0 : index
    %549 = vector.load %arg17[%c0_286, %c0_287] : memref<1x128xf32, #tpu.memory_space<vmem>>, vector<1x128xf32>
    %550 = vector.broadcast %549 : vector<1x128xf32> to vector<8x128xf32>
    %551 = arith.addf %548, %550 : vector<8x128xf32>
    %552 = arith.index_cast %c4_i32 : i32 to index
    %c0_288 = arith.constant 0 : index
    %c0_289 = arith.constant 0 : index
    %553 = vector.load %arg19[%552, %c0_288, %c0_289] : memref<5x8x128xf32, #tpu.memory_space<vmem>>, vector<1x8x128xf32>
    %554 = vector.shape_cast %553 : vector<1x8x128xf32> to vector<8x128xf32>
    %555 = vector.shape_cast %551 : vector<8x128xf32> to vector<1x8x128xf32>
    tpu.vector_store %arg19[%552, %c0_288, %c0_289], %555 {strides = array<i32>} : memref<5x8x128xf32, #tpu.memory_space<vmem>>, vector<1x8x128xf32>,
    %556 = tpu.iota {dimensions = array<i32: 1>} : vector<8x128xi32>
    %cst_290 = arith.constant dense<0xFF800000> : vector<8xf32>
    %557 = vector.multi_reduction <maximumf>, %551, %cst_290 [1] : vector<8x128xf32> to vector<8xf32>
    %558 = vector.shape_cast %557 : vector<8xf32> to vector<8x1xf32>
    %559 = vector.broadcast %558 : vector<8x1xf32> to vector<8x128xf32>
    %560 = arith.cmpf oeq, %551, %559 : vector<8x128xf32>
    %c128_i32_291 = arith.constant 128 : i32
    %561 = vector.broadcast %c128_i32_291 : i32 to vector<8x128xi32>
    %562 = arith.select %560, %556, %561 : vector<8x128xi1>, vector<8x128xi32>
    %cst_292 = arith.constant dense<2147483647> : vector<8xi32>
    %563 = vector.multi_reduction <minsi>, %562, %cst_292 [1] : vector<8x128xi32> to vector<8xi32>
    %564 = vector.shape_cast %563 : vector<8xi32> to vector<8x1xi32>
    %565 = vector.broadcast %564 : vector<8x1xi32> to vector<8x128xi32>
    %566 = arith.cmpi eq, %556, %565 : vector<8x128xi32>
    %567 = arith.extui %566 : vector<8x128xi1> to vector<8x128xi32>
    %568 = arith.sitofp %567 : vector<8x128xi32> to vector<8x128xf32>
    %c0_293 = arith.constant 0 : index
    %c0_294 = arith.constant 0 : index
    %569 = vector.load %arg18[%c0_293, %c0_294] : memref<128x32xf32, #tpu.memory_space<vmem>>, vector<128x32xf32>
    %cst_295 = arith.constant dense<0.000000e+00> : vector<8x32xf32>
    %570 = tpu.matmul %568, %569, %cst_295 {dimension_numbers = #tpu.dot_dimension_numbers<[1], [0], [0], [1], [0, 0, 1, 1], [], []>} : vector<8x128xf32>, vector<128x32xf32>, vector<8x32xf32> -> vector<8x32xf32>
    %c5_i32 = arith.constant 5 : i32
    return
  }
}

</mosaic_0001>

<llo_original>
// kernel: _seq2seq_apply.2
$region0: #{_seq2seq_apply.2}
  #allocation0 [shape = 'u32[]', space=smem, size = 0x4, offset = 0x4, fixed_abs, tag = 'smem constant byte address 0x4 - core index']
  #allocation1 [shape = 'u32[144,128]{1,0:T(1,128)}', space=vmem, size = 0x12000, scoped, tag = 'internal scratch']
  #allocation2 [shape = 'f32[8,8,384]{2,1,0:T(8,128)}', space=vmem, size = 0x18000, scoped, tag = 'scratch operand']
  %s0 = inlined_call_operand.vmem [shape: f32[8,8,32], index: 0, kind: input, shape index: {}]
  %s1 = inlined_call_operand.vmem [shape: f32[8,8,1], index: 1, kind: input, shape index: {}]
  %s2 = inlined_call_operand.vmem [shape: f32[32,384], index: 2, kind: input, shape index: {}]
  %s3 = inlined_call_operand.vmem [shape: f32[1,384], index: 3, kind: input, shape index: {}]
  %s4 = inlined_call_operand.vmem [shape: f32[128,384], index: 4, kind: input, shape index: {}]
  %s5 = inlined_call_operand.vmem [shape: f32[1,384], index: 5, kind: input, shape index: {}]
  %s6 = inlined_call_operand.vmem [shape: f32[8,8,128], index: 6, kind: output, shape index: {0}]
  %s7 = inlined_call_operand.vmem [shape: f32[8,128], index: 7, kind: output, shape index: {1}]
  %8 = xla_tuple %s6, %s7
  %s9 = sld [smem:[#allocation0]]
  $region42: #{_seq2seq_apply.2} parent=0
    _
  %s11 = ssub.s32 1, %s9
  %s12 = scalar_select 0, %s11, %s9
  // Predicated region
  $region2: #{_seq2seq_apply.2} parent=0 // pred_check
    _
  $region3: #{_seq2seq_apply.2} parent=0 // pred_check_branch
    %14 = sbr.rel (0) target = $region5
  $region4: #{_seq2seq_apply.2} parent=0 // pred_region
    _
  $region5: #{_seq2seq_apply.2} parent=0 // pred_fallthru
    _
  // Predicated region
  $region6: #{_seq2seq_apply.2} parent=0 // pred_check
    _
  $region7: #{_seq2seq_apply.2} parent=0 // pred_check_branch
    %16 = sbr.rel (0) target = $region9
  $region8: #{_seq2seq_apply.2} parent=0 // pred_region
    _
  $region9: #{_seq2seq_apply.2} parent=0 // pred_fallthru
    _
  // Predicated region
  $region10: #{_seq2seq_apply.2} parent=0 // pred_check
    _
  $region11: #{_seq2seq_apply.2} parent=0 // pred_check_branch
    %18 = sbr.rel (0) target = $region13
  $region12: #{_seq2seq_apply.2} parent=0 // pred_region
    _
  $region13: #{_seq2seq_apply.2} parent=0 // pred_fallthru
    _
  // Predicated region
  $region14: #{_seq2seq_apply.2} parent=0 // pred_check
    _
  $region15: #{_seq2seq_apply.2} parent=0 // pred_check_branch
    %20 = sbr.rel (0) target = $region17
  $region16: #{_seq2seq_apply.2} parent=0 // pred_region
    _
  $region17: #{_seq2seq_apply.2} parent=0 // pred_fallthru
    _
  // Predicated region
  $region18: #{_seq2seq_apply.2} parent=0 // pred_check
    _
  $region19: #{_seq2seq_apply.2} parent=0 // pred_check_branch
    %22 = sbr.rel (0) target = $region21
  $region20: #{_seq2seq_apply.2} parent=0 // pred_region
    _
  $region21: #{_seq2seq_apply.2} parent=0 // pred_fallthru
    _
  // Predicated region
  $region22: #{_seq2seq_apply.2} parent=0 // pred_check
    _
  $region23: #{_seq2seq_apply.2} parent=0 // pred_check_branch
    %24 = sbr.rel (0) target = $region25
  $region24: #{_seq2seq_apply.2} parent=0 // pred_region
    _
  $region25: #{_seq2seq_apply.2} parent=0 // pred_fallthru
    _
  %v25 = vld [vmem:[%s0] sm:$0xff]
  %v26 = vld [vmem:[%s0 + $0x8] sm:$0xff]
  %v27 = vld [vmem:[%s0 + $0x10] sm:$0xff]
  %v28 = vld [vmem:[%s0 + $0x18] sm:$0xff]
  %v29 = vld [vmem:[%s0 + $0x20] sm:$0xff]
  %v30 = vld [vmem:[%s0 + $0x28] sm:$0xff]
  %v31 = vld [vmem:[%s0 + $0x30] sm:$0xff]
  %v32 = vld [vmem:[%s0 + $0x38] sm:$0xff]
  %v33 = vld [vmem:[%s2] sm:$0xff]
  %v34 = vld [vmem:[%s2 + $0x8] sm:$0xff]
  %v35 = vld [vmem:[%s2 + $0x10] sm:$0xff]
  %v36 = vld [vmem:[%s2 + $0x18] sm:$0xff]
  %v37 = vld [vmem:[%s2 + $0x20] sm:$0xff]
  %v38 = vld [vmem:[%s2 + $0x28] sm:$0xff]
  %v39 = vld [vmem:[%s2 + $0x30] sm:$0xff]
  %v40 = vld [vmem:[%s2 + $0x38] sm:$0xff]
  %v41 = vld [vmem:[%s2 + $0x40] sm:$0xff]
  %v42 = vld [vmem:[%s2 + $0x48] sm:$0xff]
  %v43 = vld [vmem:[%s2 + $0x50] sm:$0xff]
  %v44 = vld [vmem:[%s2 + $0x58] sm:$0xff]
  %v45 = vld [vmem:[%s3] sm:$0x7]
  %v47 = vlaneseq
  %v48 = vshrl.u32 %v47, 7
  %v49 = vsub.s32 0, %v48
  %v50 = vrot.slane %v45, %v49
  %v51 = vlaneseq
  %v52 = vshrl.u32 %v51, 7
  %v53 = vsub.s32 1, %v52
  %v54 = vrot.slane %v45, %v53
  %v55 = vlaneseq
  %v56 = vshrl.u32 %v55, 7
  %v57 = vsub.s32 2, %v56
  %v58 = vrot.slane %v45, %v57
  %vm62 = vcmask 261120
  %v64 = vsel %vm62, %v25, 0
  %v67 = vsel %vm62, %v26, 0
  %v70 = vsel %vm62, %v27, 0
  %v73 = vsel %vm62, %v28, 0
  %v76 = vsel %vm62, %v29, 0
  %v79 = vsel %vm62, %v30, 0
  %v82 = vsel %vm62, %v31, 0
  %v85 = vsel %vm62, %v32, 0
  %87 = vmatprep.subr.mxu0 %v34
  %88 = vmatpush1.msra.mxu0 %v33
  %89 = vmatprep.subr.mxu0 %v37
  %90 = vmatpush1.msra.mxu0 %v36
  %91 = vmatprep.subr.mxu0 %v40
  %92 = vmatpush1.msra.mxu0 %v39
  %93 = vmatprep.subr.mxu0 %v43
  %94 = vmatpush1.msra.mxu0 %v42
  %95 = vmatprep.subr.mxu0 0.0
  %96 = vmatpush1.msra.mxu0 0.0
  %97 = vmatprep.subr.mxu0 0.0
  %98 = vmatpush1.msra.mxu0 0.0
  %99 = vmatprep.subr.mxu0 0.0
  %100 = vmatpush1.msra.mxu0 0.0
  %101 = vmatprep.subr.mxu0 0.0
  %102 = vmatpush1.msra.mxu0 0.0
  %103 = vmatprep.subr.mxu0 0.0
  %104 = vmatpush1.msra.mxu0 0.0
  %105 = vmatprep.subr.mxu0 0.0
  %106 = vmatpush1.msra.mxu0 0.0
  %107 = vmatprep.subr.mxu0 0.0
  %108 = vmatpush1.msra.mxu0 0.0
  %109 = vmatprep.subr.mxu0 0.0
  %110 = vmatpush1.msra.mxu0 0.0
  %111 = vmatprep.subr.mxu0 0.0
  %112 = vmatpush1.msra.mxu0 0.0
  %113 = vmatprep.subr.mxu0 0.0
  %114 = vmatpush1.msra.mxu0 0.0
  %115 = vmatprep.subr.mxu0 0.0
  %116 = vmatpush1.msra.mxu0 0.0
  %117 = vmatprep.subr.mxu0 0.0
  %118 = vmatpush1.msra.mxu0 0.0
  %119 = vmatprep.subr.mxu0 0.0
  %120 = vmatpush1.msra.mxu0 0.0
  %121 = vmatprep.subr.mxu0 0.0
  %122 = vmatpush1.msra.mxu0 0.0
  %123 = vmatprep.subr.mxu0 0.0
  %124 = vmatpush1.msra.mxu0 0.0
  %125 = vmatprep.subr.mxu0 0.0
  %126 = vmatpush1.msra.mxu0 0.0
  %127 = vmatprep.subr.mxu0 0.0
  %128 = vmatpush1.msra.mxu0 0.0
  %129 = vmatprep.subr.mxu0 0.0
  %130 = vmatpush1.msra.mxu0 0.0
  %131 = vmatprep.subr.mxu0 0.0
  %132 = vmatpush1.msra.mxu0 0.0
  %133 = vmatprep.subr.mxu0 0.0
  %134 = vmatpush1.msra.mxu0 0.0
  %135 = vmatprep.subr.mxu0 0.0
  %136 = vmatpush1.msra.mxu0 0.0
  %137 = vmatprep.subr.mxu0 0.0
  %138 = vmatpush1.msra.mxu0 0.0
  %139 = vmatprep.subr.mxu0 0.0
  %140 = vmatpush1.msra.mxu0 0.0
  %141 = vmatprep.subr.mxu0 0.0
  %142 = vmatpush1.msra.mxu0 0.0
  %143 = vmatprep.subr.mxu0 0.0
  %144 = vmatpush1.msra.mxu0 0.0
  %145 = vmatprep.subr.mxu0 0.0
  %146 = vmatpush1.msra.mxu0 0.0
  %147 = vmatprep.subr.mxu0 0.0
  %148 = vmatpush1.msra.mxu0 0.0
  %149 = vmatprep.subr.mxu0 0.0
  %150 = vmatpush1.msra.mxu0 0.0
  %151 = vmatprep.mubr.f32.mxu0 0.0
  %152 = vmatmul.mubr.f32.gmra.mrb[0].mxu0 %v64
  %v153 = vpop.f32.mrb[0].mxu0
  %v154 = vadd.f32 %v50, %v153
  %v155 = vpop.f32.mrb[0].mxu0
  %v156 = vadd.f32 %v54, %v155
  %157 = vmatprep.mubr.f32.mxu0 0.0
  %158 = vmatmul.mubr.f32.gmra.mrb[0].mxu0 %v67
  %v159 = vpop.f32.mrb[0].mxu0
  %v160 = vadd.f32 %v50, %v159
  %v161 = vpop.f32.mrb[0].mxu0
  %v162 = vadd.f32 %v54, %v161
  %163 = vmatprep.mubr.f32.mxu0 0.0
  %164 = vmatmul.mubr.f32.gmra.mrb[0].mxu0 %v70
  %v165 = vpop.f32.mrb[0].mxu0
  %v166 = vadd.f32 %v50, %v165
  %v167 = vpop.f32.mrb[0].mxu0
  %v168 = vadd.f32 %v54, %v167
  %169 = vmatprep.mubr.f32.mxu0 0.0
  %170 = vmatmul.mubr.f32.gmra.mrb[0].mxu0 %v73
  %v171 = vpop.f32.mrb[0].mxu0
  %v172 = vadd.f32 %v50, %v171
  %v173 = vpop.f32.mrb[0].mxu0
  %v174 = vadd.f32 %v54, %v173
  %175 = vmatprep.mubr.f32.mxu0 0.0
  %176 = vmatmul.mubr.f32.gmra.mrb[0].mxu0 %v76
  %v177 = vpop.f32.mrb[0].mxu0
  %v178 = vadd.f32 %v50, %v177
  %v179 = vpop.f32.mrb[0].mxu0
  %v180 = vadd.f32 %v54, %v179
  %181 = vmatprep.mubr.f32.mxu0 0.0
  %182 = vmatmul.mubr.f32.gmra.mrb[0].mxu0 %v79
  %v183 = vpop.f32.mrb[0].mxu0
  %v184 = vadd.f32 %v50, %v183
  %v185 = vpop.f32.mrb[0].mxu0
  %v186 = vadd.f32 %v54, %v185
  %187 = vmatprep.mubr.f32.mxu0 0.0
  %188 = vmatmul.mubr.f32.gmra.mrb[0].mxu0 %v82
  %v189 = vpop.f32.mrb[0].mxu0
  %v190 = vadd.f32 %v50, %v189
  %v191 = vpop.f32.mrb[0].mxu0
  %v192 = vadd.f32 %v54, %v191
  %193 = vmatprep.mubr.f32.mxu0 0.0
  %194 = vmatmul.mubr.f32.gmra.mrb[0].mxu0 %v85
  %v195 = vpop.f32.mrb[0].mxu0
  %v196 = vadd.f32 %v50, %v195
  %v197 = vpop.f32.mrb[0].mxu0
  %v198 = vadd.f32 %v54, %v197
  %199 = vdwg.mxu0
  %200 = vmatprep.subr.mxu0 0.0
  %201 = vmatpush1.msra.mxu0 %v35
  %202 = vmatprep.subr.mxu0 0.0
  %203 = vmatpush1.msra.mxu0 %v38
  %204 = vmatprep.subr.mxu0 0.0
  %205 = vmatpush1.msra.mxu0 %v41
  %206 = vmatprep.subr.mxu0 0.0
  %207 = vmatpush1.msra.mxu0 %v44
  %208 = vmatprep.subr.mxu0 0.0
  %209 = vmatpush1.msra.mxu0 0.0
  %210 = vmatprep.subr.mxu0 0.0
  %211 = vmatpush1.msra.mxu0 0.0
  %212 = vmatprep.subr.mxu0 0.0
  %213 = vmatpush1.msra.mxu0 0.0
  %214 = vmatprep.subr.mxu0 0.0
  %215 = vmatpush1.msra.mxu0 0.0
  %216 = vmatprep.subr.mxu0 0.0
  %217 = vmatpush1.msra.mxu0 0.0
  %218 = vmatprep.subr.mxu0 0.0
  %219 = vmatpush1.msra.mxu0 0.0
  %220 = vmatprep.subr.mxu0 0.0
  %221 = vmatpush1.msra.mxu0 0.0
  %222 = vmatprep.subr.mxu0 0.0
  %223 = vmatpush1.msra.mxu0 0.0
  %224 = vmatprep.subr.mxu0 0.0
  %225 = vmatpush1.msra.mxu0 0.0
  %226 = vmatprep.subr.mxu0 0.0
  %227 = vmatpush1.msra.mxu0 0.0
  %228 = vmatprep.subr.mxu0 0.0
  %229 = vmatpush1.msra.mxu0 0.0
  %230 = vmatprep.subr.mxu0 0.0
  %231 = vmatpush1.msra.mxu0 0.0
  %232 = vmatprep.subr.mxu0 0.0
  %233 = vmatpush1.msra.mxu0 0.0
  %234 = vmatprep.subr.mxu0 0.0
  %235 = vmatpush1.msra.mxu0 0.0
  %236 = vmatprep.subr.mxu0 0.0
  %237 = vmatpush1.msra.mxu0 0.0
  %238 = vmatprep.subr.mxu0 0.0
  %239 = vmatpush1.msra.mxu0 0.0
  %240 = vmatprep.subr.mxu0 0.0
  %241 = vmatpush1.msra.mxu0 0.0
  %242 = vmatprep.subr.mxu0 0.0
  %243 = vmatpush1.msra.mxu0 0.0
  %244 = vmatprep.subr.mxu0 0.0
  %245 = vmatpush1.msra.mxu0 0.0
  %246 = vmatprep.subr.mxu0 0.0
  %247 = vmatpush1.msra.mxu0 0.0
  %248 = vmatprep.subr.mxu0 0.0
  %249 = vmatpush1.msra.mxu0 0.0
  %250 = vmatprep.subr.mxu0 0.0
  %251 = vmatpush1.msra.mxu0 0.0
  %252 = vmatprep.subr.mxu0 0.0
  %253 = vmatpush1.msra.mxu0 0.0
  %254 = vmatprep.subr.mxu0 0.0
  %255 = vmatpush1.msra.mxu0 0.0
  %256 = vmatprep.subr.mxu0 0.0
  %257 = vmatpush1.msra.mxu0 0.0
  %258 = vmatprep.subr.mxu0 0.0
  %259 = vmatpush1.msra.mxu0 0.0
  %260 = vmatprep.subr.mxu0 0.0
  %261 = vmatpush1.msra.mxu0 0.0
  %262 = vmatprep.subr.mxu0 0.0
  %263 = vmatpush1.msra.mxu0 0.0
  %264 = vmatprep.mubr.f32.mxu0 0.0
  %265 = vmatmul.mubr.f32.gmra.mrb[0].mxu0 %v64
  %v266 = vpop.f32.mrb[0].mxu0
  %v267 = vadd.f32 %v58, %v266
  %v268 = vpop.f32.mrb[0].mxu0
  %269 = vmatprep.mubr.f32.mxu0 0.0
  %270 = vmatmul.mubr.f32.gmra.mrb[0].mxu0 %v67
  %v271 = vpop.f32.mrb[0].mxu0
  %v272 = vadd.f32 %v58, %v271
  %v273 = vpop.f32.mrb[0].mxu0
  %274 = vmatprep.mubr.f32.mxu0 0.0
  %275 = vmatmul.mubr.f32.gmra.mrb[0].mxu0 %v70
  %v276 = vpop.f32.mrb[0].mxu0
  %v277 = vadd.f32 %v58, %v276
  %v278 = vpop.f32.mrb[0].mxu0
  %279 = vmatprep.mubr.f32.mxu0 0.0
  %280 = vmatmul.mubr.f32.gmra.mrb[0].mxu0 %v73
  %v281 = vpop.f32.mrb[0].mxu0
  %v282 = vadd.f32 %v58, %v281
  %v283 = vpop.f32.mrb[0].mxu0
  %284 = vmatprep.mubr.f32.mxu0 0.0
  %285 = vmatmul.mubr.f32.gmra.mrb[0].mxu0 %v76
  %v286 = vpop.f32.mrb[0].mxu0
  %v287 = vadd.f32 %v58, %v286
  %v288 = vpop.f32.mrb[0].mxu0
  %289 = vmatprep.mubr.f32.mxu0 0.0
  %290 = vmatmul.mubr.f32.gmra.mrb[0].mxu0 %v79
  %v291 = vpop.f32.mrb[0].mxu0
  %v292 = vadd.f32 %v58, %v291
  %v293 = vpop.f32.mrb[0].mxu0
  %294 = vmatprep.mubr.f32.mxu0 0.0
  %295 = vmatmul.mubr.f32.gmra.mrb[0].mxu0 %v82
  %v296 = vpop.f32.mrb[0].mxu0
  %v297 = vadd.f32 %v58, %v296
  %v298 = vpop.f32.mrb[0].mxu0
  %299 = vmatprep.mubr.f32.mxu0 0.0
  %300 = vmatmul.mubr.f32.gmra.mrb[0].mxu0 %v85
  %v301 = vpop.f32.mrb[0].mxu0
  %v302 = vadd.f32 %v58, %v301
  %v303 = vpop.f32.mrb[0].mxu0
  %304 = vdwg.mxu0
  %305 = vst [vmem:[#allocation2] sm:$0xff] %v154
  %306 = vst [vmem:[#allocation2 + $0x8] sm:$0xff] %v156
  %307 = vst [vmem:[#allocation2 + $0x10] sm:$0xff] %v267
  %308 = vst [vmem:[#allocation2 + $0x18] sm:$0xff] %v160
  %309 = vst [vmem:[#allocation2 + $0x20] sm:$0xff] %v162
  %310 = vst [vmem:[#allocation2 + $0x28] sm:$0xff] %v272
  %311 = vst [vmem:[#allocation2 + $0x30] sm:$0xff] %v166
  %312 = vst [vmem:[#allocation2 + $0x38] sm:$0xff] %v168
  %313 = vst [vmem:[#allocation2 + $0x40] sm:$0xff] %v277
  %314 = vst [vmem:[#allocation2 + $0x48] sm:$0xff] %v172
  %315 = vst [vmem:[#allocation2 + $0x50] sm:$0xff] %v174
  %316 = vst [vmem:[#allocation2 + $0x58] sm:$0xff] %v282
  %317 = vst [vmem:[#allocation2 + $0x60] sm:$0xff] %v178
  %318 = vst [vmem:[#allocation2 + $0x68] sm:$0xff] %v180
  %319 = vst [vmem:[#allocation2 + $0x70] sm:$0xff] %v287
  %320 = vst [vmem:[#allocation2 + $0x78] sm:$0xff] %v184
  %321 = vst [vmem:[#allocation2 + $0x80] sm:$0xff] %v186
  %322 = vst [vmem:[#allocation2 + $0x88] sm:$0xff] %v292
  %323 = vst [vmem:[#allocation2 + $0x90] sm:$0xff] %v190
  %324 = vst [vmem:[#allocation2 + $0x98] sm:$0xff] %v192
  %325 = vst [vmem:[#allocation2 + $0xa0] sm:$0xff] %v297
  %326 = vst [vmem:[#allocation2 + $0xa8] sm:$0xff] %v196
  %327 = vst [vmem:[#allocation2 + $0xb0] sm:$0xff] %v198
  %328 = vst [vmem:[#allocation2 + $0xb8] sm:$0xff] %v302
  %v329 = vld [vmem:[#allocation2] sm:$0xff]
  %v330 = vld [vmem:[#allocation2 + $0x8] sm:$0xff]
  %v331 = vld [vmem:[#allocation2 + $0x10] sm:$0xff]
  %v332 = vld [vmem:[%s4] sm:$0xff]
  %v333 = vld [vmem:[%s4 + $0x8] sm:$0xff]
  %v334 = vld [vmem:[%s4 + $0x10] sm:$0xff]
  %v335 = vld [vmem:[%s4 + $0x18] sm:$0xff]
  %v336 = vld [vmem:[%s4 + $0x20] sm:$0xff]
  %v337 = vld [vmem:[%s4 + $0x28] sm:$0xff]
  %v338 = vld [vmem:[%s4 + $0x30] sm:$0xff]
  %v339 = vld [vmem:[%s4 + $0x38] sm:$0xff]
  %v340 = vld [vmem:[%s4 + $0x40] sm:$0xff]
  %v341 = vld [vmem:[%s4 + $0x48] sm:$0xff]
  %v342 = vld [vmem:[%s4 + $0x50] sm:$0xff]
  %v343 = vld [vmem:[%s4 + $0x58] sm:$0xff]
  %v344 = vld [vmem:[%s4 + $0x60] sm:$0xff]
  %v345 = vld [vmem:[%s4 + $0x68] sm:$0xff]
  %v346 = vld [vmem:[%s4 + $0x70] sm:$0xff]
  %v347 = vld [vmem:[%s4 + $0x78] sm:$0xff]
  %v348 = vld [vmem:[%s4 + $0x80] sm:$0xff]
  %v349 = vld [vmem:[%s4 + $0x88] sm:$0xff]
  %v350 = vld [vmem:[%s4 + $0x90] sm:$0xff]
  %v351 = vld [vmem:[%s4 + $0x98] sm:$0xff]
  %v352 = vld [vmem:[%s4 + $0xa0] sm:$0xff]
  %v353 = vld [vmem:[%s4 + $0xa8] sm:$0xff]
  %v354 = vld [vmem:[%s4 + $0xb0] sm:$0xff]
  %v355 = vld [vmem:[%s4 + $0xb8] sm:$0xff]
  %v356 = vld [vmem:[%s4 + $0xc0] sm:$0xff]
  %v357 = vld [vmem:[%s4 + $0xc8] sm:$0xff]
  %v358 = vld [vmem:[%s4 + $0xd0] sm:$0xff]
  %v359 = vld [vmem:[%s4 + $0xd8] sm:$0xff]
  %v360 = vld [vmem:[%s4 + $0xe0] sm:$0xff]
  %v361 = vld [vmem:[%s4 + $0xe8] sm:$0xff]
  %v362 = vld [vmem:[%s4 + $0xf0] sm:$0xff]
  %v363 = vld [vmem:[%s4 + $0xf8] sm:$0xff]
  %v364 = vld [vmem:[%s4 + $0x100] sm:$0xff]
  %v365 = vld [vmem:[%s4 + $0x108] sm:$0xff]
  %v366 = vld [vmem:[%s4 + $0x110] sm:$0xff]
  %v367 = vld [vmem:[%s4 + $0x118] sm:$0xff]
  %v368 = vld [vmem:[%s4 + $0x120] sm:$0xff]
  %v369 = vld [vmem:[%s4 + $0x128] sm:$0xff]
  %v370 = vld [vmem:[%s4 + $0x130] sm:$0xff]
  %v371 = vld [vmem:[%s4 + $0x138] sm:$0xff]
  %v372 = vld [vmem:[%s4 + $0x140] sm:$0xff]
  %v373 = vld [vmem:[%s4 + $0x148] sm:$0xff]
  %v374 = vld [vmem:[%s4 + $0x150] sm:$0xff]
  %v375 = vld [vmem:[%s4 + $0x158] sm:$0xff]
  %v376 = vld [vmem:[%s4 + $0x160] sm:$0xff]
  %v377 = vld [vmem:[%s4 + $0x168] sm:$0xff]
  %v378 = vld [vmem:[%s4 + $0x170] sm:$0xff]
  %v379 = vld [vmem:[%s4 + $0x178] sm:$0xff]
  %v380 = vld [vmem:[%s5] sm:$0x7]
  %v382 = vlaneseq
  %v383 = vshrl.u32 %v382, 7
  %v384 = vsub.s32 0, %v383
  %v385 = vrot.slane %v380, %v384
  %v386 = vlaneseq
  %v387 = vshrl.u32 %v386, 7
  %v388 = vsub.s32 1, %v387
  %v389 = vrot.slane %v380, %v388
  %v390 = vlaneseq
  %v391 = vshrl.u32 %v390, 7
  %v392 = vsub.s32 2, %v391
  %v393 = vrot.slane %v380, %v392
  %397 = vmatprep.subr.mxu0 %v333
  %398 = vmatpush1.msra.mxu0 %v332
  %399 = vmatprep.subr.mxu0 %v336
  %400 = vmatpush1.msra.mxu0 %v335
  %401 = vmatprep.subr.mxu0 %v339
  %402 = vmatpush1.msra.mxu0 %v338
  %403 = vmatprep.subr.mxu0 %v342
  %404 = vmatpush1.msra.mxu0 %v341
  %405 = vmatprep.subr.mxu0 %v345
  %406 = vmatpush1.msra.mxu0 %v344
  %407 = vmatprep.subr.mxu0 %v348
  %408 = vmatpush1.msra.mxu0 %v347
  %409 = vmatprep.subr.mxu0 %v351
  %410 = vmatpush1.msra.mxu0 %v350
  %411 = vmatprep.subr.mxu0 %v354
  %412 = vmatpush1.msra.mxu0 %v353
  %413 = vmatprep.subr.mxu0 %v357
  %414 = vmatpush1.msra.mxu0 %v356
  %415 = vmatprep.subr.mxu0 %v360
  %416 = vmatpush1.msra.mxu0 %v359
  %417 = vmatprep.subr.mxu0 %v363
  %418 = vmatpush1.msra.mxu0 %v362
  %419 = vmatprep.subr.mxu0 %v366
  %420 = vmatpush1.msra.mxu0 %v365
  %421 = vmatprep.subr.mxu0 %v369
  %422 = vmatpush1.msra.mxu0 %v368
  %423 = vmatprep.subr.mxu0 %v372
  %424 = vmatpush1.msra.mxu0 %v371
  %425 = vmatprep.subr.mxu0 %v375
  %426 = vmatpush1.msra.mxu0 %v374
  %427 = vmatprep.subr.mxu0 %v378
  %428 = vmatpush1.msra.mxu0 %v377
  %429 = vmatprep.subr.mxu0 0.0
  %430 = vmatpush1.msra.mxu0 0.0
  %431 = vmatprep.subr.mxu0 0.0
  %432 = vmatpush1.msra.mxu0 0.0
  %433 = vmatprep.subr.mxu0 0.0
  %434 = vmatpush1.msra.mxu0 0.0
  %435 = vmatprep.subr.mxu0 0.0
  %436 = vmatpush1.msra.mxu0 0.0
  %437 = vmatprep.subr.mxu0 0.0
  %438 = vmatpush1.msra.mxu0 0.0
  %439 = vmatprep.subr.mxu0 0.0
  %440 = vmatpush1.msra.mxu0 0.0
  %441 = vmatprep.subr.mxu0 0.0
  %442 = vmatpush1.msra.mxu0 0.0
  %443 = vmatprep.subr.mxu0 0.0
  %444 = vmatpush1.msra.mxu0 0.0
  %445 = vmatprep.subr.mxu0 0.0
  %446 = vmatpush1.msra.mxu0 0.0
  %447 = vmatprep.subr.mxu0 0.0
  %448 = vmatpush1.msra.mxu0 0.0
  %449 = vmatprep.subr.mxu0 0.0
  %450 = vmatpush1.msra.mxu0 0.0
  %451 = vmatprep.subr.mxu0 0.0
  %452 = vmatpush1.msra.mxu0 0.0
  %453 = vmatprep.subr.mxu0 0.0
  %454 = vmatpush1.msra.mxu0 0.0
  %455 = vmatprep.subr.mxu0 0.0
  %456 = vmatpush1.msra.mxu0 0.0
  %457 = vmatprep.subr.mxu0 0.0
  %458 = vmatpush1.msra.mxu0 0.0
  %459 = vmatprep.subr.mxu0 0.0
  %460 = vmatpush1.msra.mxu0 0.0
  %461 = vmatprep.mubr.f32.mxu0 0.0
  %462 = vmatmul.mubr.f32.gmra.mrb[0].mxu0 0.0
  %v463 = vpop.f32.mrb[0].mxu0
  %v464 = vadd.f32 %v385, %v463
  %v465 = vpop.f32.mrb[0].mxu0
  %v466 = vadd.f32 %v389, %v465
  %467 = vdwg.mxu0
  %468 = vmatprep.subr.mxu0 0.0
  %469 = vmatpush1.msra.mxu0 %v334
  %470 = vmatprep.subr.mxu0 0.0
  %471 = vmatpush1.msra.mxu0 %v337
  %472 = vmatprep.subr.mxu0 0.0
  %473 = vmatpush1.msra.mxu0 %v340
  %474 = vmatprep.subr.mxu0 0.0
  %475 = vmatpush1.msra.mxu0 %v343
  %476 = vmatprep.subr.mxu0 0.0
  %477 = vmatpush1.msra.mxu0 %v346
  %478 = vmatprep.subr.mxu0 0.0
  %479 = vmatpush1.msra.mxu0 %v349
  %480 = vmatprep.subr.mxu0 0.0
  %481 = vmatpush1.msra.mxu0 %v352
  %482 = vmatprep.subr.mxu0 0.0
  %483 = vmatpush1.msra.mxu0 %v355
  %484 = vmatprep.subr.mxu0 0.0
  %485 = vmatpush1.msra.mxu0 %v358
  %486 = vmatprep.subr.mxu0 0.0
  %487 = vmatpush1.msra.mxu0 %v361
  %488 = vmatprep.subr.mxu0 0.0
  %489 = vmatpush1.msra.mxu0 %v364
  %490 = vmatprep.subr.mxu0 0.0
  %491 = vmatpush1.msra.mxu0 %v367
  %492 = vmatprep.subr.mxu0 0.0
  %493 = vmatpush1.msra.mxu0 %v370
  %494 = vmatprep.subr.mxu0 0.0
  %495 = vmatpush1.msra.mxu0 %v373
  %496 = vmatprep.subr.mxu0 0.0
  %497 = vmatpush1.msra.mxu0 %v376
  %498 = vmatprep.subr.mxu0 0.0
  %499 = vmatpush1.msra.mxu0 %v379
  %500 = vmatprep.subr.mxu0 0.0
  %501 = vmatpush1.msra.mxu0 0.0
  %502 = vmatprep.subr.mxu0 0.0
  %503 = vmatpush1.msra.mxu0 0.0
  %504 = vmatprep.subr.mxu0 0.0
  %505 = vmatpush1.msra.mxu0 0.0
  %506 = vmatprep.subr.mxu0 0.0
  %507 = vmatpush1.msra.mxu0 0.0
  %508 = vmatprep.subr.mxu0 0.0
  %509 = vmatpush1.msra.mxu0 0.0
  %510 = vmatprep.subr.mxu0 0.0
  %511 = vmatpush1.msra.mxu0 0.0
  %512 = vmatprep.subr.mxu0 0.0
  %513 = vmatpush1.msra.mxu0 0.0
  %514 = vmatprep.subr.mxu0 0.0
  %515 = vmatpush1.msra.mxu0 0.0
  %516 = vmatprep.subr.mxu0 0.0
  %517 = vmatpush1.msra.mxu0 0.0
  %518 = vmatprep.subr.mxu0 0.0
  %519 = vmatpush1.msra.mxu0 0.0
  %520 = vmatprep.subr.mxu0 0.0
  %521 = vmatpush1.msra.mxu0 0.0
  %522 = vmatprep.subr.mxu0 0.0
  %523 = vmatpush1.msra.mxu0 0.0
  %524 = vmatprep.subr.mxu0 0.0
  %525 = vmatpush1.msra.mxu0 0.0
  %526 = vmatprep.subr.mxu0 0.0
  %527 = vmatpush1.msra.mxu0 0.0
  %528 = vmatprep.subr.mxu0 0.0
  %529 = vmatpush1.msra.mxu0 0.0
  %530 = vmatprep.subr.mxu0 0.0
  %531 = vmatpush1.msra.mxu0 0.0
  %532 = vmatprep.mubr.f32.mxu0 0.0
  %533 = vmatmul.mubr.f32.gmra.mrb[0].mxu0 0.0
  %v534 = vpop.f32.mrb[0].mxu0
  %v535 = vadd.f32 %v393, %v534
  %v536 = vpop.f32.mrb[0].mxu0
  %537 = vdwg.mxu0
  %v538 = vadd.f32 %v329, %v464
  %v539 = vxor.u32 %v538, 2147483648
  %v540 = vmul.f32 %v539, 1.442695
  %v541 = vpow.pop %v540
  %v542 = vadd.f32 %v541, 1.0
  %v543 = vrcp.pop %v542
  %v544 = vmul.f32 1.0, %v543
  %v545 = vadd.f32 %v330, %v466
  %v546 = vxor.u32 %v545, 2147483648
  %v547 = vmul.f32 %v546, 1.442695
  %v548 = vpow.pop %v547
  %v549 = vadd.f32 %v548, 1.0
  %v550 = vrcp.pop %v549
  %v551 = vmul.f32 1.0, %v550
  %v552 = vmul.f32 %v544, %v535
  %v553 = vadd.f32 %v331, %v552
  %v554 = vtanh.pop %v553
  %v555 = vsub.f32 1.0, %v551
  %v556 = vmul.f32 %v555, %v554
  %v557 = vmul.f32 %v551, 0.0
  %v558 = vadd.f32 %v556, %v557
  %v559 = vld [vmem:[%s1] sm:$0xff]
  %561 = vset.pattern.permute.xlu0 0
  %562 = vperm.xlu0 %561, %v559
  %v563 = vpop.permute.xlu0 %562
  %v565 = vmul.f32 %v563, %v558
  %v566 = vsub.f32 1.0, %v559
  %568 = vset.pattern.permute.xlu0 0
  %569 = vperm.xlu0 %568, %v566
  %v570 = vpop.permute.xlu0 %569
  %v572 = vmul.f32 %v570, 0.0
  %v573 = vadd.f32 %v565, %v572
  %574 = vst [vmem:[%s6] sm:$0xff] %v565
  %s575 = scalar_lea.vmem [#allocation2], 24
  %v576 = vld [vmem:[%s575] sm:$0xff]
  %v577 = vld [vmem:[%s575 + $0x8] sm:$0xff]
  %v578 = vld [vmem:[%s575 + $0x10] sm:$0xff]
  %v579 = vld [vmem:[%s4] sm:$0xff]
  %v580 = vld [vmem:[%s4 + $0x8] sm:$0xff]
  %v581 = vld [vmem:[%s4 + $0x10] sm:$0xff]
  %v582 = vld [vmem:[%s4 + $0x18] sm:$0xff]
  %v583 = vld [vmem:[%s4 + $0x20] sm:$0xff]
  %v584 = vld [vmem:[%s4 + $0x28] sm:$0xff]
  %v585 = vld [vmem:[%s4 + $0x30] sm:$0xff]
  %v586 = vld [vmem:[%s4 + $0x38] sm:$0xff]
  %v587 = vld [vmem:[%s4 + $0x40] sm:$0xff]
  %v588 = vld [vmem:[%s4 + $0x48] sm:$0xff]
  %v589 = vld [vmem:[%s4 + $0x50] sm:$0xff]
  %v590 = vld [vmem:[%s4 + $0x58] sm:$0xff]
  %v591 = vld [vmem:[%s4 + $0x60] sm:$0xff]
  %v592 = vld [vmem:[%s4 + $0x68] sm:$0xff]
  %v593 = vld [vmem:[%s4 + $0x70] sm:$0xff]
  %v594 = vld [vmem:[%s4 + $0x78] sm:$0xff]
  %v595 = vld [vmem:[%s4 + $0x80] sm:$0xff]
  %v596 = vld [vmem:[%s4 + $0x88] sm:$0xff]
  %v597 = vld [vmem:[%s4 + $0x90] sm:$0xff]
  %v598 = vld [vmem:[%s4 + $0x98] sm:$0xff]
  %v599 = vld [vmem:[%s4 + $0xa0] sm:$0xff]
  %v600 = vld [vmem:[%s4 + $0xa8] sm:$0xff]
  %v601 = vld [vmem:[%s4 + $0xb0] sm:$0xff]
  %v602 = vld [vmem:[%s4 + $0xb8] sm:$0xff]
  %v603 = vld [vmem:[%s4 + $0xc0] sm:$0xff]
  %v604 = vld [vmem:[%s4 + $0xc8] sm:$0xff]
  %v605 = vld [vmem:[%s4 + $0xd0] sm:$0xff]
  %v606 = vld [vmem:[%s4 + $0xd8] sm:$0xff]
  %v607 = vld [vmem:[%s4 + $0xe0] sm:$0xff]
  %v608 = vld [vmem:[%s4 + $0xe8] sm:$0xff]
  %v609 = vld [vmem:[%s4 + $0xf0] sm:$0xff]
  %v610 = vld [vmem:[%s4 + $0xf8] sm:$0xff]
  %v611 = vld [vmem:[%s4 + $0x100] sm:$0xff]
  %v612 = vld [vmem:[%s4 + $0x108] sm:$0xff]
  %v613 = vld [vmem:[%s4 + $0x110] sm:$0xff]
  %v614 = vld [vmem:[%s4 + $0x118] sm:$0xff]
  %v615 = vld [vmem:[%s4 + $0x120] sm:$0xff]
  %v616 = vld [vmem:[%s4 + $0x128] sm:$0xff]
  %v617 = vld [vmem:[%s4 + $0x130] sm:$0xff]
  %v618 = vld [vmem:[%s4 + $0x138] sm:$0xff]
  %v619 = vld [vmem:[%s4 + $0x140] sm:$0xff]
  %v620 = vld [vmem:[%s4 + $0x148] sm:$0xff]
  %v621 = vld [vmem:[%s4 + $0x150] sm:$0xff]
  %v622 = vld [vmem:[%s4 + $0x158] sm:$0xff]
  %v623 = vld [vmem:[%s4 + $0x160] sm:$0xff]
  %v624 = vld [vmem:[%s4 + $0x168] sm:$0xff]
  %v625 = vld [vmem:[%s4 + $0x170] sm:$0xff]
  %v626 = vld [vmem:[%s4 + $0x178] sm:$0xff]
  %v627 = vld [vmem:[%s5] sm:$0x7]
  %v629 = vlaneseq
  %v630 = vshrl.u32 %v629, 7
  %v631 = vsub.s32 0, %v630
  %v632 = vrot.slane %v627, %v631
  %v633 = vlaneseq
  %v634 = vshrl.u32 %v633, 7
  %v635 = vsub.s32 1, %v634
  %v636 = vrot.slane %v627, %v635
  %v637 = vlaneseq
  %v638 = vshrl.u32 %v637, 7
  %v639 = vsub.s32 2, %v638
  %v640 = vrot.slane %v627, %v639
  %644 = vmatprep.subr.mxu0 %v580
  %645 = vmatpush1.msra.mxu0 %v579
  %646 = vmatprep.subr.mxu0 %v583
  %647 = vmatpush1.msra.mxu0 %v582
  %648 = vmatprep.subr.mxu0 %v586
  %649 = vmatpush1.msra.mxu0 %v585
  %650 = vmatprep.subr.mxu0 %v589
  %651 = vmatpush1.msra.mxu0 %v588
  %652 = vmatprep.subr.mxu0 %v592
  %653 = vmatpush1.msra.mxu0 %v591
  %654 = vmatprep.subr.mxu0 %v595
  %655 = vmatpush1.msra.mxu0 %v594
  %656 = vmatprep.subr.mxu0 %v598
  %657 = vmatpush1.msra.mxu0 %v597
  %658 = vmatprep.subr.mxu0 %v601
  %659 = vmatpush1.msra.mxu0 %v600
  %660 = vmatprep.subr.mxu0 %v604
  %661 = vmatpush1.msra.mxu0 %v603
  %662 = vmatprep.subr.mxu0 %v607
  %663 = vmatpush1.msra.mxu0 %v606
  %664 = vmatprep.subr.mxu0 %v610
  %665 = vmatpush1.msra.mxu0 %v609
  %666 = vmatprep.subr.mxu0 %v613
  %667 = vmatpush1.msra.mxu0 %v612
  %668 = vmatprep.subr.mxu0 %v616
  %669 = vmatpush1.msra.mxu0 %v615
  %670 = vmatprep.subr.mxu0 %v619
  %671 = vmatpush1.msra.mxu0 %v618
  %672 = vmatprep.subr.mxu0 %v622
  %673 = vmatpush1.msra.mxu0 %v621
  %674 = vmatprep.subr.mxu0 %v625
  %675 = vmatpush1.msra.mxu0 %v624
  %676 = vmatprep.subr.mxu0 0.0
  %677 = vmatpush1.msra.mxu0 0.0
  %678 = vmatprep.subr.mxu0 0.0
  %679 = vmatpush1.msra.mxu0 0.0
  %680 = vmatprep.subr.mxu0 0.0
  %681 = vmatpush1.msra.mxu0 0.0
  %682 = vmatprep.subr.mxu0 0.0
  %683 = vmatpush1.msra.mxu0 0.0
  %684 = vmatprep.subr.mxu0 0.0
  %685 = vmatpush1.msra.mxu0 0.0
  %686 = vmatprep.subr.mxu0 0.0
  %687 = vmatpush1.msra.mxu0 0.0
  %688 = vmatprep.subr.mxu0 0.0
  %689 = vmatpush1.msra.mxu0 0.0
  %690 = vmatprep.subr.mxu0 0.0
  %691 = vmatpush1.msra.mxu0 0.0
  %692 = vmatprep.subr.mxu0 0.0
  %693 = vmatpush1.msra.mxu0 0.0
  %694 = vmatprep.subr.mxu0 0.0
  %695 = vmatpush1.msra.mxu0 0.0
  %696 = vmatprep.subr.mxu0 0.0
  %697 = vmatpush1.msra.mxu0 0.0
  %698 = vmatprep.subr.mxu0 0.0
  %699 = vmatpush1.msra.mxu0 0.0
  %700 = vmatprep.subr.mxu0 0.0
  %701 = vmatpush1.msra.mxu0 0.0
  %702 = vmatprep.subr.mxu0 0.0
  %703 = vmatpush1.msra.mxu0 0.0
  %704 = vmatprep.subr.mxu0 0.0
  %705 = vmatpush1.msra.mxu0 0.0
  %706 = vmatprep.subr.mxu0 0.0
  %707 = vmatpush1.msra.mxu0 0.0
  %708 = vmatprep.mubr.f32.mxu0 0.0
  %709 = vmatmul.mubr.f32.gmra.mrb[0].mxu0 %v573
  %v710 = vpop.f32.mrb[0].mxu0
  %v711 = vadd.f32 %v632, %v710
  %v712 = vpop.f32.mrb[0].mxu0
  %v713 = vadd.f32 %v636, %v712
  %714 = vdwg.mxu0
  %715 = vmatprep.subr.mxu0 0.0
  %716 = vmatpush1.msra.mxu0 %v581
  %717 = vmatprep.subr.mxu0 0.0
  %718 = vmatpush1.msra.mxu0 %v584
  %719 = vmatprep.subr.mxu0 0.0
  %720 = vmatpush1.msra.mxu0 %v587
  %721 = vmatprep.subr.mxu0 0.0
  %722 = vmatpush1.msra.mxu0 %v590
  %723 = vmatprep.subr.mxu0 0.0
  %724 = vmatpush1.msra.mxu0 %v593
  %725 = vmatprep.subr.mxu0 0.0
  %726 = vmatpush1.msra.mxu0 %v596
  %727 = vmatprep.subr.mxu0 0.0
  %728 = vmatpush1.msra.mxu0 %v599
  %729 = vmatprep.subr.mxu0 0.0
  %730 = vmatpush1.msra.mxu0 %v602
  %731 = vmatprep.subr.mxu0 0.0
  %732 = vmatpush1.msra.mxu0 %v605
  %733 = vmatprep.subr.mxu0 0.0
  %734 = vmatpush1.msra.mxu0 %v608
  %735 = vmatprep.subr.mxu0 0.0
  %736 = vmatpush1.msra.mxu0 %v611
  %737 = vmatprep.subr.mxu0 0.0
  %738 = vmatpush1.msra.mxu0 %v614
  %739 = vmatprep.subr.mxu0 0.0
  %740 = vmatpush1.msra.mxu0 %v617
  %741 = vmatprep.subr.mxu0 0.0
  %742 = vmatpush1.msra.mxu0 %v620
  %743 = vmatprep.subr.mxu0 0.0
  %744 = vmatpush1.msra.mxu0 %v623
  %745 = vmatprep.subr.mxu0 0.0
  %746 = vmatpush1.msra.mxu0 %v626
  %747 = vmatprep.subr.mxu0 0.0
  %748 = vmatpush1.msra.mxu0 0.0
  %749 = vmatprep.subr.mxu0 0.0
  %750 = vmatpush1.msra.mxu0 0.0
  %751 = vmatprep.subr.mxu0 0.0
  %752 = vmatpush1.msra.mxu0 0.0
  %753 = vmatprep.subr.mxu0 0.0
  %754 = vmatpush1.msra.mxu0 0.0
  %755 = vmatprep.subr.mxu0 0.0
  %756 = vmatpush1.msra.mxu0 0.0
  %757 = vmatprep.subr.mxu0 0.0
  %758 = vmatpush1.msra.mxu0 0.0
  %759 = vmatprep.subr.mxu0 0.0
  %760 = vmatpush1.msra.mxu0 0.0
  %761 = vmatprep.subr.mxu0 0.0
  %762 = vmatpush1.msra.mxu0 0.0
  %763 = vmatprep.subr.mxu0 0.0
  %764 = vmatpush1.msra.mxu0 0.0
  %765 = vmatprep.subr.mxu0 0.0
  %766 = vmatpush1.msra.mxu0 0.0
  %767 = vmatprep.subr.mxu0 0.0
  %768 = vmatpush1.msra.mxu0 0.0
  %769 = vmatprep.subr.mxu0 0.0
  %770 = vmatpush1.msra.mxu0 0.0
  %771 = vmatprep.subr.mxu0 0.0
  %772 = vmatpush1.msra.mxu0 0.0
  %773 = vmatprep.subr.mxu0 0.0
  %774 = vmatpush1.msra.mxu0 0.0
  %775 = vmatprep.subr.mxu0 0.0
  %776 = vmatpush1.msra.mxu0 0.0
  %777 = vmatprep.subr.mxu0 0.0
  %778 = vmatpush1.msra.mxu0 0.0
  %779 = vmatprep.mubr.f32.mxu0 0.0
  %780 = vmatmul.mubr.f32.gmra.mrb[0].mxu0 %v573
  %v781 = vpop.f32.mrb[0].mxu0
  %v782 = vadd.f32 %v640, %v781
  %v783 = vpop.f32.mrb[0].mxu0
  %784 = vdwg.mxu0
  %v785 = vadd.f32 %v576, %v711
  %v786 = vxor.u32 %v785, 2147483648
  %v787 = vmul.f32 %v786, 1.442695
  %v788 = vpow.pop %v787
  %v789 = vadd.f32 %v788, 1.0
  %v790 = vrcp.pop %v789
  %v791 = vmul.f32 1.0, %v790
  %v792 = vadd.f32 %v577, %v713
  %v793 = vxor.u32 %v792, 2147483648
  %v794 = vmul.f32 %v793, 1.442695
  %v795 = vpow.pop %v794
  %v796 = vadd.f32 %v795, 1.0
  %v797 = vrcp.pop %v796
  %v798 = vmul.f32 1.0, %v797
  %v799 = vmul.f32 %v791, %v782
  %v800 = vadd.f32 %v578, %v799
  %v801 = vtanh.pop %v800
  %v802 = vsub.f32 1.0, %v798
  %v803 = vmul.f32 %v802, %v801
  %v804 = vmul.f32 %v798, %v573
  %v805 = vadd.f32 %v803, %v804
  %s806 = scalar_lea.vmem %s1, 8
  %v807 = vld [vmem:[%s806] sm:$0xff]
  %809 = vset.pattern.permute.xlu0 0
  %810 = vperm.xlu0 %809, %v807
  %v811 = vpop.permute.xlu0 %810
  %v813 = vmul.f32 %v811, %v805
  %v814 = vsub.f32 1.0, %v807
  %816 = vset.pattern.permute.xlu0 0
  %817 = vperm.xlu0 %816, %v814
  %v818 = vpop.permute.xlu0 %817
  %v820 = vmul.f32 %v818, %v573
  %v821 = vadd.f32 %v813, %v820
  %s822 = scalar_lea.vmem %s6, 8
  %823 = vst [vmem:[%s822] sm:$0xff] %v813
  %s824 = scalar_lea.vmem [#allocation2], 48
  %v825 = vld [vmem:[%s824] sm:$0xff]
  %v826 = vld [vmem:[%s824 + $0x8] sm:$0xff]
  %v827 = vld [vmem:[%s824 + $0x10] sm:$0xff]
  %v828 = vld [vmem:[%s4] sm:$0xff]
  %v829 = vld [vmem:[%s4 + $0x8] sm:$0xff]
  %v830 = vld [vmem:[%s4 + $0x10] sm:$0xff]
  %v831 = vld [vmem:[%s4 + $0x18] sm:$0xff]
  %v832 = vld [vmem:[%s4 + $0x20] sm:$0xff]
  %v833 = vld [vmem:[%s4 + $0x28] sm:$0xff]
  %v834 = vld [vmem:[%s4 + $0x30] sm:$0xff]
  %v835 = vld [vmem:[%s4 + $0x38] sm:$0xff]
  %v836 = vld [vmem:[%s4 + $0x40] sm:$0xff]
  %v837 = vld [vmem:[%s4 + $0x48] sm:$0xff]
  %v838 = vld [vmem:[%s4 + $0x50] sm:$0xff]
  %v839 = vld [vmem:[%s4 + $0x58] sm:$0xff]
  %v840 = vld [vmem:[%s4 + $0x60] sm:$0xff]
  %v841 = vld [vmem:[%s4 + $0x68] sm:$0xff]
  %v842 = vld [vmem:[%s4 + $0x70] sm:$0xff]
  %v843 = vld [vmem:[%s4 + $0x78] sm:$0xff]
  %v844 = vld [vmem:[%s4 + $0x80] sm:$0xff]
  %v845 = vld [vmem:[%s4 + $0x88] sm:$0xff]
  %v846 = vld [vmem:[%s4 + $0x90] sm:$0xff]
  %v847 = vld [vmem:[%s4 + $0x98] sm:$0xff]
  %v848 = vld [vmem:[%s4 + $0xa0] sm:$0xff]
  %v849 = vld [vmem:[%s4 + $0xa8] sm:$0xff]
  %v850 = vld [vmem:[%s4 + $0xb0] sm:$0xff]
  %v851 = vld [vmem:[%s4 + $0xb8] sm:$0xff]
  %v852 = vld [vmem:[%s4 + $0xc0] sm:$0xff]
  %v853 = vld [vmem:[%s4 + $0xc8] sm:$0xff]
  %v854 = vld [vmem:[%s4 + $0xd0] sm:$0xff]
  %v855 = vld [vmem:[%s4 + $0xd8] sm:$0xff]
  %v856 = vld [vmem:[%s4 + $0xe0] sm:$0xff]
  %v857 = vld [vmem:[%s4 + $0xe8] sm:$0xff]
  %v858 = vld [vmem:[%s4 + $0xf0] sm:$0xff]
  %v859 = vld [vmem:[%s4 + $0xf8] sm:$0xff]
  %v860 = vld [vmem:[%s4 + $0x100] sm:$0xff]
  %v861 = vld [vmem:[%s4 + $0x108] sm:$0xff]
  %v862 = vld [vmem:[%s4 + $0x110] sm:$0xff]
  %v863 = vld [vmem:[%s4 + $0x118] sm:$0xff]
  %v864 = vld [vmem:[%s4 + $0x120] sm:$0xff]
  %v865 = vld [vmem:[%s4 + $0x128] sm:$0xff]
  %v866 = vld [vmem:[%s4 + $0x130] sm:$0xff]
  %v867 = vld [vmem:[%s4 + $0x138] sm:$0xff]
  %v868 = vld [vmem:[%s4 + $0x140] sm:$0xff]
  %v869 = vld [vmem:[%s4 + $0x148] sm:$0xff]
  %v870 = vld [vmem:[%s4 + $0x150] sm:$0xff]
  %v871 = vld [vmem:[%s4 + $0x158] sm:$0xff]
  %v872 = vld [vmem:[%s4 + $0x160] sm:$0xff]
  %v873 = vld [vmem:[%s4 + $0x168] sm:$0xff]
  %v874 = vld [vmem:[%s4 + $0x170] sm:$0xff]
  %v875 = vld [vmem:[%s4 + $0x178] sm:$0xff]
  %v876 = vld [vmem:[%s5] sm:$0x7]
  %v878 = vlaneseq
  %v879 = vshrl.u32 %v878, 7
  %v880 = vsub.s32 0, %v879
  %v881 = vrot.slane %v876, %v880
  %v882 = vlaneseq
  %v883 = vshrl.u32 %v882, 7
  %v884 = vsub.s32 1, %v883
  %v885 = vrot.slane %v876, %v884
  %v886 = vlaneseq
  %v887 = vshrl.u32 %v886, 7
  %v888 = vsub.s32 2, %v887
  %v889 = vrot.slane %v876, %v888
  %893 = vmatprep.subr.mxu0 %v829
  %894 = vmatpush1.msra.mxu0 %v828
  %895 = vmatprep.subr.mxu0 %v832
  %896 = vmatpush1.msra.mxu0 %v831
  %897 = vmatprep.subr.mxu0 %v835
  %898 = vmatpush1.msra.mxu0 %v834
  %899 = vmatprep.subr.mxu0 %v838
  %900 = vmatpush1.msra.mxu0 %v837
  %901 = vmatprep.subr.mxu0 %v841
  %902 = vmatpush1.msra.mxu0 %v840
  %903 = vmatprep.subr.mxu0 %v844
  %904 = vmatpush1.msra.mxu0 %v843
  %905 = vmatprep.subr.mxu0 %v847
  %906 = vmatpush1.msra.mxu0 %v846
  %907 = vmatprep.subr.mxu0 %v850
  %908 = vmatpush1.msra.mxu0 %v849
  %909 = vmatprep.subr.mxu0 %v853
  %910 = vmatpush1.msra.mxu0 %v852
  %911 = vmatprep.subr.mxu0 %v856
  %912 = vmatpush1.msra.mxu0 %v855
  %913 = vmatprep.subr.mxu0 %v859
  %914 = vmatpush1.msra.mxu0 %v858
  %915 = vmatprep.subr.mxu0 %v862
  %916 = vmatpush1.msra.mxu0 %v861
  %917 = vmatprep.subr.mxu0 %v865
  %918 = vmatpush1.msra.mxu0 %v864
  %919 = vmatprep.subr.mxu0 %v868
  %920 = vmatpush1.msra.mxu0 %v867
  %921 = vmatprep.subr.mxu0 %v871
  %922 = vmatpush1.msra.mxu0 %v870
  %923 = vmatprep.subr.mxu0 %v874
  %924 = vmatpush1.msra.mxu0 %v873
  %925 = vmatprep.subr.mxu0 0.0
  %926 = vmatpush1.msra.mxu0 0.0
  %927 = vmatprep.subr.mxu0 0.0
  %928 = vmatpush1.msra.mxu0 0.0
  %929 = vmatprep.subr.mxu0 0.0
  %930 = vmatpush1.msra.mxu0 0.0
  %931 = vmatprep.subr.mxu0 0.0
  %932 = vmatpush1.msra.mxu0 0.0
  %933 = vmatprep.subr.mxu0 0.0
  %934 = vmatpush1.msra.mxu0 0.0
  %935 = vmatprep.subr.mxu0 0.0
  %936 = vmatpush1.msra.mxu0 0.0
  %937 = vmatprep.subr.mxu0 0.0
  %938 = vmatpush1.msra.mxu0 0.0
  %939 = vmatprep.subr.mxu0 0.0
  %940 = vmatpush1.msra.mxu0 0.0
  %941 = vmatprep.subr.mxu0 0.0
  %942 = vmatpush1.msra.mxu0 0.0
  %943 = vmatprep.subr.mxu0 0.0
  %944 = vmatpush1.msra.mxu0 0.0
  %945 = vmatprep.subr.mxu0 0.0
  %946 = vmatpush1.msra.mxu0 0.0
  %947 = vmatprep.subr.mxu0 0.0
  %948 = vmatpush1.msra.mxu0 0.0
  %949 = vmatprep.subr.mxu0 0.0
  %950 = vmatpush1.msra.mxu0 0.0
  %951 = vmatprep.subr.mxu0 0.0
  %952 = vmatpush1.msra.mxu0 0.0
  %953 = vmatprep.subr.mxu0 0.0
  %954 = vmatpush1.msra.mxu0 0.0
  %955 = vmatprep.subr.mxu0 0.0
  %956 = vmatpush1.msra.mxu0 0.0
  %957 = vmatprep.mubr.f32.mxu0 0.0
  %958 = vmatmul.mubr.f32.gmra.mrb[0].mxu0 %v821
  %v959 = vpop.f32.mrb[0].mxu0
  %v960 = vadd.f32 %v881, %v959
  %v961 = vpop.f32.mrb[0].mxu0
  %v962 = vadd.f32 %v885, %v961
  %963 = vdwg.mxu0
  %964 = vmatprep.subr.mxu0 0.0
  %965 = vmatpush1.msra.mxu0 %v830
  %966 = vmatprep.subr.mxu0 0.0
  %967 = vmatpush1.msra.mxu0 %v833
  %968 = vmatprep.subr.mxu0 0.0
  %969 = vmatpush1.msra.mxu0 %v836
  %970 = vmatprep.subr.mxu0 0.0
  %971 = vmatpush1.msra.mxu0 %v839
  %972 = vmatprep.subr.mxu0 0.0
  %973 = vmatpush1.msra.mxu0 %v842
  %974 = vmatprep.subr.mxu0 0.0
  %975 = vmatpush1.msra.mxu0 %v845
  %976 = vmatprep.subr.mxu0 0.0
  %977 = vmatpush1.msra.mxu0 %v848
  %978 = vmatprep.subr.mxu0 0.0
  %979 = vmatpush1.msra.mxu0 %v851
  %980 = vmatprep.subr.mxu0 0.0
  %981 = vmatpush1.msra.mxu0 %v854
  %982 = vmatprep.subr.mxu0 0.0
  %983 = vmatpush1.msra.mxu0 %v857
  %984 = vmatprep.subr.mxu0 0.0
  %985 = vmatpush1.msra.mxu0 %v860
  %986 = vmatprep.subr.mxu0 0.0
  %987 = vmatpush1.msra.mxu0 %v863
  %988 = vmatprep.subr.mxu0 0.0
  %989 = vmatpush1.msra.mxu0 %v866
  %990 = vmatprep.subr.mxu0 0.0
  %991 = vmatpush1.msra.mxu0 %v869
  %992 = vmatprep.subr.mxu0 0.0
  %993 = vmatpush1.msra.mxu0 %v872
  %994 = vmatprep.subr.mxu0 0.0
  %995 = vmatpush1.msra.mxu0 %v875
  %996 = vmatprep.subr.mxu0 0.0
  %997 = vmatpush1.msra.mxu0 0.0
  %998 = vmatprep.subr.mxu0 0.0
  %999 = vmatpush1.msra.mxu0 0.0
  %1000 = vmatprep.subr.mxu0 0.0
  %1001 = vmatpush1.msra.mxu0 0.0
  %1002 = vmatprep.subr.mxu0 0.0
  %1003 = vmatpush1.msra.mxu0 0.0
  %1004 = vmatprep.subr.mxu0 0.0
  %1005 = vmatpush1.msra.mxu0 0.0
  %1006 = vmatprep.subr.mxu0 0.0
  %1007 = vmatpush1.msra.mxu0 0.0
  %1008 = vmatprep.subr.mxu0 0.0
  %1009 = vmatpush1.msra.mxu0 0.0
  %1010 = vmatprep.subr.mxu0 0.0
  %1011 = vmatpush1.msra.mxu0 0.0
  %1012 = vmatprep.subr.mxu0 0.0
  %1013 = vmatpush1.msra.mxu0 0.0
  %1014 = vmatprep.subr.mxu0 0.0
  %1015 = vmatpush1.msra.mxu0 0.0
  %1016 = vmatprep.subr.mxu0 0.0
  %1017 = vmatpush1.msra.mxu0 0.0
  %1018 = vmatprep.subr.mxu0 0.0
  %1019 = vmatpush1.msra.mxu0 0.0
  %1020 = vmatprep.subr.mxu0 0.0
  %1021 = vmatpush1.msra.mxu0 0.0
  %1022 = vmatprep.subr.mxu0 0.0
  %1023 = vmatpush1.msra.mxu0 0.0
  %1024 = vmatprep.subr.mxu0 0.0
  %1025 = vmatpush1.msra.mxu0 0.0
  %1026 = vmatprep.subr.mxu0 0.0
  %1027 = vmatpush1.msra.mxu0 0.0
  %1028 = vmatprep.mubr.f32.mxu0 0.0
  %1029 = vmatmul.mubr.f32.gmra.mrb[0].mxu0 %v821
  %v1030 = vpop.f32.mrb[0].mxu0
  %v1031 = vadd.f32 %v889, %v1030
  %v1032 = vpop.f32.mrb[0].mxu0
  %1033 = vdwg.mxu0
  %v1034 = vadd.f32 %v825, %v960
  %v1035 = vxor.u32 %v1034, 2147483648
  %v1036 = vmul.f32 %v1035, 1.442695
  %v1037 = vpow.pop %v1036
  %v1038 = vadd.f32 %v1037, 1.0
  %v1039 = vrcp.pop %v1038
  %v1040 = vmul.f32 1.0, %v1039
  %v1041 = vadd.f32 %v826, %v962
  %v1042 = vxor.u32 %v1041, 2147483648
  %v1043 = vmul.f32 %v1042, 1.442695
  %v1044 = vpow.pop %v1043
  %v1045 = vadd.f32 %v1044, 1.0
  %v1046 = vrcp.pop %v1045
  %v1047 = vmul.f32 1.0, %v1046
  %v1048 = vmul.f32 %v1040, %v1031
  %v1049 = vadd.f32 %v827, %v1048
  %v1050 = vtanh.pop %v1049
  %v1051 = vsub.f32 1.0, %v1047
  %v1052 = vmul.f32 %v1051, %v1050
  %v1053 = vmul.f32 %v1047, %v821
  %v1054 = vadd.f32 %v1052, %v1053
  %s1055 = scalar_lea.vmem %s1, 16
  %v1056 = vld [vmem:[%s1055] sm:$0xff]
  %1058 = vset.pattern.permute.xlu0 0
  %1059 = vperm.xlu0 %1058, %v1056
  %v1060 = vpop.permute.xlu0 %1059
  %v1062 = vmul.f32 %v1060, %v1054
  %v1063 = vsub.f32 1.0, %v1056
  %1065 = vset.pattern.permute.xlu0 0
  %1066 = vperm.xlu0 %1065, %v1063
  %v1067 = vpop.permute.xlu0 %1066
  %v1069 = vmul.f32 %v1067, %v821
  %v1070 = vadd.f32 %v1062, %v1069
  %s1071 = scalar_lea.vmem %s6, 16
  %1072 = vst [vmem:[%s1071] sm:$0xff] %v1062
  %s1073 = scalar_lea.vmem [#allocation2], 72
  %v1074 = vld [vmem:[%s1073] sm:$0xff]
  %v1075 = vld [vmem:[%s1073 + $0x8] sm:$0xff]
  %v1076 = vld [vmem:[%s1073 + $0x10] sm:$0xff]
  %v1077 = vld [vmem:[%s4] sm:$0xff]
  %v1078 = vld [vmem:[%s4 + $0x8] sm:$0xff]
  %v1079 = vld [vmem:[%s4 + $0x10] sm:$0xff]
  %v1080 = vld [vmem:[%s4 + $0x18] sm:$0xff]
  %v1081 = vld [vmem:[%s4 + $0x20] sm:$0xff]
  %v1082 = vld [vmem:[%s4 + $0x28] sm:$0xff]
  %v1083 = vld [vmem:[%s4 + $0x30] sm:$0xff]
  %v1084 = vld [vmem:[%s4 + $0x38] sm:$0xff]
  %v1085 = vld [vmem:[%s4 + $0x40] sm:$0xff]
  %v1086 = vld [vmem:[%s4 + $0x48] sm:$0xff]
  %v1087 = vld [vmem:[%s4 + $0x50] sm:$0xff]
  %v1088 = vld [vmem:[%s4 + $0x58] sm:$0xff]
  %v1089 = vld [vmem:[%s4 + $0x60] sm:$0xff]
  %v1090 = vld [vmem:[%s4 + $0x68] sm:$0xff]
  %v1091 = vld [vmem:[%s4 + $0x70] sm:$0xff]
  %v1092 = vld [vmem:[%s4 + $0x78] sm:$0xff]
  %v1093 = vld [vmem:[%s4 + $0x80] sm:$0xff]
  %v1094 = vld [vmem:[%s4 + $0x88] sm:$0xff]
  %v1095 = vld [vmem:[%s4 + $0x90] sm:$0xff]
  %v1096 = vld [vmem:[%s4 + $0x98] sm:$0xff]
  %v1097 = vld [vmem:[%s4 + $0xa0] sm:$0xff]
  %v1098 = vld [vmem:[%s4 + $0xa8] sm:$0xff]
  %v1099 = vld [vmem:[%s4 + $0xb0] sm:$0xff]
  %v1100 = vld [vmem:[%s4 + $0xb8] sm:$0xff]
  %v1101 = vld [vmem:[%s4 + $0xc0] sm:$0xff]
  %v1102 = vld [vmem:[%s4 + $0xc8] sm:$0xff]
  %v1103 = vld [vmem:[%s4 + $0xd0] sm:$0xff]
  %v1104 = vld [vmem:[%s4 + $0xd8] sm:$0xff]
  %v1105 = vld [vmem:[%s4 + $0xe0] sm:$0xff]
  %v1106 = vld [vmem:[%s4 + $0xe8] sm:$0xff]
  %v1107 = vld [vmem:[%s4 + $0xf0] sm:$0xff]
  %v1108 = vld [vmem:[%s4 + $0xf8] sm:$0xff]
  %v1109 = vld [vmem:[%s4 + $0x100] sm:$0xff]
  %v1110 = vld [vmem:[%s4 + $0x108] sm:$0xff]
  %v1111 = vld [vmem:[%s4 + $0x110] sm:$0xff]
  %v1112 = vld [vmem:[%s4 + $0x118] sm:$0xff]
  %v1113 = vld [vmem:[%s4 + $0x120] sm:$0xff]
  %v1114 = vld [vmem:[%s4 + $0x128] sm:$0xff]
  %v1115 = vld [vmem:[%s4 + $0x130] sm:$0xff]
  %v1116 = vld [vmem:[%s4 + $0x138] sm:$0xff]
  %v1117 = vld [vmem:[%s4 + $0x140] sm:$0xff]
  %v1118 = vld [vmem:[%s4 + $0x148] sm:$0xff]
  %v1119 = vld [vmem:[%s4 + $0x150] sm:$0xff]
  %v1120 = vld [vmem:[%s4 + $0x158] sm:$0xff]
  %v1121 = vld [vmem:[%s4 + $0x160] sm:$0xff]
  %v1122 = vld [vmem:[%s4 + $0x168] sm:$0xff]
  %v1123 = vld [vmem:[%s4 + $0x170] sm:$0xff]
  %v1124 = vld [vmem:[%s4 + $0x178] sm:$0xff]
  %v1125 = vld [vmem:[%s5] sm:$0x7]
  %v1127 = vlaneseq
  %v1128 = vshrl.u32 %v1127, 7
  %v1129 = vsub.s32 0, %v1128
  %v1130 = vrot.slane %v1125, %v1129
  %v1131 = vlaneseq
  %v1132 = vshrl.u32 %v1131, 7
  %v1133 = vsub.s32 1, %v1132
  %v1134 = vrot.slane %v1125, %v1133
  %v1135 = vlaneseq
  %v1136 = vshrl.u32 %v1135, 7
  %v1137 = vsub.s32 2, %v1136
  %v1138 = vrot.slane %v1125, %v1137
  %1142 = vmatprep.subr.mxu0 %v1078
  %1143 = vmatpush1.msra.mxu0 %v1077
  %1144 = vmatprep.subr.mxu0 %v1081
  %1145 = vmatpush1.msra.mxu0 %v1080
  %1146 = vmatprep.subr.mxu0 %v1084
  %1147 = vmatpush1.msra.mxu0 %v1083
  %1148 = vmatprep.subr.mxu0 %v1087
  %1149 = vmatpush1.msra.mxu0 %v1086
  %1150 = vmatprep.subr.mxu0 %v1090
  %1151 = vmatpush1.msra.mxu0 %v1089
  %1152 = vmatprep.subr.mxu0 %v1093
  %1153 = vmatpush1.msra.mxu0 %v1092
  %1154 = vmatprep.subr.mxu0 %v1096
  %1155 = vmatpush1.msra.mxu0 %v1095
  %1156 = vmatprep.subr.mxu0 %v1099
  %1157 = vmatpush1.msra.mxu0 %v1098
  %1158 = vmatprep.subr.mxu0 %v1102
  %1159 = vmatpush1.msra.mxu0 %v1101
  %1160 = vmatprep.subr.mxu0 %v1105
  %1161 = vmatpush1.msra.mxu0 %v1104
  %1162 = vmatprep.subr.mxu0 %v1108
  %1163 = vmatpush1.msra.mxu0 %v1107
  %1164 = vmatprep.subr.mxu0 %v1111
  %1165 = vmatpush1.msra.mxu0 %v1110
  %1166 = vmatprep.subr.mxu0 %v1114
  %1167 = vmatpush1.msra.mxu0 %v1113
  %1168 = vmatprep.subr.mxu0 %v1117
  %1169 = vmatpush1.msra.mxu0 %v1116
  %1170 = vmatprep.subr.mxu0 %v1120
  %1171 = vmatpush1.msra.mxu0 %v1119
  %1172 = vmatprep.subr.mxu0 %v1123
  %1173 = vmatpush1.msra.mxu0 %v1122
  %1174 = vmatprep.subr.mxu0 0.0
  %1175 = vmatpush1.msra.mxu0 0.0
  %1176 = vmatprep.subr.mxu0 0.0
  %1177 = vmatpush1.msra.mxu0 0.0
  %1178 = vmatprep.subr.mxu0 0.0
  %1179 = vmatpush1.msra.mxu0 0.0
  %1180 = vmatprep.subr.mxu0 0.0
  %1181 = vmatpush1.msra.mxu0 0.0
  %1182 = vmatprep.subr.mxu0 0.0
  %1183 = vmatpush1.msra.mxu0 0.0
  %1184 = vmatprep.subr.mxu0 0.0
  %1185 = vmatpush1.msra.mxu0 0.0
  %1186 = vmatprep.subr.mxu0 0.0
  %1187 = vmatpush1.msra.mxu0 0.0
  %1188 = vmatprep.subr.mxu0 0.0
  %1189 = vmatpush1.msra.mxu0 0.0
  %1190 = vmatprep.subr.mxu0 0.0
  %1191 = vmatpush1.msra.mxu0 0.0
  %1192 = vmatprep.subr.mxu0 0.0
  %1193 = vmatpush1.msra.mxu0 0.0
  %1194 = vmatprep.subr.mxu0 0.0
  %1195 = vmatpush1.msra.mxu0 0.0
  %1196 = vmatprep.subr.mxu0 0.0
  %1197 = vmatpush1.msra.mxu0 0.0
  %1198 = vmatprep.subr.mxu0 0.0
  %1199 = vmatpush1.msra.mxu0 0.0
  %1200 = vmatprep.subr.mxu0 0.0
  %1201 = vmatpush1.msra.mxu0 0.0
  %1202 = vmatprep.subr.mxu0 0.0
  %1203 = vmatpush1.msra.mxu0 0.0
  %1204 = vmatprep.subr.mxu0 0.0
  %1205 = vmatpush1.msra.mxu0 0.0
  %1206 = vmatprep.mubr.f32.mxu0 0.0
  %1207 = vmatmul.mubr.f32.gmra.mrb[0].mxu0 %v1070
  %v1208 = vpop.f32.mrb[0].mxu0
  %v1209 = vadd.f32 %v1130, %v1208
  %v1210 = vpop.f32.mrb[0].mxu0
  %v1211 = vadd.f32 %v1134, %v1210
  %1212 = vdwg.mxu0
  %1213 = vmatprep.subr.mxu0 0.0
  %1214 = vmatpush1.msra.mxu0 %v1079
  %1215 = vmatprep.subr.mxu0 0.0
  %1216 = vmatpush1.msra.mxu0 %v1082
  %1217 = vmatprep.subr.mxu0 0.0
  %1218 = vmatpush1.msra.mxu0 %v1085
  %1219 = vmatprep.subr.mxu0 0.0
  %1220 = vmatpush1.msra.mxu0 %v1088
  %1221 = vmatprep.subr.mxu0 0.0
  %1222 = vmatpush1.msra.mxu0 %v1091
  %1223 = vmatprep.subr.mxu0 0.0
  %1224 = vmatpush1.msra.mxu0 %v1094
  %1225 = vmatprep.subr.mxu0 0.0
  %1226 = vmatpush1.msra.mxu0 %v1097
  %1227 = vmatprep.subr.mxu0 0.0
  %1228 = vmatpush1.msra.mxu0 %v1100
  %1229 = vmatprep.subr.mxu0 0.0
  %1230 = vmatpush1.msra.mxu0 %v1103
  %1231 = vmatprep.subr.mxu0 0.0
  %1232 = vmatpush1.msra.mxu0 %v1106
  %1233 = vmatprep.subr.mxu0 0.0
  %1234 = vmatpush1.msra.mxu0 %v1109
  %1235 = vmatprep.subr.mxu0 0.0
  %1236 = vmatpush1.msra.mxu0 %v1112
  %1237 = vmatprep.subr.mxu0 0.0
  %1238 = vmatpush1.msra.mxu0 %v1115
  %1239 = vmatprep.subr.mxu0 0.0
  %1240 = vmatpush1.msra.mxu0 %v1118
  %1241 = vmatprep.subr.mxu0 0.0
  %1242 = vmatpush1.msra.mxu0 %v1121
  %1243 = vmatprep.subr.mxu0 0.0
  %1244 = vmatpush1.msra.mxu0 %v1124
  %1245 = vmatprep.subr.mxu0 0.0
  %1246 = vmatpush1.msra.mxu0 0.0
  %1247 = vmatprep.subr.mxu0 0.0
  %1248 = vmatpush1.msra.mxu0 0.0
  %1249 = vmatprep.subr.mxu0 0.0
  %1250 = vmatpush1.msra.mxu0 0.0
  %1251 = vmatprep.subr.mxu0 0.0
  %1252 = vmatpush1.msra.mxu0 0.0
  %1253 = vmatprep.subr.mxu0 0.0
  %1254 = vmatpush1.msra.mxu0 0.0
  %1255 = vmatprep.subr.mxu0 0.0
  %1256 = vmatpush1.msra.mxu0 0.0
  %1257 = vmatprep.subr.mxu0 0.0
  %1258 = vmatpush1.msra.mxu0 0.0
  %1259 = vmatprep.subr.mxu0 0.0
  %1260 = vmatpush1.msra.mxu0 0.0
  %1261 = vmatprep.subr.mxu0 0.0
  %1262 = vmatpush1.msra.mxu0 0.0
  %1263 = vmatprep.subr.mxu0 0.0
  %1264 = vmatpush1.msra.mxu0 0.0
  %1265 = vmatprep.subr.mxu0 0.0
  %1266 = vmatpush1.msra.mxu0 0.0
  %1267 = vmatprep.subr.mxu0 0.0
  %1268 = vmatpush1.msra.mxu0 0.0
  %1269 = vmatprep.subr.mxu0 0.0
  %1270 = vmatpush1.msra.mxu0 0.0
  %1271 = vmatprep.subr.mxu0 0.0
  %1272 = vmatpush1.msra.mxu0 0.0
  %1273 = vmatprep.subr.mxu0 0.0
  %1274 = vmatpush1.msra.mxu0 0.0
  %1275 = vmatprep.subr.mxu0 0.0
  %1276 = vmatpush1.msra.mxu0 0.0
  %1277 = vmatprep.mubr.f32.mxu0 0.0
  %1278 = vmatmul.mubr.f32.gmra.mrb[0].mxu0 %v1070
  %v1279 = vpop.f32.mrb[0].mxu0
  %v1280 = vadd.f32 %v1138, %v1279
  %v1281 = vpop.f32.mrb[0].mxu0
  %1282 = vdwg.mxu0
  %v1283 = vadd.f32 %v1074, %v1209
  %v1284 = vxor.u32 %v1283, 2147483648
  %v1285 = vmul.f32 %v1284, 1.442695
  %v1286 = vpow.pop %v1285
  %v1287 = vadd.f32 %v1286, 1.0
  %v1288 = vrcp.pop %v1287
  %v1289 = vmul.f32 1.0, %v1288
  %v1290 = vadd.f32 %v1075, %v1211
  %v1291 = vxor.u32 %v1290, 2147483648
  %v1292 = vmul.f32 %v1291, 1.442695
  %v1293 = vpow.pop %v1292
  %v1294 = vadd.f32 %v1293, 1.0
  %v1295 = vrcp.pop %v1294
  %v1296 = vmul.f32 1.0, %v1295
  %v1297 = vmul.f32 %v1289, %v1280
  %v1298 = vadd.f32 %v1076, %v1297
  %v1299 = vtanh.pop %v1298
  %v1300 = vsub.f32 1.0, %v1296
  %v1301 = vmul.f32 %v1300, %v1299
  %v1302 = vmul.f32 %v1296, %v1070
  %v1303 = vadd.f32 %v1301, %v1302
  %s1304 = scalar_lea.vmem %s1, 24
  %v1305 = vld [vmem:[%s1304] sm:$0xff]
  %1307 = vset.pattern.permute.xlu0 0
  %1308 = vperm.xlu0 %1307, %v1305
  %v1309 = vpop.permute.xlu0 %1308
  %v1311 = vmul.f32 %v1309, %v1303
  %v1312 = vsub.f32 1.0, %v1305
  %1314 = vset.pattern.permute.xlu0 0
  %1315 = vperm.xlu0 %1314, %v1312
  %v1316 = vpop.permute.xlu0 %1315
  %v1318 = vmul.f32 %v1316, %v1070
  %v1319 = vadd.f32 %v1311, %v1318
  %s1320 = scalar_lea.vmem %s6, 24
  %1321 = vst [vmem:[%s1320] sm:$0xff] %v1311
  %s1322 = scalar_lea.vmem [#allocation2], 96
  %v1323 = vld [vmem:[%s1322] sm:$0xff]
  %v1324 = vld [vmem:[%s1322 + $0x8] sm:$0xff]
  %v1325 = vld [vmem:[%s1322 + $0x10] sm:$0xff]
  %v1326 = vld [vmem:[%s4] sm:$0xff]
  %v1327 = vld [vmem:[%s4 + $0x8] sm:$0xff]
  %v1328 = vld [vmem:[%s4 + $0x10] sm:$0xff]
  %v1329 = vld [vmem:[%s4 + $0x18] sm:$0xff]
  %v1330 = vld [vmem:[%s4 + $0x20] sm:$0xff]
  %v1331 = vld [vmem:[%s4 + $0x28] sm:$0xff]
  %v1332 = vld [vmem:[%s4 + $0x30] sm:$0xff]
  %v1333 = vld [vmem:[%s4 + $0x38] sm:$0xff]
  %v1334 = vld [vmem:[%s4 + $0x40] sm:$0xff]
  %v1335 = vld [vmem:[%s4 + $0x48] sm:$0xff]
  %v1336 = vld [vmem:[%s4 + $0x50] sm:$0xff]
  %v1337 = vld [vmem:[%s4 + $0x58] sm:$0xff]
  %v1338 = vld [vmem:[%s4 + $0x60] sm:$0xff]
  %v1339 = vld [vmem:[%s4 + $0x68] sm:$0xff]
  %v1340 = vld [vmem:[%s4 + $0x70] sm:$0xff]
  %v1341 = vld [vmem:[%s4 + $0x78] sm:$0xff]
  %v1342 = vld [vmem:[%s4 + $0x80] sm:$0xff]
  %v1343 = vld [vmem:[%s4 + $0x88] sm:$0xff]
  %v1344 = vld [vmem:[%s4 + $0x90] sm:$0xff]
  %v1345 = vld [vmem:[%s4 + $0x98] sm:$0xff]
  %v1346 = vld [vmem:[%s4 + $0xa0] sm:$0xff]
  %v1347 = vld [vmem:[%s4 + $0xa8] sm:$0xff]
  %v1348 = vld [vmem:[%s4 + $0xb0] sm:$0xff]
  %v1349 = vld [vmem:[%s4 + $0xb8] sm:$0xff]
  %v1350 = vld [vmem:[%s4 + $0xc0] sm:$0xff]
  %v1351 = vld [vmem:[%s4 + $0xc8] sm:$0xff]
  %v1352 = vld [vmem:[%s4 + $0xd0] sm:$0xff]
  %v1353 = vld [vmem:[%s4 + $0xd8] sm:$0xff]
  %v1354 = vld [vmem:[%s4 + $0xe0] sm:$0xff]
  %v1355 = vld [vmem:[%s4 + $0xe8] sm:$0xff]
  %v1356 = vld [vmem:[%s4 + $0xf0] sm:$0xff]
  %v1357 = vld [vmem:[%s4 + $0xf8] sm:$0xff]
  %v1358 = vld [vmem:[%s4 + $0x100] sm:$0xff]
  %v1359 = vld [vmem:[%s4 + $0x108] sm:$0xff]
  %v1360 = vld [vmem:[%s4 + $0x110] sm:$0xff]
  %v1361 = vld [vmem:[%s4 + $0x118] sm:$0xff]
  %v1362 = vld [vmem:[%s4 + $0x120] sm:$0xff]
  %v1363 = vld [vmem:[%s4 + $0x128] sm:$0xff]
  %v1364 = vld [vmem:[%s4 + $0x130] sm:$0xff]
  %v1365 = vld [vmem:[%s4 + $0x138] sm:$0xff]
  %v1366 = vld [vmem:[%s4 + $0x140] sm:$0xff]
  %v1367 = vld [vmem:[%s4 + $0x148] sm:$0xff]
  %v1368 = vld [vmem:[%s4 + $0x150] sm:$0xff]
  %v1369 = vld [vmem:[%s4 + $0x158] sm:$0xff]
  %v1370 = vld [vmem:[%s4 + $0x160] sm:$0xff]
  %v1371 = vld [vmem:[%s4 + $0x168] sm:$0xff]
  %v1372 = vld [vmem:[%s4 + $0x170] sm:$0xff]
  %v1373 = vld [vmem:[%s4 + $0x178] sm:$0xff]
  %v1374 = vld [vmem:[%s5] sm:$0x7]
  %v1376 = vlaneseq
  %v1377 = vshrl.u32 %v1376, 7
  %v1378 = vsub.s32 0, %v1377
  %v1379 = vrot.slane %v1374, %v1378
  %v1380 = vlaneseq
  %v1381 = vshrl.u32 %v1380, 7
  %v1382 = vsub.s32 1, %v1381
  %v1383 = vrot.slane %v1374, %v1382
  %v1384 = vlaneseq
  %v1385 = vshrl.u32 %v1384, 7
  %v1386 = vsub.s32 2, %v1385
  %v1387 = vrot.slane %v1374, %v1386
  %1391 = vmatprep.subr.mxu0 %v1327
  %1392 = vmatpush1.msra.mxu0 %v1326
  %1393 = vmatprep.subr.mxu0 %v1330
  %1394 = vmatpush1.msra.mxu0 %v1329
  %1395 = vmatprep.subr.mxu0 %v1333
  %1396 = vmatpush1.msra.mxu0 %v1332
  %1397 = vmatprep.subr.mxu0 %v1336
  %1398 = vmatpush1.msra.mxu0 %v1335
  %1399 = vmatprep.subr.mxu0 %v1339
  %1400 = vmatpush1.msra.mxu0 %v1338
  %1401 = vmatprep.subr.mxu0 %v1342
  %1402 = vmatpush1.msra.mxu0 %v1341
  %1403 = vmatprep.subr.mxu0 %v1345
  %1404 = vmatpush1.msra.mxu0 %v1344
  %1405 = vmatprep.subr.mxu0 %v1348
  %1406 = vmatpush1.msra.mxu0 %v1347
  %1407 = vmatprep.subr.mxu0 %v1351
  %1408 = vmatpush1.msra.mxu0 %v1350
  %1409 = vmatprep.subr.mxu0 %v1354
  %1410 = vmatpush1.msra.mxu0 %v1353
  %1411 = vmatprep.subr.mxu0 %v1357
  %1412 = vmatpush1.msra.mxu0 %v1356
  %1413 = vmatprep.subr.mxu0 %v1360
  %1414 = vmatpush1.msra.mxu0 %v1359
  %1415 = vmatprep.subr.mxu0 %v1363
  %1416 = vmatpush1.msra.mxu0 %v1362
  %1417 = vmatprep.subr.mxu0 %v1366
  %1418 = vmatpush1.msra.mxu0 %v1365
  %1419 = vmatprep.subr.mxu0 %v1369
  %1420 = vmatpush1.msra.mxu0 %v1368
  %1421 = vmatprep.subr.mxu0 %v1372
  %1422 = vmatpush1.msra.mxu0 %v1371
  %1423 = vmatprep.subr.mxu0 0.0
  %1424 = vmatpush1.msra.mxu0 0.0
  %1425 = vmatprep.subr.mxu0 0.0
  %1426 = vmatpush1.msra.mxu0 0.0
  %1427 = vmatprep.subr.mxu0 0.0
  %1428 = vmatpush1.msra.mxu0 0.0
  %1429 = vmatprep.subr.mxu0 0.0
  %1430 = vmatpush1.msra.mxu0 0.0
  %1431 = vmatprep.subr.mxu0 0.0
  %1432 = vmatpush1.msra.mxu0 0.0
  %1433 = vmatprep.subr.mxu0 0.0
  %1434 = vmatpush1.msra.mxu0 0.0
  %1435 = vmatprep.subr.mxu0 0.0
  %1436 = vmatpush1.msra.mxu0 0.0
  %1437 = vmatprep.subr.mxu0 0.0
  %1438 = vmatpush1.msra.mxu0 0.0
  %1439 = vmatprep.subr.mxu0 0.0
  %1440 = vmatpush1.msra.mxu0 0.0
  %1441 = vmatprep.subr.mxu0 0.0
  %1442 = vmatpush1.msra.mxu0 0.0
  %1443 = vmatprep.subr.mxu0 0.0
  %1444 = vmatpush1.msra.mxu0 0.0
  %1445 = vmatprep.subr.mxu0 0.0
  %1446 = vmatpush1.msra.mxu0 0.0
  %1447 = vmatprep.subr.mxu0 0.0
  %1448 = vmatpush1.msra.mxu0 0.0
  %1449 = vmatprep.subr.mxu0 0.0
  %1450 = vmatpush1.msra.mxu0 0.0
  %1451 = vmatprep.subr.mxu0 0.0
  %1452 = vmatpush1.msra.mxu0 0.0
  %1453 = vmatprep.subr.mxu0 0.0
  %1454 = vmatpush1.msra.mxu0 0.0
  %1455 = vmatprep.mubr.f32.mxu0 0.0
  %1456 = vmatmul.mubr.f32.gmra.mrb[0].mxu0 %v1319
  %v1457 = vpop.f32.mrb[0].mxu0
  %v1458 = vadd.f32 %v1379, %v1457
  %v1459 = vpop.f32.mrb[0].mxu0
  %v1460 = vadd.f32 %v1383, %v1459
  %1461 = vdwg.mxu0
  %1462 = vmatprep.subr.mxu0 0.0
  %1463 = vmatpush1.msra.mxu0 %v1328
  %1464 = vmatprep.subr.mxu0 0.0
  %1465 = vmatpush1.msra.mxu0 %v1331
  %1466 = vmatprep.subr.mxu0 0.0
  %1467 = vmatpush1.msra.mxu0 %v1334
  %1468 = vmatprep.subr.mxu0 0.0
  %1469 = vmatpush1.msra.mxu0 %v1337
  %1470 = vmatprep.subr.mxu0 0.0
  %1471 = vmatpush1.msra.mxu0 %v1340
  %1472 = vmatprep.subr.mxu0 0.0
  %1473 = vmatpush1.msra.mxu0 %v1343
  %1474 = vmatprep.subr.mxu0 0.0
  %1475 = vmatpush1.msra.mxu0 %v1346
  %1476 = vmatprep.subr.mxu0 0.0
  %1477 = vmatpush1.msra.mxu0 %v1349
  %1478 = vmatprep.subr.mxu0 0.0
  %1479 = vmatpush1.msra.mxu0 %v1352
  %1480 = vmatprep.subr.mxu0 0.0
  %1481 = vmatpush1.msra.mxu0 %v1355
  %1482 = vmatprep.subr.mxu0 0.0
  %1483 = vmatpush1.msra.mxu0 %v1358
  %1484 = vmatprep.subr.mxu0 0.0
  %1485 = vmatpush1.msra.mxu0 %v1361
  %1486 = vmatprep.subr.mxu0 0.0
  %1487 = vmatpush1.msra.mxu0 %v1364
  %1488 = vmatprep.subr.mxu0 0.0
  %1489 = vmatpush1.msra.mxu0 %v1367
  %1490 = vmatprep.subr.mxu0 0.0
  %1491 = vmatpush1.msra.mxu0 %v1370
  %1492 = vmatprep.subr.mxu0 0.0
  %1493 = vmatpush1.msra.mxu0 %v1373
  %1494 = vmatprep.subr.mxu0 0.0
  %1495 = vmatpush1.msra.mxu0 0.0
  %1496 = vmatprep.subr.mxu0 0.0
  %1497 = vmatpush1.msra.mxu0 0.0
  %1498 = vmatprep.subr.mxu0 0.0
  %1499 = vmatpush1.msra.mxu0 0.0
  %1500 = vmatprep.subr.mxu0 0.0
  %1501 = vmatpush1.msra.mxu0 0.0
  %1502 = vmatprep.subr.mxu0 0.0
  %1503 = vmatpush1.msra.mxu0 0.0
  %1504 = vmatprep.subr.mxu0 0.0
  %1505 = vmatpush1.msra.mxu0 0.0
  %1506 = vmatprep.subr.mxu0 0.0
  %1507 = vmatpush1.msra.mxu0 0.0
  %1508 = vmatprep.subr.mxu0 0.0
  %1509 = vmatpush1.msra.mxu0 0.0
  %1510 = vmatprep.subr.mxu0 0.0
  %1511 = vmatpush1.msra.mxu0 0.0
  %1512 = vmatprep.subr.mxu0 0.0
  %1513 = vmatpush1.msra.mxu0 0.0
  %1514 = vmatprep.subr.mxu0 0.0
  %1515 = vmatpush1.msra.mxu0 0.0
  %1516 = vmatprep.subr.mxu0 0.0
  %1517 = vmatpush1.msra.mxu0 0.0
  %1518 = vmatprep.subr.mxu0 0.0
  %1519 = vmatpush1.msra.mxu0 0.0
  %1520 = vmatprep.subr.mxu0 0.0
  %1521 = vmatpush1.msra.mxu0 0.0
  %1522 = vmatprep.subr.mxu0 0.0
  %1523 = vmatpush1.msra.mxu0 0.0
  %1524 = vmatprep.subr.mxu0 0.0
  %1525 = vmatpush1.msra.mxu0 0.0
  %1526 = vmatprep.mubr.f32.mxu0 0.0
  %1527 = vmatmul.mubr.f32.gmra.mrb[0].mxu0 %v1319
  %v1528 = vpop.f32.mrb[0].mxu0
  %v1529 = vadd.f32 %v1387, %v1528
  %v1530 = vpop.f32.mrb[0].mxu0
  %1531 = vdwg.mxu0
  %v1532 = vadd.f32 %v1323, %v1458
  %v1533 = vxor.u32 %v1532, 2147483648
  %v1534 = vmul.f32 %v1533, 1.442695
  %v1535 = vpow.pop %v1534
  %v1536 = vadd.f32 %v1535, 1.0
  %v1537 = vrcp.pop %v1536
  %v1538 = vmul.f32 1.0, %v1537
  %v1539 = vadd.f32 %v1324, %v1460
  %v1540 = vxor.u32 %v1539, 2147483648
  %v1541 = vmul.f32 %v1540, 1.442695
  %v1542 = vpow.pop %v1541
  %v1543 = vadd.f32 %v1542, 1.0
  %v1544 = vrcp.pop %v1543
  %v1545 = vmul.f32 1.0, %v1544
  %v1546 = vmul.f32 %v1538, %v1529
  %v1547 = vadd.f32 %v1325, %v1546
  %v1548 = vtanh.pop %v1547
  %v1549 = vsub.f32 1.0, %v1545
  %v1550 = vmul.f32 %v1549, %v1548
  %v1551 = vmul.f32 %v1545, %v1319
  %v1552 = vadd.f32 %v1550, %v1551
  %s1553 = scalar_lea.vmem %s1, 32
  %v1554 = vld [vmem:[%s1553] sm:$0xff]
  %1556 = vset.pattern.permute.xlu0 0
  %1557 = vperm.xlu0 %1556, %v1554
  %v1558 = vpop.permute.xlu0 %1557
  %v1560 = vmul.f32 %v1558, %v1552
  %v1561 = vsub.f32 1.0, %v1554
  %1563 = vset.pattern.permute.xlu0 0
  %1564 = vperm.xlu0 %1563, %v1561
  %v1565 = vpop.permute.xlu0 %1564
  %v1567 = vmul.f32 %v1565, %v1319
  %v1568 = vadd.f32 %v1560, %v1567
  %s1569 = scalar_lea.vmem %s6, 32
  %1570 = vst [vmem:[%s1569] sm:$0xff] %v1560
  %s1571 = scalar_lea.vmem [#allocation2], 120
  %v1572 = vld [vmem:[%s1571] sm:$0xff]
  %v1573 = vld [vmem:[%s1571 + $0x8] sm:$0xff]
  %v1574 = vld [vmem:[%s1571 + $0x10] sm:$0xff]
  %v1575 = vld [vmem:[%s4] sm:$0xff]
  %v1576 = vld [vmem:[%s4 + $0x8] sm:$0xff]
  %v1577 = vld [vmem:[%s4 + $0x10] sm:$0xff]
  %v1578 = vld [vmem:[%s4 + $0x18] sm:$0xff]
  %v1579 = vld [vmem:[%s4 + $0x20] sm:$0xff]
  %v1580 = vld [vmem:[%s4 + $0x28] sm:$0xff]
  %v1581 = vld [vmem:[%s4 + $0x30] sm:$0xff]
  %v1582 = vld [vmem:[%s4 + $0x38] sm:$0xff]
  %v1583 = vld [vmem:[%s4 + $0x40] sm:$0xff]
  %v1584 = vld [vmem:[%s4 + $0x48] sm:$0xff]
  %v1585 = vld [vmem:[%s4 + $0x50] sm:$0xff]
  %v1586 = vld [vmem:[%s4 + $0x58] sm:$0xff]
  %v1587 = vld [vmem:[%s4 + $0x60] sm:$0xff]
  %v1588 = vld [vmem:[%s4 + $0x68] sm:$0xff]
  %v1589 = vld [vmem:[%s4 + $0x70] sm:$0xff]
  %v1590 = vld [vmem:[%s4 + $0x78] sm:$0xff]
  %v1591 = vld [vmem:[%s4 + $0x80] sm:$0xff]
  %v1592 = vld [vmem:[%s4 + $0x88] sm:$0xff]
  %v1593 = vld [vmem:[%s4 + $0x90] sm:$0xff]
  %v1594 = vld [vmem:[%s4 + $0x98] sm:$0xff]
  %v1595 = vld [vmem:[%s4 + $0xa0] sm:$0xff]
  %v1596 = vld [vmem:[%s4 + $0xa8] sm:$0xff]
  %v1597 = vld [vmem:[%s4 + $0xb0] sm:$0xff]
  %v1598 = vld [vmem:[%s4 + $0xb8] sm:$0xff]
  %v1599 = vld [vmem:[%s4 + $0xc0] sm:$0xff]
  %v1600 = vld [vmem:[%s4 + $0xc8] sm:$0xff]
  %v1601 = vld [vmem:[%s4 + $0xd0] sm:$0xff]
  %v1602 = vld [vmem:[%s4 + $0xd8] sm:$0xff]
  %v1603 = vld [vmem:[%s4 + $0xe0] sm:$0xff]
  %v1604 = vld [vmem:[%s4 + $0xe8] sm:$0xff]
  %v1605 = vld [vmem:[%s4 + $0xf0] sm:$0xff]
  %v1606 = vld [vmem:[%s4 + $0xf8] sm:$0xff]
  %v1607 = vld [vmem:[%s4 + $0x100] sm:$0xff]
  %v1608 = vld [vmem:[%s4 + $0x108] sm:$0xff]
  %v1609 = vld [vmem:[%s4 + $0x110] sm:$0xff]
  %v1610 = vld [vmem:[%s4 + $0x118] sm:$0xff]
  %v1611 = vld [vmem:[%s4 + $0x120] sm:$0xff]
  %v1612 = vld [vmem:[%s4 + $0x128] sm:$0xff]
  %v1613 = vld [vmem:[%s4 + $0x130] sm:$0xff]
  %v1614 = vld [vmem:[%s4 + $0x138] sm:$0xff]
  %v1615 = vld [vmem:[%s4 + $0x140] sm:$0xff]
  %v1616 = vld [vmem:[%s4 + $0x148] sm:$0xff]
  %v1617 = vld [vmem:[%s4 + $0x150] sm:$0xff]
  %v1618 = vld [vmem:[%s4 + $0x158] sm:$0xff]
  %v1619 = vld [vmem:[%s4 + $0x160] sm:$0xff]
  %v1620 = vld [vmem:[%s4 + $0x168] sm:$0xff]
  %v1621 = vld [vmem:[%s4 + $0x170] sm:$0xff]
  %v1622 = vld [vmem:[%s4 + $0x178] sm:$0xff]
  %v1623 = vld [vmem:[%s5] sm:$0x7]
  %v1625 = vlaneseq
  %v1626 = vshrl.u32 %v1625, 7
  %v1627 = vsub.s32 0, %v1626
  %v1628 = vrot.slane %v1623, %v1627
  %v1629 = vlaneseq
  %v1630 = vshrl.u32 %v1629, 7
  %v1631 = vsub.s32 1, %v1630
  %v1632 = vrot.slane %v1623, %v1631
  %v1633 = vlaneseq
  %v1634 = vshrl.u32 %v1633, 7
  %v1635 = vsub.s32 2, %v1634
  %v1636 = vrot.slane %v1623, %v1635
  %1640 = vmatprep.subr.mxu0 %v1576
  %1641 = vmatpush1.msra.mxu0 %v1575
  %1642 = vmatprep.subr.mxu0 %v1579
  %1643 = vmatpush1.msra.mxu0 %v1578
  %1644 = vmatprep.subr.mxu0 %v1582
  %1645 = vmatpush1.msra.mxu0 %v1581
  %1646 = vmatprep.subr.mxu0 %v1585
  %1647 = vmatpush1.msra.mxu0 %v1584
  %1648 = vmatprep.subr.mxu0 %v1588
  %1649 = vmatpush1.msra.mxu0 %v1587
  %1650 = vmatprep.subr.mxu0 %v1591
  %1651 = vmatpush1.msra.mxu0 %v1590
  %1652 = vmatprep.subr.mxu0 %v1594
  %1653 = vmatpush1.msra.mxu0 %v1593
  %1654 = vmatprep.subr.mxu0 %v1597
  %1655 = vmatpush1.msra.mxu0 %v1596
  %1656 = vmatprep.subr.mxu0 %v1600
  %1657 = vmatpush1.msra.mxu0 %v1599
  %1658 = vmatprep.subr.mxu0 %v1603
  %1659 = vmatpush1.msra.mxu0 %v1602
  %1660 = vmatprep.subr.mxu0 %v1606
  %1661 = vmatpush1.msra.mxu0 %v1605
  %1662 = vmatprep.subr.mxu0 %v1609
  %1663 = vmatpush1.msra.mxu0 %v1608
  %1664 = vmatprep.subr.mxu0 %v1612
  %1665 = vmatpush1.msra.mxu0 %v1611
  %1666 = vmatprep.subr.mxu0 %v1615
  %1667 = vmatpush1.msra.mxu0 %v1614
  %1668 = vmatprep.subr.mxu0 %v1618
  %1669 = vmatpush1.msra.mxu0 %v1617
  %1670 = vmatprep.subr.mxu0 %v1621
  %1671 = vmatpush1.msra.mxu0 %v1620
  %1672 = vmatprep.subr.mxu0 0.0
  %1673 = vmatpush1.msra.mxu0 0.0
  %1674 = vmatprep.subr.mxu0 0.0
  %1675 = vmatpush1.msra.mxu0 0.0
  %1676 = vmatprep.subr.mxu0 0.0
  %1677 = vmatpush1.msra.mxu0 0.0
  %1678 = vmatprep.subr.mxu0 0.0
  %1679 = vmatpush1.msra.mxu0 0.0
  %1680 = vmatprep.subr.mxu0 0.0
  %1681 = vmatpush1.msra.mxu0 0.0
  %1682 = vmatprep.subr.mxu0 0.0
  %1683 = vmatpush1.msra.mxu0 0.0
  %1684 = vmatprep.subr.mxu0 0.0
  %1685 = vmatpush1.msra.mxu0 0.0
  %1686 = vmatprep.subr.mxu0 0.0
  %1687 = vmatpush1.msra.mxu0 0.0
  %1688 = vmatprep.subr.mxu0 0.0
  %1689 = vmatpush1.msra.mxu0 0.0
  %1690 = vmatprep.subr.mxu0 0.0
  %1691 = vmatpush1.msra.mxu0 0.0
  %1692 = vmatprep.subr.mxu0 0.0
  %1693 = vmatpush1.msra.mxu0 0.0
  %1694 = vmatprep.subr.mxu0 0.0
  %1695 = vmatpush1.msra.mxu0 0.0
  %1696 = vmatprep.subr.mxu0 0.0
  %1697 = vmatpush1.msra.mxu0 0.0
  %1698 = vmatprep.subr.mxu0 0.0
  %1699 = vmatpush1.msra.mxu0 0.0
  %1700 = vmatprep.subr.mxu0 0.0
  %1701 = vmatpush1.msra.mxu0 0.0
  %1702 = vmatprep.subr.mxu0 0.0
  %1703 = vmatpush1.msra.mxu0 0.0
  %1704 = vmatprep.mubr.f32.mxu0 0.0
  %1705 = vmatmul.mubr.f32.gmra.mrb[0].mxu0 %v1568
  %v1706 = vpop.f32.mrb[0].mxu0
  %v1707 = vadd.f32 %v1628, %v1706
  %v1708 = vpop.f32.mrb[0].mxu0
  %v1709 = vadd.f32 %v1632, %v1708
  %1710 = vdwg.mxu0
  %1711 = vmatprep.subr.mxu0 0.0
  %1712 = vmatpush1.msra.mxu0 %v1577
  %1713 = vmatprep.subr.mxu0 0.0
  %1714 = vmatpush1.msra.mxu0 %v1580
  %1715 = vmatprep.subr.mxu0 0.0
  %1716 = vmatpush1.msra.mxu0 %v1583
  %1717 = vmatprep.subr.mxu0 0.0
  %1718 = vmatpush1.msra.mxu0 %v1586
  %1719 = vmatprep.subr.mxu0 0.0
  %1720 = vmatpush1.msra.mxu0 %v1589
  %1721 = vmatprep.subr.mxu0 0.0
  %1722 = vmatpush1.msra.mxu0 %v1592
  %1723 = vmatprep.subr.mxu0 0.0
  %1724 = vmatpush1.msra.mxu0 %v1595
  %1725 = vmatprep.subr.mxu0 0.0
  %1726 = vmatpush1.msra.mxu0 %v1598
  %1727 = vmatprep.subr.mxu0 0.0
  %1728 = vmatpush1.msra.mxu0 %v1601
  %1729 = vmatprep.subr.mxu0 0.0
  %1730 = vmatpush1.msra.mxu0 %v1604
  %1731 = vmatprep.subr.mxu0 0.0
  %1732 = vmatpush1.msra.mxu0 %v1607
  %1733 = vmatprep.subr.mxu0 0.0
  %1734 = vmatpush1.msra.mxu0 %v1610
  %1735 = vmatprep.subr.mxu0 0.0
  %1736 = vmatpush1.msra.mxu0 %v1613
  %1737 = vmatprep.subr.mxu0 0.0
  %1738 = vmatpush1.msra.mxu0 %v1616
  %1739 = vmatprep.subr.mxu0 0.0
  %1740 = vmatpush1.msra.mxu0 %v1619
  %1741 = vmatprep.subr.mxu0 0.0
  %1742 = vmatpush1.msra.mxu0 %v1622
  %1743 = vmatprep.subr.mxu0 0.0
  %1744 = vmatpush1.msra.mxu0 0.0
  %1745 = vmatprep.subr.mxu0 0.0
  %1746 = vmatpush1.msra.mxu0 0.0
  %1747 = vmatprep.subr.mxu0 0.0
  %1748 = vmatpush1.msra.mxu0 0.0
  %1749 = vmatprep.subr.mxu0 0.0
  %1750 = vmatpush1.msra.mxu0 0.0
  %1751 = vmatprep.subr.mxu0 0.0
  %1752 = vmatpush1.msra.mxu0 0.0
  %1753 = vmatprep.subr.mxu0 0.0
  %1754 = vmatpush1.msra.mxu0 0.0
  %1755 = vmatprep.subr.mxu0 0.0
  %1756 = vmatpush1.msra.mxu0 0.0
  %1757 = vmatprep.subr.mxu0 0.0
  %1758 = vmatpush1.msra.mxu0 0.0
  %1759 = vmatprep.subr.mxu0 0.0
  %1760 = vmatpush1.msra.mxu0 0.0
  %1761 = vmatprep.subr.mxu0 0.0
  %1762 = vmatpush1.msra.mxu0 0.0
  %1763 = vmatprep.subr.mxu0 0.0
  %1764 = vmatpush1.msra.mxu0 0.0
  %1765 = vmatprep.subr.mxu0 0.0
  %1766 = vmatpush1.msra.mxu0 0.0
  %1767 = vmatprep.subr.mxu0 0.0
  %1768 = vmatpush1.msra.mxu0 0.0
  %1769 = vmatprep.subr.mxu0 0.0
  %1770 = vmatpush1.msra.mxu0 0.0
  %1771 = vmatprep.subr.mxu0 0.0
  %1772 = vmatpush1.msra.mxu0 0.0
  %1773 = vmatprep.subr.mxu0 0.0
  %1774 = vmatpush1.msra.mxu0 0.0
  %1775 = vmatprep.mubr.f32.mxu0 0.0
  %1776 = vmatmul.mubr.f32.gmra.mrb[0].mxu0 %v1568
  %v1777 = vpop.f32.mrb[0].mxu0
  %v1778 = vadd.f32 %v1636, %v1777
  %v1779 = vpop.f32.mrb[0].mxu0
  %1780 = vdwg.mxu0
  %v1781 = vadd.f32 %v1572, %v1707
  %v1782 = vxor.u32 %v1781, 2147483648
  %v1783 = vmul.f32 %v1782, 1.442695
  %v1784 = vpow.pop %v1783
  %v1785 = vadd.f32 %v1784, 1.0
  %v1786 = vrcp.pop %v1785
  %v1787 = vmul.f32 1.0, %v1786
  %v1788 = vadd.f32 %v1573, %v1709
  %v1789 = vxor.u32 %v1788, 2147483648
  %v1790 = vmul.f32 %v1789, 1.442695
  %v1791 = vpow.pop %v1790
  %v1792 = vadd.f32 %v1791, 1.0
  %v1793 = vrcp.pop %v1792
  %v1794 = vmul.f32 1.0, %v1793
  %v1795 = vmul.f32 %v1787, %v1778
  %v1796 = vadd.f32 %v1574, %v1795
  %v1797 = vtanh.pop %v1796
  %v1798 = vsub.f32 1.0, %v1794
  %v1799 = vmul.f32 %v1798, %v1797
  %v1800 = vmul.f32 %v1794, %v1568
  %v1801 = vadd.f32 %v1799, %v1800
  %s1802 = scalar_lea.vmem %s1, 40
  %v1803 = vld [vmem:[%s1802] sm:$0xff]
  %1805 = vset.pattern.permute.xlu0 0
  %1806 = vperm.xlu0 %1805, %v1803
  %v1807 = vpop.permute.xlu0 %1806
  %v1809 = vmul.f32 %v1807, %v1801
  %v1810 = vsub.f32 1.0, %v1803
  %1812 = vset.pattern.permute.xlu0 0
  %1813 = vperm.xlu0 %1812, %v1810
  %v1814 = vpop.permute.xlu0 %1813
  %v1816 = vmul.f32 %v1814, %v1568
  %v1817 = vadd.f32 %v1809, %v1816
  %s1818 = scalar_lea.vmem %s6, 40
  %1819 = vst [vmem:[%s1818] sm:$0xff] %v1809
  %s1820 = scalar_lea.vmem [#allocation2], 144
  %v1821 = vld [vmem:[%s1820] sm:$0xff]
  %v1822 = vld [vmem:[%s1820 + $0x8] sm:$0xff]
  %v1823 = vld [vmem:[%s1820 + $0x10] sm:$0xff]
  %v1824 = vld [vmem:[%s4] sm:$0xff]
  %v1825 = vld [vmem:[%s4 + $0x8] sm:$0xff]
  %v1826 = vld [vmem:[%s4 + $0x10] sm:$0xff]
  %v1827 = vld [vmem:[%s4 + $0x18] sm:$0xff]
  %v1828 = vld [vmem:[%s4 + $0x20] sm:$0xff]
  %v1829 = vld [vmem:[%s4 + $0x28] sm:$0xff]
  %v1830 = vld [vmem:[%s4 + $0x30] sm:$0xff]
  %v1831 = vld [vmem:[%s4 + $0x38] sm:$0xff]
  %v1832 = vld [vmem:[%s4 + $0x40] sm:$0xff]
  %v1833 = vld [vmem:[%s4 + $0x48] sm:$0xff]
  %v1834 = vld [vmem:[%s4 + $0x50] sm:$0xff]
  %v1835 = vld [vmem:[%s4 + $0x58] sm:$0xff]
  %v1836 = vld [vmem:[%s4 + $0x60] sm:$0xff]
  %v1837 = vld [vmem:[%s4 + $0x68] sm:$0xff]
  %v1838 = vld [vmem:[%s4 + $0x70] sm:$0xff]
  %v1839 = vld [vmem:[%s4 + $0x78] sm:$0xff]
  %v1840 = vld [vmem:[%s4 + $0x80] sm:$0xff]
  %v1841 = vld [vmem:[%s4 + $0x88] sm:$0xff]
  %v1842 = vld [vmem:[%s4 + $0x90] sm:$0xff]
  %v1843 = vld [vmem:[%s4 + $0x98] sm:$0xff]
  %v1844 = vld [vmem:[%s4 + $0xa0] sm:$0xff]
  %v1845 = vld [vmem:[%s4 + $0xa8] sm:$0xff]
  %v1846 = vld [vmem:[%s4 + $0xb0] sm:$0xff]
  %v1847 = vld [vmem:[%s4 + $0xb8] sm:$0xff]
  %v1848 = vld [vmem:[%s4 + $0xc0] sm:$0xff]
  %v1849 = vld [vmem:[%s4 + $0xc8] sm:$0xff]
  %v1850 = vld [vmem:[%s4 + $0xd0] sm:$0xff]
  %v1851 = vld [vmem:[%s4 + $0xd8] sm:$0xff]
  %v1852 = vld [vmem:[%s4 + $0xe0] sm:$0xff]
  %v1853 = vld [vmem:[%s4 + $0xe8] sm:$0xff]
  %v1854 = vld [vmem:[%s4 + $0xf0] sm:$0xff]
  %v1855 = vld [vmem:[%s4 + $0xf8] sm:$0xff]
  %v1856 = vld [vmem:[%s4 + $0x100] sm:$0xff]
  %v1857 = vld [vmem:[%s4 + $0x108] sm:$0xff]
  %v1858 = vld [vmem:[%s4 + $0x110] sm:$0xff]
  %v1859 = vld [vmem:[%s4 + $0x118] sm:$0xff]
  %v1860 = vld [vmem:[%s4 + $0x120] sm:$0xff]
  %v1861 = vld [vmem:[%s4 + $0x128] sm:$0xff]
  %v1862 = vld [vmem:[%s4 + $0x130] sm:$0xff]
  %v1863 = vld [vmem:[%s4 + $0x138] sm:$0xff]
  %v1864 = vld [vmem:[%s4 + $0x140] sm:$0xff]
  %v1865 = vld [vmem:[%s4 + $0x148] sm:$0xff]
  %v1866 = vld [vmem:[%s4 + $0x150] sm:$0xff]
  %v1867 = vld [vmem:[%s4 + $0x158] sm:$0xff]
  %v1868 = vld [vmem:[%s4 + $0x160] sm:$0xff]
  %v1869 = vld [vmem:[%s4 + $0x168] sm:$0xff]
  %v1870 = vld [vmem:[%s4 + $0x170] sm:$0xff]
  %v1871 = vld [vmem:[%s4 + $0x178] sm:$0xff]
  %v1872 = vld [vmem:[%s5] sm:$0x7]
  %v1874 = vlaneseq
  %v1875 = vshrl.u32 %v1874, 7
  %v1876 = vsub.s32 0, %v1875
  %v1877 = vrot.slane %v1872, %v1876
  %v1878 = vlaneseq
  %v1879 = vshrl.u32 %v1878, 7
  %v1880 = vsub.s32 1, %v1879
  %v1881 = vrot.slane %v1872, %v1880
  %v1882 = vlaneseq
  %v1883 = vshrl.u32 %v1882, 7
  %v1884 = vsub.s32 2, %v1883
  %v1885 = vrot.slane %v1872, %v1884
  %1889 = vmatprep.subr.mxu0 %v1825
  %1890 = vmatpush1.msra.mxu0 %v1824
  %1891 = vmatprep.subr.mxu0 %v1828
  %1892 = vmatpush1.msra.mxu0 %v1827
  %1893 = vmatprep.subr.mxu0 %v1831
  %1894 = vmatpush1.msra.mxu0 %v1830
  %1895 = vmatprep.subr.mxu0 %v1834
  %1896 = vmatpush1.msra.mxu0 %v1833
  %1897 = vmatprep.subr.mxu0 %v1837
  %1898 = vmatpush1.msra.mxu0 %v1836
  %1899 = vmatprep.subr.mxu0 %v1840
  %1900 = vmatpush1.msra.mxu0 %v1839
  %1901 = vmatprep.subr.mxu0 %v1843
  %1902 = vmatpush1.msra.mxu0 %v1842
  %1903 = vmatprep.subr.mxu0 %v1846
  %1904 = vmatpush1.msra.mxu0 %v1845
  %1905 = vmatprep.subr.mxu0 %v1849
  %1906 = vmatpush1.msra.mxu0 %v1848
  %1907 = vmatprep.subr.mxu0 %v1852
  %1908 = vmatpush1.msra.mxu0 %v1851
  %1909 = vmatprep.subr.mxu0 %v1855
  %1910 = vmatpush1.msra.mxu0 %v1854
  %1911 = vmatprep.subr.mxu0 %v1858
  %1912 = vmatpush1.msra.mxu0 %v1857
  %1913 = vmatprep.subr.mxu0 %v1861
  %1914 = vmatpush1.msra.mxu0 %v1860
  %1915 = vmatprep.subr.mxu0 %v1864
  %1916 = vmatpush1.msra.mxu0 %v1863
  %1917 = vmatprep.subr.mxu0 %v1867
  %1918 = vmatpush1.msra.mxu0 %v1866
  %1919 = vmatprep.subr.mxu0 %v1870
  %1920 = vmatpush1.msra.mxu0 %v1869
  %1921 = vmatprep.subr.mxu0 0.0
  %1922 = vmatpush1.msra.mxu0 0.0
  %1923 = vmatprep.subr.mxu0 0.0
  %1924 = vmatpush1.msra.mxu0 0.0
  %1925 = vmatprep.subr.mxu0 0.0
  %1926 = vmatpush1.msra.mxu0 0.0
  %1927 = vmatprep.subr.mxu0 0.0
  %1928 = vmatpush1.msra.mxu0 0.0
  %1929 = vmatprep.subr.mxu0 0.0
  %1930 = vmatpush1.msra.mxu0 0.0
  %1931 = vmatprep.subr.mxu0 0.0
  %1932 = vmatpush1.msra.mxu0 0.0
  %1933 = vmatprep.subr.mxu0 0.0
  %1934 = vmatpush1.msra.mxu0 0.0
  %1935 = vmatprep.subr.mxu0 0.0
  %1936 = vmatpush1.msra.mxu0 0.0
  %1937 = vmatprep.subr.mxu0 0.0
  %1938 = vmatpush1.msra.mxu0 0.0
  %1939 = vmatprep.subr.mxu0 0.0
  %1940 = vmatpush1.msra.mxu0 0.0
  %1941 = vmatprep.subr.mxu0 0.0
  %1942 = vmatpush1.msra.mxu0 0.0
  %1943 = vmatprep.subr.mxu0 0.0
  %1944 = vmatpush1.msra.mxu0 0.0
  %1945 = vmatprep.subr.mxu0 0.0
  %1946 = vmatpush1.msra.mxu0 0.0
  %1947 = vmatprep.subr.mxu0 0.0
  %1948 = vmatpush1.msra.mxu0 0.0
  %1949 = vmatprep.subr.mxu0 0.0
  %1950 = vmatpush1.msra.mxu0 0.0
  %1951 = vmatprep.subr.mxu0 0.0
  %1952 = vmatpush1.msra.mxu0 0.0
  %1953 = vmatprep.mubr.f32.mxu0 0.0
  %1954 = vmatmul.mubr.f32.gmra.mrb[0].mxu0 %v1817
  %v1955 = vpop.f32.mrb[0].mxu0
  %v1956 = vadd.f32 %v1877, %v1955
  %v1957 = vpop.f32.mrb[0].mxu0
  %v1958 = vadd.f32 %v1881, %v1957
  %1959 = vdwg.mxu0
  %1960 = vmatprep.subr.mxu0 0.0
  %1961 = vmatpush1.msra.mxu0 %v1826
  %1962 = vmatprep.subr.mxu0 0.0
  %1963 = vmatpush1.msra.mxu0 %v1829
  %1964 = vmatprep.subr.mxu0 0.0
  %1965 = vmatpush1.msra.mxu0 %v1832
  %1966 = vmatprep.subr.mxu0 0.0
  %1967 = vmatpush1.msra.mxu0 %v1835
  %1968 = vmatprep.subr.mxu0 0.0
  %1969 = vmatpush1.msra.mxu0 %v1838
  %1970 = vmatprep.subr.mxu0 0.0
  %1971 = vmatpush1.msra.mxu0 %v1841
  %1972 = vmatprep.subr.mxu0 0.0
  %1973 = vmatpush1.msra.mxu0 %v1844
  %1974 = vmatprep.subr.mxu0 0.0
  %1975 = vmatpush1.msra.mxu0 %v1847
  %1976 = vmatprep.subr.mxu0 0.0
  %1977 = vmatpush1.msra.mxu0 %v1850
  %1978 = vmatprep.subr.mxu0 0.0
  %1979 = vmatpush1.msra.mxu0 %v1853
  %1980 = vmatprep.subr.mxu0 0.0
  %1981 = vmatpush1.msra.mxu0 %v1856
  %1982 = vmatprep.subr.mxu0 0.0
  %1983 = vmatpush1.msra.mxu0 %v1859
  %1984 = vmatprep.subr.mxu0 0.0
  %1985 = vmatpush1.msra.mxu0 %v1862
  %1986 = vmatprep.subr.mxu0 0.0
  %1987 = vmatpush1.msra.mxu0 %v1865
  %1988 = vmatprep.subr.mxu0 0.0
  %1989 = vmatpush1.msra.mxu0 %v1868
  %1990 = vmatprep.subr.mxu0 0.0
  %1991 = vmatpush1.msra.mxu0 %v1871
  %1992 = vmatprep.subr.mxu0 0.0
  %1993 = vmatpush1.msra.mxu0 0.0
  %1994 = vmatprep.subr.mxu0 0.0
  %1995 = vmatpush1.msra.mxu0 0.0
  %1996 = vmatprep.subr.mxu0 0.0
  %1997 = vmatpush1.msra.mxu0 0.0
  %1998 = vmatprep.subr.mxu0 0.0
  %1999 = vmatpush1.msra.mxu0 0.0
  %2000 = vmatprep.subr.mxu0 0.0
  %2001 = vmatpush1.msra.mxu0 0.0
  %2002 = vmatprep.subr.mxu0 0.0
  %2003 = vmatpush1.msra.mxu0 0.0
  %2004 = vmatprep.subr.mxu0 0.0
  %2005 = vmatpush1.msra.mxu0 0.0
  %2006 = vmatprep.subr.mxu0 0.0
  %2007 = vmatpush1.msra.mxu0 0.0
  %2008 = vmatprep.subr.mxu0 0.0
  %2009 = vmatpush1.msra.mxu0 0.0
  %2010 = vmatprep.subr.mxu0 0.0
  %2011 = vmatpush1.msra.mxu0 0.0
  %2012 = vmatprep.subr.mxu0 0.0
  %2013 = vmatpush1.msra.mxu0 0.0
  %2014 = vmatprep.subr.mxu0 0.0
  %2015 = vmatpush1.msra.mxu0 0.0
  %2016 = vmatprep.subr.mxu0 0.0
  %2017 = vmatpush1.msra.mxu0 0.0
  %2018 = vmatprep.subr.mxu0 0.0
  %2019 = vmatpush1.msra.mxu0 0.0
  %2020 = vmatprep.subr.mxu0 0.0
  %2021 = vmatpush1.msra.mxu0 0.0
  %2022 = vmatprep.subr.mxu0 0.0
  %2023 = vmatpush1.msra.mxu0 0.0
  %2024 = vmatprep.mubr.f32.mxu0 0.0
  %2025 = vmatmul.mubr.f32.gmra.mrb[0].mxu0 %v1817
  %v2026 = vpop.f32.mrb[0].mxu0
  %v2027 = vadd.f32 %v1885, %v2026
  %v2028 = vpop.f32.mrb[0].mxu0
  %2029 = vdwg.mxu0
  %v2030 = vadd.f32 %v1821, %v1956
  %v2031 = vxor.u32 %v2030, 2147483648
  %v2032 = vmul.f32 %v2031, 1.442695
  %v2033 = vpow.pop %v2032
  %v2034 = vadd.f32 %v2033, 1.0
  %v2035 = vrcp.pop %v2034
  %v2036 = vmul.f32 1.0, %v2035
  %v2037 = vadd.f32 %v1822, %v1958
  %v2038 = vxor.u32 %v2037, 2147483648
  %v2039 = vmul.f32 %v2038, 1.442695
  %v2040 = vpow.pop %v2039
  %v2041 = vadd.f32 %v2040, 1.0
  %v2042 = vrcp.pop %v2041
  %v2043 = vmul.f32 1.0, %v2042
  %v2044 = vmul.f32 %v2036, %v2027
  %v2045 = vadd.f32 %v1823, %v2044
  %v2046 = vtanh.pop %v2045
  %v2047 = vsub.f32 1.0, %v2043
  %v2048 = vmul.f32 %v2047, %v2046
  %v2049 = vmul.f32 %v2043, %v1817
  %v2050 = vadd.f32 %v2048, %v2049
  %s2051 = scalar_lea.vmem %s1, 48
  %v2052 = vld [vmem:[%s2051] sm:$0xff]
  %2054 = vset.pattern.permute.xlu0 0
  %2055 = vperm.xlu0 %2054, %v2052
  %v2056 = vpop.permute.xlu0 %2055
  %v2058 = vmul.f32 %v2056, %v2050
  %v2059 = vsub.f32 1.0, %v2052
  %2061 = vset.pattern.permute.xlu0 0
  %2062 = vperm.xlu0 %2061, %v2059
  %v2063 = vpop.permute.xlu0 %2062
  %v2065 = vmul.f32 %v2063, %v1817
  %v2066 = vadd.f32 %v2058, %v2065
  %s2067 = scalar_lea.vmem %s6, 48
  %2068 = vst [vmem:[%s2067] sm:$0xff] %v2058
  %s2069 = scalar_lea.vmem [#allocation2], 168
  %v2070 = vld [vmem:[%s2069] sm:$0xff]
  %v2071 = vld [vmem:[%s2069 + $0x8] sm:$0xff]
  %v2072 = vld [vmem:[%s2069 + $0x10] sm:$0xff]
  %v2073 = vld [vmem:[%s4] sm:$0xff]
  %v2074 = vld [vmem:[%s4 + $0x8] sm:$0xff]
  %v2075 = vld [vmem:[%s4 + $0x10] sm:$0xff]
  %v2076 = vld [vmem:[%s4 + $0x18] sm:$0xff]
  %v2077 = vld [vmem:[%s4 + $0x20] sm:$0xff]
  %v2078 = vld [vmem:[%s4 + $0x28] sm:$0xff]
  %v2079 = vld [vmem:[%s4 + $0x30] sm:$0xff]
  %v2080 = vld [vmem:[%s4 + $0x38] sm:$0xff]
  %v2081 = vld [vmem:[%s4 + $0x40] sm:$0xff]
  %v2082 = vld [vmem:[%s4 + $0x48] sm:$0xff]
  %v2083 = vld [vmem:[%s4 + $0x50] sm:$0xff]
  %v2084 = vld [vmem:[%s4 + $0x58] sm:$0xff]
  %v2085 = vld [vmem:[%s4 + $0x60] sm:$0xff]
  %v2086 = vld [vmem:[%s4 + $0x68] sm:$0xff]
  %v2087 = vld [vmem:[%s4 + $0x70] sm:$0xff]
  %v2088 = vld [vmem:[%s4 + $0x78] sm:$0xff]
  %v2089 = vld [vmem:[%s4 + $0x80] sm:$0xff]
  %v2090 = vld [vmem:[%s4 + $0x88] sm:$0xff]
  %v2091 = vld [vmem:[%s4 + $0x90] sm:$0xff]
  %v2092 = vld [vmem:[%s4 + $0x98] sm:$0xff]
  %v2093 = vld [vmem:[%s4 + $0xa0] sm:$0xff]
  %v2094 = vld [vmem:[%s4 + $0xa8] sm:$0xff]
  %v2095 = vld [vmem:[%s4 + $0xb0] sm:$0xff]
  %v2096 = vld [vmem:[%s4 + $0xb8] sm:$0xff]
  %v2097 = vld [vmem:[%s4 + $0xc0] sm:$0xff]
  %v2098 = vld [vmem:[%s4 + $0xc8] sm:$0xff]
  %v2099 = vld [vmem:[%s4 + $0xd0] sm:$0xff]
  %v2100 = vld [vmem:[%s4 + $0xd8] sm:$0xff]
  %v2101 = vld [vmem:[%s4 + $0xe0] sm:$0xff]
  %v2102 = vld [vmem:[%s4 + $0xe8] sm:$0xff]
  %v2103 = vld [vmem:[%s4 + $0xf0] sm:$0xff]
  %v2104 = vld [vmem:[%s4 + $0xf8] sm:$0xff]
  %v2105 = vld [vmem:[%s4 + $0x100] sm:$0xff]
  %v2106 = vld [vmem:[%s4 + $0x108] sm:$0xff]
  %v2107 = vld [vmem:[%s4 + $0x110] sm:$0xff]
  %v2108 = vld [vmem:[%s4 + $0x118] sm:$0xff]
  %v2109 = vld [vmem:[%s4 + $0x120] sm:$0xff]
  %v2110 = vld [vmem:[%s4 + $0x128] sm:$0xff]
  %v2111 = vld [vmem:[%s4 + $0x130] sm:$0xff]
  %v2112 = vld [vmem:[%s4 + $0x138] sm:$0xff]
  %v2113 = vld [vmem:[%s4 + $0x140] sm:$0xff]
  %v2114 = vld [vmem:[%s4 + $0x148] sm:$0xff]
  %v2115 = vld [vmem:[%s4 + $0x150] sm:$0xff]
  %v2116 = vld [vmem:[%s4 + $0x158] sm:$0xff]
  %v2117 = vld [vmem:[%s4 + $0x160] sm:$0xff]
  %v2118 = vld [vmem:[%s4 + $0x168] sm:$0xff]
  %v2119 = vld [vmem:[%s4 + $0x170] sm:$0xff]
  %v2120 = vld [vmem:[%s4 + $0x178] sm:$0xff]
  %v2121 = vld [vmem:[%s5] sm:$0x7]
  %v2123 = vlaneseq
  %v2124 = vshrl.u32 %v2123, 7
  %v2125 = vsub.s32 0, %v2124
  %v2126 = vrot.slane %v2121, %v2125
  %v2127 = vlaneseq
  %v2128 = vshrl.u32 %v2127, 7
  %v2129 = vsub.s32 1, %v2128
  %v2130 = vrot.slane %v2121, %v2129
  %v2131 = vlaneseq
  %v2132 = vshrl.u32 %v2131, 7
  %v2133 = vsub.s32 2, %v2132
  %v2134 = vrot.slane %v2121, %v2133
  %2138 = vmatprep.subr.mxu0 %v2074
  %2139 = vmatpush1.msra.mxu0 %v2073
  %2140 = vmatprep.subr.mxu0 %v2077
  %2141 = vmatpush1.msra.mxu0 %v2076
  %2142 = vmatprep.subr.mxu0 %v2080
  %2143 = vmatpush1.msra.mxu0 %v2079
  %2144 = vmatprep.subr.mxu0 %v2083
  %2145 = vmatpush1.msra.mxu0 %v2082
  %2146 = vmatprep.subr.mxu0 %v2086
  %2147 = vmatpush1.msra.mxu0 %v2085
  %2148 = vmatprep.subr.mxu0 %v2089
  %2149 = vmatpush1.msra.mxu0 %v2088
  %2150 = vmatprep.subr.mxu0 %v2092
  %2151 = vmatpush1.msra.mxu0 %v2091
  %2152 = vmatprep.subr.mxu0 %v2095
  %2153 = vmatpush1.msra.mxu0 %v2094
  %2154 = vmatprep.subr.mxu0 %v2098
  %2155 = vmatpush1.msra.mxu0 %v2097
  %2156 = vmatprep.subr.mxu0 %v2101
  %2157 = vmatpush1.msra.mxu0 %v2100
  %2158 = vmatprep.subr.mxu0 %v2104
  %2159 = vmatpush1.msra.mxu0 %v2103
  %2160 = vmatprep.subr.mxu0 %v2107
  %2161 = vmatpush1.msra.mxu0 %v2106
  %2162 = vmatprep.subr.mxu0 %v2110
  %2163 = vmatpush1.msra.mxu0 %v2109
  %2164 = vmatprep.subr.mxu0 %v2113
  %2165 = vmatpush1.msra.mxu0 %v2112
  %2166 = vmatprep.subr.mxu0 %v2116
  %2167 = vmatpush1.msra.mxu0 %v2115
  %2168 = vmatprep.subr.mxu0 %v2119
  %2169 = vmatpush1.msra.mxu0 %v2118
  %2170 = vmatprep.subr.mxu0 0.0
  %2171 = vmatpush1.msra.mxu0 0.0
  %2172 = vmatprep.subr.mxu0 0.0
  %2173 = vmatpush1.msra.mxu0 0.0
  %2174 = vmatprep.subr.mxu0 0.0
  %2175 = vmatpush1.msra.mxu0 0.0
  %2176 = vmatprep.subr.mxu0 0.0
  %2177 = vmatpush1.msra.mxu0 0.0
  %2178 = vmatprep.subr.mxu0 0.0
  %2179 = vmatpush1.msra.mxu0 0.0
  %2180 = vmatprep.subr.mxu0 0.0
  %2181 = vmatpush1.msra.mxu0 0.0
  %2182 = vmatprep.subr.mxu0 0.0
  %2183 = vmatpush1.msra.mxu0 0.0
  %2184 = vmatprep.subr.mxu0 0.0
  %2185 = vmatpush1.msra.mxu0 0.0
  %2186 = vmatprep.subr.mxu0 0.0
  %2187 = vmatpush1.msra.mxu0 0.0
  %2188 = vmatprep.subr.mxu0 0.0
  %2189 = vmatpush1.msra.mxu0 0.0
  %2190 = vmatprep.subr.mxu0 0.0
  %2191 = vmatpush1.msra.mxu0 0.0
  %2192 = vmatprep.subr.mxu0 0.0
  %2193 = vmatpush1.msra.mxu0 0.0
  %2194 = vmatprep.subr.mxu0 0.0
  %2195 = vmatpush1.msra.mxu0 0.0
  %2196 = vmatprep.subr.mxu0 0.0
  %2197 = vmatpush1.msra.mxu0 0.0
  %2198 = vmatprep.subr.mxu0 0.0
  %2199 = vmatpush1.msra.mxu0 0.0
  %2200 = vmatprep.subr.mxu0 0.0
  %2201 = vmatpush1.msra.mxu0 0.0
  %2202 = vmatprep.mubr.f32.mxu0 0.0
  %2203 = vmatmul.mubr.f32.gmra.mrb[0].mxu0 %v2066
  %v2204 = vpop.f32.mrb[0].mxu0
  %v2205 = vadd.f32 %v2126, %v2204
  %v2206 = vpop.f32.mrb[0].mxu0
  %v2207 = vadd.f32 %v2130, %v2206
  %2208 = vdwg.mxu0
  %2209 = vmatprep.subr.mxu0 0.0
  %2210 = vmatpush1.msra.mxu0 %v2075
  %2211 = vmatprep.subr.mxu0 0.0
  %2212 = vmatpush1.msra.mxu0 %v2078
  %2213 = vmatprep.subr.mxu0 0.0
  %2214 = vmatpush1.msra.mxu0 %v2081
  %2215 = vmatprep.subr.mxu0 0.0
  %2216 = vmatpush1.msra.mxu0 %v2084
  %2217 = vmatprep.subr.mxu0 0.0
  %2218 = vmatpush1.msra.mxu0 %v2087
  %2219 = vmatprep.subr.mxu0 0.0
  %2220 = vmatpush1.msra.mxu0 %v2090
  %2221 = vmatprep.subr.mxu0 0.0
  %2222 = vmatpush1.msra.mxu0 %v2093
  %2223 = vmatprep.subr.mxu0 0.0
  %2224 = vmatpush1.msra.mxu0 %v2096
  %2225 = vmatprep.subr.mxu0 0.0
  %2226 = vmatpush1.msra.mxu0 %v2099
  %2227 = vmatprep.subr.mxu0 0.0
  %2228 = vmatpush1.msra.mxu0 %v2102
  %2229 = vmatprep.subr.mxu0 0.0
  %2230 = vmatpush1.msra.mxu0 %v2105
  %2231 = vmatprep.subr.mxu0 0.0
  %2232 = vmatpush1.msra.mxu0 %v2108
  %2233 = vmatprep.subr.mxu0 0.0
  %2234 = vmatpush1.msra.mxu0 %v2111
  %2235 = vmatprep.subr.mxu0 0.0
  %2236 = vmatpush1.msra.mxu0 %v2114
  %2237 = vmatprep.subr.mxu0 0.0
  %2238 = vmatpush1.msra.mxu0 %v2117
  %2239 = vmatprep.subr.mxu0 0.0
  %2240 = vmatpush1.msra.mxu0 %v2120
  %2241 = vmatprep.subr.mxu0 0.0
  %2242 = vmatpush1.msra.mxu0 0.0
  %2243 = vmatprep.subr.mxu0 0.0
  %2244 = vmatpush1.msra.mxu0 0.0
  %2245 = vmatprep.subr.mxu0 0.0
  %2246 = vmatpush1.msra.mxu0 0.0
  %2247 = vmatprep.subr.mxu0 0.0
  %2248 = vmatpush1.msra.mxu0 0.0
  %2249 = vmatprep.subr.mxu0 0.0
  %2250 = vmatpush1.msra.mxu0 0.0
  %2251 = vmatprep.subr.mxu0 0.0
  %2252 = vmatpush1.msra.mxu0 0.0
  %2253 = vmatprep.subr.mxu0 0.0
  %2254 = vmatpush1.msra.mxu0 0.0
  %2255 = vmatprep.subr.mxu0 0.0
  %2256 = vmatpush1.msra.mxu0 0.0
  %2257 = vmatprep.subr.mxu0 0.0
  %2258 = vmatpush1.msra.mxu0 0.0
  %2259 = vmatprep.subr.mxu0 0.0
  %2260 = vmatpush1.msra.mxu0 0.0
  %2261 = vmatprep.subr.mxu0 0.0
  %2262 = vmatpush1.msra.mxu0 0.0
  %2263 = vmatprep.subr.mxu0 0.0
  %2264 = vmatpush1.msra.mxu0 0.0
  %2265 = vmatprep.subr.mxu0 0.0
  %2266 = vmatpush1.msra.mxu0 0.0
  %2267 = vmatprep.subr.mxu0 0.0
  %2268 = vmatpush1.msra.mxu0 0.0
  %2269 = vmatprep.subr.mxu0 0.0
  %2270 = vmatpush1.msra.mxu0 0.0
  %2271 = vmatprep.subr.mxu0 0.0
  %2272 = vmatpush1.msra.mxu0 0.0
  %2273 = vmatprep.mubr.f32.mxu0 0.0
  %2274 = vmatmul.mubr.f32.gmra.mrb[0].mxu0 %v2066
  %v2275 = vpop.f32.mrb[0].mxu0
  %v2276 = vadd.f32 %v2134, %v2275
  %v2277 = vpop.f32.mrb[0].mxu0
  %2278 = vdwg.mxu0
  %v2279 = vadd.f32 %v2070, %v2205
  %v2280 = vxor.u32 %v2279, 2147483648
  %v2281 = vmul.f32 %v2280, 1.442695
  %v2282 = vpow.pop %v2281
  %v2283 = vadd.f32 %v2282, 1.0
  %v2284 = vrcp.pop %v2283
  %v2285 = vmul.f32 1.0, %v2284
  %v2286 = vadd.f32 %v2071, %v2207
  %v2287 = vxor.u32 %v2286, 2147483648
  %v2288 = vmul.f32 %v2287, 1.442695
  %v2289 = vpow.pop %v2288
  %v2290 = vadd.f32 %v2289, 1.0
  %v2291 = vrcp.pop %v2290
  %v2292 = vmul.f32 1.0, %v2291
  %v2293 = vmul.f32 %v2285, %v2276
  %v2294 = vadd.f32 %v2072, %v2293
  %v2295 = vtanh.pop %v2294
  %v2296 = vsub.f32 1.0, %v2292
  %v2297 = vmul.f32 %v2296, %v2295
  %v2298 = vmul.f32 %v2292, %v2066
  %v2299 = vadd.f32 %v2297, %v2298
  %s2300 = scalar_lea.vmem %s1, 56
  %v2301 = vld [vmem:[%s2300] sm:$0xff]
  %2303 = vset.pattern.permute.xlu0 0
  %2304 = vperm.xlu0 %2303, %v2301
  %v2305 = vpop.permute.xlu0 %2304
  %v2307 = vmul.f32 %v2305, %v2299
  %v2308 = vsub.f32 1.0, %v2301
  %2310 = vset.pattern.permute.xlu0 0
  %2311 = vperm.xlu0 %2310, %v2308
  %v2312 = vpop.permute.xlu0 %2311
  %v2314 = vmul.f32 %v2312, %v2066
  %v2315 = vadd.f32 %v2307, %v2314
  %s2316 = scalar_lea.vmem %s6, 56
  %2317 = vst [vmem:[%s2316] sm:$0xff] %v2307
  %2318 = vst [vmem:[%s7] sm:$0xff] %v2315
  // Predicated region
  $region26: #{_seq2seq_apply.2} parent=0 // pred_check
    _
  $region27: #{_seq2seq_apply.2} parent=0 // pred_check_branch
    %2320 = sbr.rel (0) target = $region29
  $region28: #{_seq2seq_apply.2} parent=0 // pred_region
    _
  $region29: #{_seq2seq_apply.2} parent=0 // pred_fallthru
    _
  // Predicated region
  $region30: #{_seq2seq_apply.2} parent=0 // pred_check
    _
  $region31: #{_seq2seq_apply.2} parent=0 // pred_check_branch
    %2322 = sbr.rel (0) target = $region33
  $region32: #{_seq2seq_apply.2} parent=0 // pred_region
    _
  $region33: #{_seq2seq_apply.2} parent=0 // pred_fallthru
    _
  // Predicated region
  $region34: #{_seq2seq_apply.2} parent=0 // pred_check
    _
  $region35: #{_seq2seq_apply.2} parent=0 // pred_check_branch
    %2324 = sbr.rel (0) target = $region37
  $region36: #{_seq2seq_apply.2} parent=0 // pred_region
    _
  $region37: #{_seq2seq_apply.2} parent=0 // pred_fallthru
    _
  // Predicated region
  $region38: #{_seq2seq_apply.2} parent=0 // pred_check
    _
  $region39: #{_seq2seq_apply.2} parent=0 // pred_check_branch
    %2326 = sbr.rel (0) target = $region41
  $region40: #{_seq2seq_apply.2} parent=0 // pred_region
    _
  $region41: #{_seq2seq_apply.2} parent=0 // pred_fallthru
    _

// kernel: _seq2seq_apply.3
$region0: #{_seq2seq_apply.3}
  #allocation0 [shape = 'u32[]', space=smem, size = 0x4, offset = 0x4, fixed_abs, tag = 'smem constant byte address 0x4 - core index']
  #allocation1 [shape = 'u32[144,128]{1,0:T(1,128)}', space=vmem, size = 0x12000, scoped, tag = 'internal scratch']
  #allocation2 [shape = 'f32[8,8,128]{2,1,0:T(8,128)}', space=vmem, size = 0x8000, scoped, tag = 'scratch operand']
  %s0 = inlined_call_operand.vmem [shape: s32[5], index: 0, kind: input, shape index: {}]
  %s1 = inlined_call_operand.vmem [shape: f32[5,8,32], index: 1, kind: input, shape index: {}]
  %s2 = inlined_call_operand.vmem [shape: f32[8,128], index: 2, kind: input, shape index: {}]
  %s3 = inlined_call_operand.vmem [shape: f32[8,8,128], index: 3, kind: input, shape index: {}]
  %s4 = inlined_call_operand.vmem [shape: f32[8,8], index: 4, kind: input, shape index: {}]
  %s5 = inlined_call_operand.vmem [shape: f32[128,128], index: 5, kind: input, shape index: {}]
  %s6 = inlined_call_operand.vmem [shape: f32[128,128], index: 6, kind: input, shape index: {}]
  %s7 = inlined_call_operand.vmem [shape: f32[1,128], index: 7, kind: input, shape index: {}]
  %s8 = inlined_call_operand.vmem [shape: f32[1,128], index: 8, kind: input, shape index: {}]
  %s9 = inlined_call_operand.vmem [shape: f32[32,384], index: 9, kind: input, shape index: {}]
  %s10 = inlined_call_operand.vmem [shape: f32[128,384], index: 10, kind: input, shape index: {}]
  %s11 = inlined_call_operand.vmem [shape: f32[128,384], index: 11, kind: input, shape index: {}]
  %s12 = inlined_call_operand.vmem [shape: f32[1,384], index: 12, kind: input, shape index: {}]
  %s13 = inlined_call_operand.vmem [shape: f32[1,384], index: 13, kind: input, shape index: {}]
  %s14 = inlined_call_operand.vmem [shape: f32[128,128], index: 14, kind: input, shape index: {}]
  %s15 = inlined_call_operand.vmem [shape: f32[128,128], index: 15, kind: input, shape index: {}]
  %s16 = inlined_call_operand.vmem [shape: f32[32,128], index: 16, kind: input, shape index: {}]
  %s17 = inlined_call_operand.vmem [shape: f32[1,128], index: 17, kind: input, shape index: {}]
  %s18 = inlined_call_operand.vmem [shape: f32[128,32], index: 18, kind: input, shape index: {}]
  %s19 = inlined_call_operand.vmem [shape: f32[5,8,128], index: 19, kind: output, shape index: {}]
  %s20 = sld [smem:[#allocation0]]
  $region90: #{_seq2seq_apply.3} parent=0
    _
  %s22 = ssub.s32 1, %s20
  %s23 = scalar_select 0, %s22, %s20
  $region1: #{_seq2seq_apply.3} parent=0
    #allocation3 [shape = 'u8[512]{0}', space=smem, size = 0x200, scoped, tag = 'input window, operand 0, single buffered']
    #allocation4 [shape = 's32[1]{0}', space=sflag, size = 0x4, scoped, tag = 'scoped memory for _seq2seq_apply.3']
    %24 = vsyncpa [#allocation4], 0
    // Predicated region
    $region2: #{_seq2seq_apply.3} parent=1 // pred_check
      _
    $region3: #{_seq2seq_apply.3} parent=1 // pred_check_branch
      %26 = sbr.rel (0) target = $region5
    $region4: #{_seq2seq_apply.3} parent=1 // pred_region
      %s28 = ssub.s32 16, 16
      %29 = vsyncadd [#allocation4], %s28
      %s31 = sshll.u32 %s0, 4
      %s32 = int_to_ptr.vmem [resolvable:$true] %s31
      %34 = dma.vmem_to_smem %s32, 16, [#allocation3], [#allocation4]
    $region5: #{_seq2seq_apply.3} parent=1 // pred_fallthru
      _
    // Predicated region
    $region6: #{_seq2seq_apply.3} parent=1 // pred_check
      _
    $region7: #{_seq2seq_apply.3} parent=1 // pred_check_branch
      %36 = sbr.rel (0) target = $region9
    $region8: #{_seq2seq_apply.3} parent=1 // pred_region
      _
    $region9: #{_seq2seq_apply.3} parent=1 // pred_fallthru
      _
    // Predicated region
    $region10: #{_seq2seq_apply.3} parent=1 // pred_check
      _
    $region11: #{_seq2seq_apply.3} parent=1 // pred_check_branch
      %38 = sbr.rel (0) target = $region13
    $region12: #{_seq2seq_apply.3} parent=1 // pred_region
      _
    $region13: #{_seq2seq_apply.3} parent=1 // pred_fallthru
      _
    // Predicated region
    $region14: #{_seq2seq_apply.3} parent=1 // pred_check
      _
    $region15: #{_seq2seq_apply.3} parent=1 // pred_check_branch
      %40 = sbr.rel (0) target = $region17
    $region16: #{_seq2seq_apply.3} parent=1 // pred_region
      _
    $region17: #{_seq2seq_apply.3} parent=1 // pred_fallthru
      _
    // Predicated region
    $region18: #{_seq2seq_apply.3} parent=1 // pred_check
      _
    $region19: #{_seq2seq_apply.3} parent=1 // pred_check_branch
      %42 = sbr.rel (0) target = $region21
    $region20: #{_seq2seq_apply.3} parent=1 // pred_region
      _
    $region21: #{_seq2seq_apply.3} parent=1 // pred_fallthru
      _
    // Predicated region
    $region22: #{_seq2seq_apply.3} parent=1 // pred_check
      _
    $region23: #{_seq2seq_apply.3} parent=1 // pred_check_branch
      %44 = sbr.rel (0) target = $region25
    $region24: #{_seq2seq_apply.3} parent=1 // pred_region
      _
    $region25: #{_seq2seq_apply.3} parent=1 // pred_fallthru
      _
    // Predicated region
    $region26: #{_seq2seq_apply.3} parent=1 // pred_check
      _
    $region27: #{_seq2seq_apply.3} parent=1 // pred_check_branch
      %46 = sbr.rel (0) target = $region29
    $region28: #{_seq2seq_apply.3} parent=1 // pred_region
      _
    $region29: #{_seq2seq_apply.3} parent=1 // pred_fallthru
      _
    // Predicated region
    $region30: #{_seq2seq_apply.3} parent=1 // pred_check
      _
    $region31: #{_seq2seq_apply.3} parent=1 // pred_check_branch
      %48 = sbr.rel (0) target = $region33
    $region32: #{_seq2seq_apply.3} parent=1 // pred_region
      _
    $region33: #{_seq2seq_apply.3} parent=1 // pred_fallthru
      _
    // Predicated region
    $region34: #{_seq2seq_apply.3} parent=1 // pred_check
      _
    $region35: #{_seq2seq_apply.3} parent=1 // pred_check_branch
      %50 = sbr.rel (0) target = $region37
    $region36: #{_seq2seq_apply.3} parent=1 // pred_region
      _
    $region37: #{_seq2seq_apply.3} parent=1 // pred_fallthru
      _
    // Predicated region
    $region38: #{_seq2seq_apply.3} parent=1 // pred_check
      _
    $region39: #{_seq2seq_apply.3} parent=1 // pred_check_branch
      %52 = sbr.rel (0) target = $region41
    $region40: #{_seq2seq_apply.3} parent=1 // pred_region
      _
    $region41: #{_seq2seq_apply.3} parent=1 // pred_fallthru
      _
    // Predicated region
    $region42: #{_seq2seq_apply.3} parent=1 // pred_check
      _
    $region43: #{_seq2seq_apply.3} parent=1 // pred_check_branch
      %54 = sbr.rel (0) target = $region45
    $region44: #{_seq2seq_apply.3} parent=1 // pred_region
      _
    $region45: #{_seq2seq_apply.3} parent=1 // pred_fallthru
      _
    // Predicated region
    $region46: #{_seq2seq_apply.3} parent=1 // pred_check
      _
    $region47: #{_seq2seq_apply.3} parent=1 // pred_check_branch
      %56 = sbr.rel (0) target = $region49
    $region48: #{_seq2seq_apply.3} parent=1 // pred_region
      _
    $region49: #{_seq2seq_apply.3} parent=1 // pred_fallthru
      _
    // Predicated region
    $region50: #{_seq2seq_apply.3} parent=1 // pred_check
      _
    $region51: #{_seq2seq_apply.3} parent=1 // pred_check_branch
      %58 = sbr.rel (0) target = $region53
    $region52: #{_seq2seq_apply.3} parent=1 // pred_region
      _
    $region53: #{_seq2seq_apply.3} parent=1 // pred_fallthru
      _
    // Predicated region
    $region54: #{_seq2seq_apply.3} parent=1 // pred_check
      _
    $region55: #{_seq2seq_apply.3} parent=1 // pred_check_branch
      %60 = sbr.rel (0) target = $region57
    $region56: #{_seq2seq_apply.3} parent=1 // pred_region
      _
    $region57: #{_seq2seq_apply.3} parent=1 // pred_fallthru
      _
    // Predicated region
    $region58: #{_seq2seq_apply.3} parent=1 // pred_check
      _
    $region59: #{_seq2seq_apply.3} parent=1 // pred_check_branch
      %62 = sbr.rel (0) target = $region61
    $region60: #{_seq2seq_apply.3} parent=1 // pred_region
      _
    $region61: #{_seq2seq_apply.3} parent=1 // pred_fallthru
      _
    // Predicated region
    $region62: #{_seq2seq_apply.3} parent=1 // pred_check
      _
    $region63: #{_seq2seq_apply.3} parent=1 // pred_check_branch
      %64 = sbr.rel (0) target = $region65
    $region64: #{_seq2seq_apply.3} parent=1 // pred_region
      _
    $region65: #{_seq2seq_apply.3} parent=1 // pred_fallthru
      _
    // Predicated region
    $region66: #{_seq2seq_apply.3} parent=1 // pred_check
      _
    $region67: #{_seq2seq_apply.3} parent=1 // pred_check_branch
      %66 = sbr.rel (0) target = $region69
    $region68: #{_seq2seq_apply.3} parent=1 // pred_region
      _
    $region69: #{_seq2seq_apply.3} parent=1 // pred_fallthru
      _
    // Predicated region
    $region70: #{_seq2seq_apply.3} parent=1 // pred_check
      _
    $region71: #{_seq2seq_apply.3} parent=1 // pred_check_branch
      %68 = sbr.rel (0) target = $region73
    $region72: #{_seq2seq_apply.3} parent=1 // pred_region
      _
    $region73: #{_seq2seq_apply.3} parent=1 // pred_fallthru
      _
    // Predicated region
    $region74: #{_seq2seq_apply.3} parent=1 // pred_check
      _
    $region75: #{_seq2seq_apply.3} parent=1 // pred_check_branch
      %70 = sbr.rel (0) target = $region77
    $region76: #{_seq2seq_apply.3} parent=1 // pred_region
      _
    $region77: #{_seq2seq_apply.3} parent=1 // pred_fallthru
      _
    // Predicated region
    $region78: #{_seq2seq_apply.3} parent=1 // pred_check
      _
    $region79: #{_seq2seq_apply.3} parent=1 // pred_check_branch
      %72 = sbr.rel (0) target = $region81
    $region80: #{_seq2seq_apply.3} parent=1 // pred_region
      %73 = dma.done [#allocation4], 16
    $region81: #{_seq2seq_apply.3} parent=1 // pred_fallthru
      _
    %74 = sfence
    %v75 = vld [vmem:[%s3] sm:$0xff]
    %v76 = vld [vmem:[%s3 + $0x8] sm:$0xff]
    %v77 = vld [vmem:[%s3 + $0x10] sm:$0xff]
    %v78 = vld [vmem:[%s3 + $0x18] sm:$0xff]
    %v79 = vld [vmem:[%s3 + $0x20] sm:$0xff]
    %v80 = vld [vmem:[%s3 + $0x28] sm:$0xff]
    %v81 = vld [vmem:[%s3 + $0x30] sm:$0xff]
    %v82 = vld [vmem:[%s3 + $0x38] sm:$0xff]
    %v83 = vld [vmem:[%s6] sm:$0xff]
    %v84 = vld [vmem:[%s6 + $0x8] sm:$0xff]
    %v85 = vld [vmem:[%s6 + $0x10] sm:$0xff]
    %v86 = vld [vmem:[%s6 + $0x18] sm:$0xff]
    %v87 = vld [vmem:[%s6 + $0x20] sm:$0xff]
    %v88 = vld [vmem:[%s6 + $0x28] sm:$0xff]
    %v89 = vld [vmem:[%s6 + $0x30] sm:$0xff]
    %v90 = vld [vmem:[%s6 + $0x38] sm:$0xff]
    %v91 = vld [vmem:[%s6 + $0x40] sm:$0xff]
    %v92 = vld [vmem:[%s6 + $0x48] sm:$0xff]
    %v93 = vld [vmem:[%s6 + $0x50] sm:$0xff]
    %v94 = vld [vmem:[%s6 + $0x58] sm:$0xff]
    %v95 = vld [vmem:[%s6 + $0x60] sm:$0xff]
    %v96 = vld [vmem:[%s6 + $0x68] sm:$0xff]
    %v97 = vld [vmem:[%s6 + $0x70] sm:$0xff]
    %v98 = vld [vmem:[%s6 + $0x78] sm:$0xff]
    %v99 = vld [vmem:[%s7] sm:$0x1]
    %v101 = vlaneseq
    %v102 = vshrl.u32 %v101, 7
    %v103 = vsub.s32 0, %v102
    %v104 = vrot.slane %v99, %v103
    %106 = vmatprep.subr.mxu0 0.0
    %107 = vmatpush1.msra.mxu0 %v83
    %108 = vmatprep.subr.mxu0 0.0
    %109 = vmatpush1.msra.mxu0 %v84
    %110 = vmatprep.subr.mxu0 0.0
    %111 = vmatpush1.msra.mxu0 %v85
    %112 = vmatprep.subr.mxu0 0.0
    %113 = vmatpush1.msra.mxu0 %v86
    %114 = vmatprep.subr.mxu0 0.0
    %115 = vmatpush1.msra.mxu0 %v87
    %116 = vmatprep.subr.mxu0 0.0
    %117 = vmatpush1.msra.mxu0 %v88
    %118 = vmatprep.subr.mxu0 0.0
    %119 = vmatpush1.msra.mxu0 %v89
    %120 = vmatprep.subr.mxu0 0.0
    %121 = vmatpush1.msra.mxu0 %v90
    %122 = vmatprep.subr.mxu0 0.0
    %123 = vmatpush1.msra.mxu0 %v91
    %124 = vmatprep.subr.mxu0 0.0
    %125 = vmatpush1.msra.mxu0 %v92
    %126 = vmatprep.subr.mxu0 0.0
    %127 = vmatpush1.msra.mxu0 %v93
    %128 = vmatprep.subr.mxu0 0.0
    %129 = vmatpush1.msra.mxu0 %v94
    %130 = vmatprep.subr.mxu0 0.0
    %131 = vmatpush1.msra.mxu0 %v95
    %132 = vmatprep.subr.mxu0 0.0
    %133 = vmatpush1.msra.mxu0 %v96
    %134 = vmatprep.subr.mxu0 0.0
    %135 = vmatpush1.msra.mxu0 %v97
    %136 = vmatprep.subr.mxu0 0.0
    %137 = vmatpush1.msra.mxu0 %v98
    %138 = vmatprep.subr.mxu0 0.0
    %139 = vmatpush1.msra.mxu0 0.0
    %140 = vmatprep.subr.mxu0 0.0
    %141 = vmatpush1.msra.mxu0 0.0
    %142 = vmatprep.subr.mxu0 0.0
    %143 = vmatpush1.msra.mxu0 0.0
    %144 = vmatprep.subr.mxu0 0.0
    %145 = vmatpush1.msra.mxu0 0.0
    %146 = vmatprep.subr.mxu0 0.0
    %147 = vmatpush1.msra.mxu0 0.0
    %148 = vmatprep.subr.mxu0 0.0
    %149 = vmatpush1.msra.mxu0 0.0
    %150 = vmatprep.subr.mxu0 0.0
    %151 = vmatpush1.msra.mxu0 0.0
    %152 = vmatprep.subr.mxu0 0.0
    %153 = vmatpush1.msra.mxu0 0.0
    %154 = vmatprep.subr.mxu0 0.0
    %155 = vmatpush1.msra.mxu0 0.0
    %156 = vmatprep.subr.mxu0 0.0
    %157 = vmatpush1.msra.mxu0 0.0
    %158 = vmatprep.subr.mxu0 0.0
    %159 = vmatpush1.msra.mxu0 0.0
    %160 = vmatprep.subr.mxu0 0.0
    %161 = vmatpush1.msra.mxu0 0.0
    %162 = vmatprep.subr.mxu0 0.0
    %163 = vmatpush1.msra.mxu0 0.0
    %164 = vmatprep.subr.mxu0 0.0
    %165 = vmatpush1.msra.mxu0 0.0
    %166 = vmatprep.subr.mxu0 0.0
    %167 = vmatpush1.msra.mxu0 0.0
    %168 = vmatprep.subr.mxu0 0.0
    %169 = vmatpush1.msra.mxu0 0.0
    %170 = vmatprep.mubr.f32.mxu0 0.0
    %171 = vmatmul.mubr.f32.gmra.mrb[0].mxu0 %v75
    %v172 = vpop.f32.mrb[0].mxu0
    %v173 = vadd.f32 %v104, %v172
    %v174 = vpop.f32.mrb[0].mxu0
    %175 = vmatprep.mubr.f32.mxu0 0.0
    %176 = vmatmul.mubr.f32.gmra.mrb[0].mxu0 %v76
    %v177 = vpop.f32.mrb[0].mxu0
    %v178 = vadd.f32 %v104, %v177
    %v179 = vpop.f32.mrb[0].mxu0
    %180 = vmatprep.mubr.f32.mxu0 0.0
    %181 = vmatmul.mubr.f32.gmra.mrb[0].mxu0 %v77
    %v182 = vpop.f32.mrb[0].mxu0
    %v183 = vadd.f32 %v104, %v182
    %v184 = vpop.f32.mrb[0].mxu0
    %185 = vmatprep.mubr.f32.mxu0 0.0
    %186 = vmatmul.mubr.f32.gmra.mrb[0].mxu0 %v78
    %v187 = vpop.f32.mrb[0].mxu0
    %v188 = vadd.f32 %v104, %v187
    %v189 = vpop.f32.mrb[0].mxu0
    %190 = vmatprep.mubr.f32.mxu0 0.0
    %191 = vmatmul.mubr.f32.gmra.mrb[0].mxu0 %v79
    %v192 = vpop.f32.mrb[0].mxu0
    %v193 = vadd.f32 %v104, %v192
    %v194 = vpop.f32.mrb[0].mxu0
    %195 = vmatprep.mubr.f32.mxu0 0.0
    %196 = vmatmul.mubr.f32.gmra.mrb[0].mxu0 %v80
    %v197 = vpop.f32.mrb[0].mxu0
    %v198 = vadd.f32 %v104, %v197
    %v199 = vpop.f32.mrb[0].mxu0
    %200 = vmatprep.mubr.f32.mxu0 0.0
    %201 = vmatmul.mubr.f32.gmra.mrb[0].mxu0 %v81
    %v202 = vpop.f32.mrb[0].mxu0
    %v203 = vadd.f32 %v104, %v202
    %v204 = vpop.f32.mrb[0].mxu0
    %205 = vmatprep.mubr.f32.mxu0 0.0
    %206 = vmatmul.mubr.f32.gmra.mrb[0].mxu0 %v82
    %v207 = vpop.f32.mrb[0].mxu0
    %v208 = vadd.f32 %v104, %v207
    %v209 = vpop.f32.mrb[0].mxu0
    %210 = vdwg.mxu0
    %211 = vst [vmem:[#allocation2] sm:$0xff] %v173
    %212 = vst [vmem:[#allocation2 + $0x8] sm:$0xff] %v178
    %213 = vst [vmem:[#allocation2 + $0x10] sm:$0xff] %v183
    %214 = vst [vmem:[#allocation2 + $0x18] sm:$0xff] %v188
    %215 = vst [vmem:[#allocation2 + $0x20] sm:$0xff] %v193
    %216 = vst [vmem:[#allocation2 + $0x28] sm:$0xff] %v198
    %217 = vst [vmem:[#allocation2 + $0x30] sm:$0xff] %v203
    %218 = vst [vmem:[#allocation2 + $0x38] sm:$0xff] %v208
    %v219 = vld [vmem:[%s2] sm:$0xff]
    %s220 = sld [smem:[#allocation3]]
    %s221 = scvt.s32.f32 %s220
    %v222 = vld [vmem:[%s1] sm:$0xff]
    %v223 = vstv %s221
    %v224 = vmul.f32 %v223, %v222
    %s225 = ssub.f32 1.0, %s221
    %v226 = vstv %s225
    %v227 = vmul.f32 %v226, 0.0
    %v228 = vadd.f32 %v224, %v227
    %v229 = vld [vmem:[%s5] sm:$0xff]
    %v230 = vld [vmem:[%s5 + $0x8] sm:$0xff]
    %v231 = vld [vmem:[%s5 + $0x10] sm:$0xff]
    %v232 = vld [vmem:[%s5 + $0x18] sm:$0xff]
    %v233 = vld [vmem:[%s5 + $0x20] sm:$0xff]
    %v234 = vld [vmem:[%s5 + $0x28] sm:$0xff]
    %v235 = vld [vmem:[%s5 + $0x30] sm:$0xff]
    %v236 = vld [vmem:[%s5 + $0x38] sm:$0xff]
    %v237 = vld [vmem:[%s5 + $0x40] sm:$0xff]
    %v238 = vld [vmem:[%s5 + $0x48] sm:$0xff]
    %v239 = vld [vmem:[%s5 + $0x50] sm:$0xff]
    %v240 = vld [vmem:[%s5 + $0x58] sm:$0xff]
    %v241 = vld [vmem:[%s5 + $0x60] sm:$0xff]
    %v242 = vld [vmem:[%s5 + $0x68] sm:$0xff]
    %v243 = vld [vmem:[%s5 + $0x70] sm:$0xff]
    %v244 = vld [vmem:[%s5 + $0x78] sm:$0xff]
    %245 = vmatprep.subr.mxu0 0.0
    %246 = vmatpush1.msra.mxu0 %v229
    %247 = vmatprep.subr.mxu0 0.0
    %248 = vmatpush1.msra.mxu0 %v230
    %249 = vmatprep.subr.mxu0 0.0
    %250 = vmatpush1.msra.mxu0 %v231
    %251 = vmatprep.subr.mxu0 0.0
    %252 = vmatpush1.msra.mxu0 %v232
    %253 = vmatprep.subr.mxu0 0.0
    %254 = vmatpush1.msra.mxu0 %v233
    %255 = vmatprep.subr.mxu0 0.0
    %256 = vmatpush1.msra.mxu0 %v234
    %257 = vmatprep.subr.mxu0 0.0
    %258 = vmatpush1.msra.mxu0 %v235
    %259 = vmatprep.subr.mxu0 0.0
    %260 = vmatpush1.msra.mxu0 %v236
    %261 = vmatprep.subr.mxu0 0.0
    %262 = vmatpush1.msra.mxu0 %v237
    %263 = vmatprep.subr.mxu0 0.0
    %264 = vmatpush1.msra.mxu0 %v238
    %265 = vmatprep.subr.mxu0 0.0
    %266 = vmatpush1.msra.mxu0 %v239
    %267 = vmatprep.subr.mxu0 0.0
    %268 = vmatpush1.msra.mxu0 %v240
    %269 = vmatprep.subr.mxu0 0.0
    %270 = vmatpush1.msra.mxu0 %v241
    %271 = vmatprep.subr.mxu0 0.0
    %272 = vmatpush1.msra.mxu0 %v242
    %273 = vmatprep.subr.mxu0 0.0
    %274 = vmatpush1.msra.mxu0 %v243
    %275 = vmatprep.subr.mxu0 0.0
    %276 = vmatpush1.msra.mxu0 %v244
    %277 = vmatprep.subr.mxu0 0.0
    %278 = vmatpush1.msra.mxu0 0.0
    %279 = vmatprep.subr.mxu0 0.0
    %280 = vmatpush1.msra.mxu0 0.0
    %281 = vmatprep.subr.mxu0 0.0
    %282 = vmatpush1.msra.mxu0 0.0
    %283 = vmatprep.subr.mxu0 0.0
    %284 = vmatpush1.msra.mxu0 0.0
    %285 = vmatprep.subr.mxu0 0.0
    %286 = vmatpush1.msra.mxu0 0.0
    %287 = vmatprep.subr.mxu0 0.0
    %288 = vmatpush1.msra.mxu0 0.0
    %289 = vmatprep.subr.mxu0 0.0
    %290 = vmatpush1.msra.mxu0 0.0
    %291 = vmatprep.subr.mxu0 0.0
    %292 = vmatpush1.msra.mxu0 0.0
    %293 = vmatprep.subr.mxu0 0.0
    %294 = vmatpush1.msra.mxu0 0.0
    %295 = vmatprep.subr.mxu0 0.0
    %296 = vmatpush1.msra.mxu0 0.0
    %297 = vmatprep.subr.mxu0 0.0
    %298 = vmatpush1.msra.mxu0 0.0
    %299 = vmatprep.subr.mxu0 0.0
    %300 = vmatpush1.msra.mxu0 0.0
    %301 = vmatprep.subr.mxu0 0.0
    %302 = vmatpush1.msra.mxu0 0.0
    %303 = vmatprep.subr.mxu0 0.0
    %304 = vmatpush1.msra.mxu0 0.0
    %305 = vmatprep.subr.mxu0 0.0
    %306 = vmatpush1.msra.mxu0 0.0
    %307 = vmatprep.subr.mxu0 0.0
    %308 = vmatpush1.msra.mxu0 0.0
    %309 = vmatprep.mubr.f32.mxu0 0.0
    %310 = vmatmul.mubr.f32.gmra.mrb[0].mxu0 %v219
    %v311 = vpop.f32.mrb[0].mxu0
    %v312 = vadd.f32 0.0, %v311
    %v313 = vpop.f32.mrb[0].mxu0
    %314 = vdwg.mxu0
    %v315 = vld [vmem:[#allocation2] sm:$0xff]
    %v316 = vld [vmem:[#allocation2 + $0x8] sm:$0xff]
    %v317 = vld [vmem:[#allocation2 + $0x10] sm:$0xff]
    %v318 = vld [vmem:[#allocation2 + $0x18] sm:$0xff]
    %v319 = vld [vmem:[#allocation2 + $0x20] sm:$0xff]
    %v320 = vld [vmem:[#allocation2 + $0x28] sm:$0xff]
    %v321 = vld [vmem:[#allocation2 + $0x30] sm:$0xff]
    %v322 = vld [vmem:[#allocation2 + $0x38] sm:$0xff]
    %v323 = vadd.f32 %v312, %v315
    %v324 = vadd.f32 %v312, %v316
    %v325 = vadd.f32 %v312, %v317
    %v326 = vadd.f32 %v312, %v318
    %v327 = vadd.f32 %v312, %v319
    %v328 = vadd.f32 %v312, %v320
    %v329 = vadd.f32 %v312, %v321
    %v330 = vadd.f32 %v312, %v322
    %v331 = vtanh.pop %v323
    %v332 = vtanh.pop %v324
    %v333 = vtanh.pop %v325
    %v334 = vtanh.pop %v326
    %v335 = vtanh.pop %v327
    %v336 = vtanh.pop %v328
    %v337 = vtanh.pop %v329
    %v338 = vtanh.pop %v330
    %v339 = vld [vmem:[%s8] sm:$0x1]
    %v341 = vlaneseq
    %v342 = vshrl.u32 %v341, 7
    %v343 = vsub.s32 0, %v342
    %v344 = vrot.slane %v339, %v343
    %v346 = vmul.f32 %v331, %v344
    %v347 = vmul.f32 %v332, %v344
    %v348 = vmul.f32 %v333, %v344
    %v349 = vmul.f32 %v334, %v344
    %v350 = vmul.f32 %v335, %v344
    %v351 = vmul.f32 %v336, %v344
    %v352 = vmul.f32 %v337, %v344
    %v353 = vmul.f32 %v338, %v344
    %354 = vadd.xlane.f32.xlu0 %v346
    %v355 = vpop.xlane.xlu0 %354
    %356 = vadd.xlane.f32.xlu0 %v347
    %v357 = vpop.xlane.xlu0 %356
    %358 = vadd.xlane.f32.xlu0 %v348
    %v359 = vpop.xlane.xlu0 %358
    %360 = vadd.xlane.f32.xlu0 %v349
    %v361 = vpop.xlane.xlu0 %360
    %362 = vadd.xlane.f32.xlu0 %v350
    %v363 = vpop.xlane.xlu0 %362
    %364 = vadd.xlane.f32.xlu0 %v351
    %v365 = vpop.xlane.xlu0 %364
    %366 = vadd.xlane.f32.xlu0 %v352
    %v367 = vpop.xlane.xlu0 %366
    %368 = vadd.xlane.f32.xlu0 %v353
    %v369 = vpop.xlane.xlu0 %368
    %v370 = vld [vmem:[%s4] sm:$0xff]
    %vm371 = vcmp.gt.f32.partialorder %v370, 0.5
    %v380 = vlaneseq
    %v381 = vand.u32 %v380, 127
    %v382 = vlaneseq
    %v383 = vshrl.u32 %v382, 7
    %v384 = vsub.s32 %v381, %v383
    %v385 = vrot.slane %v355, %v384
    %v386 = vlaneseq
    %v387 = vshrl.u32 %v386, 7
    %v388 = vsub.s32 %v381, %v387
    %v389 = vrot.slane %v357, %v388
    %v390 = vlaneseq
    %v391 = vshrl.u32 %v390, 7
    %v392 = vsub.s32 %v381, %v391
    %v393 = vrot.slane %v359, %v392
    %v394 = vlaneseq
    %v395 = vshrl.u32 %v394, 7
    %v396 = vsub.s32 %v381, %v395
    %v397 = vrot.slane %v361, %v396
    %v398 = vlaneseq
    %v399 = vshrl.u32 %v398, 7
    %v400 = vsub.s32 %v381, %v399
    %v401 = vrot.slane %v363, %v400
    %v402 = vlaneseq
    %v403 = vshrl.u32 %v402, 7
    %v404 = vsub.s32 %v381, %v403
    %v405 = vrot.slane %v365, %v404
    %v406 = vlaneseq
    %v407 = vshrl.u32 %v406, 7
    %v408 = vsub.s32 %v381, %v407
    %v409 = vrot.slane %v367, %v408
    %v410 = vlaneseq
    %v411 = vshrl.u32 %v410, 7
    %v412 = vsub.s32 %v381, %v411
    %v413 = vrot.slane %v369, %v412
    %vm414 = vcmask 1041409
    %v415 = vsel %vm414, %v389, %v385
    %vm416 = vcmask 1042434
    %v417 = vsel %vm416, %v393, %v415
    %vm418 = vcmask 1043459
    %v419 = vsel %vm418, %v397, %v417
    %vm420 = vcmask 1044484
    %v421 = vsel %vm420, %v401, %v419
    %vm422 = vcmask 1045509
    %v423 = vsel %vm422, %v405, %v421
    %vm424 = vcmask 1046534
    %v425 = vsel %vm424, %v409, %v423
    %vm426 = vcmask 1047559
    %v427 = vsel %vm426, %v413, %v425
    %v429 = vsel %vm371, %v427, -1e+10
    %vm430 = vcmask 64512
    %v431 = vsel %vm430, %v429, -inf
    %v432 = vrot.slane %v431, 4
    %v433 = vmax.f32 %v431, %v432
    %v434 = vrot.slane %v433, 2
    %v435 = vmax.f32 %v433, %v434
    %v436 = vrot.slane %v435, 1
    %v437 = vmax.f32 %v435, %v436
    %v438 = vsub.f32 %v429, %v437
    %v439 = vmul.f32 %v438, 1.442695
    %v440 = vpow.pop %v439
    %v441 = vsel %vm430, %v440, 0.0
    %v442 = vrot.slane %v441, 4
    %v443 = vadd.f32 %v441, %v442
    %v444 = vrot.slane %v443, 2
    %v445 = vadd.f32 %v443, %v444
    %v446 = vrot.slane %v445, 1
    %v447 = vadd.f32 %v445, %v446
    %v448 = vrcp.pop %v447
    %v449 = vmul.f32 %v440, %v448
    %v450 = vlaneseq
    %v451 = vshrl.u32 %v450, 7
    %v452 = vsub.s32 0, %v451
    %v453 = vrot.slane %v449, %v452
    %455 = vbcast.lane.b32.xlu0 %v453, 256
    %v456 = vpop.permute.xlu0 %455
    %v457 = vlaneseq
    %v458 = vshrl.u32 %v457, 7
    %v459 = vsub.s32 1, %v458
    %v460 = vrot.slane %v449, %v459
    %462 = vbcast.lane.b32.xlu0 %v460, 256
    %v463 = vpop.permute.xlu0 %462
    %v464 = vlaneseq
    %v465 = vshrl.u32 %v464, 7
    %v466 = vsub.s32 2, %v465
    %v467 = vrot.slane %v449, %v466
    %469 = vbcast.lane.b32.xlu0 %v467, 256
    %v470 = vpop.permute.xlu0 %469
    %v471 = vlaneseq
    %v472 = vshrl.u32 %v471, 7
    %v473 = vsub.s32 3, %v472
    %v474 = vrot.slane %v449, %v473
    %476 = vbcast.lane.b32.xlu0 %v474, 256
    %v477 = vpop.permute.xlu0 %476
    %v478 = vlaneseq
    %v479 = vshrl.u32 %v478, 7
    %v480 = vsub.s32 4, %v479
    %v481 = vrot.slane %v449, %v480
    %483 = vbcast.lane.b32.xlu0 %v481, 256
    %v484 = vpop.permute.xlu0 %483
    %v485 = vlaneseq
    %v486 = vshrl.u32 %v485, 7
    %v487 = vsub.s32 5, %v486
    %v488 = vrot.slane %v449, %v487
    %490 = vbcast.lane.b32.xlu0 %v488, 256
    %v491 = vpop.permute.xlu0 %490
    %v492 = vlaneseq
    %v493 = vshrl.u32 %v492, 7
    %v494 = vsub.s32 6, %v493
    %v495 = vrot.slane %v449, %v494
    %497 = vbcast.lane.b32.xlu0 %v495, 256
    %v498 = vpop.permute.xlu0 %497
    %v499 = vlaneseq
    %v500 = vshrl.u32 %v499, 7
    %v501 = vsub.s32 7, %v500
    %v502 = vrot.slane %v449, %v501
    %504 = vbcast.lane.b32.xlu0 %v502, 256
    %v505 = vpop.permute.xlu0 %504
    %v506 = vld [vmem:[%s3] sm:$0xff]
    %v507 = vld [vmem:[%s3 + $0x8] sm:$0xff]
    %v508 = vld [vmem:[%s3 + $0x10] sm:$0xff]
    %v509 = vld [vmem:[%s3 + $0x18] sm:$0xff]
    %v510 = vld [vmem:[%s3 + $0x20] sm:$0xff]
    %v511 = vld [vmem:[%s3 + $0x28] sm:$0xff]
    %v512 = vld [vmem:[%s3 + $0x30] sm:$0xff]
    %v513 = vld [vmem:[%s3 + $0x38] sm:$0xff]
    %v514 = vmul.f32 %v456, %v506
    %v515 = vmul.f32 %v463, %v507
    %v516 = vmul.f32 %v470, %v508
    %v517 = vmul.f32 %v477, %v509
    %v518 = vmul.f32 %v484, %v510
    %v519 = vmul.f32 %v491, %v511
    %v520 = vmul.f32 %v498, %v512
    %v521 = vmul.f32 %v505, %v513
    %v522 = vadd.f32 %v514, %v515
    %v523 = vadd.f32 %v522, %v516
    %v524 = vadd.f32 %v523, %v517
    %v525 = vadd.f32 %v524, %v518
    %v526 = vadd.f32 %v525, %v519
    %v527 = vadd.f32 %v526, %v520
    %v528 = vadd.f32 %v527, %v521
    %v529 = vld [vmem:[%s9] sm:$0xff]
    %v530 = vld [vmem:[%s9 + $0x8] sm:$0xff]
    %v531 = vld [vmem:[%s9 + $0x10] sm:$0xff]
    %v532 = vld [vmem:[%s9 + $0x18] sm:$0xff]
    %v533 = vld [vmem:[%s9 + $0x20] sm:$0xff]
    %v534 = vld [vmem:[%s9 + $0x28] sm:$0xff]
    %v535 = vld [vmem:[%s9 + $0x30] sm:$0xff]
    %v536 = vld [vmem:[%s9 + $0x38] sm:$0xff]
    %v537 = vld [vmem:[%s9 + $0x40] sm:$0xff]
    %v538 = vld [vmem:[%s9 + $0x48] sm:$0xff]
    %v539 = vld [vmem:[%s9 + $0x50] sm:$0xff]
    %v540 = vld [vmem:[%s9 + $0x58] sm:$0xff]
    %v541 = vld [vmem:[%s10] sm:$0xff]
    %v542 = vld [vmem:[%s10 + $0x8] sm:$0xff]
    %v543 = vld [vmem:[%s10 + $0x10] sm:$0xff]
    %v544 = vld [vmem:[%s10 + $0x18] sm:$0xff]
    %v545 = vld [vmem:[%s10 + $0x20] sm:$0xff]
    %v546 = vld [vmem:[%s10 + $0x28] sm:$0xff]
    %v547 = vld [vmem:[%s10 + $0x30] sm:$0xff]
    %v548 = vld [vmem:[%s10 + $0x38] sm:$0xff]
    %v549 = vld [vmem:[%s10 + $0x40] sm:$0xff]
    %v550 = vld [vmem:[%s10 + $0x48] sm:$0xff]
    %v551 = vld [vmem:[%s10 + $0x50] sm:$0xff]
    %v552 = vld [vmem:[%s10 + $0x58] sm:$0xff]
    %v553 = vld [vmem:[%s10 + $0x60] sm:$0xff]
    %v554 = vld [vmem:[%s10 + $0x68] sm:$0xff]
    %v555 = vld [vmem:[%s10 + $0x70] sm:$0xff]
    %v556 = vld [vmem:[%s10 + $0x78] sm:$0xff]
    %v557 = vld [vmem:[%s10 + $0x80] sm:$0xff]
    %v558 = vld [vmem:[%s10 + $0x88] sm:$0xff]
    %v559 = vld [vmem:[%s10 + $0x90] sm:$0xff]
    %v560 = vld [vmem:[%s10 + $0x98] sm:$0xff]
    %v561 = vld [vmem:[%s10 + $0xa0] sm:$0xff]
    %v562 = vld [vmem:[%s10 + $0xa8] sm:$0xff]
    %v563 = vld [vmem:[%s10 + $0xb0] sm:$0xff]
    %v564 = vld [vmem:[%s10 + $0xb8] sm:$0xff]
    %v565 = vld [vmem:[%s10 + $0xc0] sm:$0xff]
    %v566 = vld [vmem:[%s10 + $0xc8] sm:$0xff]
    %v567 = vld [vmem:[%s10 + $0xd0] sm:$0xff]
    %v568 = vld [vmem:[%s10 + $0xd8] sm:$0xff]
    %v569 = vld [vmem:[%s10 + $0xe0] sm:$0xff]
    %v570 = vld [vmem:[%s10 + $0xe8] sm:$0xff]
    %v571 = vld [vmem:[%s10 + $0xf0] sm:$0xff]
    %v572 = vld [vmem:[%s10 + $0xf8] sm:$0xff]
    %v573 = vld [vmem:[%s10 + $0x100] sm:$0xff]
    %v574 = vld [vmem:[%s10 + $0x108] sm:$0xff]
    %v575 = vld [vmem:[%s10 + $0x110] sm:$0xff]
    %v576 = vld [vmem:[%s10 + $0x118] sm:$0xff]
    %v577 = vld [vmem:[%s10 + $0x120] sm:$0xff]
    %v578 = vld [vmem:[%s10 + $0x128] sm:$0xff]
    %v579 = vld [vmem:[%s10 + $0x130] sm:$0xff]
    %v580 = vld [vmem:[%s10 + $0x138] sm:$0xff]
    %v581 = vld [vmem:[%s10 + $0x140] sm:$0xff]
    %v582 = vld [vmem:[%s10 + $0x148] sm:$0xff]
    %v583 = vld [vmem:[%s10 + $0x150] sm:$0xff]
    %v584 = vld [vmem:[%s10 + $0x158] sm:$0xff]
    %v585 = vld [vmem:[%s10 + $0x160] sm:$0xff]
    %v586 = vld [vmem:[%s10 + $0x168] sm:$0xff]
    %v587 = vld [vmem:[%s10 + $0x170] sm:$0xff]
    %v588 = vld [vmem:[%s10 + $0x178] sm:$0xff]
    %589 = vmatprep.subr.mxu0 %v542
    %590 = vmatpush1.msra.mxu0 %v541
    %591 = vmatprep.subr.mxu0 %v545
    %592 = vmatpush1.msra.mxu0 %v544
    %593 = vmatprep.subr.mxu0 %v548
    %594 = vmatpush1.msra.mxu0 %v547
    %595 = vmatprep.subr.mxu0 %v551
    %596 = vmatpush1.msra.mxu0 %v550
    %597 = vmatprep.subr.mxu0 %v554
    %598 = vmatpush1.msra.mxu0 %v553
    %599 = vmatprep.subr.mxu0 %v557
    %600 = vmatpush1.msra.mxu0 %v556
    %601 = vmatprep.subr.mxu0 %v560
    %602 = vmatpush1.msra.mxu0 %v559
    %603 = vmatprep.subr.mxu0 %v563
    %604 = vmatpush1.msra.mxu0 %v562
    %605 = vmatprep.subr.mxu0 %v566
    %606 = vmatpush1.msra.mxu0 %v565
    %607 = vmatprep.subr.mxu0 %v569
    %608 = vmatpush1.msra.mxu0 %v568
    %609 = vmatprep.subr.mxu0 %v572
    %610 = vmatpush1.msra.mxu0 %v571
    %611 = vmatprep.subr.mxu0 %v575
    %612 = vmatpush1.msra.mxu0 %v574
    %613 = vmatprep.subr.mxu0 %v578
    %614 = vmatpush1.msra.mxu0 %v577
    %615 = vmatprep.subr.mxu0 %v581
    %616 = vmatpush1.msra.mxu0 %v580
    %617 = vmatprep.subr.mxu0 %v584
    %618 = vmatpush1.msra.mxu0 %v583
    %619 = vmatprep.subr.mxu0 %v587
    %620 = vmatpush1.msra.mxu0 %v586
    %621 = vmatprep.subr.mxu0 0.0
    %622 = vmatpush1.msra.mxu0 0.0
    %623 = vmatprep.subr.mxu0 0.0
    %624 = vmatpush1.msra.mxu0 0.0
    %625 = vmatprep.subr.mxu0 0.0
    %626 = vmatpush1.msra.mxu0 0.0
    %627 = vmatprep.subr.mxu0 0.0
    %628 = vmatpush1.msra.mxu0 0.0
    %629 = vmatprep.subr.mxu0 0.0
    %630 = vmatpush1.msra.mxu0 0.0
    %631 = vmatprep.subr.mxu0 0.0
    %632 = vmatpush1.msra.mxu0 0.0
    %633 = vmatprep.subr.mxu0 0.0
    %634 = vmatpush1.msra.mxu0 0.0
    %635 = vmatprep.subr.mxu0 0.0
    %636 = vmatpush1.msra.mxu0 0.0
    %637 = vmatprep.subr.mxu0 0.0
    %638 = vmatpush1.msra.mxu0 0.0
    %639 = vmatprep.subr.mxu0 0.0
    %640 = vmatpush1.msra.mxu0 0.0
    %641 = vmatprep.subr.mxu0 0.0
    %642 = vmatpush1.msra.mxu0 0.0
    %643 = vmatprep.subr.mxu0 0.0
    %644 = vmatpush1.msra.mxu0 0.0
    %645 = vmatprep.subr.mxu0 0.0
    %646 = vmatpush1.msra.mxu0 0.0
    %647 = vmatprep.subr.mxu0 0.0
    %648 = vmatpush1.msra.mxu0 0.0
    %649 = vmatprep.subr.mxu0 0.0
    %650 = vmatpush1.msra.mxu0 0.0
    %651 = vmatprep.subr.mxu0 0.0
    %652 = vmatpush1.msra.mxu0 0.0
    %653 = vmatprep.mubr.f32.mxu0 0.0
    %654 = vmatmul.mubr.f32.gmra.mrb[0].mxu0 %v528
    %v655 = vpop.f32.mrb[0].mxu0
    %v656 = vadd.f32 0.0, %v655
    %v657 = vpop.f32.mrb[0].mxu0
    %v658 = vadd.f32 0.0, %v657
    %659 = vdwg.mxu0
    %660 = vmatprep.subr.mxu0 0.0
    %661 = vmatpush1.msra.mxu0 %v543
    %662 = vmatprep.subr.mxu0 0.0
    %663 = vmatpush1.msra.mxu0 %v546
    %664 = vmatprep.subr.mxu0 0.0
    %665 = vmatpush1.msra.mxu0 %v549
    %666 = vmatprep.subr.mxu0 0.0
    %667 = vmatpush1.msra.mxu0 %v552
    %668 = vmatprep.subr.mxu0 0.0
    %669 = vmatpush1.msra.mxu0 %v555
    %670 = vmatprep.subr.mxu0 0.0
    %671 = vmatpush1.msra.mxu0 %v558
    %672 = vmatprep.subr.mxu0 0.0
    %673 = vmatpush1.msra.mxu0 %v561
    %674 = vmatprep.subr.mxu0 0.0
    %675 = vmatpush1.msra.mxu0 %v564
    %676 = vmatprep.subr.mxu0 0.0
    %677 = vmatpush1.msra.mxu0 %v567
    %678 = vmatprep.subr.mxu0 0.0
    %679 = vmatpush1.msra.mxu0 %v570
    %680 = vmatprep.subr.mxu0 0.0
    %681 = vmatpush1.msra.mxu0 %v573
    %682 = vmatprep.subr.mxu0 0.0
    %683 = vmatpush1.msra.mxu0 %v576
    %684 = vmatprep.subr.mxu0 0.0
    %685 = vmatpush1.msra.mxu0 %v579
    %686 = vmatprep.subr.mxu0 0.0
    %687 = vmatpush1.msra.mxu0 %v582
    %688 = vmatprep.subr.mxu0 0.0
    %689 = vmatpush1.msra.mxu0 %v585
    %690 = vmatprep.subr.mxu0 0.0
    %691 = vmatpush1.msra.mxu0 %v588
    %692 = vmatprep.subr.mxu0 0.0
    %693 = vmatpush1.msra.mxu0 0.0
    %694 = vmatprep.subr.mxu0 0.0
    %695 = vmatpush1.msra.mxu0 0.0
    %696 = vmatprep.subr.mxu0 0.0
    %697 = vmatpush1.msra.mxu0 0.0
    %698 = vmatprep.subr.mxu0 0.0
    %699 = vmatpush1.msra.mxu0 0.0
    %700 = vmatprep.subr.mxu0 0.0
    %701 = vmatpush1.msra.mxu0 0.0
    %702 = vmatprep.subr.mxu0 0.0
    %703 = vmatpush1.msra.mxu0 0.0
    %704 = vmatprep.subr.mxu0 0.0
    %705 = vmatpush1.msra.mxu0 0.0
    %706 = vmatprep.subr.mxu0 0.0
    %707 = vmatpush1.msra.mxu0 0.0
    %708 = vmatprep.subr.mxu0 0.0
    %709 = vmatpush1.msra.mxu0 0.0
    %710 = vmatprep.subr.mxu0 0.0
    %711 = vmatpush1.msra.mxu0 0.0
    %712 = vmatprep.subr.mxu0 0.0
    %713 = vmatpush1.msra.mxu0 0.0
    %714 = vmatprep.subr.mxu0 0.0
    %715 = vmatpush1.msra.mxu0 0.0
    %716 = vmatprep.subr.mxu0 0.0
    %717 = vmatpush1.msra.mxu0 0.0
    %718 = vmatprep.subr.mxu0 0.0
    %719 = vmatpush1.msra.mxu0 0.0
    %720 = vmatprep.subr.mxu0 0.0
    %721 = vmatpush1.msra.mxu0 0.0
    %722 = vmatprep.subr.mxu0 0.0
    %723 = vmatpush1.msra.mxu0 0.0
    %724 = vmatprep.mubr.f32.mxu0 0.0
    %725 = vmatmul.mubr.f32.gmra.mrb[0].mxu0 %v528
    %v726 = vpop.f32.mrb[0].mxu0
    %v727 = vadd.f32 0.0, %v726
    %v728 = vpop.f32.mrb[0].mxu0
    %729 = vdwg.mxu0
    %vm730 = vcmask 261120
    %v732 = vsel %vm730, %v228, 0
    %734 = vmatprep.subr.mxu0 %v530
    %735 = vmatpush1.msra.mxu0 %v529
    %736 = vmatprep.subr.mxu0 %v533
    %737 = vmatpush1.msra.mxu0 %v532
    %738 = vmatprep.subr.mxu0 %v536
    %739 = vmatpush1.msra.mxu0 %v535
    %740 = vmatprep.subr.mxu0 %v539
    %741 = vmatpush1.msra.mxu0 %v538
    %742 = vmatprep.subr.mxu0 0.0
    %743 = vmatpush1.msra.mxu0 0.0
    %744 = vmatprep.subr.mxu0 0.0
    %745 = vmatpush1.msra.mxu0 0.0
    %746 = vmatprep.subr.mxu0 0.0
    %747 = vmatpush1.msra.mxu0 0.0
    %748 = vmatprep.subr.mxu0 0.0
    %749 = vmatpush1.msra.mxu0 0.0
    %750 = vmatprep.subr.mxu0 0.0
    %751 = vmatpush1.msra.mxu0 0.0
    %752 = vmatprep.subr.mxu0 0.0
    %753 = vmatpush1.msra.mxu0 0.0
    %754 = vmatprep.subr.mxu0 0.0
    %755 = vmatpush1.msra.mxu0 0.0
    %756 = vmatprep.subr.mxu0 0.0
    %757 = vmatpush1.msra.mxu0 0.0
    %758 = vmatprep.subr.mxu0 0.0
    %759 = vmatpush1.msra.mxu0 0.0
    %760 = vmatprep.subr.mxu0 0.0
    %761 = vmatpush1.msra.mxu0 0.0
    %762 = vmatprep.subr.mxu0 0.0
    %763 = vmatpush1.msra.mxu0 0.0
    %764 = vmatprep.subr.mxu0 0.0
    %765 = vmatpush1.msra.mxu0 0.0
    %766 = vmatprep.subr.mxu0 0.0
    %767 = vmatpush1.msra.mxu0 0.0
    %768 = vmatprep.subr.mxu0 0.0
    %769 = vmatpush1.msra.mxu0 0.0
    %770 = vmatprep.subr.mxu0 0.0
    %771 = vmatpush1.msra.mxu0 0.0
    %772 = vmatprep.subr.mxu0 0.0
    %773 = vmatpush1.msra.mxu0 0.0
    %774 = vmatprep.subr.mxu0 0.0
    %775 = vmatpush1.msra.mxu0 0.0
    %776 = vmatprep.subr.mxu0 0.0
    %777 = vmatpush1.msra.mxu0 0.0
    %778 = vmatprep.subr.mxu0 0.0
    %779 = vmatpush1.msra.mxu0 0.0
    %780 = vmatprep.subr.mxu0 0.0
    %781 = vmatpush1.msra.mxu0 0.0
    %782 = vmatprep.subr.mxu0 0.0
    %783 = vmatpush1.msra.mxu0 0.0
    %784 = vmatprep.subr.mxu0 0.0
    %785 = vmatpush1.msra.mxu0 0.0
    %786 = vmatprep.subr.mxu0 0.0
    %787 = vmatpush1.msra.mxu0 0.0
    %788 = vmatprep.subr.mxu0 0.0
    %789 = vmatpush1.msra.mxu0 0.0
    %790 = vmatprep.subr.mxu0 0.0
    %791 = vmatpush1.msra.mxu0 0.0
    %792 = vmatprep.subr.mxu0 0.0
    %793 = vmatpush1.msra.mxu0 0.0
    %794 = vmatprep.subr.mxu0 0.0
    %795 = vmatpush1.msra.mxu0 0.0
    %796 = vmatprep.subr.mxu0 0.0
    %797 = vmatpush1.msra.mxu0 0.0
    %798 = vmatprep.mubr.f32.mxu0 0.0
    %799 = vmatmul.mubr.f32.gmra.mrb[0].mxu0 %v732
    %v800 = vpop.f32.mrb[0].mxu0
    %v801 = vadd.f32 %v656, %v800
    %v802 = vpop.f32.mrb[0].mxu0
    %v803 = vadd.f32 %v658, %v802
    %804 = vdwg.mxu0
    %805 = vmatprep.subr.mxu0 0.0
    %806 = vmatpush1.msra.mxu0 %v531
    %807 = vmatprep.subr.mxu0 0.0
    %808 = vmatpush1.msra.mxu0 %v534
    %809 = vmatprep.subr.mxu0 0.0
    %810 = vmatpush1.msra.mxu0 %v537
    %811 = vmatprep.subr.mxu0 0.0
    %812 = vmatpush1.msra.mxu0 %v540
    %813 = vmatprep.subr.mxu0 0.0
    %814 = vmatpush1.msra.mxu0 0.0
    %815 = vmatprep.subr.mxu0 0.0
    %816 = vmatpush1.msra.mxu0 0.0
    %817 = vmatprep.subr.mxu0 0.0
    %818 = vmatpush1.msra.mxu0 0.0
    %819 = vmatprep.subr.mxu0 0.0
    %820 = vmatpush1.msra.mxu0 0.0
    %821 = vmatprep.subr.mxu0 0.0
    %822 = vmatpush1.msra.mxu0 0.0
    %823 = vmatprep.subr.mxu0 0.0
    %824 = vmatpush1.msra.mxu0 0.0
    %825 = vmatprep.subr.mxu0 0.0
    %826 = vmatpush1.msra.mxu0 0.0
    %827 = vmatprep.subr.mxu0 0.0
    %828 = vmatpush1.msra.mxu0 0.0
    %829 = vmatprep.subr.mxu0 0.0
    %830 = vmatpush1.msra.mxu0 0.0
    %831 = vmatprep.subr.mxu0 0.0
    %832 = vmatpush1.msra.mxu0 0.0
    %833 = vmatprep.subr.mxu0 0.0
    %834 = vmatpush1.msra.mxu0 0.0
    %835 = vmatprep.subr.mxu0 0.0
    %836 = vmatpush1.msra.mxu0 0.0
    %837 = vmatprep.subr.mxu0 0.0
    %838 = vmatpush1.msra.mxu0 0.0
    %839 = vmatprep.subr.mxu0 0.0
    %840 = vmatpush1.msra.mxu0 0.0
    %841 = vmatprep.subr.mxu0 0.0
    %842 = vmatpush1.msra.mxu0 0.0
    %843 = vmatprep.subr.mxu0 0.0
    %844 = vmatpush1.msra.mxu0 0.0
    %845 = vmatprep.subr.mxu0 0.0
    %846 = vmatpush1.msra.mxu0 0.0
    %847 = vmatprep.subr.mxu0 0.0
    %848 = vmatpush1.msra.mxu0 0.0
    %849 = vmatprep.subr.mxu0 0.0
    %850 = vmatpush1.msra.mxu0 0.0
    %851 = vmatprep.subr.mxu0 0.0
    %852 = vmatpush1.msra.mxu0 0.0
    %853 = vmatprep.subr.mxu0 0.0
    %854 = vmatpush1.msra.mxu0 0.0
    %855 = vmatprep.subr.mxu0 0.0
    %856 = vmatpush1.msra.mxu0 0.0
    %857 = vmatprep.subr.mxu0 0.0
    %858 = vmatpush1.msra.mxu0 0.0
    %859 = vmatprep.subr.mxu0 0.0
    %860 = vmatpush1.msra.mxu0 0.0
    %861 = vmatprep.subr.mxu0 0.0
    %862 = vmatpush1.msra.mxu0 0.0
    %863 = vmatprep.subr.mxu0 0.0
    %864 = vmatpush1.msra.mxu0 0.0
    %865 = vmatprep.subr.mxu0 0.0
    %866 = vmatpush1.msra.mxu0 0.0
    %867 = vmatprep.subr.mxu0 0.0
    %868 = vmatpush1.msra.mxu0 0.0
    %869 = vmatprep.mubr.f32.mxu0 0.0
    %870 = vmatmul.mubr.f32.gmra.mrb[0].mxu0 %v732
    %v871 = vpop.f32.mrb[0].mxu0
    %v872 = vadd.f32 %v727, %v871
    %v873 = vpop.f32.mrb[0].mxu0
    %874 = vdwg.mxu0
    %v875 = vld [vmem:[%s12] sm:$0x7]
    %v877 = vlaneseq
    %v878 = vshrl.u32 %v877, 7
    %v879 = vsub.s32 0, %v878
    %v880 = vrot.slane %v875, %v879
    %v881 = vlaneseq
    %v882 = vshrl.u32 %v881, 7
    %v883 = vsub.s32 1, %v882
    %v884 = vrot.slane %v875, %v883
    %v885 = vlaneseq
    %v886 = vshrl.u32 %v885, 7
    %v887 = vsub.s32 2, %v886
    %v888 = vrot.slane %v875, %v887
    %v892 = vadd.f32 %v801, %v880
    %v893 = vadd.f32 %v803, %v884
    %v894 = vadd.f32 %v872, %v888
    %v895 = vld [vmem:[%s11] sm:$0xff]
    %v896 = vld [vmem:[%s11 + $0x8] sm:$0xff]
    %v897 = vld [vmem:[%s11 + $0x10] sm:$0xff]
    %v898 = vld [vmem:[%s11 + $0x18] sm:$0xff]
    %v899 = vld [vmem:[%s11 + $0x20] sm:$0xff]
    %v900 = vld [vmem:[%s11 + $0x28] sm:$0xff]
    %v901 = vld [vmem:[%s11 + $0x30] sm:$0xff]
    %v902 = vld [vmem:[%s11 + $0x38] sm:$0xff]
    %v903 = vld [vmem:[%s11 + $0x40] sm:$0xff]
    %v904 = vld [vmem:[%s11 + $0x48] sm:$0xff]
    %v905 = vld [vmem:[%s11 + $0x50] sm:$0xff]
    %v906 = vld [vmem:[%s11 + $0x58] sm:$0xff]
    %v907 = vld [vmem:[%s11 + $0x60] sm:$0xff]
    %v908 = vld [vmem:[%s11 + $0x68] sm:$0xff]
    %v909 = vld [vmem:[%s11 + $0x70] sm:$0xff]
    %v910 = vld [vmem:[%s11 + $0x78] sm:$0xff]
    %v911 = vld [vmem:[%s11 + $0x80] sm:$0xff]
    %v912 = vld [vmem:[%s11 + $0x88] sm:$0xff]
    %v913 = vld [vmem:[%s11 + $0x90] sm:$0xff]
    %v914 = vld [vmem:[%s11 + $0x98] sm:$0xff]
    %v915 = vld [vmem:[%s11 + $0xa0] sm:$0xff]
    %v916 = vld [vmem:[%s11 + $0xa8] sm:$0xff]
    %v917 = vld [vmem:[%s11 + $0xb0] sm:$0xff]
    %v918 = vld [vmem:[%s11 + $0xb8] sm:$0xff]
    %v919 = vld [vmem:[%s11 + $0xc0] sm:$0xff]
    %v920 = vld [vmem:[%s11 + $0xc8] sm:$0xff]
    %v921 = vld [vmem:[%s11 + $0xd0] sm:$0xff]
    %v922 = vld [vmem:[%s11 + $0xd8] sm:$0xff]
    %v923 = vld [vmem:[%s11 + $0xe0] sm:$0xff]
    %v924 = vld [vmem:[%s11 + $0xe8] sm:$0xff]
    %v925 = vld [vmem:[%s11 + $0xf0] sm:$0xff]
    %v926 = vld [vmem:[%s11 + $0xf8] sm:$0xff]
    %v927 = vld [vmem:[%s11 + $0x100] sm:$0xff]
    %v928 = vld [vmem:[%s11 + $0x108] sm:$0xff]
    %v929 = vld [vmem:[%s11 + $0x110] sm:$0xff]
    %v930 = vld [vmem:[%s11 + $0x118] sm:$0xff]
    %v931 = vld [vmem:[%s11 + $0x120] sm:$0xff]
    %v932 = vld [vmem:[%s11 + $0x128] sm:$0xff]
    %v933 = vld [vmem:[%s11 + $0x130] sm:$0xff]
    %v934 = vld [vmem:[%s11 + $0x138] sm:$0xff]
    %v935 = vld [vmem:[%s11 + $0x140] sm:$0xff]
    %v936 = vld [vmem:[%s11 + $0x148] sm:$0xff]
    %v937 = vld [vmem:[%s11 + $0x150] sm:$0xff]
    %v938 = vld [vmem:[%s11 + $0x158] sm:$0xff]
    %v939 = vld [vmem:[%s11 + $0x160] sm:$0xff]
    %v940 = vld [vmem:[%s11 + $0x168] sm:$0xff]
    %v941 = vld [vmem:[%s11 + $0x170] sm:$0xff]
    %v942 = vld [vmem:[%s11 + $0x178] sm:$0xff]
    %v943 = vld [vmem:[%s13] sm:$0x7]
    %v945 = vlaneseq
    %v946 = vshrl.u32 %v945, 7
    %v947 = vsub.s32 0, %v946
    %v948 = vrot.slane %v943, %v947
    %v949 = vlaneseq
    %v950 = vshrl.u32 %v949, 7
    %v951 = vsub.s32 1, %v950
    %v952 = vrot.slane %v943, %v951
    %v953 = vlaneseq
    %v954 = vshrl.u32 %v953, 7
    %v955 = vsub.s32 2, %v954
    %v956 = vrot.slane %v943, %v955
    %960 = vmatprep.subr.mxu0 %v896
    %961 = vmatpush1.msra.mxu0 %v895
    %962 = vmatprep.subr.mxu0 %v899
    %963 = vmatpush1.msra.mxu0 %v898
    %964 = vmatprep.subr.mxu0 %v902
    %965 = vmatpush1.msra.mxu0 %v901
    %966 = vmatprep.subr.mxu0 %v905
    %967 = vmatpush1.msra.mxu0 %v904
    %968 = vmatprep.subr.mxu0 %v908
    %969 = vmatpush1.msra.mxu0 %v907
    %970 = vmatprep.subr.mxu0 %v911
    %971 = vmatpush1.msra.mxu0 %v910
    %972 = vmatprep.subr.mxu0 %v914
    %973 = vmatpush1.msra.mxu0 %v913
    %974 = vmatprep.subr.mxu0 %v917
    %975 = vmatpush1.msra.mxu0 %v916
    %976 = vmatprep.subr.mxu0 %v920
    %977 = vmatpush1.msra.mxu0 %v919
    %978 = vmatprep.subr.mxu0 %v923
    %979 = vmatpush1.msra.mxu0 %v922
    %980 = vmatprep.subr.mxu0 %v926
    %981 = vmatpush1.msra.mxu0 %v925
    %982 = vmatprep.subr.mxu0 %v929
    %983 = vmatpush1.msra.mxu0 %v928
    %984 = vmatprep.subr.mxu0 %v932
    %985 = vmatpush1.msra.mxu0 %v931
    %986 = vmatprep.subr.mxu0 %v935
    %987 = vmatpush1.msra.mxu0 %v934
    %988 = vmatprep.subr.mxu0 %v938
    %989 = vmatpush1.msra.mxu0 %v937
    %990 = vmatprep.subr.mxu0 %v941
    %991 = vmatpush1.msra.mxu0 %v940
    %992 = vmatprep.subr.mxu0 0.0
    %993 = vmatpush1.msra.mxu0 0.0
    %994 = vmatprep.subr.mxu0 0.0
    %995 = vmatpush1.msra.mxu0 0.0
    %996 = vmatprep.subr.mxu0 0.0
    %997 = vmatpush1.msra.mxu0 0.0
    %998 = vmatprep.subr.mxu0 0.0
    %999 = vmatpush1.msra.mxu0 0.0
    %1000 = vmatprep.subr.mxu0 0.0
    %1001 = vmatpush1.msra.mxu0 0.0
    %1002 = vmatprep.subr.mxu0 0.0
    %1003 = vmatpush1.msra.mxu0 0.0
    %1004 = vmatprep.subr.mxu0 0.0
    %1005 = vmatpush1.msra.mxu0 0.0
    %1006 = vmatprep.subr.mxu0 0.0
    %1007 = vmatpush1.msra.mxu0 0.0
    %1008 = vmatprep.subr.mxu0 0.0
    %1009 = vmatpush1.msra.mxu0 0.0
    %1010 = vmatprep.subr.mxu0 0.0
    %1011 = vmatpush1.msra.mxu0 0.0
    %1012 = vmatprep.subr.mxu0 0.0
    %1013 = vmatpush1.msra.mxu0 0.0
    %1014 = vmatprep.subr.mxu0 0.0
    %1015 = vmatpush1.msra.mxu0 0.0
    %1016 = vmatprep.subr.mxu0 0.0
    %1017 = vmatpush1.msra.mxu0 0.0
    %1018 = vmatprep.subr.mxu0 0.0
    %1019 = vmatpush1.msra.mxu0 0.0
    %1020 = vmatprep.subr.mxu0 0.0
    %1021 = vmatpush1.msra.mxu0 0.0
    %1022 = vmatprep.subr.mxu0 0.0
    %1023 = vmatpush1.msra.mxu0 0.0
    %1024 = vmatprep.mubr.f32.mxu0 0.0
    %1025 = vmatmul.mubr.f32.gmra.mrb[0].mxu0 %v219
    %v1026 = vpop.f32.mrb[0].mxu0
    %v1027 = vadd.f32 %v948, %v1026
    %v1028 = vpop.f32.mrb[0].mxu0
    %v1029 = vadd.f32 %v952, %v1028
    %1030 = vdwg.mxu0
    %1031 = vmatprep.subr.mxu0 0.0
    %1032 = vmatpush1.msra.mxu0 %v897
    %1033 = vmatprep.subr.mxu0 0.0
    %1034 = vmatpush1.msra.mxu0 %v900
    %1035 = vmatprep.subr.mxu0 0.0
    %1036 = vmatpush1.msra.mxu0 %v903
    %1037 = vmatprep.subr.mxu0 0.0
    %1038 = vmatpush1.msra.mxu0 %v906
    %1039 = vmatprep.subr.mxu0 0.0
    %1040 = vmatpush1.msra.mxu0 %v909
    %1041 = vmatprep.subr.mxu0 0.0
    %1042 = vmatpush1.msra.mxu0 %v912
    %1043 = vmatprep.subr.mxu0 0.0
    %1044 = vmatpush1.msra.mxu0 %v915
    %1045 = vmatprep.subr.mxu0 0.0
    %1046 = vmatpush1.msra.mxu0 %v918
    %1047 = vmatprep.subr.mxu0 0.0
    %1048 = vmatpush1.msra.mxu0 %v921
    %1049 = vmatprep.subr.mxu0 0.0
    %1050 = vmatpush1.msra.mxu0 %v924
    %1051 = vmatprep.subr.mxu0 0.0
    %1052 = vmatpush1.msra.mxu0 %v927
    %1053 = vmatprep.subr.mxu0 0.0
    %1054 = vmatpush1.msra.mxu0 %v930
    %1055 = vmatprep.subr.mxu0 0.0
    %1056 = vmatpush1.msra.mxu0 %v933
    %1057 = vmatprep.subr.mxu0 0.0
    %1058 = vmatpush1.msra.mxu0 %v936
    %1059 = vmatprep.subr.mxu0 0.0
    %1060 = vmatpush1.msra.mxu0 %v939
    %1061 = vmatprep.subr.mxu0 0.0
    %1062 = vmatpush1.msra.mxu0 %v942
    %1063 = vmatprep.subr.mxu0 0.0
    %1064 = vmatpush1.msra.mxu0 0.0
    %1065 = vmatprep.subr.mxu0 0.0
    %1066 = vmatpush1.msra.mxu0 0.0
    %1067 = vmatprep.subr.mxu0 0.0
    %1068 = vmatpush1.msra.mxu0 0.0
    %1069 = vmatprep.subr.mxu0 0.0
    %1070 = vmatpush1.msra.mxu0 0.0
    %1071 = vmatprep.subr.mxu0 0.0
    %1072 = vmatpush1.msra.mxu0 0.0
    %1073 = vmatprep.subr.mxu0 0.0
    %1074 = vmatpush1.msra.mxu0 0.0
    %1075 = vmatprep.subr.mxu0 0.0
    %1076 = vmatpush1.msra.mxu0 0.0
    %1077 = vmatprep.subr.mxu0 0.0
    %1078 = vmatpush1.msra.mxu0 0.0
    %1079 = vmatprep.subr.mxu0 0.0
    %1080 = vmatpush1.msra.mxu0 0.0
    %1081 = vmatprep.subr.mxu0 0.0
    %1082 = vmatpush1.msra.mxu0 0.0
    %1083 = vmatprep.subr.mxu0 0.0
    %1084 = vmatpush1.msra.mxu0 0.0
    %1085 = vmatprep.subr.mxu0 0.0
    %1086 = vmatpush1.msra.mxu0 0.0
    %1087 = vmatprep.subr.mxu0 0.0
    %1088 = vmatpush1.msra.mxu0 0.0
    %1089 = vmatprep.subr.mxu0 0.0
    %1090 = vmatpush1.msra.mxu0 0.0
    %1091 = vmatprep.subr.mxu0 0.0
    %1092 = vmatpush1.msra.mxu0 0.0
    %1093 = vmatprep.subr.mxu0 0.0
    %1094 = vmatpush1.msra.mxu0 0.0
    %1095 = vmatprep.mubr.f32.mxu0 0.0
    %1096 = vmatmul.mubr.f32.gmra.mrb[0].mxu0 %v219
    %v1097 = vpop.f32.mrb[0].mxu0
    %v1098 = vadd.f32 %v956, %v1097
    %v1099 = vpop.f32.mrb[0].mxu0
    %1100 = vdwg.mxu0
    %v1101 = vadd.f32 %v892, %v1027
    %v1102 = vxor.u32 %v1101, 2147483648
    %v1103 = vmul.f32 %v1102, 1.442695
    %v1104 = vpow.pop %v1103
    %v1105 = vadd.f32 %v1104, 1.0
    %v1106 = vrcp.pop %v1105
    %v1107 = vmul.f32 1.0, %v1106
    %v1108 = vadd.f32 %v893, %v1029
    %v1109 = vxor.u32 %v1108, 2147483648
    %v1110 = vmul.f32 %v1109, 1.442695
    %v1111 = vpow.pop %v1110
    %v1112 = vadd.f32 %v1111, 1.0
    %v1113 = vrcp.pop %v1112
    %v1114 = vmul.f32 1.0, %v1113
    %v1115 = vmul.f32 %v1107, %v1098
    %v1116 = vadd.f32 %v894, %v1115
    %v1117 = vtanh.pop %v1116
    %v1118 = vsub.f32 1.0, %v1114
    %v1119 = vmul.f32 %v1118, %v1117
    %v1120 = vmul.f32 %v1114, %v219
    %v1121 = vadd.f32 %v1119, %v1120
    %v1122 = vld [vmem:[%s14] sm:$0xff]
    %v1123 = vld [vmem:[%s14 + $0x8] sm:$0xff]
    %v1124 = vld [vmem:[%s14 + $0x10] sm:$0xff]
    %v1125 = vld [vmem:[%s14 + $0x18] sm:$0xff]
    %v1126 = vld [vmem:[%s14 + $0x20] sm:$0xff]
    %v1127 = vld [vmem:[%s14 + $0x28] sm:$0xff]
    %v1128 = vld [vmem:[%s14 + $0x30] sm:$0xff]
    %v1129 = vld [vmem:[%s14 + $0x38] sm:$0xff]
    %v1130 = vld [vmem:[%s14 + $0x40] sm:$0xff]
    %v1131 = vld [vmem:[%s14 + $0x48] sm:$0xff]
    %v1132 = vld [vmem:[%s14 + $0x50] sm:$0xff]
    %v1133 = vld [vmem:[%s14 + $0x58] sm:$0xff]
    %v1134 = vld [vmem:[%s14 + $0x60] sm:$0xff]
    %v1135 = vld [vmem:[%s14 + $0x68] sm:$0xff]
    %v1136 = vld [vmem:[%s14 + $0x70] sm:$0xff]
    %v1137 = vld [vmem:[%s14 + $0x78] sm:$0xff]
    %v1138 = vld [vmem:[%s15] sm:$0xff]
    %v1139 = vld [vmem:[%s15 + $0x8] sm:$0xff]
    %v1140 = vld [vmem:[%s15 + $0x10] sm:$0xff]
    %v1141 = vld [vmem:[%s15 + $0x18] sm:$0xff]
    %v1142 = vld [vmem:[%s15 + $0x20] sm:$0xff]
    %v1143 = vld [vmem:[%s15 + $0x28] sm:$0xff]
    %v1144 = vld [vmem:[%s15 + $0x30] sm:$0xff]
    %v1145 = vld [vmem:[%s15 + $0x38] sm:$0xff]
    %v1146 = vld [vmem:[%s15 + $0x40] sm:$0xff]
    %v1147 = vld [vmem:[%s15 + $0x48] sm:$0xff]
    %v1148 = vld [vmem:[%s15 + $0x50] sm:$0xff]
    %v1149 = vld [vmem:[%s15 + $0x58] sm:$0xff]
    %v1150 = vld [vmem:[%s15 + $0x60] sm:$0xff]
    %v1151 = vld [vmem:[%s15 + $0x68] sm:$0xff]
    %v1152 = vld [vmem:[%s15 + $0x70] sm:$0xff]
    %v1153 = vld [vmem:[%s15 + $0x78] sm:$0xff]
    %1154 = vmatprep.subr.mxu0 0.0
    %1155 = vmatpush1.msra.mxu0 %v1138
    %1156 = vmatprep.subr.mxu0 0.0
    %1157 = vmatpush1.msra.mxu0 %v1139
    %1158 = vmatprep.subr.mxu0 0.0
    %1159 = vmatpush1.msra.mxu0 %v1140
    %1160 = vmatprep.subr.mxu0 0.0
    %1161 = vmatpush1.msra.mxu0 %v1141
    %1162 = vmatprep.subr.mxu0 0.0
    %1163 = vmatpush1.msra.mxu0 %v1142
    %1164 = vmatprep.subr.mxu0 0.0
    %1165 = vmatpush1.msra.mxu0 %v1143
    %1166 = vmatprep.subr.mxu0 0.0
    %1167 = vmatpush1.msra.mxu0 %v1144
    %1168 = vmatprep.subr.mxu0 0.0
    %1169 = vmatpush1.msra.mxu0 %v1145
    %1170 = vmatprep.subr.mxu0 0.0
    %1171 = vmatpush1.msra.mxu0 %v1146
    %1172 = vmatprep.subr.mxu0 0.0
    %1173 = vmatpush1.msra.mxu0 %v1147
    %1174 = vmatprep.subr.mxu0 0.0
    %1175 = vmatpush1.msra.mxu0 %v1148
    %1176 = vmatprep.subr.mxu0 0.0
    %1177 = vmatpush1.msra.mxu0 %v1149
    %1178 = vmatprep.subr.mxu0 0.0
    %1179 = vmatpush1.msra.mxu0 %v1150
    %1180 = vmatprep.subr.mxu0 0.0
    %1181 = vmatpush1.msra.mxu0 %v1151
    %1182 = vmatprep.subr.mxu0 0.0
    %1183 = vmatpush1.msra.mxu0 %v1152
    %1184 = vmatprep.subr.mxu0 0.0
    %1185 = vmatpush1.msra.mxu0 %v1153
    %1186 = vmatprep.subr.mxu0 0.0
    %1187 = vmatpush1.msra.mxu0 0.0
    %1188 = vmatprep.subr.mxu0 0.0
    %1189 = vmatpush1.msra.mxu0 0.0
    %1190 = vmatprep.subr.mxu0 0.0
    %1191 = vmatpush1.msra.mxu0 0.0
    %1192 = vmatprep.subr.mxu0 0.0
    %1193 = vmatpush1.msra.mxu0 0.0
    %1194 = vmatprep.subr.mxu0 0.0
    %1195 = vmatpush1.msra.mxu0 0.0
    %1196 = vmatprep.subr.mxu0 0.0
    %1197 = vmatpush1.msra.mxu0 0.0
    %1198 = vmatprep.subr.mxu0 0.0
    %1199 = vmatpush1.msra.mxu0 0.0
    %1200 = vmatprep.subr.mxu0 0.0
    %1201 = vmatpush1.msra.mxu0 0.0
    %1202 = vmatprep.subr.mxu0 0.0
    %1203 = vmatpush1.msra.mxu0 0.0
    %1204 = vmatprep.subr.mxu0 0.0
    %1205 = vmatpush1.msra.mxu0 0.0
    %1206 = vmatprep.subr.mxu0 0.0
    %1207 = vmatpush1.msra.mxu0 0.0
    %1208 = vmatprep.subr.mxu0 0.0
    %1209 = vmatpush1.msra.mxu0 0.0
    %1210 = vmatprep.subr.mxu0 0.0
    %1211 = vmatpush1.msra.mxu0 0.0
    %1212 = vmatprep.subr.mxu0 0.0
    %1213 = vmatpush1.msra.mxu0 0.0
    %1214 = vmatprep.subr.mxu0 0.0
    %1215 = vmatpush1.msra.mxu0 0.0
    %1216 = vmatprep.subr.mxu0 0.0
    %1217 = vmatpush1.msra.mxu0 0.0
    %1218 = vmatprep.mubr.f32.mxu0 0.0
    %1219 = vmatmul.mubr.f32.gmra.mrb[0].mxu0 %v528
    %v1220 = vpop.f32.mrb[0].mxu0
    %v1221 = vadd.f32 0.0, %v1220
    %v1222 = vpop.f32.mrb[0].mxu0
    %1223 = vdwg.mxu0
    %1224 = vmatprep.subr.mxu0 0.0
    %1225 = vmatpush1.msra.mxu0 %v1122
    %1226 = vmatprep.subr.mxu0 0.0
    %1227 = vmatpush1.msra.mxu0 %v1123
    %1228 = vmatprep.subr.mxu0 0.0
    %1229 = vmatpush1.msra.mxu0 %v1124
    %1230 = vmatprep.subr.mxu0 0.0
    %1231 = vmatpush1.msra.mxu0 %v1125
    %1232 = vmatprep.subr.mxu0 0.0
    %1233 = vmatpush1.msra.mxu0 %v1126
    %1234 = vmatprep.subr.mxu0 0.0
    %1235 = vmatpush1.msra.mxu0 %v1127
    %1236 = vmatprep.subr.mxu0 0.0
    %1237 = vmatpush1.msra.mxu0 %v1128
    %1238 = vmatprep.subr.mxu0 0.0
    %1239 = vmatpush1.msra.mxu0 %v1129
    %1240 = vmatprep.subr.mxu0 0.0
    %1241 = vmatpush1.msra.mxu0 %v1130
    %1242 = vmatprep.subr.mxu0 0.0
    %1243 = vmatpush1.msra.mxu0 %v1131
    %1244 = vmatprep.subr.mxu0 0.0
    %1245 = vmatpush1.msra.mxu0 %v1132
    %1246 = vmatprep.subr.mxu0 0.0
    %1247 = vmatpush1.msra.mxu0 %v1133
    %1248 = vmatprep.subr.mxu0 0.0
    %1249 = vmatpush1.msra.mxu0 %v1134
    %1250 = vmatprep.subr.mxu0 0.0
    %1251 = vmatpush1.msra.mxu0 %v1135
    %1252 = vmatprep.subr.mxu0 0.0
    %1253 = vmatpush1.msra.mxu0 %v1136
    %1254 = vmatprep.subr.mxu0 0.0
    %1255 = vmatpush1.msra.mxu0 %v1137
    %1256 = vmatprep.subr.mxu0 0.0
    %1257 = vmatpush1.msra.mxu0 0.0
    %1258 = vmatprep.subr.mxu0 0.0
    %1259 = vmatpush1.msra.mxu0 0.0
    %1260 = vmatprep.subr.mxu0 0.0
    %1261 = vmatpush1.msra.mxu0 0.0
    %1262 = vmatprep.subr.mxu0 0.0
    %1263 = vmatpush1.msra.mxu0 0.0
    %1264 = vmatprep.subr.mxu0 0.0
    %1265 = vmatpush1.msra.mxu0 0.0
    %1266 = vmatprep.subr.mxu0 0.0
    %1267 = vmatpush1.msra.mxu0 0.0
    %1268 = vmatprep.subr.mxu0 0.0
    %1269 = vmatpush1.msra.mxu0 0.0
    %1270 = vmatprep.subr.mxu0 0.0
    %1271 = vmatpush1.msra.mxu0 0.0
    %1272 = vmatprep.subr.mxu0 0.0
    %1273 = vmatpush1.msra.mxu0 0.0
    %1274 = vmatprep.subr.mxu0 0.0
    %1275 = vmatpush1.msra.mxu0 0.0
    %1276 = vmatprep.subr.mxu0 0.0
    %1277 = vmatpush1.msra.mxu0 0.0
    %1278 = vmatprep.subr.mxu0 0.0
    %1279 = vmatpush1.msra.mxu0 0.0
    %1280 = vmatprep.subr.mxu0 0.0
    %1281 = vmatpush1.msra.mxu0 0.0
    %1282 = vmatprep.subr.mxu0 0.0
    %1283 = vmatpush1.msra.mxu0 0.0
    %1284 = vmatprep.subr.mxu0 0.0
    %1285 = vmatpush1.msra.mxu0 0.0
    %1286 = vmatprep.subr.mxu0 0.0
    %1287 = vmatpush1.msra.mxu0 0.0
    %1288 = vmatprep.mubr.f32.mxu0 0.0
    %1289 = vmatmul.mubr.f32.gmra.mrb[0].mxu0 %v1121
    %v1290 = vpop.f32.mrb[0].mxu0
    %v1291 = vadd.f32 %v1221, %v1290
    %v1292 = vpop.f32.mrb[0].mxu0
    %1293 = vdwg.mxu0
    %v1294 = vld [vmem:[%s16] sm:$0xff]
    %v1295 = vld [vmem:[%s16 + $0x8] sm:$0xff]
    %v1296 = vld [vmem:[%s16 + $0x10] sm:$0xff]
    %v1297 = vld [vmem:[%s16 + $0x18] sm:$0xff]
    %1298 = vmatprep.subr.mxu0 0.0
    %1299 = vmatpush1.msra.mxu0 %v1294
    %1300 = vmatprep.subr.mxu0 0.0
    %1301 = vmatpush1.msra.mxu0 %v1295
    %1302 = vmatprep.subr.mxu0 0.0
    %1303 = vmatpush1.msra.mxu0 %v1296
    %1304 = vmatprep.subr.mxu0 0.0
    %1305 = vmatpush1.msra.mxu0 %v1297
    %1306 = vmatprep.subr.mxu0 0.0
    %1307 = vmatpush1.msra.mxu0 0.0
    %1308 = vmatprep.subr.mxu0 0.0
    %1309 = vmatpush1.msra.mxu0 0.0
    %1310 = vmatprep.subr.mxu0 0.0
    %1311 = vmatpush1.msra.mxu0 0.0
    %1312 = vmatprep.subr.mxu0 0.0
    %1313 = vmatpush1.msra.mxu0 0.0
    %1314 = vmatprep.subr.mxu0 0.0
    %1315 = vmatpush1.msra.mxu0 0.0
    %1316 = vmatprep.subr.mxu0 0.0
    %1317 = vmatpush1.msra.mxu0 0.0
    %1318 = vmatprep.subr.mxu0 0.0
    %1319 = vmatpush1.msra.mxu0 0.0
    %1320 = vmatprep.subr.mxu0 0.0
    %1321 = vmatpush1.msra.mxu0 0.0
    %1322 = vmatprep.subr.mxu0 0.0
    %1323 = vmatpush1.msra.mxu0 0.0
    %1324 = vmatprep.subr.mxu0 0.0
    %1325 = vmatpush1.msra.mxu0 0.0
    %1326 = vmatprep.subr.mxu0 0.0
    %1327 = vmatpush1.msra.mxu0 0.0
    %1328 = vmatprep.subr.mxu0 0.0
    %1329 = vmatpush1.msra.mxu0 0.0
    %1330 = vmatprep.subr.mxu0 0.0
    %1331 = vmatpush1.msra.mxu0 0.0
    %1332 = vmatprep.subr.mxu0 0.0
    %1333 = vmatpush1.msra.mxu0 0.0
    %1334 = vmatprep.subr.mxu0 0.0
    %1335 = vmatpush1.msra.mxu0 0.0
    %1336 = vmatprep.subr.mxu0 0.0
    %1337 = vmatpush1.msra.mxu0 0.0
    %1338 = vmatprep.subr.mxu0 0.0
    %1339 = vmatpush1.msra.mxu0 0.0
    %1340 = vmatprep.subr.mxu0 0.0
    %1341 = vmatpush1.msra.mxu0 0.0
    %1342 = vmatprep.subr.mxu0 0.0
    %1343 = vmatpush1.msra.mxu0 0.0
    %1344 = vmatprep.subr.mxu0 0.0
    %1345 = vmatpush1.msra.mxu0 0.0
    %1346 = vmatprep.subr.mxu0 0.0
    %1347 = vmatpush1.msra.mxu0 0.0
    %1348 = vmatprep.subr.mxu0 0.0
    %1349 = vmatpush1.msra.mxu0 0.0
    %1350 = vmatprep.subr.mxu0 0.0
    %1351 = vmatpush1.msra.mxu0 0.0
    %1352 = vmatprep.subr.mxu0 0.0
    %1353 = vmatpush1.msra.mxu0 0.0
    %1354 = vmatprep.subr.mxu0 0.0
    %1355 = vmatpush1.msra.mxu0 0.0
    %1356 = vmatprep.subr.mxu0 0.0
    %1357 = vmatpush1.msra.mxu0 0.0
    %1358 = vmatprep.subr.mxu0 0.0
    %1359 = vmatpush1.msra.mxu0 0.0
    %1360 = vmatprep.subr.mxu0 0.0
    %1361 = vmatpush1.msra.mxu0 0.0
    %1362 = vmatprep.mubr.f32.mxu0 0.0
    %1363 = vmatmul.mubr.f32.gmra.mrb[0].mxu0 %v732
    %v1364 = vpop.f32.mrb[0].mxu0
    %v1365 = vadd.f32 0.0, %v1364
    %v1366 = vpop.f32.mrb[0].mxu0
    %1367 = vdwg.mxu0
    %v1368 = vadd.f32 %v1291, %v1365
    %v1369 = vld [vmem:[%s17] sm:$0x1]
    %v1371 = vlaneseq
    %v1372 = vshrl.u32 %v1371, 7
    %v1373 = vsub.s32 0, %v1372
    %v1374 = vrot.slane %v1369, %v1373
    %v1376 = vadd.f32 %v1368, %v1374
    %1377 = vst [vmem:[%s19] sm:$0xff] %v1376
    %1378 = vmax.xlane.f32.xlu0 %v1376
    %v1379 = vpop.xlane.xlu0 %1378
    %vm1380 = vcmp.eq.f32.partialorder %v1376, %v1379
    %v1381 = vsel %vm1380, %v381, 128
    %v1382 = vand.u32 %v1381, 65535
    %v1383 = vshra.s32 %v1381, 16
    %v1384 = vcvt.s32.f32 %v1382
    %v1385 = vcvt.s32.f32 %v1383
    %1386 = vmin.xlane.f32.xlu0 %v1385
    %v1387 = vpop.xlane.xlu0 %1386
    %vm1388 = vcmp.eq.f32.partialorder %v1385, %v1387
    %v1389 = vsel %vm1388, %v1384, inf
    %1390 = vmin.xlane.f32.xlu0 %v1389
    %v1391 = vpop.xlane.xlu0 %1390
    %v1392 = vcvt.f32.s32 %v1391
    %v1393 = vcvt.f32.s32 %v1387
    %v1394 = vshll.u32 %v1393, 16
    %v1395 = vadd.s32 %v1394, %v1392
    %vm1396 = vcmp.eq.s32.totalorder %v381, %v1395
    %v1397 = vsel %vm1396, 1, 0
    %v1398 = vcvt.s32.f32 %v1397
    %v1399 = vld [vmem:[%s18] sm:$0xff]
    %v1400 = vld [vmem:[%s18 + $0x8] sm:$0xff]
    %v1401 = vld [vmem:[%s18 + $0x10] sm:$0xff]
    %v1402 = vld [vmem:[%s18 + $0x18] sm:$0xff]
    %v1403 = vld [vmem:[%s18 + $0x20] sm:$0xff]
    %v1404 = vld [vmem:[%s18 + $0x28] sm:$0xff]
    %v1405 = vld [vmem:[%s18 + $0x30] sm:$0xff]
    %v1406 = vld [vmem:[%s18 + $0x38] sm:$0xff]
    %v1407 = vld [vmem:[%s18 + $0x40] sm:$0xff]
    %v1408 = vld [vmem:[%s18 + $0x48] sm:$0xff]
    %v1409 = vld [vmem:[%s18 + $0x50] sm:$0xff]
    %v1410 = vld [vmem:[%s18 + $0x58] sm:$0xff]
    %v1411 = vld [vmem:[%s18 + $0x60] sm:$0xff]
    %v1412 = vld [vmem:[%s18 + $0x68] sm:$0xff]
    %v1413 = vld [vmem:[%s18 + $0x70] sm:$0xff]
    %v1414 = vld [vmem:[%s18 + $0x78] sm:$0xff]
    %1415 = vmatprep.subr.mxu0 0.0
    %1416 = vmatpush1.msra.mxu0 %v1399
    %1417 = vmatprep.subr.mxu0 0.0
    %1418 = vmatpush1.msra.mxu0 %v1400
    %1419 = vmatprep.subr.mxu0 0.0
    %1420 = vmatpush1.msra.mxu0 %v1401
    %1421 = vmatprep.subr.mxu0 0.0
    %1422 = vmatpush1.msra.mxu0 %v1402
    %1423 = vmatprep.subr.mxu0 0.0
    %1424 = vmatpush1.msra.mxu0 %v1403
    %1425 = vmatprep.subr.mxu0 0.0
    %1426 = vmatpush1.msra.mxu0 %v1404
    %1427 = vmatprep.subr.mxu0 0.0
    %1428 = vmatpush1.msra.mxu0 %v1405
    %1429 = vmatprep.subr.mxu0 0.0
    %1430 = vmatpush1.msra.mxu0 %v1406
    %1431 = vmatprep.subr.mxu0 0.0
    %1432 = vmatpush1.msra.mxu0 %v1407
    %1433 = vmatprep.subr.mxu0 0.0
    %1434 = vmatpush1.msra.mxu0 %v1408
    %1435 = vmatprep.subr.mxu0 0.0
    %1436 = vmatpush1.msra.mxu0 %v1409
    %1437 = vmatprep.subr.mxu0 0.0
    %1438 = vmatpush1.msra.mxu0 %v1410
    %1439 = vmatprep.subr.mxu0 0.0
    %1440 = vmatpush1.msra.mxu0 %v1411
    %1441 = vmatprep.subr.mxu0 0.0
    %1442 = vmatpush1.msra.mxu0 %v1412
    %1443 = vmatprep.subr.mxu0 0.0
    %1444 = vmatpush1.msra.mxu0 %v1413
    %1445 = vmatprep.subr.mxu0 0.0
    %1446 = vmatpush1.msra.mxu0 %v1414
    %1447 = vmatprep.subr.mxu0 0.0
    %1448 = vmatpush1.msra.mxu0 0.0
    %1449 = vmatprep.subr.mxu0 0.0
    %1450 = vmatpush1.msra.mxu0 0.0
    %1451 = vmatprep.subr.mxu0 0.0
    %1452 = vmatpush1.msra.mxu0 0.0
    %1453 = vmatprep.subr.mxu0 0.0
    %1454 = vmatpush1.msra.mxu0 0.0
    %1455 = vmatprep.subr.mxu0 0.0
    %1456 = vmatpush1.msra.mxu0 0.0
    %1457 = vmatprep.subr.mxu0 0.0
    %1458 = vmatpush1.msra.mxu0 0.0
    %1459 = vmatprep.subr.mxu0 0.0
    %1460 = vmatpush1.msra.mxu0 0.0
    %1461 = vmatprep.subr.mxu0 0.0
    %1462 = vmatpush1.msra.mxu0 0.0
    %1463 = vmatprep.subr.mxu0 0.0
    %1464 = vmatpush1.msra.mxu0 0.0
    %1465 = vmatprep.subr.mxu0 0.0
    %1466 = vmatpush1.msra.mxu0 0.0
    %1467 = vmatprep.subr.mxu0 0.0
    %1468 = vmatpush1.msra.mxu0 0.0
    %1469 = vmatprep.subr.mxu0 0.0
    %1470 = vmatpush1.msra.mxu0 0.0
    %1471 = vmatprep.subr.mxu0 0.0
    %1472 = vmatpush1.msra.mxu0 0.0
    %1473 = vmatprep.subr.mxu0 0.0
    %1474 = vmatpush1.msra.mxu0 0.0
    %1475 = vmatprep.subr.mxu0 0.0
    %1476 = vmatpush1.msra.mxu0 0.0
    %1477 = vmatprep.subr.mxu0 0.0
    %1478 = vmatpush1.msra.mxu0 0.0
    %1479 = vmatprep.mubr.f32.mxu0 0.0
    %1480 = vmatmul.mubr.f32.gmra.mrb[0].mxu0 %v1398
    %v1481 = vpop.f32.mrb[0].mxu0
    %v1482 = vadd.f32 0.0, %v1481
    %v1483 = vpop.f32.mrb[0].mxu0
    %1484 = vdwg.mxu0
    %s1485 = sld [smem:[#allocation3 + $0x1]]
    %s1486 = scvt.s32.f32 %s1485
    %s1487 = scalar_lea.vmem %s1, 8
    %v1488 = vld [vmem:[%s1487] sm:$0xff]
    %v1489 = vstv %s1486
    %v1490 = vmul.f32 %v1489, %v1488
    %s1491 = ssub.f32 1.0, %s1486
    %v1492 = vstv %s1491
    %v1493 = vmul.f32 %v1492, %v1482
    %v1494 = vadd.f32 %v1490, %v1493
    %v1495 = vld [vmem:[%s5] sm:$0xff]
    %v1496 = vld [vmem:[%s5 + $0x8] sm:$0xff]
    %v1497 = vld [vmem:[%s5 + $0x10] sm:$0xff]
    %v1498 = vld [vmem:[%s5 + $0x18] sm:$0xff]
    %v1499 = vld [vmem:[%s5 + $0x20] sm:$0xff]
    %v1500 = vld [vmem:[%s5 + $0x28] sm:$0xff]
    %v1501 = vld [vmem:[%s5 + $0x30] sm:$0xff]
    %v1502 = vld [vmem:[%s5 + $0x38] sm:$0xff]
    %v1503 = vld [vmem:[%s5 + $0x40] sm:$0xff]
    %v1504 = vld [vmem:[%s5 + $0x48] sm:$0xff]
    %v1505 = vld [vmem:[%s5 + $0x50] sm:$0xff]
    %v1506 = vld [vmem:[%s5 + $0x58] sm:$0xff]
    %v1507 = vld [vmem:[%s5 + $0x60] sm:$0xff]
    %v1508 = vld [vmem:[%s5 + $0x68] sm:$0xff]
    %v1509 = vld [vmem:[%s5 + $0x70] sm:$0xff]
    %v1510 = vld [vmem:[%s5 + $0x78] sm:$0xff]
    %1511 = vmatprep.subr.mxu0 0.0
    %1512 = vmatpush1.msra.mxu0 %v1495
    %1513 = vmatprep.subr.mxu0 0.0
    %1514 = vmatpush1.msra.mxu0 %v1496
    %1515 = vmatprep.subr.mxu0 0.0
    %1516 = vmatpush1.msra.mxu0 %v1497
    %1517 = vmatprep.subr.mxu0 0.0
    %1518 = vmatpush1.msra.mxu0 %v1498
    %1519 = vmatprep.subr.mxu0 0.0
    %1520 = vmatpush1.msra.mxu0 %v1499
    %1521 = vmatprep.subr.mxu0 0.0
    %1522 = vmatpush1.msra.mxu0 %v1500
    %1523 = vmatprep.subr.mxu0 0.0
    %1524 = vmatpush1.msra.mxu0 %v1501
    %1525 = vmatprep.subr.mxu0 0.0
    %1526 = vmatpush1.msra.mxu0 %v1502
    %1527 = vmatprep.subr.mxu0 0.0
    %1528 = vmatpush1.msra.mxu0 %v1503
    %1529 = vmatprep.subr.mxu0 0.0
    %1530 = vmatpush1.msra.mxu0 %v1504
    %1531 = vmatprep.subr.mxu0 0.0
    %1532 = vmatpush1.msra.mxu0 %v1505
    %1533 = vmatprep.subr.mxu0 0.0
    %1534 = vmatpush1.msra.mxu0 %v1506
    %1535 = vmatprep.subr.mxu0 0.0
    %1536 = vmatpush1.msra.mxu0 %v1507
    %1537 = vmatprep.subr.mxu0 0.0
    %1538 = vmatpush1.msra.mxu0 %v1508
    %1539 = vmatprep.subr.mxu0 0.0
    %1540 = vmatpush1.msra.mxu0 %v1509
    %1541 = vmatprep.subr.mxu0 0.0
    %1542 = vmatpush1.msra.mxu0 %v1510
    %1543 = vmatprep.subr.mxu0 0.0
    %1544 = vmatpush1.msra.mxu0 0.0
    %1545 = vmatprep.subr.mxu0 0.0
    %1546 = vmatpush1.msra.mxu0 0.0
    %1547 = vmatprep.subr.mxu0 0.0
    %1548 = vmatpush1.msra.mxu0 0.0
    %1549 = vmatprep.subr.mxu0 0.0
    %1550 = vmatpush1.msra.mxu0 0.0
    %1551 = vmatprep.subr.mxu0 0.0
    %1552 = vmatpush1.msra.mxu0 0.0
    %1553 = vmatprep.subr.mxu0 0.0
    %1554 = vmatpush1.msra.mxu0 0.0
    %1555 = vmatprep.subr.mxu0 0.0
    %1556 = vmatpush1.msra.mxu0 0.0
    %1557 = vmatprep.subr.mxu0 0.0
    %1558 = vmatpush1.msra.mxu0 0.0
    %1559 = vmatprep.subr.mxu0 0.0
    %1560 = vmatpush1.msra.mxu0 0.0
    %1561 = vmatprep.subr.mxu0 0.0
    %1562 = vmatpush1.msra.mxu0 0.0
    %1563 = vmatprep.subr.mxu0 0.0
    %1564 = vmatpush1.msra.mxu0 0.0
    %1565 = vmatprep.subr.mxu0 0.0
    %1566 = vmatpush1.msra.mxu0 0.0
    %1567 = vmatprep.subr.mxu0 0.0
    %1568 = vmatpush1.msra.mxu0 0.0
    %1569 = vmatprep.subr.mxu0 0.0
    %1570 = vmatpush1.msra.mxu0 0.0
    %1571 = vmatprep.subr.mxu0 0.0
    %1572 = vmatpush1.msra.mxu0 0.0
    %1573 = vmatprep.subr.mxu0 0.0
    %1574 = vmatpush1.msra.mxu0 0.0
    %1575 = vmatprep.mubr.f32.mxu0 0.0
    %1576 = vmatmul.mubr.f32.gmra.mrb[0].mxu0 %v1121
    %v1577 = vpop.f32.mrb[0].mxu0
    %v1578 = vadd.f32 0.0, %v1577
    %v1579 = vpop.f32.mrb[0].mxu0
    %1580 = vdwg.mxu0
    %v1581 = vld [vmem:[#allocation2] sm:$0xff]
    %v1582 = vld [vmem:[#allocation2 + $0x8] sm:$0xff]
    %v1583 = vld [vmem:[#allocation2 + $0x10] sm:$0xff]
    %v1584 = vld [vmem:[#allocation2 + $0x18] sm:$0xff]
    %v1585 = vld [vmem:[#allocation2 + $0x20] sm:$0xff]
    %v1586 = vld [vmem:[#allocation2 + $0x28] sm:$0xff]
    %v1587 = vld [vmem:[#allocation2 + $0x30] sm:$0xff]
    %v1588 = vld [vmem:[#allocation2 + $0x38] sm:$0xff]
    %v1589 = vadd.f32 %v1578, %v1581
    %v1590 = vadd.f32 %v1578, %v1582
    %v1591 = vadd.f32 %v1578, %v1583
    %v1592 = vadd.f32 %v1578, %v1584
    %v1593 = vadd.f32 %v1578, %v1585
    %v1594 = vadd.f32 %v1578, %v1586
    %v1595 = vadd.f32 %v1578, %v1587
    %v1596 = vadd.f32 %v1578, %v1588
    %v1597 = vtanh.pop %v1589
    %v1598 = vtanh.pop %v1590
    %v1599 = vtanh.pop %v1591
    %v1600 = vtanh.pop %v1592
    %v1601 = vtanh.pop %v1593
    %v1602 = vtanh.pop %v1594
    %v1603 = vtanh.pop %v1595
    %v1604 = vtanh.pop %v1596
    %v1605 = vld [vmem:[%s8] sm:$0x1]
    %v1607 = vlaneseq
    %v1608 = vshrl.u32 %v1607, 7
    %v1609 = vsub.s32 0, %v1608
    %v1610 = vrot.slane %v1605, %v1609
    %v1612 = vmul.f32 %v1597, %v1610
    %v1613 = vmul.f32 %v1598, %v1610
    %v1614 = vmul.f32 %v1599, %v1610
    %v1615 = vmul.f32 %v1600, %v1610
    %v1616 = vmul.f32 %v1601, %v1610
    %v1617 = vmul.f32 %v1602, %v1610
    %v1618 = vmul.f32 %v1603, %v1610
    %v1619 = vmul.f32 %v1604, %v1610
    %1620 = vadd.xlane.f32.xlu0 %v1612
    %v1621 = vpop.xlane.xlu0 %1620
    %1622 = vadd.xlane.f32.xlu0 %v1613
    %v1623 = vpop.xlane.xlu0 %1622
    %1624 = vadd.xlane.f32.xlu0 %v1614
    %v1625 = vpop.xlane.xlu0 %1624
    %1626 = vadd.xlane.f32.xlu0 %v1615
    %v1627 = vpop.xlane.xlu0 %1626
    %1628 = vadd.xlane.f32.xlu0 %v1616
    %v1629 = vpop.xlane.xlu0 %1628
    %1630 = vadd.xlane.f32.xlu0 %v1617
    %v1631 = vpop.xlane.xlu0 %1630
    %1632 = vadd.xlane.f32.xlu0 %v1618
    %v1633 = vpop.xlane.xlu0 %1632
    %1634 = vadd.xlane.f32.xlu0 %v1619
    %v1635 = vpop.xlane.xlu0 %1634
    %v1636 = vld [vmem:[%s4] sm:$0xff]
    %vm1637 = vcmp.gt.f32.partialorder %v1636, 0.5
    %v1646 = vlaneseq
    %v1647 = vshrl.u32 %v1646, 7
    %v1648 = vsub.s32 %v381, %v1647
    %v1649 = vrot.slane %v1621, %v1648
    %v1650 = vlaneseq
    %v1651 = vshrl.u32 %v1650, 7
    %v1652 = vsub.s32 %v381, %v1651
    %v1653 = vrot.slane %v1623, %v1652
    %v1654 = vlaneseq
    %v1655 = vshrl.u32 %v1654, 7
    %v1656 = vsub.s32 %v381, %v1655
    %v1657 = vrot.slane %v1625, %v1656
    %v1658 = vlaneseq
    %v1659 = vshrl.u32 %v1658, 7
    %v1660 = vsub.s32 %v381, %v1659
    %v1661 = vrot.slane %v1627, %v1660
    %v1662 = vlaneseq
    %v1663 = vshrl.u32 %v1662, 7
    %v1664 = vsub.s32 %v381, %v1663
    %v1665 = vrot.slane %v1629, %v1664
    %v1666 = vlaneseq
    %v1667 = vshrl.u32 %v1666, 7
    %v1668 = vsub.s32 %v381, %v1667
    %v1669 = vrot.slane %v1631, %v1668
    %v1670 = vlaneseq
    %v1671 = vshrl.u32 %v1670, 7
    %v1672 = vsub.s32 %v381, %v1671
    %v1673 = vrot.slane %v1633, %v1672
    %v1674 = vlaneseq
    %v1675 = vshrl.u32 %v1674, 7
    %v1676 = vsub.s32 %v381, %v1675
    %v1677 = vrot.slane %v1635, %v1676
    %v1678 = vsel %vm414, %v1653, %v1649
    %v1679 = vsel %vm416, %v1657, %v1678
    %v1680 = vsel %vm418, %v1661, %v1679
    %v1681 = vsel %vm420, %v1665, %v1680
    %v1682 = vsel %vm422, %v1669, %v1681
    %v1683 = vsel %vm424, %v1673, %v1682
    %v1684 = vsel %vm426, %v1677, %v1683
    %v1686 = vsel %vm1637, %v1684, -1e+10
    %v1687 = vsel %vm430, %v1686, -inf
    %v1688 = vrot.slane %v1687, 4
    %v1689 = vmax.f32 %v1687, %v1688
    %v1690 = vrot.slane %v1689, 2
    %v1691 = vmax.f32 %v1689, %v1690
    %v1692 = vrot.slane %v1691, 1
    %v1693 = vmax.f32 %v1691, %v1692
    %v1694 = vsub.f32 %v1686, %v1693
    %v1695 = vmul.f32 %v1694, 1.442695
    %v1696 = vpow.pop %v1695
    %v1697 = vsel %vm430, %v1696, 0.0
    %v1698 = vrot.slane %v1697, 4
    %v1699 = vadd.f32 %v1697, %v1698
    %v1700 = vrot.slane %v1699, 2
    %v1701 = vadd.f32 %v1699, %v1700
    %v1702 = vrot.slane %v1701, 1
    %v1703 = vadd.f32 %v1701, %v1702
    %v1704 = vrcp.pop %v1703
    %v1705 = vmul.f32 %v1696, %v1704
    %v1706 = vlaneseq
    %v1707 = vshrl.u32 %v1706, 7
    %v1708 = vsub.s32 0, %v1707
    %v1709 = vrot.slane %v1705, %v1708
    %1711 = vbcast.lane.b32.xlu0 %v1709, 256
    %v1712 = vpop.permute.xlu0 %1711
    %v1713 = vlaneseq
    %v1714 = vshrl.u32 %v1713, 7
    %v1715 = vsub.s32 1, %v1714
    %v1716 = vrot.slane %v1705, %v1715
    %1718 = vbcast.lane.b32.xlu0 %v1716, 256
    %v1719 = vpop.permute.xlu0 %1718
    %v1720 = vlaneseq
    %v1721 = vshrl.u32 %v1720, 7
    %v1722 = vsub.s32 2, %v1721
    %v1723 = vrot.slane %v1705, %v1722
    %1725 = vbcast.lane.b32.xlu0 %v1723, 256
    %v1726 = vpop.permute.xlu0 %1725
    %v1727 = vlaneseq
    %v1728 = vshrl.u32 %v1727, 7
    %v1729 = vsub.s32 3, %v1728
    %v1730 = vrot.slane %v1705, %v1729
    %1732 = vbcast.lane.b32.xlu0 %v1730, 256
    %v1733 = vpop.permute.xlu0 %1732
    %v1734 = vlaneseq
    %v1735 = vshrl.u32 %v1734, 7
    %v1736 = vsub.s32 4, %v1735
    %v1737 = vrot.slane %v1705, %v1736
    %1739 = vbcast.lane.b32.xlu0 %v1737, 256
    %v1740 = vpop.permute.xlu0 %1739
    %v1741 = vlaneseq
    %v1742 = vshrl.u32 %v1741, 7
    %v1743 = vsub.s32 5, %v1742
    %v1744 = vrot.slane %v1705, %v1743
    %1746 = vbcast.lane.b32.xlu0 %v1744, 256
    %v1747 = vpop.permute.xlu0 %1746
    %v1748 = vlaneseq
    %v1749 = vshrl.u32 %v1748, 7
    %v1750 = vsub.s32 6, %v1749
    %v1751 = vrot.slane %v1705, %v1750
    %1753 = vbcast.lane.b32.xlu0 %v1751, 256
    %v1754 = vpop.permute.xlu0 %1753
    %v1755 = vlaneseq
    %v1756 = vshrl.u32 %v1755, 7
    %v1757 = vsub.s32 7, %v1756
    %v1758 = vrot.slane %v1705, %v1757
    %1760 = vbcast.lane.b32.xlu0 %v1758, 256
    %v1761 = vpop.permute.xlu0 %1760
    %v1762 = vld [vmem:[%s3] sm:$0xff]
    %v1763 = vld [vmem:[%s3 + $0x8] sm:$0xff]
    %v1764 = vld [vmem:[%s3 + $0x10] sm:$0xff]
    %v1765 = vld [vmem:[%s3 + $0x18] sm:$0xff]
    %v1766 = vld [vmem:[%s3 + $0x20] sm:$0xff]
    %v1767 = vld [vmem:[%s3 + $0x28] sm:$0xff]
    %v1768 = vld [vmem:[%s3 + $0x30] sm:$0xff]
    %v1769 = vld [vmem:[%s3 + $0x38] sm:$0xff]
    %v1770 = vmul.f32 %v1712, %v1762
    %v1771 = vmul.f32 %v1719, %v1763
    %v1772 = vmul.f32 %v1726, %v1764
    %v1773 = vmul.f32 %v1733, %v1765
    %v1774 = vmul.f32 %v1740, %v1766
    %v1775 = vmul.f32 %v1747, %v1767
    %v1776 = vmul.f32 %v1754, %v1768
    %v1777 = vmul.f32 %v1761, %v1769
    %v1778 = vadd.f32 %v1770, %v1771
    %v1779 = vadd.f32 %v1778, %v1772
    %v1780 = vadd.f32 %v1779, %v1773
    %v1781 = vadd.f32 %v1780, %v1774
    %v1782 = vadd.f32 %v1781, %v1775
    %v1783 = vadd.f32 %v1782, %v1776
    %v1784 = vadd.f32 %v1783, %v1777
    %v1785 = vld [vmem:[%s9] sm:$0xff]
    %v1786 = vld [vmem:[%s9 + $0x8] sm:$0xff]
    %v1787 = vld [vmem:[%s9 + $0x10] sm:$0xff]
    %v1788 = vld [vmem:[%s9 + $0x18] sm:$0xff]
    %v1789 = vld [vmem:[%s9 + $0x20] sm:$0xff]
    %v1790 = vld [vmem:[%s9 + $0x28] sm:$0xff]
    %v1791 = vld [vmem:[%s9 + $0x30] sm:$0xff]
    %v1792 = vld [vmem:[%s9 + $0x38] sm:$0xff]
    %v1793 = vld [vmem:[%s9 + $0x40] sm:$0xff]
    %v1794 = vld [vmem:[%s9 + $0x48] sm:$0xff]
    %v1795 = vld [vmem:[%s9 + $0x50] sm:$0xff]
    %v1796 = vld [vmem:[%s9 + $0x58] sm:$0xff]
    %v1797 = vld [vmem:[%s10] sm:$0xff]
    %v1798 = vld [vmem:[%s10 + $0x8] sm:$0xff]
    %v1799 = vld [vmem:[%s10 + $0x10] sm:$0xff]
    %v1800 = vld [vmem:[%s10 + $0x18] sm:$0xff]
    %v1801 = vld [vmem:[%s10 + $0x20] sm:$0xff]
    %v1802 = vld [vmem:[%s10 + $0x28] sm:$0xff]
    %v1803 = vld [vmem:[%s10 + $0x30] sm:$0xff]
    %v1804 = vld [vmem:[%s10 + $0x38] sm:$0xff]
    %v1805 = vld [vmem:[%s10 + $0x40] sm:$0xff]
    %v1806 = vld [vmem:[%s10 + $0x48] sm:$0xff]
    %v1807 = vld [vmem:[%s10 + $0x50] sm:$0xff]
    %v1808 = vld [vmem:[%s10 + $0x58] sm:$0xff]
    %v1809 = vld [vmem:[%s10 + $0x60] sm:$0xff]
    %v1810 = vld [vmem:[%s10 + $0x68] sm:$0xff]
    %v1811 = vld [vmem:[%s10 + $0x70] sm:$0xff]
    %v1812 = vld [vmem:[%s10 + $0x78] sm:$0xff]
    %v1813 = vld [vmem:[%s10 + $0x80] sm:$0xff]
    %v1814 = vld [vmem:[%s10 + $0x88] sm:$0xff]
    %v1815 = vld [vmem:[%s10 + $0x90] sm:$0xff]
    %v1816 = vld [vmem:[%s10 + $0x98] sm:$0xff]
    %v1817 = vld [vmem:[%s10 + $0xa0] sm:$0xff]
    %v1818 = vld [vmem:[%s10 + $0xa8] sm:$0xff]
    %v1819 = vld [vmem:[%s10 + $0xb0] sm:$0xff]
    %v1820 = vld [vmem:[%s10 + $0xb8] sm:$0xff]
    %v1821 = vld [vmem:[%s10 + $0xc0] sm:$0xff]
    %v1822 = vld [vmem:[%s10 + $0xc8] sm:$0xff]
    %v1823 = vld [vmem:[%s10 + $0xd0] sm:$0xff]
    %v1824 = vld [vmem:[%s10 + $0xd8] sm:$0xff]
    %v1825 = vld [vmem:[%s10 + $0xe0] sm:$0xff]
    %v1826 = vld [vmem:[%s10 + $0xe8] sm:$0xff]
    %v1827 = vld [vmem:[%s10 + $0xf0] sm:$0xff]
    %v1828 = vld [vmem:[%s10 + $0xf8] sm:$0xff]
    %v1829 = vld [vmem:[%s10 + $0x100] sm:$0xff]
    %v1830 = vld [vmem:[%s10 + $0x108] sm:$0xff]
    %v1831 = vld [vmem:[%s10 + $0x110] sm:$0xff]
    %v1832 = vld [vmem:[%s10 + $0x118] sm:$0xff]
    %v1833 = vld [vmem:[%s10 + $0x120] sm:$0xff]
    %v1834 = vld [vmem:[%s10 + $0x128] sm:$0xff]
    %v1835 = vld [vmem:[%s10 + $0x130] sm:$0xff]
    %v1836 = vld [vmem:[%s10 + $0x138] sm:$0xff]
    %v1837 = vld [vmem:[%s10 + $0x140] sm:$0xff]
    %v1838 = vld [vmem:[%s10 + $0x148] sm:$0xff]
    %v1839 = vld [vmem:[%s10 + $0x150] sm:$0xff]
    %v1840 = vld [vmem:[%s10 + $0x158] sm:$0xff]
    %v1841 = vld [vmem:[%s10 + $0x160] sm:$0xff]
    %v1842 = vld [vmem:[%s10 + $0x168] sm:$0xff]
    %v1843 = vld [vmem:[%s10 + $0x170] sm:$0xff]
    %v1844 = vld [vmem:[%s10 + $0x178] sm:$0xff]
    %1845 = vmatprep.subr.mxu0 %v1798
    %1846 = vmatpush1.msra.mxu0 %v1797
    %1847 = vmatprep.subr.mxu0 %v1801
    %1848 = vmatpush1.msra.mxu0 %v1800
    %1849 = vmatprep.subr.mxu0 %v1804
    %1850 = vmatpush1.msra.mxu0 %v1803
    %1851 = vmatprep.subr.mxu0 %v1807
    %1852 = vmatpush1.msra.mxu0 %v1806
    %1853 = vmatprep.subr.mxu0 %v1810
    %1854 = vmatpush1.msra.mxu0 %v1809
    %1855 = vmatprep.subr.mxu0 %v1813
    %1856 = vmatpush1.msra.mxu0 %v1812
    %1857 = vmatprep.subr.mxu0 %v1816
    %1858 = vmatpush1.msra.mxu0 %v1815
    %1859 = vmatprep.subr.mxu0 %v1819
    %1860 = vmatpush1.msra.mxu0 %v1818
    %1861 = vmatprep.subr.mxu0 %v1822
    %1862 = vmatpush1.msra.mxu0 %v1821
    %1863 = vmatprep.subr.mxu0 %v1825
    %1864 = vmatpush1.msra.mxu0 %v1824
    %1865 = vmatprep.subr.mxu0 %v1828
    %1866 = vmatpush1.msra.mxu0 %v1827
    %1867 = vmatprep.subr.mxu0 %v1831
    %1868 = vmatpush1.msra.mxu0 %v1830
    %1869 = vmatprep.subr.mxu0 %v1834
    %1870 = vmatpush1.msra.mxu0 %v1833
    %1871 = vmatprep.subr.mxu0 %v1837
    %1872 = vmatpush1.msra.mxu0 %v1836
    %1873 = vmatprep.subr.mxu0 %v1840
    %1874 = vmatpush1.msra.mxu0 %v1839
    %1875 = vmatprep.subr.mxu0 %v1843
    %1876 = vmatpush1.msra.mxu0 %v1842
    %1877 = vmatprep.subr.mxu0 0.0
    %1878 = vmatpush1.msra.mxu0 0.0
    %1879 = vmatprep.subr.mxu0 0.0
    %1880 = vmatpush1.msra.mxu0 0.0
    %1881 = vmatprep.subr.mxu0 0.0
    %1882 = vmatpush1.msra.mxu0 0.0
    %1883 = vmatprep.subr.mxu0 0.0
    %1884 = vmatpush1.msra.mxu0 0.0
    %1885 = vmatprep.subr.mxu0 0.0
    %1886 = vmatpush1.msra.mxu0 0.0
    %1887 = vmatprep.subr.mxu0 0.0
    %1888 = vmatpush1.msra.mxu0 0.0
    %1889 = vmatprep.subr.mxu0 0.0
    %1890 = vmatpush1.msra.mxu0 0.0
    %1891 = vmatprep.subr.mxu0 0.0
    %1892 = vmatpush1.msra.mxu0 0.0
    %1893 = vmatprep.subr.mxu0 0.0
    %1894 = vmatpush1.msra.mxu0 0.0
    %1895 = vmatprep.subr.mxu0 0.0
    %1896 = vmatpush1.msra.mxu0 0.0
    %1897 = vmatprep.subr.mxu0 0.0
    %1898 = vmatpush1.msra.mxu0 0.0
    %1899 = vmatprep.subr.mxu0 0.0
    %1900 = vmatpush1.msra.mxu0 0.0
    %1901 = vmatprep.subr.mxu0 0.0
    %1902 = vmatpush1.msra.mxu0 0.0
    %1903 = vmatprep.subr.mxu0 0.0
    %1904 = vmatpush1.msra.mxu0 0.0
    %1905 = vmatprep.subr.mxu0 0.0
    %1906 = vmatpush1.msra.mxu0 0.0
    %1907 = vmatprep.subr.mxu0 0.0
    %1908 = vmatpush1.msra.mxu0 0.0
    %1909 = vmatprep.mubr.f32.mxu0 0.0
    %1910 = vmatmul.mubr.f32.gmra.mrb[0].mxu0 %v1784
    %v1911 = vpop.f32.mrb[0].mxu0
    %v1912 = vadd.f32 0.0, %v1911
    %v1913 = vpop.f32.mrb[0].mxu0
    %v1914 = vadd.f32 0.0, %v1913
    %1915 = vdwg.mxu0
    %1916 = vmatprep.subr.mxu0 0.0
    %1917 = vmatpush1.msra.mxu0 %v1799
    %1918 = vmatprep.subr.mxu0 0.0
    %1919 = vmatpush1.msra.mxu0 %v1802
    %1920 = vmatprep.subr.mxu0 0.0
    %1921 = vmatpush1.msra.mxu0 %v1805
    %1922 = vmatprep.subr.mxu0 0.0
    %1923 = vmatpush1.msra.mxu0 %v1808
    %1924 = vmatprep.subr.mxu0 0.0
    %1925 = vmatpush1.msra.mxu0 %v1811
    %1926 = vmatprep.subr.mxu0 0.0
    %1927 = vmatpush1.msra.mxu0 %v1814
    %1928 = vmatprep.subr.mxu0 0.0
    %1929 = vmatpush1.msra.mxu0 %v1817
    %1930 = vmatprep.subr.mxu0 0.0
    %1931 = vmatpush1.msra.mxu0 %v1820
    %1932 = vmatprep.subr.mxu0 0.0
    %1933 = vmatpush1.msra.mxu0 %v1823
    %1934 = vmatprep.subr.mxu0 0.0
    %1935 = vmatpush1.msra.mxu0 %v1826
    %1936 = vmatprep.subr.mxu0 0.0
    %1937 = vmatpush1.msra.mxu0 %v1829
    %1938 = vmatprep.subr.mxu0 0.0
    %1939 = vmatpush1.msra.mxu0 %v1832
    %1940 = vmatprep.subr.mxu0 0.0
    %1941 = vmatpush1.msra.mxu0 %v1835
    %1942 = vmatprep.subr.mxu0 0.0
    %1943 = vmatpush1.msra.mxu0 %v1838
    %1944 = vmatprep.subr.mxu0 0.0
    %1945 = vmatpush1.msra.mxu0 %v1841
    %1946 = vmatprep.subr.mxu0 0.0
    %1947 = vmatpush1.msra.mxu0 %v1844
    %1948 = vmatprep.subr.mxu0 0.0
    %1949 = vmatpush1.msra.mxu0 0.0
    %1950 = vmatprep.subr.mxu0 0.0
    %1951 = vmatpush1.msra.mxu0 0.0
    %1952 = vmatprep.subr.mxu0 0.0
    %1953 = vmatpush1.msra.mxu0 0.0
    %1954 = vmatprep.subr.mxu0 0.0
    %1955 = vmatpush1.msra.mxu0 0.0
    %1956 = vmatprep.subr.mxu0 0.0
    %1957 = vmatpush1.msra.mxu0 0.0
    %1958 = vmatprep.subr.mxu0 0.0
    %1959 = vmatpush1.msra.mxu0 0.0
    %1960 = vmatprep.subr.mxu0 0.0
    %1961 = vmatpush1.msra.mxu0 0.0
    %1962 = vmatprep.subr.mxu0 0.0
    %1963 = vmatpush1.msra.mxu0 0.0
    %1964 = vmatprep.subr.mxu0 0.0
    %1965 = vmatpush1.msra.mxu0 0.0
    %1966 = vmatprep.subr.mxu0 0.0
    %1967 = vmatpush1.msra.mxu0 0.0
    %1968 = vmatprep.subr.mxu0 0.0
    %1969 = vmatpush1.msra.mxu0 0.0
    %1970 = vmatprep.subr.mxu0 0.0
    %1971 = vmatpush1.msra.mxu0 0.0
    %1972 = vmatprep.subr.mxu0 0.0
    %1973 = vmatpush1.msra.mxu0 0.0
    %1974 = vmatprep.subr.mxu0 0.0
    %1975 = vmatpush1.msra.mxu0 0.0
    %1976 = vmatprep.subr.mxu0 0.0
    %1977 = vmatpush1.msra.mxu0 0.0
    %1978 = vmatprep.subr.mxu0 0.0
    %1979 = vmatpush1.msra.mxu0 0.0
    %1980 = vmatprep.mubr.f32.mxu0 0.0
    %1981 = vmatmul.mubr.f32.gmra.mrb[0].mxu0 %v1784
    %v1982 = vpop.f32.mrb[0].mxu0
    %v1983 = vadd.f32 0.0, %v1982
    %v1984 = vpop.f32.mrb[0].mxu0
    %1985 = vdwg.mxu0
    %v1987 = vsel %vm730, %v1494, 0
    %1989 = vmatprep.subr.mxu0 %v1786
    %1990 = vmatpush1.msra.mxu0 %v1785
    %1991 = vmatprep.subr.mxu0 %v1789
    %1992 = vmatpush1.msra.mxu0 %v1788
    %1993 = vmatprep.subr.mxu0 %v1792
    %1994 = vmatpush1.msra.mxu0 %v1791
    %1995 = vmatprep.subr.mxu0 %v1795
    %1996 = vmatpush1.msra.mxu0 %v1794
    %1997 = vmatprep.subr.mxu0 0.0
    %1998 = vmatpush1.msra.mxu0 0.0
    %1999 = vmatprep.subr.mxu0 0.0
    %2000 = vmatpush1.msra.mxu0 0.0
    %2001 = vmatprep.subr.mxu0 0.0
    %2002 = vmatpush1.msra.mxu0 0.0
    %2003 = vmatprep.subr.mxu0 0.0
    %2004 = vmatpush1.msra.mxu0 0.0
    %2005 = vmatprep.subr.mxu0 0.0
    %2006 = vmatpush1.msra.mxu0 0.0
    %2007 = vmatprep.subr.mxu0 0.0
    %2008 = vmatpush1.msra.mxu0 0.0
    %2009 = vmatprep.subr.mxu0 0.0
    %2010 = vmatpush1.msra.mxu0 0.0
    %2011 = vmatprep.subr.mxu0 0.0
    %2012 = vmatpush1.msra.mxu0 0.0
    %2013 = vmatprep.subr.mxu0 0.0
    %2014 = vmatpush1.msra.mxu0 0.0
    %2015 = vmatprep.subr.mxu0 0.0
    %2016 = vmatpush1.msra.mxu0 0.0
    %2017 = vmatprep.subr.mxu0 0.0
    %2018 = vmatpush1.msra.mxu0 0.0
    %2019 = vmatprep.subr.mxu0 0.0
    %2020 = vmatpush1.msra.mxu0 0.0
    %2021 = vmatprep.subr.mxu0 0.0
    %2022 = vmatpush1.msra.mxu0 0.0
    %2023 = vmatprep.subr.mxu0 0.0
    %2024 = vmatpush1.msra.mxu0 0.0
    %2025 = vmatprep.subr.mxu0 0.0
    %2026 = vmatpush1.msra.mxu0 0.0
    %2027 = vmatprep.subr.mxu0 0.0
    %2028 = vmatpush1.msra.mxu0 0.0
    %2029 = vmatprep.subr.mxu0 0.0
    %2030 = vmatpush1.msra.mxu0 0.0
    %2031 = vmatprep.subr.mxu0 0.0
    %2032 = vmatpush1.msra.mxu0 0.0
    %2033 = vmatprep.subr.mxu0 0.0
    %2034 = vmatpush1.msra.mxu0 0.0
    %2035 = vmatprep.subr.mxu0 0.0
    %2036 = vmatpush1.msra.mxu0 0.0
    %2037 = vmatprep.subr.mxu0 0.0
    %2038 = vmatpush1.msra.mxu0 0.0
    %2039 = vmatprep.subr.mxu0 0.0
    %2040 = vmatpush1.msra.mxu0 0.0
    %2041 = vmatprep.subr.mxu0 0.0
    %2042 = vmatpush1.msra.mxu0 0.0
    %2043 = vmatprep.subr.mxu0 0.0
    %2044 = vmatpush1.msra.mxu0 0.0
    %2045 = vmatprep.subr.mxu0 0.0
    %2046 = vmatpush1.msra.mxu0 0.0
    %2047 = vmatprep.subr.mxu0 0.0
    %2048 = vmatpush1.msra.mxu0 0.0
    %2049 = vmatprep.subr.mxu0 0.0
    %2050 = vmatpush1.msra.mxu0 0.0
    %2051 = vmatprep.subr.mxu0 0.0
    %2052 = vmatpush1.msra.mxu0 0.0
    %2053 = vmatprep.mubr.f32.mxu0 0.0
    %2054 = vmatmul.mubr.f32.gmra.mrb[0].mxu0 %v1987
    %v2055 = vpop.f32.mrb[0].mxu0
    %v2056 = vadd.f32 %v1912, %v2055
    %v2057 = vpop.f32.mrb[0].mxu0
    %v2058 = vadd.f32 %v1914, %v2057
    %2059 = vdwg.mxu0
    %2060 = vmatprep.subr.mxu0 0.0
    %2061 = vmatpush1.msra.mxu0 %v1787
    %2062 = vmatprep.subr.mxu0 0.0
    %2063 = vmatpush1.msra.mxu0 %v1790
    %2064 = vmatprep.subr.mxu0 0.0
    %2065 = vmatpush1.msra.mxu0 %v1793
    %2066 = vmatprep.subr.mxu0 0.0
    %2067 = vmatpush1.msra.mxu0 %v1796
    %2068 = vmatprep.subr.mxu0 0.0
    %2069 = vmatpush1.msra.mxu0 0.0
    %2070 = vmatprep.subr.mxu0 0.0
    %2071 = vmatpush1.msra.mxu0 0.0
    %2072 = vmatprep.subr.mxu0 0.0
    %2073 = vmatpush1.msra.mxu0 0.0
    %2074 = vmatprep.subr.mxu0 0.0
    %2075 = vmatpush1.msra.mxu0 0.0
    %2076 = vmatprep.subr.mxu0 0.0
    %2077 = vmatpush1.msra.mxu0 0.0
    %2078 = vmatprep.subr.mxu0 0.0
    %2079 = vmatpush1.msra.mxu0 0.0
    %2080 = vmatprep.subr.mxu0 0.0
    %2081 = vmatpush1.msra.mxu0 0.0
    %2082 = vmatprep.subr.mxu0 0.0
    %2083 = vmatpush1.msra.mxu0 0.0
    %2084 = vmatprep.subr.mxu0 0.0
    %2085 = vmatpush1.msra.mxu0 0.0
    %2086 = vmatprep.subr.mxu0 0.0
    %2087 = vmatpush1.msra.mxu0 0.0
    %2088 = vmatprep.subr.mxu0 0.0
    %2089 = vmatpush1.msra.mxu0 0.0
    %2090 = vmatprep.subr.mxu0 0.0
    %2091 = vmatpush1.msra.mxu0 0.0
    %2092 = vmatprep.subr.mxu0 0.0
    %2093 = vmatpush1.msra.mxu0 0.0
    %2094 = vmatprep.subr.mxu0 0.0
    %2095 = vmatpush1.msra.mxu0 0.0
    %2096 = vmatprep.subr.mxu0 0.0
    %2097 = vmatpush1.msra.mxu0 0.0
    %2098 = vmatprep.subr.mxu0 0.0
    %2099 = vmatpush1.msra.mxu0 0.0
    %2100 = vmatprep.subr.mxu0 0.0
    %2101 = vmatpush1.msra.mxu0 0.0
    %2102 = vmatprep.subr.mxu0 0.0
    %2103 = vmatpush1.msra.mxu0 0.0
    %2104 = vmatprep.subr.mxu0 0.0
    %2105 = vmatpush1.msra.mxu0 0.0
    %2106 = vmatprep.subr.mxu0 0.0
    %2107 = vmatpush1.msra.mxu0 0.0
    %2108 = vmatprep.subr.mxu0 0.0
    %2109 = vmatpush1.msra.mxu0 0.0
    %2110 = vmatprep.subr.mxu0 0.0
    %2111 = vmatpush1.msra.mxu0 0.0
    %2112 = vmatprep.subr.mxu0 0.0
    %2113 = vmatpush1.msra.mxu0 0.0
    %2114 = vmatprep.subr.mxu0 0.0
    %2115 = vmatpush1.msra.mxu0 0.0
    %2116 = vmatprep.subr.mxu0 0.0
    %2117 = vmatpush1.msra.mxu0 0.0
    %2118 = vmatprep.subr.mxu0 0.0
    %2119 = vmatpush1.msra.mxu0 0.0
    %2120 = vmatprep.subr.mxu0 0.0
    %2121 = vmatpush1.msra.mxu0 0.0
    %2122 = vmatprep.subr.mxu0 0.0
    %2123 = vmatpush1.msra.mxu0 0.0
    %2124 = vmatprep.mubr.f32.mxu0 0.0
    %2125 = vmatmul.mubr.f32.gmra.mrb[0].mxu0 %v1987
    %v2126 = vpop.f32.mrb[0].mxu0
    %v2127 = vadd.f32 %v1983, %v2126
    %v2128 = vpop.f32.mrb[0].mxu0
    %2129 = vdwg.mxu0
    %v2130 = vld [vmem:[%s12] sm:$0x7]
    %v2132 = vlaneseq
    %v2133 = vshrl.u32 %v2132, 7
    %v2134 = vsub.s32 0, %v2133
    %v2135 = vrot.slane %v2130, %v2134
    %v2136 = vlaneseq
    %v2137 = vshrl.u32 %v2136, 7
    %v2138 = vsub.s32 1, %v2137
    %v2139 = vrot.slane %v2130, %v2138
    %v2140 = vlaneseq
    %v2141 = vshrl.u32 %v2140, 7
    %v2142 = vsub.s32 2, %v2141
    %v2143 = vrot.slane %v2130, %v2142
    %v2147 = vadd.f32 %v2056, %v2135
    %v2148 = vadd.f32 %v2058, %v2139
    %v2149 = vadd.f32 %v2127, %v2143
    %v2150 = vld [vmem:[%s11] sm:$0xff]
    %v2151 = vld [vmem:[%s11 + $0x8] sm:$0xff]
    %v2152 = vld [vmem:[%s11 + $0x10] sm:$0xff]
    %v2153 = vld [vmem:[%s11 + $0x18] sm:$0xff]
    %v2154 = vld [vmem:[%s11 + $0x20] sm:$0xff]
    %v2155 = vld [vmem:[%s11 + $0x28] sm:$0xff]
    %v2156 = vld [vmem:[%s11 + $0x30] sm:$0xff]
    %v2157 = vld [vmem:[%s11 + $0x38] sm:$0xff]
    %v2158 = vld [vmem:[%s11 + $0x40] sm:$0xff]
    %v2159 = vld [vmem:[%s11 + $0x48] sm:$0xff]
    %v2160 = vld [vmem:[%s11 + $0x50] sm:$0xff]
    %v2161 = vld [vmem:[%s11 + $0x58] sm:$0xff]
    %v2162 = vld [vmem:[%s11 + $0x60] sm:$0xff]
    %v2163 = vld [vmem:[%s11 + $0x68] sm:$0xff]
    %v2164 = vld [vmem:[%s11 + $0x70] sm:$0xff]
    %v2165 = vld [vmem:[%s11 + $0x78] sm:$0xff]
    %v2166 = vld [vmem:[%s11 + $0x80] sm:$0xff]
    %v2167 = vld [vmem:[%s11 + $0x88] sm:$0xff]
    %v2168 = vld [vmem:[%s11 + $0x90] sm:$0xff]
    %v2169 = vld [vmem:[%s11 + $0x98] sm:$0xff]
    %v2170 = vld [vmem:[%s11 + $0xa0] sm:$0xff]
    %v2171 = vld [vmem:[%s11 + $0xa8] sm:$0xff]
    %v2172 = vld [vmem:[%s11 + $0xb0] sm:$0xff]
    %v2173 = vld [vmem:[%s11 + $0xb8] sm:$0xff]
    %v2174 = vld [vmem:[%s11 + $0xc0] sm:$0xff]
    %v2175 = vld [vmem:[%s11 + $0xc8] sm:$0xff]
    %v2176 = vld [vmem:[%s11 + $0xd0] sm:$0xff]
    %v2177 = vld [vmem:[%s11 + $0xd8] sm:$0xff]
    %v2178 = vld [vmem:[%s11 + $0xe0] sm:$0xff]
    %v2179 = vld [vmem:[%s11 + $0xe8] sm:$0xff]
    %v2180 = vld [vmem:[%s11 + $0xf0] sm:$0xff]
    %v2181 = vld [vmem:[%s11 + $0xf8] sm:$0xff]
    %v2182 = vld [vmem:[%s11 + $0x100] sm:$0xff]
    %v2183 = vld [vmem:[%s11 + $0x108] sm:$0xff]
    %v2184 = vld [vmem:[%s11 + $0x110] sm:$0xff]
    %v2185 = vld [vmem:[%s11 + $0x118] sm:$0xff]
    %v2186 = vld [vmem:[%s11 + $0x120] sm:$0xff]
    %v2187 = vld [vmem:[%s11 + $0x128] sm:$0xff]
    %v2188 = vld [vmem:[%s11 + $0x130] sm:$0xff]
    %v2189 = vld [vmem:[%s11 + $0x138] sm:$0xff]
    %v2190 = vld [vmem:[%s11 + $0x140] sm:$0xff]
    %v2191 = vld [vmem:[%s11 + $0x148] sm:$0xff]
    %v2192 = vld [vmem:[%s11 + $0x150] sm:$0xff]
    %v2193 = vld [vmem:[%s11 + $0x158] sm:$0xff]
    %v2194 = vld [vmem:[%s11 + $0x160] sm:$0xff]
    %v2195 = vld [vmem:[%s11 + $0x168] sm:$0xff]
    %v2196 = vld [vmem:[%s11 + $0x170] sm:$0xff]
    %v2197 = vld [vmem:[%s11 + $0x178] sm:$0xff]
    %v2198 = vld [vmem:[%s13] sm:$0x7]
    %v2200 = vlaneseq
    %v2201 = vshrl.u32 %v2200, 7
    %v2202 = vsub.s32 0, %v2201
    %v2203 = vrot.slane %v2198, %v2202
    %v2204 = vlaneseq
    %v2205 = vshrl.u32 %v2204, 7
    %v2206 = vsub.s32 1, %v2205
    %v2207 = vrot.slane %v2198, %v2206
    %v2208 = vlaneseq
    %v2209 = vshrl.u32 %v2208, 7
    %v2210 = vsub.s32 2, %v2209
    %v2211 = vrot.slane %v2198, %v2210
    %2215 = vmatprep.subr.mxu0 %v2151
    %2216 = vmatpush1.msra.mxu0 %v2150
    %2217 = vmatprep.subr.mxu0 %v2154
    %2218 = vmatpush1.msra.mxu0 %v2153
    %2219 = vmatprep.subr.mxu0 %v2157
    %2220 = vmatpush1.msra.mxu0 %v2156
    %2221 = vmatprep.subr.mxu0 %v2160
    %2222 = vmatpush1.msra.mxu0 %v2159
    %2223 = vmatprep.subr.mxu0 %v2163
    %2224 = vmatpush1.msra.mxu0 %v2162
    %2225 = vmatprep.subr.mxu0 %v2166
    %2226 = vmatpush1.msra.mxu0 %v2165
    %2227 = vmatprep.subr.mxu0 %v2169
    %2228 = vmatpush1.msra.mxu0 %v2168
    %2229 = vmatprep.subr.mxu0 %v2172
    %2230 = vmatpush1.msra.mxu0 %v2171
    %2231 = vmatprep.subr.mxu0 %v2175
    %2232 = vmatpush1.msra.mxu0 %v2174
    %2233 = vmatprep.subr.mxu0 %v2178
    %2234 = vmatpush1.msra.mxu0 %v2177
    %2235 = vmatprep.subr.mxu0 %v2181
    %2236 = vmatpush1.msra.mxu0 %v2180
    %2237 = vmatprep.subr.mxu0 %v2184
    %2238 = vmatpush1.msra.mxu0 %v2183
    %2239 = vmatprep.subr.mxu0 %v2187
    %2240 = vmatpush1.msra.mxu0 %v2186
    %2241 = vmatprep.subr.mxu0 %v2190
    %2242 = vmatpush1.msra.mxu0 %v2189
    %2243 = vmatprep.subr.mxu0 %v2193
    %2244 = vmatpush1.msra.mxu0 %v2192
    %2245 = vmatprep.subr.mxu0 %v2196
    %2246 = vmatpush1.msra.mxu0 %v2195
    %2247 = vmatprep.subr.mxu0 0.0
    %2248 = vmatpush1.msra.mxu0 0.0
    %2249 = vmatprep.subr.mxu0 0.0
    %2250 = vmatpush1.msra.mxu0 0.0
    %2251 = vmatprep.subr.mxu0 0.0
    %2252 = vmatpush1.msra.mxu0 0.0
    %2253 = vmatprep.subr.mxu0 0.0
    %2254 = vmatpush1.msra.mxu0 0.0
    %2255 = vmatprep.subr.mxu0 0.0
    %2256 = vmatpush1.msra.mxu0 0.0
    %2257 = vmatprep.subr.mxu0 0.0
    %2258 = vmatpush1.msra.mxu0 0.0
    %2259 = vmatprep.subr.mxu0 0.0
    %2260 = vmatpush1.msra.mxu0 0.0
    %2261 = vmatprep.subr.mxu0 0.0
    %2262 = vmatpush1.msra.mxu0 0.0
    %2263 = vmatprep.subr.mxu0 0.0
    %2264 = vmatpush1.msra.mxu0 0.0
    %2265 = vmatprep.subr.mxu0 0.0
    %2266 = vmatpush1.msra.mxu0 0.0
    %2267 = vmatprep.subr.mxu0 0.0
    %2268 = vmatpush1.msra.mxu0 0.0
    %2269 = vmatprep.subr.mxu0 0.0
    %2270 = vmatpush1.msra.mxu0 0.0
    %2271 = vmatprep.subr.mxu0 0.0
    %2272 = vmatpush1.msra.mxu0 0.0
    %2273 = vmatprep.subr.mxu0 0.0
    %2274 = vmatpush1.msra.mxu0 0.0
    %2275 = vmatprep.subr.mxu0 0.0
    %2276 = vmatpush1.msra.mxu0 0.0
    %2277 = vmatprep.subr.mxu0 0.0
    %2278 = vmatpush1.msra.mxu0 0.0
    %2279 = vmatprep.mubr.f32.mxu0 0.0
    %2280 = vmatmul.mubr.f32.gmra.mrb[0].mxu0 %v1121
    %v2281 = vpop.f32.mrb[0].mxu0
    %v2282 = vadd.f32 %v2203, %v2281
    %v2283 = vpop.f32.mrb[0].mxu0
    %v2284 = vadd.f32 %v2207, %v2283
    %2285 = vdwg.mxu0
    %2286 = vmatprep.subr.mxu0 0.0
    %2287 = vmatpush1.msra.mxu0 %v2152
    %2288 = vmatprep.subr.mxu0 0.0
    %2289 = vmatpush1.msra.mxu0 %v2155
    %2290 = vmatprep.subr.mxu0 0.0
    %2291 = vmatpush1.msra.mxu0 %v2158
    %2292 = vmatprep.subr.mxu0 0.0
    %2293 = vmatpush1.msra.mxu0 %v2161
    %2294 = vmatprep.subr.mxu0 0.0
    %2295 = vmatpush1.msra.mxu0 %v2164
    %2296 = vmatprep.subr.mxu0 0.0
    %2297 = vmatpush1.msra.mxu0 %v2167
    %2298 = vmatprep.subr.mxu0 0.0
    %2299 = vmatpush1.msra.mxu0 %v2170
    %2300 = vmatprep.subr.mxu0 0.0
    %2301 = vmatpush1.msra.mxu0 %v2173
    %2302 = vmatprep.subr.mxu0 0.0
    %2303 = vmatpush1.msra.mxu0 %v2176
    %2304 = vmatprep.subr.mxu0 0.0
    %2305 = vmatpush1.msra.mxu0 %v2179
    %2306 = vmatprep.subr.mxu0 0.0
    %2307 = vmatpush1.msra.mxu0 %v2182
    %2308 = vmatprep.subr.mxu0 0.0
    %2309 = vmatpush1.msra.mxu0 %v2185
    %2310 = vmatprep.subr.mxu0 0.0
    %2311 = vmatpush1.msra.mxu0 %v2188
    %2312 = vmatprep.subr.mxu0 0.0
    %2313 = vmatpush1.msra.mxu0 %v2191
    %2314 = vmatprep.subr.mxu0 0.0
    %2315 = vmatpush1.msra.mxu0 %v2194
    %2316 = vmatprep.subr.mxu0 0.0
    %2317 = vmatpush1.msra.mxu0 %v2197
    %2318 = vmatprep.subr.mxu0 0.0
    %2319 = vmatpush1.msra.mxu0 0.0
    %2320 = vmatprep.subr.mxu0 0.0
    %2321 = vmatpush1.msra.mxu0 0.0
    %2322 = vmatprep.subr.mxu0 0.0
    %2323 = vmatpush1.msra.mxu0 0.0
    %2324 = vmatprep.subr.mxu0 0.0
    %2325 = vmatpush1.msra.mxu0 0.0
    %2326 = vmatprep.subr.mxu0 0.0
    %2327 = vmatpush1.msra.mxu0 0.0
    %2328 = vmatprep.subr.mxu0 0.0
    %2329 = vmatpush1.msra.mxu0 0.0
    %2330 = vmatprep.subr.mxu0 0.0
    %2331 = vmatpush1.msra.mxu0 0.0
    %2332 = vmatprep.subr.mxu0 0.0
    %2333 = vmatpush1.msra.mxu0 0.0
    %2334 = vmatprep.subr.mxu0 0.0
    %2335 = vmatpush1.msra.mxu0 0.0
    %2336 = vmatprep.subr.mxu0 0.0
    %2337 = vmatpush1.msra.mxu0 0.0
    %2338 = vmatprep.subr.mxu0 0.0
    %2339 = vmatpush1.msra.mxu0 0.0
    %2340 = vmatprep.subr.mxu0 0.0
    %2341 = vmatpush1.msra.mxu0 0.0
    %2342 = vmatprep.subr.mxu0 0.0
    %2343 = vmatpush1.msra.mxu0 0.0
    %2344 = vmatprep.subr.mxu0 0.0
    %2345 = vmatpush1.msra.mxu0 0.0
    %2346 = vmatprep.subr.mxu0 0.0
    %2347 = vmatpush1.msra.mxu0 0.0
    %2348 = vmatprep.subr.mxu0 0.0
    %2349 = vmatpush1.msra.mxu0 0.0
    %2350 = vmatprep.mubr.f32.mxu0 0.0
    %2351 = vmatmul.mubr.f32.gmra.mrb[0].mxu0 %v1121
    %v2352 = vpop.f32.mrb[0].mxu0
    %v2353 = vadd.f32 %v2211, %v2352
    %v2354 = vpop.f32.mrb[0].mxu0
    %2355 = vdwg.mxu0
    %v2356 = vadd.f32 %v2147, %v2282
    %v2357 = vxor.u32 %v2356, 2147483648
    %v2358 = vmul.f32 %v2357, 1.442695
    %v2359 = vpow.pop %v2358
    %v2360 = vadd.f32 %v2359, 1.0
    %v2361 = vrcp.pop %v2360
    %v2362 = vmul.f32 1.0, %v2361
    %v2363 = vadd.f32 %v2148, %v2284
    %v2364 = vxor.u32 %v2363, 2147483648
    %v2365 = vmul.f32 %v2364, 1.442695
    %v2366 = vpow.pop %v2365
    %v2367 = vadd.f32 %v2366, 1.0
    %v2368 = vrcp.pop %v2367
    %v2369 = vmul.f32 1.0, %v2368
    %v2370 = vmul.f32 %v2362, %v2353
    %v2371 = vadd.f32 %v2149, %v2370
    %v2372 = vtanh.pop %v2371
    %v2373 = vsub.f32 1.0, %v2369
    %v2374 = vmul.f32 %v2373, %v2372
    %v2375 = vmul.f32 %v2369, %v1121
    %v2376 = vadd.f32 %v2374, %v2375
    %v2377 = vld [vmem:[%s14] sm:$0xff]
    %v2378 = vld [vmem:[%s14 + $0x8] sm:$0xff]
    %v2379 = vld [vmem:[%s14 + $0x10] sm:$0xff]
    %v2380 = vld [vmem:[%s14 + $0x18] sm:$0xff]
    %v2381 = vld [vmem:[%s14 + $0x20] sm:$0xff]
    %v2382 = vld [vmem:[%s14 + $0x28] sm:$0xff]
    %v2383 = vld [vmem:[%s14 + $0x30] sm:$0xff]
    %v2384 = vld [vmem:[%s14 + $0x38] sm:$0xff]
    %v2385 = vld [vmem:[%s14 + $0x40] sm:$0xff]
    %v2386 = vld [vmem:[%s14 + $0x48] sm:$0xff]
    %v2387 = vld [vmem:[%s14 + $0x50] sm:$0xff]
    %v2388 = vld [vmem:[%s14 + $0x58] sm:$0xff]
    %v2389 = vld [vmem:[%s14 + $0x60] sm:$0xff]
    %v2390 = vld [vmem:[%s14 + $0x68] sm:$0xff]
    %v2391 = vld [vmem:[%s14 + $0x70] sm:$0xff]
    %v2392 = vld [vmem:[%s14 + $0x78] sm:$0xff]
    %v2393 = vld [vmem:[%s15] sm:$0xff]
    %v2394 = vld [vmem:[%s15 + $0x8] sm:$0xff]
    %v2395 = vld [vmem:[%s15 + $0x10] sm:$0xff]
    %v2396 = vld [vmem:[%s15 + $0x18] sm:$0xff]
    %v2397 = vld [vmem:[%s15 + $0x20] sm:$0xff]
    %v2398 = vld [vmem:[%s15 + $0x28] sm:$0xff]
    %v2399 = vld [vmem:[%s15 + $0x30] sm:$0xff]
    %v2400 = vld [vmem:[%s15 + $0x38] sm:$0xff]
    %v2401 = vld [vmem:[%s15 + $0x40] sm:$0xff]
    %v2402 = vld [vmem:[%s15 + $0x48] sm:$0xff]
    %v2403 = vld [vmem:[%s15 + $0x50] sm:$0xff]
    %v2404 = vld [vmem:[%s15 + $0x58] sm:$0xff]
    %v2405 = vld [vmem:[%s15 + $0x60] sm:$0xff]
    %v2406 = vld [vmem:[%s15 + $0x68] sm:$0xff]
    %v2407 = vld [vmem:[%s15 + $0x70] sm:$0xff]
    %v2408 = vld [vmem:[%s15 + $0x78] sm:$0xff]
    %2409 = vmatprep.subr.mxu0 0.0
    %2410 = vmatpush1.msra.mxu0 %v2393
    %2411 = vmatprep.subr.mxu0 0.0
    %2412 = vmatpush1.msra.mxu0 %v2394
    %2413 = vmatprep.subr.mxu0 0.0
    %2414 = vmatpush1.msra.mxu0 %v2395
    %2415 = vmatprep.subr.mxu0 0.0
    %2416 = vmatpush1.msra.mxu0 %v2396
    %2417 = vmatprep.subr.mxu0 0.0
    %2418 = vmatpush1.msra.mxu0 %v2397
    %2419 = vmatprep.subr.mxu0 0.0
    %2420 = vmatpush1.msra.mxu0 %v2398
    %2421 = vmatprep.subr.mxu0 0.0
    %2422 = vmatpush1.msra.mxu0 %v2399
    %2423 = vmatprep.subr.mxu0 0.0
    %2424 = vmatpush1.msra.mxu0 %v2400
    %2425 = vmatprep.subr.mxu0 0.0
    %2426 = vmatpush1.msra.mxu0 %v2401
    %2427 = vmatprep.subr.mxu0 0.0
    %2428 = vmatpush1.msra.mxu0 %v2402
    %2429 = vmatprep.subr.mxu0 0.0
    %2430 = vmatpush1.msra.mxu0 %v2403
    %2431 = vmatprep.subr.mxu0 0.0
    %2432 = vmatpush1.msra.mxu0 %v2404
    %2433 = vmatprep.subr.mxu0 0.0
    %2434 = vmatpush1.msra.mxu0 %v2405
    %2435 = vmatprep.subr.mxu0 0.0
    %2436 = vmatpush1.msra.mxu0 %v2406
    %2437 = vmatprep.subr.mxu0 0.0
    %2438 = vmatpush1.msra.mxu0 %v2407
    %2439 = vmatprep.subr.mxu0 0.0
    %2440 = vmatpush1.msra.mxu0 %v2408
    %2441 = vmatprep.subr.mxu0 0.0
    %2442 = vmatpush1.msra.mxu0 0.0
    %2443 = vmatprep.subr.mxu0 0.0
    %2444 = vmatpush1.msra.mxu0 0.0
    %2445 = vmatprep.subr.mxu0 0.0
    %2446 = vmatpush1.msra.mxu0 0.0
    %2447 = vmatprep.subr.mxu0 0.0
    %2448 = vmatpush1.msra.mxu0 0.0
    %2449 = vmatprep.subr.mxu0 0.0
    %2450 = vmatpush1.msra.mxu0 0.0
    %2451 = vmatprep.subr.mxu0 0.0
    %2452 = vmatpush1.msra.mxu0 0.0
    %2453 = vmatprep.subr.mxu0 0.0
    %2454 = vmatpush1.msra.mxu0 0.0
    %2455 = vmatprep.subr.mxu0 0.0
    %2456 = vmatpush1.msra.mxu0 0.0
    %2457 = vmatprep.subr.mxu0 0.0
    %2458 = vmatpush1.msra.mxu0 0.0
    %2459 = vmatprep.subr.mxu0 0.0
    %2460 = vmatpush1.msra.mxu0 0.0
    %2461 = vmatprep.subr.mxu0 0.0
    %2462 = vmatpush1.msra.mxu0 0.0
    %2463 = vmatprep.subr.mxu0 0.0
    %2464 = vmatpush1.msra.mxu0 0.0
    %2465 = vmatprep.subr.mxu0 0.0
    %2466 = vmatpush1.msra.mxu0 0.0
    %2467 = vmatprep.subr.mxu0 0.0
    %2468 = vmatpush1.msra.mxu0 0.0
    %2469 = vmatprep.subr.mxu0 0.0
    %2470 = vmatpush1.msra.mxu0 0.0
    %2471 = vmatprep.subr.mxu0 0.0
    %2472 = vmatpush1.msra.mxu0 0.0
    %2473 = vmatprep.mubr.f32.mxu0 0.0
    %2474 = vmatmul.mubr.f32.gmra.mrb[0].mxu0 %v1784
    %v2475 = vpop.f32.mrb[0].mxu0
    %v2476 = vadd.f32 0.0, %v2475
    %v2477 = vpop.f32.mrb[0].mxu0
    %2478 = vdwg.mxu0
    %2479 = vmatprep.subr.mxu0 0.0
    %2480 = vmatpush1.msra.mxu0 %v2377
    %2481 = vmatprep.subr.mxu0 0.0
    %2482 = vmatpush1.msra.mxu0 %v2378
    %2483 = vmatprep.subr.mxu0 0.0
    %2484 = vmatpush1.msra.mxu0 %v2379
    %2485 = vmatprep.subr.mxu0 0.0
    %2486 = vmatpush1.msra.mxu0 %v2380
    %2487 = vmatprep.subr.mxu0 0.0
    %2488 = vmatpush1.msra.mxu0 %v2381
    %2489 = vmatprep.subr.mxu0 0.0
    %2490 = vmatpush1.msra.mxu0 %v2382
    %2491 = vmatprep.subr.mxu0 0.0
    %2492 = vmatpush1.msra.mxu0 %v2383
    %2493 = vmatprep.subr.mxu0 0.0
    %2494 = vmatpush1.msra.mxu0 %v2384
    %2495 = vmatprep.subr.mxu0 0.0
    %2496 = vmatpush1.msra.mxu0 %v2385
    %2497 = vmatprep.subr.mxu0 0.0
    %2498 = vmatpush1.msra.mxu0 %v2386
    %2499 = vmatprep.subr.mxu0 0.0
    %2500 = vmatpush1.msra.mxu0 %v2387
    %2501 = vmatprep.subr.mxu0 0.0
    %2502 = vmatpush1.msra.mxu0 %v2388
    %2503 = vmatprep.subr.mxu0 0.0
    %2504 = vmatpush1.msra.mxu0 %v2389
    %2505 = vmatprep.subr.mxu0 0.0
    %2506 = vmatpush1.msra.mxu0 %v2390
    %2507 = vmatprep.subr.mxu0 0.0
    %2508 = vmatpush1.msra.mxu0 %v2391
    %2509 = vmatprep.subr.mxu0 0.0
    %2510 = vmatpush1.msra.mxu0 %v2392
    %2511 = vmatprep.subr.mxu0 0.0
    %2512 = vmatpush1.msra.mxu0 0.0
    %2513 = vmatprep.subr.mxu0 0.0
    %2514 = vmatpush1.msra.mxu0 0.0
    %2515 = vmatprep.subr.mxu0 0.0
    %2516 = vmatpush1.msra.mxu0 0.0
    %2517 = vmatprep.subr.mxu0 0.0
    %2518 = vmatpush1.msra.mxu0 0.0
    %2519 = vmatprep.subr.mxu0 0.0
    %2520 = vmatpush1.msra.mxu0 0.0
    %2521 = vmatprep.subr.mxu0 0.0
    %2522 = vmatpush1.msra.mxu0 0.0
    %2523 = vmatprep.subr.mxu0 0.0
    %2524 = vmatpush1.msra.mxu0 0.0
    %2525 = vmatprep.subr.mxu0 0.0
    %2526 = vmatpush1.msra.mxu0 0.0
    %2527 = vmatprep.subr.mxu0 0.0
    %2528 = vmatpush1.msra.mxu0 0.0
    %2529 = vmatprep.subr.mxu0 0.0
    %2530 = vmatpush1.msra.mxu0 0.0
    %2531 = vmatprep.subr.mxu0 0.0
    %2532 = vmatpush1.msra.mxu0 0.0
    %2533 = vmatprep.subr.mxu0 0.0
    %2534 = vmatpush1.msra.mxu0 0.0
    %2535 = vmatprep.subr.mxu0 0.0
    %2536 = vmatpush1.msra.mxu0 0.0
    %2537 = vmatprep.subr.mxu0 0.0
    %2538 = vmatpush1.msra.mxu0 0.0
    %2539 = vmatprep.subr.mxu0 0.0
    %2540 = vmatpush1.msra.mxu0 0.0
    %2541 = vmatprep.subr.mxu0 0.0
    %2542 = vmatpush1.msra.mxu0 0.0
    %2543 = vmatprep.mubr.f32.mxu0 0.0
    %2544 = vmatmul.mubr.f32.gmra.mrb[0].mxu0 %v2376
    %v2545 = vpop.f32.mrb[0].mxu0
    %v2546 = vadd.f32 %v2476, %v2545
    %v2547 = vpop.f32.mrb[0].mxu0
    %2548 = vdwg.mxu0
    %v2549 = vld [vmem:[%s16] sm:$0xff]
    %v2550 = vld [vmem:[%s16 + $0x8] sm:$0xff]
    %v2551 = vld [vmem:[%s16 + $0x10] sm:$0xff]
    %v2552 = vld [vmem:[%s16 + $0x18] sm:$0xff]
    %2553 = vmatprep.subr.mxu0 0.0
    %2554 = vmatpush1.msra.mxu0 %v2549
    %2555 = vmatprep.subr.mxu0 0.0
    %2556 = vmatpush1.msra.mxu0 %v2550
    %2557 = vmatprep.subr.mxu0 0.0
    %2558 = vmatpush1.msra.mxu0 %v2551
    %2559 = vmatprep.subr.mxu0 0.0
    %2560 = vmatpush1.msra.mxu0 %v2552
    %2561 = vmatprep.subr.mxu0 0.0
    %2562 = vmatpush1.msra.mxu0 0.0
    %2563 = vmatprep.subr.mxu0 0.0
    %2564 = vmatpush1.msra.mxu0 0.0
    %2565 = vmatprep.subr.mxu0 0.0
    %2566 = vmatpush1.msra.mxu0 0.0
    %2567 = vmatprep.subr.mxu0 0.0
    %2568 = vmatpush1.msra.mxu0 0.0
    %2569 = vmatprep.subr.mxu0 0.0
    %2570 = vmatpush1.msra.mxu0 0.0
    %2571 = vmatprep.subr.mxu0 0.0
    %2572 = vmatpush1.msra.mxu0 0.0
    %2573 = vmatprep.subr.mxu0 0.0
    %2574 = vmatpush1.msra.mxu0 0.0
    %2575 = vmatprep.subr.mxu0 0.0
    %2576 = vmatpush1.msra.mxu0 0.0
    %2577 = vmatprep.subr.mxu0 0.0
    %2578 = vmatpush1.msra.mxu0 0.0
    %2579 = vmatprep.subr.mxu0 0.0
    %2580 = vmatpush1.msra.mxu0 0.0
    %2581 = vmatprep.subr.mxu0 0.0
    %2582 = vmatpush1.msra.mxu0 0.0
    %2583 = vmatprep.subr.mxu0 0.0
    %2584 = vmatpush1.msra.mxu0 0.0
    %2585 = vmatprep.subr.mxu0 0.0
    %2586 = vmatpush1.msra.mxu0 0.0
    %2587 = vmatprep.subr.mxu0 0.0
    %2588 = vmatpush1.msra.mxu0 0.0
    %2589 = vmatprep.subr.mxu0 0.0
    %2590 = vmatpush1.msra.mxu0 0.0
    %2591 = vmatprep.subr.mxu0 0.0
    %2592 = vmatpush1.msra.mxu0 0.0
    %2593 = vmatprep.subr.mxu0 0.0
    %2594 = vmatpush1.msra.mxu0 0.0
    %2595 = vmatprep.subr.mxu0 0.0
    %2596 = vmatpush1.msra.mxu0 0.0
    %2597 = vmatprep.subr.mxu0 0.0
    %2598 = vmatpush1.msra.mxu0 0.0
    %2599 = vmatprep.subr.mxu0 0.0
    %2600 = vmatpush1.msra.mxu0 0.0
    %2601 = vmatprep.subr.mxu0 0.0
    %2602 = vmatpush1.msra.mxu0 0.0
    %2603 = vmatprep.subr.mxu0 0.0
    %2604 = vmatpush1.msra.mxu0 0.0
    %2605 = vmatprep.subr.mxu0 0.0
    %2606 = vmatpush1.msra.mxu0 0.0
    %2607 = vmatprep.subr.mxu0 0.0
    %2608 = vmatpush1.msra.mxu0 0.0
    %2609 = vmatprep.subr.mxu0 0.0
    %2610 = vmatpush1.msra.mxu0 0.0
    %2611 = vmatprep.subr.mxu0 0.0
    %2612 = vmatpush1.msra.mxu0 0.0
    %2613 = vmatprep.subr.mxu0 0.0
    %2614 = vmatpush1.msra.mxu0 0.0
    %2615 = vmatprep.subr.mxu0 0.0
    %2616 = vmatpush1.msra.mxu0 0.0
    %2617 = vmatprep.mubr.f32.mxu0 0.0
    %2618 = vmatmul.mubr.f32.gmra.mrb[0].mxu0 %v1987
    %v2619 = vpop.f32.mrb[0].mxu0
    %v2620 = vadd.f32 0.0, %v2619
    %v2621 = vpop.f32.mrb[0].mxu0
    %2622 = vdwg.mxu0
    %v2623 = vadd.f32 %v2546, %v2620
    %v2624 = vld [vmem:[%s17] sm:$0x1]
    %v2626 = vlaneseq
    %v2627 = vshrl.u32 %v2626, 7
    %v2628 = vsub.s32 0, %v2627
    %v2629 = vrot.slane %v2624, %v2628
    %v2631 = vadd.f32 %v2623, %v2629
    %s2632 = scalar_lea.vmem %s19, 8
    %2633 = vst [vmem:[%s2632] sm:$0xff] %v2631
    %2634 = vmax.xlane.f32.xlu0 %v2631
    %v2635 = vpop.xlane.xlu0 %2634
    %vm2636 = vcmp.eq.f32.partialorder %v2631, %v2635
    %v2637 = vsel %vm2636, %v381, 128
    %v2638 = vand.u32 %v2637, 65535
    %v2639 = vshra.s32 %v2637, 16
    %v2640 = vcvt.s32.f32 %v2638
    %v2641 = vcvt.s32.f32 %v2639
    %2642 = vmin.xlane.f32.xlu0 %v2641
    %v2643 = vpop.xlane.xlu0 %2642
    %vm2644 = vcmp.eq.f32.partialorder %v2641, %v2643
    %v2645 = vsel %vm2644, %v2640, inf
    %2646 = vmin.xlane.f32.xlu0 %v2645
    %v2647 = vpop.xlane.xlu0 %2646
    %v2648 = vcvt.f32.s32 %v2647
    %v2649 = vcvt.f32.s32 %v2643
    %v2650 = vshll.u32 %v2649, 16
    %v2651 = vadd.s32 %v2650, %v2648
    %vm2652 = vcmp.eq.s32.totalorder %v381, %v2651
    %v2653 = vsel %vm2652, 1, 0
    %v2654 = vcvt.s32.f32 %v2653
    %v2655 = vld [vmem:[%s18] sm:$0xff]
    %v2656 = vld [vmem:[%s18 + $0x8] sm:$0xff]
    %v2657 = vld [vmem:[%s18 + $0x10] sm:$0xff]
    %v2658 = vld [vmem:[%s18 + $0x18] sm:$0xff]
    %v2659 = vld [vmem:[%s18 + $0x20] sm:$0xff]
    %v2660 = vld [vmem:[%s18 + $0x28] sm:$0xff]
    %v2661 = vld [vmem:[%s18 + $0x30] sm:$0xff]
    %v2662 = vld [vmem:[%s18 + $0x38] sm:$0xff]
    %v2663 = vld [vmem:[%s18 + $0x40] sm:$0xff]
    %v2664 = vld [vmem:[%s18 + $0x48] sm:$0xff]
    %v2665 = vld [vmem:[%s18 + $0x50] sm:$0xff]
    %v2666 = vld [vmem:[%s18 + $0x58] sm:$0xff]
    %v2667 = vld [vmem:[%s18 + $0x60] sm:$0xff]
    %v2668 = vld [vmem:[%s18 + $0x68] sm:$0xff]
    %v2669 = vld [vmem:[%s18 + $0x70] sm:$0xff]
    %v2670 = vld [vmem:[%s18 + $0x78] sm:$0xff]
    %2671 = vmatprep.subr.mxu0 0.0
    %2672 = vmatpush1.msra.mxu0 %v2655
    %2673 = vmatprep.subr.mxu0 0.0
    %2674 = vmatpush1.msra.mxu0 %v2656
    %2675 = vmatprep.subr.mxu0 0.0
    %2676 = vmatpush1.msra.mxu0 %v2657
    %2677 = vmatprep.subr.mxu0 0.0
    %2678 = vmatpush1.msra.mxu0 %v2658
    %2679 = vmatprep.subr.mxu0 0.0
    %2680 = vmatpush1.msra.mxu0 %v2659
    %2681 = vmatprep.subr.mxu0 0.0
    %2682 = vmatpush1.msra.mxu0 %v2660
    %2683 = vmatprep.subr.mxu0 0.0
    %2684 = vmatpush1.msra.mxu0 %v2661
    %2685 = vmatprep.subr.mxu0 0.0
    %2686 = vmatpush1.msra.mxu0 %v2662
    %2687 = vmatprep.subr.mxu0 0.0
    %2688 = vmatpush1.msra.mxu0 %v2663
    %2689 = vmatprep.subr.mxu0 0.0
    %2690 = vmatpush1.msra.mxu0 %v2664
    %2691 = vmatprep.subr.mxu0 0.0
    %2692 = vmatpush1.msra.mxu0 %v2665
    %2693 = vmatprep.subr.mxu0 0.0
    %2694 = vmatpush1.msra.mxu0 %v2666
    %2695 = vmatprep.subr.mxu0 0.0
    %2696 = vmatpush1.msra.mxu0 %v2667
    %2697 = vmatprep.subr.mxu0 0.0
    %2698 = vmatpush1.msra.mxu0 %v2668
    %2699 = vmatprep.subr.mxu0 0.0
    %2700 = vmatpush1.msra.mxu0 %v2669
    %2701 = vmatprep.subr.mxu0 0.0
    %2702 = vmatpush1.msra.mxu0 %v2670
    %2703 = vmatprep.subr.mxu0 0.0
    %2704 = vmatpush1.msra.mxu0 0.0
    %2705 = vmatprep.subr.mxu0 0.0
    %2706 = vmatpush1.msra.mxu0 0.0
    %2707 = vmatprep.subr.mxu0 0.0
    %2708 = vmatpush1.msra.mxu0 0.0
    %2709 = vmatprep.subr.mxu0 0.0
    %2710 = vmatpush1.msra.mxu0 0.0
    %2711 = vmatprep.subr.mxu0 0.0
    %2712 = vmatpush1.msra.mxu0 0.0
    %2713 = vmatprep.subr.mxu0 0.0
    %2714 = vmatpush1.msra.mxu0 0.0
    %2715 = vmatprep.subr.mxu0 0.0
    %2716 = vmatpush1.msra.mxu0 0.0
    %2717 = vmatprep.subr.mxu0 0.0
    %2718 = vmatpush1.msra.mxu0 0.0
    %2719 = vmatprep.subr.mxu0 0.0
    %2720 = vmatpush1.msra.mxu0 0.0
    %2721 = vmatprep.subr.mxu0 0.0
    %2722 = vmatpush1.msra.mxu0 0.0
    %2723 = vmatprep.subr.mxu0 0.0
    %2724 = vmatpush1.msra.mxu0 0.0
    %2725 = vmatprep.subr.mxu0 0.0
    %2726 = vmatpush1.msra.mxu0 0.0
    %2727 = vmatprep.subr.mxu0 0.0
    %2728 = vmatpush1.msra.mxu0 0.0
    %2729 = vmatprep.subr.mxu0 0.0
    %2730 = vmatpush1.msra.mxu0 0.0
    %2731 = vmatprep.subr.mxu0 0.0
    %2732 = vmatpush1.msra.mxu0 0.0
    %2733 = vmatprep.subr.mxu0 0.0
    %2734 = vmatpush1.msra.mxu0 0.0
    %2735 = vmatprep.mubr.f32.mxu0 0.0
    %2736 = vmatmul.mubr.f32.gmra.mrb[0].mxu0 %v2654
    %v2737 = vpop.f32.mrb[0].mxu0
    %v2738 = vadd.f32 0.0, %v2737
    %v2739 = vpop.f32.mrb[0].mxu0
    %2740 = vdwg.mxu0
    %s2741 = sld [smem:[#allocation3 + $0x2]]
    %s2742 = scvt.s32.f32 %s2741
    %s2743 = scalar_lea.vmem %s1, 16
    %v2744 = vld [vmem:[%s2743] sm:$0xff]
    %v2745 = vstv %s2742
    %v2746 = vmul.f32 %v2745, %v2744
    %s2747 = ssub.f32 1.0, %s2742
    %v2748 = vstv %s2747
    %v2749 = vmul.f32 %v2748, %v2738
    %v2750 = vadd.f32 %v2746, %v2749
    %v2751 = vld [vmem:[%s5] sm:$0xff]
    %v2752 = vld [vmem:[%s5 + $0x8] sm:$0xff]
    %v2753 = vld [vmem:[%s5 + $0x10] sm:$0xff]
    %v2754 = vld [vmem:[%s5 + $0x18] sm:$0xff]
    %v2755 = vld [vmem:[%s5 + $0x20] sm:$0xff]
    %v2756 = vld [vmem:[%s5 + $0x28] sm:$0xff]
    %v2757 = vld [vmem:[%s5 + $0x30] sm:$0xff]
    %v2758 = vld [vmem:[%s5 + $0x38] sm:$0xff]
    %v2759 = vld [vmem:[%s5 + $0x40] sm:$0xff]
    %v2760 = vld [vmem:[%s5 + $0x48] sm:$0xff]
    %v2761 = vld [vmem:[%s5 + $0x50] sm:$0xff]
    %v2762 = vld [vmem:[%s5 + $0x58] sm:$0xff]
    %v2763 = vld [vmem:[%s5 + $0x60] sm:$0xff]
    %v2764 = vld [vmem:[%s5 + $0x68] sm:$0xff]
    %v2765 = vld [vmem:[%s5 + $0x70] sm:$0xff]
    %v2766 = vld [vmem:[%s5 + $0x78] sm:$0xff]
    %2767 = vmatprep.subr.mxu0 0.0
    %2768 = vmatpush1.msra.mxu0 %v2751
    %2769 = vmatprep.subr.mxu0 0.0
    %2770 = vmatpush1.msra.mxu0 %v2752
    %2771 = vmatprep.subr.mxu0 0.0
    %2772 = vmatpush1.msra.mxu0 %v2753
    %2773 = vmatprep.subr.mxu0 0.0
    %2774 = vmatpush1.msra.mxu0 %v2754
    %2775 = vmatprep.subr.mxu0 0.0
    %2776 = vmatpush1.msra.mxu0 %v2755
    %2777 = vmatprep.subr.mxu0 0.0
    %2778 = vmatpush1.msra.mxu0 %v2756
    %2779 = vmatprep.subr.mxu0 0.0
    %2780 = vmatpush1.msra.mxu0 %v2757
    %2781 = vmatprep.subr.mxu0 0.0
    %2782 = vmatpush1.msra.mxu0 %v2758
    %2783 = vmatprep.subr.mxu0 0.0
    %2784 = vmatpush1.msra.mxu0 %v2759
    %2785 = vmatprep.subr.mxu0 0.0
    %2786 = vmatpush1.msra.mxu0 %v2760
    %2787 = vmatprep.subr.mxu0 0.0
    %2788 = vmatpush1.msra.mxu0 %v2761
    %2789 = vmatprep.subr.mxu0 0.0
    %2790 = vmatpush1.msra.mxu0 %v2762
    %2791 = vmatprep.subr.mxu0 0.0
    %2792 = vmatpush1.msra.mxu0 %v2763
    %2793 = vmatprep.subr.mxu0 0.0
    %2794 = vmatpush1.msra.mxu0 %v2764
    %2795 = vmatprep.subr.mxu0 0.0
    %2796 = vmatpush1.msra.mxu0 %v2765
    %2797 = vmatprep.subr.mxu0 0.0
    %2798 = vmatpush1.msra.mxu0 %v2766
    %2799 = vmatprep.subr.mxu0 0.0
    %2800 = vmatpush1.msra.mxu0 0.0
    %2801 = vmatprep.subr.mxu0 0.0
    %2802 = vmatpush1.msra.mxu0 0.0
    %2803 = vmatprep.subr.mxu0 0.0
    %2804 = vmatpush1.msra.mxu0 0.0
    %2805 = vmatprep.subr.mxu0 0.0
    %2806 = vmatpush1.msra.mxu0 0.0
    %2807 = vmatprep.subr.mxu0 0.0
    %2808 = vmatpush1.msra.mxu0 0.0
    %2809 = vmatprep.subr.mxu0 0.0
    %2810 = vmatpush1.msra.mxu0 0.0
    %2811 = vmatprep.subr.mxu0 0.0
    %2812 = vmatpush1.msra.mxu0 0.0
    %2813 = vmatprep.subr.mxu0 0.0
    %2814 = vmatpush1.msra.mxu0 0.0
    %2815 = vmatprep.subr.mxu0 0.0
    %2816 = vmatpush1.msra.mxu0 0.0
    %2817 = vmatprep.subr.mxu0 0.0
    %2818 = vmatpush1.msra.mxu0 0.0
    %2819 = vmatprep.subr.mxu0 0.0
    %2820 = vmatpush1.msra.mxu0 0.0
    %2821 = vmatprep.subr.mxu0 0.0
    %2822 = vmatpush1.msra.mxu0 0.0
    %2823 = vmatprep.subr.mxu0 0.0
    %2824 = vmatpush1.msra.mxu0 0.0
    %2825 = vmatprep.subr.mxu0 0.0
    %2826 = vmatpush1.msra.mxu0 0.0
    %2827 = vmatprep.subr.mxu0 0.0
    %2828 = vmatpush1.msra.mxu0 0.0
    %2829 = vmatprep.subr.mxu0 0.0
    %2830 = vmatpush1.msra.mxu0 0.0
    %2831 = vmatprep.mubr.f32.mxu0 0.0
    %2832 = vmatmul.mubr.f32.gmra.mrb[0].mxu0 %v2376
    %v2833 = vpop.f32.mrb[0].mxu0
    %v2834 = vadd.f32 0.0, %v2833
    %v2835 = vpop.f32.mrb[0].mxu0
    %2836 = vdwg.mxu0
    %v2837 = vld [vmem:[#allocation2] sm:$0xff]
    %v2838 = vld [vmem:[#allocation2 + $0x8] sm:$0xff]
    %v2839 = vld [vmem:[#allocation2 + $0x10] sm:$0xff]
    %v2840 = vld [vmem:[#allocation2 + $0x18] sm:$0xff]
    %v2841 = vld [vmem:[#allocation2 + $0x20] sm:$0xff]
    %v2842 = vld [vmem:[#allocation2 + $0x28] sm:$0xff]
    %v2843 = vld [vmem:[#allocation2 + $0x30] sm:$0xff]
    %v2844 = vld [vmem:[#allocation2 + $0x38] sm:$0xff]
    %v2845 = vadd.f32 %v2834, %v2837
    %v2846 = vadd.f32 %v2834, %v2838
    %v2847 = vadd.f32 %v2834, %v2839
    %v2848 = vadd.f32 %v2834, %v2840
    %v2849 = vadd.f32 %v2834, %v2841
    %v2850 = vadd.f32 %v2834, %v2842
    %v2851 = vadd.f32 %v2834, %v2843
    %v2852 = vadd.f32 %v2834, %v2844
    %v2853 = vtanh.pop %v2845
    %v2854 = vtanh.pop %v2846
    %v2855 = vtanh.pop %v2847
    %v2856 = vtanh.pop %v2848
    %v2857 = vtanh.pop %v2849
    %v2858 = vtanh.pop %v2850
    %v2859 = vtanh.pop %v2851
    %v2860 = vtanh.pop %v2852
    %v2861 = vld [vmem:[%s8] sm:$0x1]
    %v2863 = vlaneseq
    %v2864 = vshrl.u32 %v2863, 7
    %v2865 = vsub.s32 0, %v2864
    %v2866 = vrot.slane %v2861, %v2865
    %v2868 = vmul.f32 %v2853, %v2866
    %v2869 = vmul.f32 %v2854, %v2866
    %v2870 = vmul.f32 %v2855, %v2866
    %v2871 = vmul.f32 %v2856, %v2866
    %v2872 = vmul.f32 %v2857, %v2866
    %v2873 = vmul.f32 %v2858, %v2866
    %v2874 = vmul.f32 %v2859, %v2866
    %v2875 = vmul.f32 %v2860, %v2866
    %2876 = vadd.xlane.f32.xlu0 %v2868
    %v2877 = vpop.xlane.xlu0 %2876
    %2878 = vadd.xlane.f32.xlu0 %v2869
    %v2879 = vpop.xlane.xlu0 %2878
    %2880 = vadd.xlane.f32.xlu0 %v2870
    %v2881 = vpop.xlane.xlu0 %2880
    %2882 = vadd.xlane.f32.xlu0 %v2871
    %v2883 = vpop.xlane.xlu0 %2882
    %2884 = vadd.xlane.f32.xlu0 %v2872
    %v2885 = vpop.xlane.xlu0 %2884
    %2886 = vadd.xlane.f32.xlu0 %v2873
    %v2887 = vpop.xlane.xlu0 %2886
    %2888 = vadd.xlane.f32.xlu0 %v2874
    %v2889 = vpop.xlane.xlu0 %2888
    %2890 = vadd.xlane.f32.xlu0 %v2875
    %v2891 = vpop.xlane.xlu0 %2890
    %v2892 = vld [vmem:[%s4] sm:$0xff]
    %vm2893 = vcmp.gt.f32.partialorder %v2892, 0.5
    %v2902 = vlaneseq
    %v2903 = vshrl.u32 %v2902, 7
    %v2904 = vsub.s32 %v381, %v2903
    %v2905 = vrot.slane %v2877, %v2904
    %v2906 = vlaneseq
    %v2907 = vshrl.u32 %v2906, 7
    %v2908 = vsub.s32 %v381, %v2907
    %v2909 = vrot.slane %v2879, %v2908
    %v2910 = vlaneseq
    %v2911 = vshrl.u32 %v2910, 7
    %v2912 = vsub.s32 %v381, %v2911
    %v2913 = vrot.slane %v2881, %v2912
    %v2914 = vlaneseq
    %v2915 = vshrl.u32 %v2914, 7
    %v2916 = vsub.s32 %v381, %v2915
    %v2917 = vrot.slane %v2883, %v2916
    %v2918 = vlaneseq
    %v2919 = vshrl.u32 %v2918, 7
    %v2920 = vsub.s32 %v381, %v2919
    %v2921 = vrot.slane %v2885, %v2920
    %v2922 = vlaneseq
    %v2923 = vshrl.u32 %v2922, 7
    %v2924 = vsub.s32 %v381, %v2923
    %v2925 = vrot.slane %v2887, %v2924
    %v2926 = vlaneseq
    %v2927 = vshrl.u32 %v2926, 7
    %v2928 = vsub.s32 %v381, %v2927
    %v2929 = vrot.slane %v2889, %v2928
    %v2930 = vlaneseq
    %v2931 = vshrl.u32 %v2930, 7
    %v2932 = vsub.s32 %v381, %v2931
    %v2933 = vrot.slane %v2891, %v2932
    %v2934 = vsel %vm414, %v2909, %v2905
    %v2935 = vsel %vm416, %v2913, %v2934
    %v2936 = vsel %vm418, %v2917, %v2935
    %v2937 = vsel %vm420, %v2921, %v2936
    %v2938 = vsel %vm422, %v2925, %v2937
    %v2939 = vsel %vm424, %v2929, %v2938
    %v2940 = vsel %vm426, %v2933, %v2939
    %v2942 = vsel %vm2893, %v2940, -1e+10
    %v2943 = vsel %vm430, %v2942, -inf
    %v2944 = vrot.slane %v2943, 4
    %v2945 = vmax.f32 %v2943, %v2944
    %v2946 = vrot.slane %v2945, 2
    %v2947 = vmax.f32 %v2945, %v2946
    %v2948 = vrot.slane %v2947, 1
    %v2949 = vmax.f32 %v2947, %v2948
    %v2950 = vsub.f32 %v2942, %v2949
    %v2951 = vmul.f32 %v2950, 1.442695
    %v2952 = vpow.pop %v2951
    %v2953 = vsel %vm430, %v2952, 0.0
    %v2954 = vrot.slane %v2953, 4
    %v2955 = vadd.f32 %v2953, %v2954
    %v2956 = vrot.slane %v2955, 2
    %v2957 = vadd.f32 %v2955, %v2956
    %v2958 = vrot.slane %v2957, 1
    %v2959 = vadd.f32 %v2957, %v2958
    %v2960 = vrcp.pop %v2959
    %v2961 = vmul.f32 %v2952, %v2960
    %v2962 = vlaneseq
    %v2963 = vshrl.u32 %v2962, 7
    %v2964 = vsub.s32 0, %v2963
    %v2965 = vrot.slane %v2961, %v2964
    %2967 = vbcast.lane.b32.xlu0 %v2965, 256
    %v2968 = vpop.permute.xlu0 %2967
    %v2969 = vlaneseq
    %v2970 = vshrl.u32 %v2969, 7
    %v2971 = vsub.s32 1, %v2970
    %v2972 = vrot.slane %v2961, %v2971
    %2974 = vbcast.lane.b32.xlu0 %v2972, 256
    %v2975 = vpop.permute.xlu0 %2974
    %v2976 = vlaneseq
    %v2977 = vshrl.u32 %v2976, 7
    %v2978 = vsub.s32 2, %v2977
    %v2979 = vrot.slane %v2961, %v2978
    %2981 = vbcast.lane.b32.xlu0 %v2979, 256
    %v2982 = vpop.permute.xlu0 %2981
    %v2983 = vlaneseq
    %v2984 = vshrl.u32 %v2983, 7
    %v2985 = vsub.s32 3, %v2984
    %v2986 = vrot.slane %v2961, %v2985
    %2988 = vbcast.lane.b32.xlu0 %v2986, 256
    %v2989 = vpop.permute.xlu0 %2988
    %v2990 = vlaneseq
    %v2991 = vshrl.u32 %v2990, 7
    %v2992 = vsub.s32 4, %v2991
    %v2993 = vrot.slane %v2961, %v2992
    %2995 = vbcast.lane.b32.xlu0 %v2993, 256
    %v2996 = vpop.permute.xlu0 %2995
    %v2997 = vlaneseq
    %v2998 = vshrl.u32 %v2997, 7
    %v2999 = vsub.s32 5, %v2998
    %v3000 = vrot.slane %v2961, %v2999
    %3002 = vbcast.lane.b32.xlu0 %v3000, 256
    %v3003 = vpop.permute.xlu0 %3002
    %v3004 = vlaneseq
    %v3005 = vshrl.u32 %v3004, 7
    %v3006 = vsub.s32 6, %v3005
    %v3007 = vrot.slane %v2961, %v3006
    %3009 = vbcast.lane.b32.xlu0 %v3007, 256
    %v3010 = vpop.permute.xlu0 %3009
    %v3011 = vlaneseq
    %v3012 = vshrl.u32 %v3011, 7
    %v3013 = vsub.s32 7, %v3012
    %v3014 = vrot.slane %v2961, %v3013
    %3016 = vbcast.lane.b32.xlu0 %v3014, 256
    %v3017 = vpop.permute.xlu0 %3016
    %v3018 = vld [vmem:[%s3] sm:$0xff]
    %v3019 = vld [vmem:[%s3 + $0x8] sm:$0xff]
    %v3020 = vld [vmem:[%s3 + $0x10] sm:$0xff]
    %v3021 = vld [vmem:[%s3 + $0x18] sm:$0xff]
    %v3022 = vld [vmem:[%s3 + $0x20] sm:$0xff]
    %v3023 = vld [vmem:[%s3 + $0x28] sm:$0xff]
    %v3024 = vld [vmem:[%s3 + $0x30] sm:$0xff]
    %v3025 = vld [vmem:[%s3 + $0x38] sm:$0xff]
    %v3026 = vmul.f32 %v2968, %v3018
    %v3027 = vmul.f32 %v2975, %v3019
    %v3028 = vmul.f32 %v2982, %v3020
    %v3029 = vmul.f32 %v2989, %v3021
    %v3030 = vmul.f32 %v2996, %v3022
    %v3031 = vmul.f32 %v3003, %v3023
    %v3032 = vmul.f32 %v3010, %v3024
    %v3033 = vmul.f32 %v3017, %v3025
    %v3034 = vadd.f32 %v3026, %v3027
    %v3035 = vadd.f32 %v3034, %v3028
    %v3036 = vadd.f32 %v3035, %v3029
    %v3037 = vadd.f32 %v3036, %v3030
    %v3038 = vadd.f32 %v3037, %v3031
    %v3039 = vadd.f32 %v3038, %v3032
    %v3040 = vadd.f32 %v3039, %v3033
    %v3041 = vld [vmem:[%s9] sm:$0xff]
    %v3042 = vld [vmem:[%s9 + $0x8] sm:$0xff]
    %v3043 = vld [vmem:[%s9 + $0x10] sm:$0xff]
    %v3044 = vld [vmem:[%s9 + $0x18] sm:$0xff]
    %v3045 = vld [vmem:[%s9 + $0x20] sm:$0xff]
    %v3046 = vld [vmem:[%s9 + $0x28] sm:$0xff]
    %v3047 = vld [vmem:[%s9 + $0x30] sm:$0xff]
    %v3048 = vld [vmem:[%s9 + $0x38] sm:$0xff]
    %v3049 = vld [vmem:[%s9 + $0x40] sm:$0xff]
    %v3050 = vld [vmem:[%s9 + $0x48] sm:$0xff]
    %v3051 = vld [vmem:[%s9 + $0x50] sm:$0xff]
    %v3052 = vld [vmem:[%s9 + $0x58] sm:$0xff]
    %v3053 = vld [vmem:[%s10] sm:$0xff]
    %v3054 = vld [vmem:[%s10 + $0x8] sm:$0xff]
    %v3055 = vld [vmem:[%s10 + $0x10] sm:$0xff]
    %v3056 = vld [vmem:[%s10 + $0x18] sm:$0xff]
    %v3057 = vld [vmem:[%s10 + $0x20] sm:$0xff]
    %v3058 = vld [vmem:[%s10 + $0x28] sm:$0xff]
    %v3059 = vld [vmem:[%s10 + $0x30] sm:$0xff]
    %v3060 = vld [vmem:[%s10 + $0x38] sm:$0xff]
    %v3061 = vld [vmem:[%s10 + $0x40] sm:$0xff]
    %v3062 = vld [vmem:[%s10 + $0x48] sm:$0xff]
    %v3063 = vld [vmem:[%s10 + $0x50] sm:$0xff]
    %v3064 = vld [vmem:[%s10 + $0x58] sm:$0xff]
    %v3065 = vld [vmem:[%s10 + $0x60] sm:$0xff]
    %v3066 = vld [vmem:[%s10 + $0x68] sm:$0xff]
    %v3067 = vld [vmem:[%s10 + $0x70] sm:$0xff]
    %v3068 = vld [vmem:[%s10 + $0x78] sm:$0xff]
    %v3069 = vld [vmem:[%s10 + $0x80] sm:$0xff]
    %v3070 = vld [vmem:[%s10 + $0x88] sm:$0xff]
    %v3071 = vld [vmem:[%s10 + $0x90] sm:$0xff]
    %v3072 = vld [vmem:[%s10 + $0x98] sm:$0xff]
    %v3073 = vld [vmem:[%s10 + $0xa0] sm:$0xff]
    %v3074 = vld [vmem:[%s10 + $0xa8] sm:$0xff]
    %v3075 = vld [vmem:[%s10 + $0xb0] sm:$0xff]
    %v3076 = vld [vmem:[%s10 + $0xb8] sm:$0xff]
    %v3077 = vld [vmem:[%s10 + $0xc0] sm:$0xff]
    %v3078 = vld [vmem:[%s10 + $0xc8] sm:$0xff]
    %v3079 = vld [vmem:[%s10 + $0xd0] sm:$0xff]
    %v3080 = vld [vmem:[%s10 + $0xd8] sm:$0xff]
    %v3081 = vld [vmem:[%s10 + $0xe0] sm:$0xff]
    %v3082 = vld [vmem:[%s10 + $0xe8] sm:$0xff]
    %v3083 = vld [vmem:[%s10 + $0xf0] sm:$0xff]
    %v3084 = vld [vmem:[%s10 + $0xf8] sm:$0xff]
    %v3085 = vld [vmem:[%s10 + $0x100] sm:$0xff]
    %v3086 = vld [vmem:[%s10 + $0x108] sm:$0xff]
    %v3087 = vld [vmem:[%s10 + $0x110] sm:$0xff]
    %v3088 = vld [vmem:[%s10 + $0x118] sm:$0xff]
    %v3089 = vld [vmem:[%s10 + $0x120] sm:$0xff]
    %v3090 = vld [vmem:[%s10 + $0x128] sm:$0xff]
    %v3091 = vld [vmem:[%s10 + $0x130] sm:$0xff]
    %v3092 = vld [vmem:[%s10 + $0x138] sm:$0xff]
    %v3093 = vld [vmem:[%s10 + $0x140] sm:$0xff]
    %v3094 = vld [vmem:[%s10 + $0x148] sm:$0xff]
    %v3095 = vld [vmem:[%s10 + $0x150] sm:$0xff]
    %v3096 = vld [vmem:[%s10 + $0x158] sm:$0xff]
    %v3097 = vld [vmem:[%s10 + $0x160] sm:$0xff]
    %v3098 = vld [vmem:[%s10 + $0x168] sm:$0xff]
    %v3099 = vld [vmem:[%s10 + $0x170] sm:$0xff]
    %v3100 = vld [vmem:[%s10 + $0x178] sm:$0xff]
    %3101 = vmatprep.subr.mxu0 %v3054
    %3102 = vmatpush1.msra.mxu0 %v3053
    %3103 = vmatprep.subr.mxu0 %v3057
    %3104 = vmatpush1.msra.mxu0 %v3056
    %3105 = vmatprep.subr.mxu0 %v3060
    %3106 = vmatpush1.msra.mxu0 %v3059
    %3107 = vmatprep.subr.mxu0 %v3063
    %3108 = vmatpush1.msra.mxu0 %v3062
    %3109 = vmatprep.subr.mxu0 %v3066
    %3110 = vmatpush1.msra.mxu0 %v3065
    %3111 = vmatprep.subr.mxu0 %v3069
    %3112 = vmatpush1.msra.mxu0 %v3068
    %3113 = vmatprep.subr.mxu0 %v3072
    %3114 = vmatpush1.msra.mxu0 %v3071
    %3115 = vmatprep.subr.mxu0 %v3075
    %3116 = vmatpush1.msra.mxu0 %v3074
    %3117 = vmatprep.subr.mxu0 %v3078
    %3118 = vmatpush1.msra.mxu0 %v3077
    %3119 = vmatprep.subr.mxu0 %v3081
    %3120 = vmatpush1.msra.mxu0 %v3080
    %3121 = vmatprep.subr.mxu0 %v3084
    %3122 = vmatpush1.msra.mxu0 %v3083
    %3123 = vmatprep.subr.mxu0 %v3087
    %3124 = vmatpush1.msra.mxu0 %v3086
    %3125 = vmatprep.subr.mxu0 %v3090
    %3126 = vmatpush1.msra.mxu0 %v3089
    %3127 = vmatprep.subr.mxu0 %v3093
    %3128 = vmatpush1.msra.mxu0 %v3092
    %3129 = vmatprep.subr.mxu0 %v3096
    %3130 = vmatpush1.msra.mxu0 %v3095
    %3131 = vmatprep.subr.mxu0 %v3099
    %3132 = vmatpush1.msra.mxu0 %v3098
    %3133 = vmatprep.subr.mxu0 0.0
    %3134 = vmatpush1.msra.mxu0 0.0
    %3135 = vmatprep.subr.mxu0 0.0
    %3136 = vmatpush1.msra.mxu0 0.0
    %3137 = vmatprep.subr.mxu0 0.0
    %3138 = vmatpush1.msra.mxu0 0.0
    %3139 = vmatprep.subr.mxu0 0.0
    %3140 = vmatpush1.msra.mxu0 0.0
    %3141 = vmatprep.subr.mxu0 0.0
    %3142 = vmatpush1.msra.mxu0 0.0
    %3143 = vmatprep.subr.mxu0 0.0
    %3144 = vmatpush1.msra.mxu0 0.0
    %3145 = vmatprep.subr.mxu0 0.0
    %3146 = vmatpush1.msra.mxu0 0.0
    %3147 = vmatprep.subr.mxu0 0.0
    %3148 = vmatpush1.msra.mxu0 0.0
    %3149 = vmatprep.subr.mxu0 0.0
    %3150 = vmatpush1.msra.mxu0 0.0
    %3151 = vmatprep.subr.mxu0 0.0
    %3152 = vmatpush1.msra.mxu0 0.0
    %3153 = vmatprep.subr.mxu0 0.0
    %3154 = vmatpush1.msra.mxu0 0.0
    %3155 = vmatprep.subr.mxu0 0.0
    %3156 = vmatpush1.msra.mxu0 0.0
    %3157 = vmatprep.subr.mxu0 0.0
    %3158 = vmatpush1.msra.mxu0 0.0
    %3159 = vmatprep.subr.mxu0 0.0
    %3160 = vmatpush1.msra.mxu0 0.0
    %3161 = vmatprep.subr.mxu0 0.0
    %3162 = vmatpush1.msra.mxu0 0.0
    %3163 = vmatprep.subr.mxu0 0.0
    %3164 = vmatpush1.msra.mxu0 0.0
    %3165 = vmatprep.mubr.f32.mxu0 0.0
    %3166 = vmatmul.mubr.f32.gmra.mrb[0].mxu0 %v3040
    %v3167 = vpop.f32.mrb[0].mxu0
    %v3168 = vadd.f32 0.0, %v3167
    %v3169 = vpop.f32.mrb[0].mxu0
    %v3170 = vadd.f32 0.0, %v3169
    %3171 = vdwg.mxu0
    %3172 = vmatprep.subr.mxu0 0.0
    %3173 = vmatpush1.msra.mxu0 %v3055
    %3174 = vmatprep.subr.mxu0 0.0
    %3175 = vmatpush1.msra.mxu0 %v3058
    %3176 = vmatprep.subr.mxu0 0.0
    %3177 = vmatpush1.msra.mxu0 %v3061
    %3178 = vmatprep.subr.mxu0 0.0
    %3179 = vmatpush1.msra.mxu0 %v3064
    %3180 = vmatprep.subr.mxu0 0.0
    %3181 = vmatpush1.msra.mxu0 %v3067
    %3182 = vmatprep.subr.mxu0 0.0
    %3183 = vmatpush1.msra.mxu0 %v3070
    %3184 = vmatprep.subr.mxu0 0.0
    %3185 = vmatpush1.msra.mxu0 %v3073
    %3186 = vmatprep.subr.mxu0 0.0
    %3187 = vmatpush1.msra.mxu0 %v3076
    %3188 = vmatprep.subr.mxu0 0.0
    %3189 = vmatpush1.msra.mxu0 %v3079
    %3190 = vmatprep.subr.mxu0 0.0
    %3191 = vmatpush1.msra.mxu0 %v3082
    %3192 = vmatprep.subr.mxu0 0.0
    %3193 = vmatpush1.msra.mxu0 %v3085
    %3194 = vmatprep.subr.mxu0 0.0
    %3195 = vmatpush1.msra.mxu0 %v3088
    %3196 = vmatprep.subr.mxu0 0.0
    %3197 = vmatpush1.msra.mxu0 %v3091
    %3198 = vmatprep.subr.mxu0 0.0
    %3199 = vmatpush1.msra.mxu0 %v3094
    %3200 = vmatprep.subr.mxu0 0.0
    %3201 = vmatpush1.msra.mxu0 %v3097
    %3202 = vmatprep.subr.mxu0 0.0
    %3203 = vmatpush1.msra.mxu0 %v3100
    %3204 = vmatprep.subr.mxu0 0.0
    %3205 = vmatpush1.msra.mxu0 0.0
    %3206 = vmatprep.subr.mxu0 0.0
    %3207 = vmatpush1.msra.mxu0 0.0
    %3208 = vmatprep.subr.mxu0 0.0
    %3209 = vmatpush1.msra.mxu0 0.0
    %3210 = vmatprep.subr.mxu0 0.0
    %3211 = vmatpush1.msra.mxu0 0.0
    %3212 = vmatprep.subr.mxu0 0.0
    %3213 = vmatpush1.msra.mxu0 0.0
    %3214 = vmatprep.subr.mxu0 0.0
    %3215 = vmatpush1.msra.mxu0 0.0
    %3216 = vmatprep.subr.mxu0 0.0
    %3217 = vmatpush1.msra.mxu0 0.0
    %3218 = vmatprep.subr.mxu0 0.0
    %3219 = vmatpush1.msra.mxu0 0.0
    %3220 = vmatprep.subr.mxu0 0.0
    %3221 = vmatpush1.msra.mxu0 0.0
    %3222 = vmatprep.subr.mxu0 0.0
    %3223 = vmatpush1.msra.mxu0 0.0
    %3224 = vmatprep.subr.mxu0 0.0
    %3225 = vmatpush1.msra.mxu0 0.0
    %3226 = vmatprep.subr.mxu0 0.0
    %3227 = vmatpush1.msra.mxu0 0.0
    %3228 = vmatprep.subr.mxu0 0.0
    %3229 = vmatpush1.msra.mxu0 0.0
    %3230 = vmatprep.subr.mxu0 0.0
    %3231 = vmatpush1.msra.mxu0 0.0
    %3232 = vmatprep.subr.mxu0 0.0
    %3233 = vmatpush1.msra.mxu0 0.0
    %3234 = vmatprep.subr.mxu0 0.0
    %3235 = vmatpush1.msra.mxu0 0.0
    %3236 = vmatprep.mubr.f32.mxu0 0.0
    %3237 = vmatmul.mubr.f32.gmra.mrb[0].mxu0 %v3040
    %v3238 = vpop.f32.mrb[0].mxu0
    %v3239 = vadd.f32 0.0, %v3238
    %v3240 = vpop.f32.mrb[0].mxu0
    %3241 = vdwg.mxu0
    %v3243 = vsel %vm730, %v2750, 0
    %3245 = vmatprep.subr.mxu0 %v3042
    %3246 = vmatpush1.msra.mxu0 %v3041
    %3247 = vmatprep.subr.mxu0 %v3045
    %3248 = vmatpush1.msra.mxu0 %v3044
    %3249 = vmatprep.subr.mxu0 %v3048
    %3250 = vmatpush1.msra.mxu0 %v3047
    %3251 = vmatprep.subr.mxu0 %v3051
    %3252 = vmatpush1.msra.mxu0 %v3050
    %3253 = vmatprep.subr.mxu0 0.0
    %3254 = vmatpush1.msra.mxu0 0.0
    %3255 = vmatprep.subr.mxu0 0.0
    %3256 = vmatpush1.msra.mxu0 0.0
    %3257 = vmatprep.subr.mxu0 0.0
    %3258 = vmatpush1.msra.mxu0 0.0
    %3259 = vmatprep.subr.mxu0 0.0
    %3260 = vmatpush1.msra.mxu0 0.0
    %3261 = vmatprep.subr.mxu0 0.0
    %3262 = vmatpush1.msra.mxu0 0.0
    %3263 = vmatprep.subr.mxu0 0.0
    %3264 = vmatpush1.msra.mxu0 0.0
    %3265 = vmatprep.subr.mxu0 0.0
    %3266 = vmatpush1.msra.mxu0 0.0
    %3267 = vmatprep.subr.mxu0 0.0
    %3268 = vmatpush1.msra.mxu0 0.0
    %3269 = vmatprep.subr.mxu0 0.0
    %3270 = vmatpush1.msra.mxu0 0.0
    %3271 = vmatprep.subr.mxu0 0.0
    %3272 = vmatpush1.msra.mxu0 0.0
    %3273 = vmatprep.subr.mxu0 0.0
    %3274 = vmatpush1.msra.mxu0 0.0
    %3275 = vmatprep.subr.mxu0 0.0
    %3276 = vmatpush1.msra.mxu0 0.0
    %3277 = vmatprep.subr.mxu0 0.0
    %3278 = vmatpush1.msra.mxu0 0.0
    %3279 = vmatprep.subr.mxu0 0.0
    %3280 = vmatpush1.msra.mxu0 0.0
    %3281 = vmatprep.subr.mxu0 0.0
    %3282 = vmatpush1.msra.mxu0 0.0
    %3283 = vmatprep.subr.mxu0 0.0
    %3284 = vmatpush1.msra.mxu0 0.0
    %3285 = vmatprep.subr.mxu0 0.0
    %3286 = vmatpush1.msra.mxu0 0.0
    %3287 = vmatprep.subr.mxu0 0.0
    %3288 = vmatpush1.msra.mxu0 0.0
    %3289 = vmatprep.subr.mxu0 0.0
    %3290 = vmatpush1.msra.mxu0 0.0
    %3291 = vmatprep.subr.mxu0 0.0
    %3292 = vmatpush1.msra.mxu0 0.0
    %3293 = vmatprep.subr.mxu0 0.0
    %3294 = vmatpush1.msra.mxu0 0.0
    %3295 = vmatprep.subr.mxu0 0.0
    %3296 = vmatpush1.msra.mxu0 0.0
    %3297 = vmatprep.subr.mxu0 0.0
    %3298 = vmatpush1.msra.mxu0 0.0
    %3299 = vmatprep.subr.mxu0 0.0
    %3300 = vmatpush1.msra.mxu0 0.0
    %3301 = vmatprep.subr.mxu0 0.0
    %3302 = vmatpush1.msra.mxu0 0.0
    %3303 = vmatprep.subr.mxu0 0.0
    %3304 = vmatpush1.msra.mxu0 0.0
    %3305 = vmatprep.subr.mxu0 0.0
    %3306 = vmatpush1.msra.mxu0 0.0
    %3307 = vmatprep.subr.mxu0 0.0
    %3308 = vmatpush1.msra.mxu0 0.0
    %3309 = vmatprep.mubr.f32.mxu0 0.0
    %3310 = vmatmul.mubr.f32.gmra.mrb[0].mxu0 %v3243
    %v3311 = vpop.f32.mrb[0].mxu0
    %v3312 = vadd.f32 %v3168, %v3311
    %v3313 = vpop.f32.mrb[0].mxu0
    %v3314 = vadd.f32 %v3170, %v3313
    %3315 = vdwg.mxu0
    %3316 = vmatprep.subr.mxu0 0.0
    %3317 = vmatpush1.msra.mxu0 %v3043
    %3318 = vmatprep.subr.mxu0 0.0
    %3319 = vmatpush1.msra.mxu0 %v3046
    %3320 = vmatprep.subr.mxu0 0.0
    %3321 = vmatpush1.msra.mxu0 %v3049
    %3322 = vmatprep.subr.mxu0 0.0
    %3323 = vmatpush1.msra.mxu0 %v3052
    %3324 = vmatprep.subr.mxu0 0.0
    %3325 = vmatpush1.msra.mxu0 0.0
    %3326 = vmatprep.subr.mxu0 0.0
    %3327 = vmatpush1.msra.mxu0 0.0
    %3328 = vmatprep.subr.mxu0 0.0
    %3329 = vmatpush1.msra.mxu0 0.0
    %3330 = vmatprep.subr.mxu0 0.0
    %3331 = vmatpush1.msra.mxu0 0.0
    %3332 = vmatprep.subr.mxu0 0.0
    %3333 = vmatpush1.msra.mxu0 0.0
    %3334 = vmatprep.subr.mxu0 0.0
    %3335 = vmatpush1.msra.mxu0 0.0
    %3336 = vmatprep.subr.mxu0 0.0
    %3337 = vmatpush1.msra.mxu0 0.0
    %3338 = vmatprep.subr.mxu0 0.0
    %3339 = vmatpush1.msra.mxu0 0.0
    %3340 = vmatprep.subr.mxu0 0.0
    %3341 = vmatpush1.msra.mxu0 0.0
    %3342 = vmatprep.subr.mxu0 0.0
    %3343 = vmatpush1.msra.mxu0 0.0
    %3344 = vmatprep.subr.mxu0 0.0
    %3345 = vmatpush1.msra.mxu0 0.0
    %3346 = vmatprep.subr.mxu0 0.0
    %3347 = vmatpush1.msra.mxu0 0.0
    %3348 = vmatprep.subr.mxu0 0.0
    %3349 = vmatpush1.msra.mxu0 0.0
    %3350 = vmatprep.subr.mxu0 0.0
    %3351 = vmatpush1.msra.mxu0 0.0
    %3352 = vmatprep.subr.mxu0 0.0
    %3353 = vmatpush1.msra.mxu0 0.0
    %3354 = vmatprep.subr.mxu0 0.0
    %3355 = vmatpush1.msra.mxu0 0.0
    %3356 = vmatprep.subr.mxu0 0.0
    %3357 = vmatpush1.msra.mxu0 0.0
    %3358 = vmatprep.subr.mxu0 0.0
    %3359 = vmatpush1.msra.mxu0 0.0
    %3360 = vmatprep.subr.mxu0 0.0
    %3361 = vmatpush1.msra.mxu0 0.0
    %3362 = vmatprep.subr.mxu0 0.0
    %3363 = vmatpush1.msra.mxu0 0.0
    %3364 = vmatprep.subr.mxu0 0.0
    %3365 = vmatpush1.msra.mxu0 0.0
    %3366 = vmatprep.subr.mxu0 0.0
    %3367 = vmatpush1.msra.mxu0 0.0
    %3368 = vmatprep.subr.mxu0 0.0
    %3369 = vmatpush1.msra.mxu0 0.0
    %3370 = vmatprep.subr.mxu0 0.0
    %3371 = vmatpush1.msra.mxu0 0.0
    %3372 = vmatprep.subr.mxu0 0.0
    %3373 = vmatpush1.msra.mxu0 0.0
    %3374 = vmatprep.subr.mxu0 0.0
    %3375 = vmatpush1.msra.mxu0 0.0
    %3376 = vmatprep.subr.mxu0 0.0
    %3377 = vmatpush1.msra.mxu0 0.0
    %3378 = vmatprep.subr.mxu0 0.0
    %3379 = vmatpush1.msra.mxu0 0.0
    %3380 = vmatprep.mubr.f32.mxu0 0.0
    %3381 = vmatmul.mubr.f32.gmra.mrb[0].mxu0 %v3243
    %v3382 = vpop.f32.mrb[0].mxu0
    %v3383 = vadd.f32 %v3239, %v3382
    %v3384 = vpop.f32.mrb[0].mxu0
    %3385 = vdwg.mxu0
    %v3386 = vld [vmem:[%s12] sm:$0x7]
    %v3388 = vlaneseq
    %v3389 = vshrl.u32 %v3388, 7
    %v3390 = vsub.s32 0, %v3389
    %v3391 = vrot.slane %v3386, %v3390
    %v3392 = vlaneseq
    %v3393 = vshrl.u32 %v3392, 7
    %v3394 = vsub.s32 1, %v3393
    %v3395 = vrot.slane %v3386, %v3394
    %v3396 = vlaneseq
    %v3397 = vshrl.u32 %v3396, 7
    %v3398 = vsub.s32 2, %v3397
    %v3399 = vrot.slane %v3386, %v3398
    %v3403 = vadd.f32 %v3312, %v3391
    %v3404 = vadd.f32 %v3314, %v3395
    %v3405 = vadd.f32 %v3383, %v3399
    %v3406 = vld [vmem:[%s11] sm:$0xff]
    %v3407 = vld [vmem:[%s11 + $0x8] sm:$0xff]
    %v3408 = vld [vmem:[%s11 + $0x10] sm:$0xff]
    %v3409 = vld [vmem:[%s11 + $0x18] sm:$0xff]
    %v3410 = vld [vmem:[%s11 + $0x20] sm:$0xff]
    %v3411 = vld [vmem:[%s11 + $0x28] sm:$0xff]
    %v3412 = vld [vmem:[%s11 + $0x30] sm:$0xff]
    %v3413 = vld [vmem:[%s11 + $0x38] sm:$0xff]
    %v3414 = vld [vmem:[%s11 + $0x40] sm:$0xff]
    %v3415 = vld [vmem:[%s11 + $0x48] sm:$0xff]
    %v3416 = vld [vmem:[%s11 + $0x50] sm:$0xff]
    %v3417 = vld [vmem:[%s11 + $0x58] sm:$0xff]
    %v3418 = vld [vmem:[%s11 + $0x60] sm:$0xff]
    %v3419 = vld [vmem:[%s11 + $0x68] sm:$0xff]
    %v3420 = vld [vmem:[%s11 + $0x70] sm:$0xff]
    %v3421 = vld [vmem:[%s11 + $0x78] sm:$0xff]
    %v3422 = vld [vmem:[%s11 + $0x80] sm:$0xff]
    %v3423 = vld [vmem:[%s11 + $0x88] sm:$0xff]
    %v3424 = vld [vmem:[%s11 + $0x90] sm:$0xff]
    %v3425 = vld [vmem:[%s11 + $0x98] sm:$0xff]
    %v3426 = vld [vmem:[%s11 + $0xa0] sm:$0xff]
    %v3427 = vld [vmem:[%s11 + $0xa8] sm:$0xff]
    %v3428 = vld [vmem:[%s11 + $0xb0] sm:$0xff]
    %v3429 = vld [vmem:[%s11 + $0xb8] sm:$0xff]
    %v3430 = vld [vmem:[%s11 + $0xc0] sm:$0xff]
    %v3431 = vld [vmem:[%s11 + $0xc8] sm:$0xff]
    %v3432 = vld [vmem:[%s11 + $0xd0] sm:$0xff]
    %v3433 = vld [vmem:[%s11 + $0xd8] sm:$0xff]
    %v3434 = vld [vmem:[%s11 + $0xe0] sm:$0xff]
    %v3435 = vld [vmem:[%s11 + $0xe8] sm:$0xff]
    %v3436 = vld [vmem:[%s11 + $0xf0] sm:$0xff]
    %v3437 = vld [vmem:[%s11 + $0xf8] sm:$0xff]
    %v3438 = vld [vmem:[%s11 + $0x100] sm:$0xff]
    %v3439 = vld [vmem:[%s11 + $0x108] sm:$0xff]
    %v3440 = vld [vmem:[%s11 + $0x110] sm:$0xff]
    %v3441 = vld [vmem:[%s11 + $0x118] sm:$0xff]
    %v3442 = vld [vmem:[%s11 + $0x120] sm:$0xff]
    %v3443 = vld [vmem:[%s11 + $0x128] sm:$0xff]
    %v3444 = vld [vmem:[%s11 + $0x130] sm:$0xff]
    %v3445 = vld [vmem:[%s11 + $0x138] sm:$0xff]
    %v3446 = vld [vmem:[%s11 + $0x140] sm:$0xff]
    %v3447 = vld [vmem:[%s11 + $0x148] sm:$0xff]
    %v3448 = vld [vmem:[%s11 + $0x150] sm:$0xff]
    %v3449 = vld [vmem:[%s11 + $0x158] sm:$0xff]
    %v3450 = vld [vmem:[%s11 + $0x160] sm:$0xff]
    %v3451 = vld [vmem:[%s11 + $0x168] sm:$0xff]
    %v3452 = vld [vmem:[%s11 + $0x170] sm:$0xff]
    %v3453 = vld [vmem:[%s11 + $0x178] sm:$0xff]
    %v3454 = vld [vmem:[%s13] sm:$0x7]
    %v3456 = vlaneseq
    %v3457 = vshrl.u32 %v3456, 7
    %v3458 = vsub.s32 0, %v3457
    %v3459 = vrot.slane %v3454, %v3458
    %v3460 = vlaneseq
    %v3461 = vshrl.u32 %v3460, 7
    %v3462 = vsub.s32 1, %v3461
    %v3463 = vrot.slane %v3454, %v3462
    %v3464 = vlaneseq
    %v3465 = vshrl.u32 %v3464, 7
    %v3466 = vsub.s32 2, %v3465
    %v3467 = vrot.slane %v3454, %v3466
    %3471 = vmatprep.subr.mxu0 %v3407
    %3472 = vmatpush1.msra.mxu0 %v3406
    %3473 = vmatprep.subr.mxu0 %v3410
    %3474 = vmatpush1.msra.mxu0 %v3409
    %3475 = vmatprep.subr.mxu0 %v3413
    %3476 = vmatpush1.msra.mxu0 %v3412
    %3477 = vmatprep.subr.mxu0 %v3416
    %3478 = vmatpush1.msra.mxu0 %v3415
    %3479 = vmatprep.subr.mxu0 %v3419
    %3480 = vmatpush1.msra.mxu0 %v3418
    %3481 = vmatprep.subr.mxu0 %v3422
    %3482 = vmatpush1.msra.mxu0 %v3421
    %3483 = vmatprep.subr.mxu0 %v3425
    %3484 = vmatpush1.msra.mxu0 %v3424
    %3485 = vmatprep.subr.mxu0 %v3428
    %3486 = vmatpush1.msra.mxu0 %v3427
    %3487 = vmatprep.subr.mxu0 %v3431
    %3488 = vmatpush1.msra.mxu0 %v3430
    %3489 = vmatprep.subr.mxu0 %v3434
    %3490 = vmatpush1.msra.mxu0 %v3433
    %3491 = vmatprep.subr.mxu0 %v3437
    %3492 = vmatpush1.msra.mxu0 %v3436
    %3493 = vmatprep.subr.mxu0 %v3440
    %3494 = vmatpush1.msra.mxu0 %v3439
    %3495 = vmatprep.subr.mxu0 %v3443
    %3496 = vmatpush1.msra.mxu0 %v3442
    %3497 = vmatprep.subr.mxu0 %v3446
    %3498 = vmatpush1.msra.mxu0 %v3445
    %3499 = vmatprep.subr.mxu0 %v3449
    %3500 = vmatpush1.msra.mxu0 %v3448
    %3501 = vmatprep.subr.mxu0 %v3452
    %3502 = vmatpush1.msra.mxu0 %v3451
    %3503 = vmatprep.subr.mxu0 0.0
    %3504 = vmatpush1.msra.mxu0 0.0
    %3505 = vmatprep.subr.mxu0 0.0
    %3506 = vmatpush1.msra.mxu0 0.0
    %3507 = vmatprep.subr.mxu0 0.0
    %3508 = vmatpush1.msra.mxu0 0.0
    %3509 = vmatprep.subr.mxu0 0.0
    %3510 = vmatpush1.msra.mxu0 0.0
    %3511 = vmatprep.subr.mxu0 0.0
    %3512 = vmatpush1.msra.mxu0 0.0
    %3513 = vmatprep.subr.mxu0 0.0
    %3514 = vmatpush1.msra.mxu0 0.0
    %3515 = vmatprep.subr.mxu0 0.0
    %3516 = vmatpush1.msra.mxu0 0.0
    %3517 = vmatprep.subr.mxu0 0.0
    %3518 = vmatpush1.msra.mxu0 0.0
    %3519 = vmatprep.subr.mxu0 0.0
    %3520 = vmatpush1.msra.mxu0 0.0
    %3521 = vmatprep.subr.mxu0 0.0
    %3522 = vmatpush1.msra.mxu0 0.0
    %3523 = vmatprep.subr.mxu0 0.0
    %3524 = vmatpush1.msra.mxu0 0.0
    %3525 = vmatprep.subr.mxu0 0.0
    %3526 = vmatpush1.msra.mxu0 0.0
    %3527 = vmatprep.subr.mxu0 0.0
    %3528 = vmatpush1.msra.mxu0 0.0
    %3529 = vmatprep.subr.mxu0 0.0
    %3530 = vmatpush1.msra.mxu0 0.0
    %3531 = vmatprep.subr.mxu0 0.0
    %3532 = vmatpush1.msra.mxu0 0.0
    %3533 = vmatprep.subr.mxu0 0.0
    %3534 = vmatpush1.msra.mxu0 0.0
    %3535 = vmatprep.mubr.f32.mxu0 0.0
    %3536 = vmatmul.mubr.f32.gmra.mrb[0].mxu0 %v2376
    %v3537 = vpop.f32.mrb[0].mxu0
    %v3538 = vadd.f32 %v3459, %v3537
    %v3539 = vpop.f32.mrb[0].mxu0
    %v3540 = vadd.f32 %v3463, %v3539
    %3541 = vdwg.mxu0
    %3542 = vmatprep.subr.mxu0 0.0
    %3543 = vmatpush1.msra.mxu0 %v3408
    %3544 = vmatprep.subr.mxu0 0.0
    %3545 = vmatpush1.msra.mxu0 %v3411
    %3546 = vmatprep.subr.mxu0 0.0
    %3547 = vmatpush1.msra.mxu0 %v3414
    %3548 = vmatprep.subr.mxu0 0.0
    %3549 = vmatpush1.msra.mxu0 %v3417
    %3550 = vmatprep.subr.mxu0 0.0
    %3551 = vmatpush1.msra.mxu0 %v3420
    %3552 = vmatprep.subr.mxu0 0.0
    %3553 = vmatpush1.msra.mxu0 %v3423
    %3554 = vmatprep.subr.mxu0 0.0
    %3555 = vmatpush1.msra.mxu0 %v3426
    %3556 = vmatprep.subr.mxu0 0.0
    %3557 = vmatpush1.msra.mxu0 %v3429
    %3558 = vmatprep.subr.mxu0 0.0
    %3559 = vmatpush1.msra.mxu0 %v3432
    %3560 = vmatprep.subr.mxu0 0.0
    %3561 = vmatpush1.msra.mxu0 %v3435
    %3562 = vmatprep.subr.mxu0 0.0
    %3563 = vmatpush1.msra.mxu0 %v3438
    %3564 = vmatprep.subr.mxu0 0.0
    %3565 = vmatpush1.msra.mxu0 %v3441
    %3566 = vmatprep.subr.mxu0 0.0
    %3567 = vmatpush1.msra.mxu0 %v3444
    %3568 = vmatprep.subr.mxu0 0.0
    %3569 = vmatpush1.msra.mxu0 %v3447
    %3570 = vmatprep.subr.mxu0 0.0
    %3571 = vmatpush1.msra.mxu0 %v3450
    %3572 = vmatprep.subr.mxu0 0.0
    %3573 = vmatpush1.msra.mxu0 %v3453
    %3574 = vmatprep.subr.mxu0 0.0
    %3575 = vmatpush1.msra.mxu0 0.0
    %3576 = vmatprep.subr.mxu0 0.0
    %3577 = vmatpush1.msra.mxu0 0.0
    %3578 = vmatprep.subr.mxu0 0.0
    %3579 = vmatpush1.msra.mxu0 0.0
    %3580 = vmatprep.subr.mxu0 0.0
    %3581 = vmatpush1.msra.mxu0 0.0
    %3582 = vmatprep.subr.mxu0 0.0
    %3583 = vmatpush1.msra.mxu0 0.0
    %3584 = vmatprep.subr.mxu0 0.0
    %3585 = vmatpush1.msra.mxu0 0.0
    %3586 = vmatprep.subr.mxu0 0.0
    %3587 = vmatpush1.msra.mxu0 0.0
    %3588 = vmatprep.subr.mxu0 0.0
    %3589 = vmatpush1.msra.mxu0 0.0
    %3590 = vmatprep.subr.mxu0 0.0
    %3591 = vmatpush1.msra.mxu0 0.0
    %3592 = vmatprep.subr.mxu0 0.0
    %3593 = vmatpush1.msra.mxu0 0.0
    %3594 = vmatprep.subr.mxu0 0.0
    %3595 = vmatpush1.msra.mxu0 0.0
    %3596 = vmatprep.subr.mxu0 0.0
    %3597 = vmatpush1.msra.mxu0 0.0
    %3598 = vmatprep.subr.mxu0 0.0
    %3599 = vmatpush1.msra.mxu0 0.0
    %3600 = vmatprep.subr.mxu0 0.0
    %3601 = vmatpush1.msra.mxu0 0.0
    %3602 = vmatprep.subr.mxu0 0.0
    %3603 = vmatpush1.msra.mxu0 0.0
    %3604 = vmatprep.subr.mxu0 0.0
    %3605 = vmatpush1.msra.mxu0 0.0
    %3606 = vmatprep.mubr.f32.mxu0 0.0
    %3607 = vmatmul.mubr.f32.gmra.mrb[0].mxu0 %v2376
    %v3608 = vpop.f32.mrb[0].mxu0
    %v3609 = vadd.f32 %v3467, %v3608
    %v3610 = vpop.f32.mrb[0].mxu0
    %3611 = vdwg.mxu0
    %v3612 = vadd.f32 %v3403, %v3538
    %v3613 = vxor.u32 %v3612, 2147483648
    %v3614 = vmul.f32 %v3613, 1.442695
    %v3615 = vpow.pop %v3614
    %v3616 = vadd.f32 %v3615, 1.0
    %v3617 = vrcp.pop %v3616
    %v3618 = vmul.f32 1.0, %v3617
    %v3619 = vadd.f32 %v3404, %v3540
    %v3620 = vxor.u32 %v3619, 2147483648
    %v3621 = vmul.f32 %v3620, 1.442695
    %v3622 = vpow.pop %v3621
    %v3623 = vadd.f32 %v3622, 1.0
    %v3624 = vrcp.pop %v3623
    %v3625 = vmul.f32 1.0, %v3624
    %v3626 = vmul.f32 %v3618, %v3609
    %v3627 = vadd.f32 %v3405, %v3626
    %v3628 = vtanh.pop %v3627
    %v3629 = vsub.f32 1.0, %v3625
    %v3630 = vmul.f32 %v3629, %v3628
    %v3631 = vmul.f32 %v3625, %v2376
    %v3632 = vadd.f32 %v3630, %v3631
    %v3633 = vld [vmem:[%s14] sm:$0xff]
    %v3634 = vld [vmem:[%s14 + $0x8] sm:$0xff]
    %v3635 = vld [vmem:[%s14 + $0x10] sm:$0xff]
    %v3636 = vld [vmem:[%s14 + $0x18] sm:$0xff]
    %v3637 = vld [vmem:[%s14 + $0x20] sm:$0xff]
    %v3638 = vld [vmem:[%s14 + $0x28] sm:$0xff]
    %v3639 = vld [vmem:[%s14 + $0x30] sm:$0xff]
    %v3640 = vld [vmem:[%s14 + $0x38] sm:$0xff]
    %v3641 = vld [vmem:[%s14 + $0x40] sm:$0xff]
    %v3642 = vld [vmem:[%s14 + $0x48] sm:$0xff]
    %v3643 = vld [vmem:[%s14 + $0x50] sm:$0xff]
    %v3644 = vld [vmem:[%s14 + $0x58] sm:$0xff]
    %v3645 = vld [vmem:[%s14 + $0x60] sm:$0xff]
    %v3646 = vld [vmem:[%s14 + $0x68] sm:$0xff]
    %v3647 = vld [vmem:[%s14 + $0x70] sm:$0xff]
    %v3648 = vld [vmem:[%s14 + $0x78] sm:$0xff]
    %v3649 = vld [vmem:[%s15] sm:$0xff]
    %v3650 = vld [vmem:[%s15 + $0x8] sm:$0xff]
    %v3651 = vld [vmem:[%s15 + $0x10] sm:$0xff]
    %v3652 = vld [vmem:[%s15 + $0x18] sm:$0xff]
    %v3653 = vld [vmem:[%s15 + $0x20] sm:$0xff]
    %v3654 = vld [vmem:[%s15 + $0x28] sm:$0xff]
    %v3655 = vld [vmem:[%s15 + $0x30] sm:$0xff]
    %v3656 = vld [vmem:[%s15 + $0x38] sm:$0xff]
    %v3657 = vld [vmem:[%s15 + $0x40] sm:$0xff]
    %v3658 = vld [vmem:[%s15 + $0x48] sm:$0xff]
    %v3659 = vld [vmem:[%s15 + $0x50] sm:$0xff]
    %v3660 = vld [vmem:[%s15 + $0x58] sm:$0xff]
    %v3661 = vld [vmem:[%s15 + $0x60] sm:$0xff]
    %v3662 = vld [vmem:[%s15 + $0x68] sm:$0xff]
    %v3663 = vld [vmem:[%s15 + $0x70] sm:$0xff]
    %v3664 = vld [vmem:[%s15 + $0x78] sm:$0xff]
    %3665 = vmatprep.subr.mxu0 0.0
    %3666 = vmatpush1.msra.mxu0 %v3649
    %3667 = vmatprep.subr.mxu0 0.0
    %3668 = vmatpush1.msra.mxu0 %v3650
    %3669 = vmatprep.subr.mxu0 0.0
    %3670 = vmatpush1.msra.mxu0 %v3651
    %3671 = vmatprep.subr.mxu0 0.0
    %3672 = vmatpush1.msra.mxu0 %v3652
    %3673 = vmatprep.subr.mxu0 0.0
    %3674 = vmatpush1.msra.mxu0 %v3653
    %3675 = vmatprep.subr.mxu0 0.0
    %3676 = vmatpush1.msra.mxu0 %v3654
    %3677 = vmatprep.subr.mxu0 0.0
    %3678 = vmatpush1.msra.mxu0 %v3655
    %3679 = vmatprep.subr.mxu0 0.0
    %3680 = vmatpush1.msra.mxu0 %v3656
    %3681 = vmatprep.subr.mxu0 0.0
    %3682 = vmatpush1.msra.mxu0 %v3657
    %3683 = vmatprep.subr.mxu0 0.0
    %3684 = vmatpush1.msra.mxu0 %v3658
    %3685 = vmatprep.subr.mxu0 0.0
    %3686 = vmatpush1.msra.mxu0 %v3659
    %3687 = vmatprep.subr.mxu0 0.0
    %3688 = vmatpush1.msra.mxu0 %v3660
    %3689 = vmatprep.subr.mxu0 0.0
    %3690 = vmatpush1.msra.mxu0 %v3661
    %3691 = vmatprep.subr.mxu0 0.0
    %3692 = vmatpush1.msra.mxu0 %v3662
    %3693 = vmatprep.subr.mxu0 0.0
    %3694 = vmatpush1.msra.mxu0 %v3663
    %3695 = vmatprep.subr.mxu0 0.0
    %3696 = vmatpush1.msra.mxu0 %v3664
    %3697 = vmatprep.subr.mxu0 0.0
    %3698 = vmatpush1.msra.mxu0 0.0
    %3699 = vmatprep.subr.mxu0 0.0
    %3700 = vmatpush1.msra.mxu0 0.0
    %3701 = vmatprep.subr.mxu0 0.0
    %3702 = vmatpush1.msra.mxu0 0.0
    %3703 = vmatprep.subr.mxu0 0.0
    %3704 = vmatpush1.msra.mxu0 0.0
    %3705 = vmatprep.subr.mxu0 0.0
    %3706 = vmatpush1.msra.mxu0 0.0
    %3707 = vmatprep.subr.mxu0 0.0
    %3708 = vmatpush1.msra.mxu0 0.0
    %3709 = vmatprep.subr.mxu0 0.0
    %3710 = vmatpush1.msra.mxu0 0.0
    %3711 = vmatprep.subr.mxu0 0.0
    %3712 = vmatpush1.msra.mxu0 0.0
    %3713 = vmatprep.subr.mxu0 0.0
    %3714 = vmatpush1.msra.mxu0 0.0
    %3715 = vmatprep.subr.mxu0 0.0
    %3716 = vmatpush1.msra.mxu0 0.0
    %3717 = vmatprep.subr.mxu0 0.0
    %3718 = vmatpush1.msra.mxu0 0.0
    %3719 = vmatprep.subr.mxu0 0.0
    %3720 = vmatpush1.msra.mxu0 0.0
    %3721 = vmatprep.subr.mxu0 0.0
    %3722 = vmatpush1.msra.mxu0 0.0
    %3723 = vmatprep.subr.mxu0 0.0
    %3724 = vmatpush1.msra.mxu0 0.0
    %3725 = vmatprep.subr.mxu0 0.0
    %3726 = vmatpush1.msra.mxu0 0.0
    %3727 = vmatprep.subr.mxu0 0.0
    %3728 = vmatpush1.msra.mxu0 0.0
    %3729 = vmatprep.mubr.f32.mxu0 0.0
    %3730 = vmatmul.mubr.f32.gmra.mrb[0].mxu0 %v3040
    %v3731 = vpop.f32.mrb[0].mxu0
    %v3732 = vadd.f32 0.0, %v3731
    %v3733 = vpop.f32.mrb[0].mxu0
    %3734 = vdwg.mxu0
    %3735 = vmatprep.subr.mxu0 0.0
    %3736 = vmatpush1.msra.mxu0 %v3633
    %3737 = vmatprep.subr.mxu0 0.0
    %3738 = vmatpush1.msra.mxu0 %v3634
    %3739 = vmatprep.subr.mxu0 0.0
    %3740 = vmatpush1.msra.mxu0 %v3635
    %3741 = vmatprep.subr.mxu0 0.0
    %3742 = vmatpush1.msra.mxu0 %v3636
    %3743 = vmatprep.subr.mxu0 0.0
    %3744 = vmatpush1.msra.mxu0 %v3637
    %3745 = vmatprep.subr.mxu0 0.0
    %3746 = vmatpush1.msra.mxu0 %v3638
    %3747 = vmatprep.subr.mxu0 0.0
    %3748 = vmatpush1.msra.mxu0 %v3639
    %3749 = vmatprep.subr.mxu0 0.0
    %3750 = vmatpush1.msra.mxu0 %v3640
    %3751 = vmatprep.subr.mxu0 0.0
    %3752 = vmatpush1.msra.mxu0 %v3641
    %3753 = vmatprep.subr.mxu0 0.0
    %3754 = vmatpush1.msra.mxu0 %v3642
    %3755 = vmatprep.subr.mxu0 0.0
    %3756 = vmatpush1.msra.mxu0 %v3643
    %3757 = vmatprep.subr.mxu0 0.0
    %3758 = vmatpush1.msra.mxu0 %v3644
    %3759 = vmatprep.subr.mxu0 0.0
    %3760 = vmatpush1.msra.mxu0 %v3645
    %3761 = vmatprep.subr.mxu0 0.0
    %3762 = vmatpush1.msra.mxu0 %v3646
    %3763 = vmatprep.subr.mxu0 0.0
    %3764 = vmatpush1.msra.mxu0 %v3647
    %3765 = vmatprep.subr.mxu0 0.0
    %3766 = vmatpush1.msra.mxu0 %v3648
    %3767 = vmatprep.subr.mxu0 0.0
    %3768 = vmatpush1.msra.mxu0 0.0
    %3769 = vmatprep.subr.mxu0 0.0
    %3770 = vmatpush1.msra.mxu0 0.0
    %3771 = vmatprep.subr.mxu0 0.0
    %3772 = vmatpush1.msra.mxu0 0.0
    %3773 = vmatprep.subr.mxu0 0.0
    %3774 = vmatpush1.msra.mxu0 0.0
    %3775 = vmatprep.subr.mxu0 0.0
    %3776 = vmatpush1.msra.mxu0 0.0
    %3777 = vmatprep.subr.mxu0 0.0
    %3778 = vmatpush1.msra.mxu0 0.0
    %3779 = vmatprep.subr.mxu0 0.0
    %3780 = vmatpush1.msra.mxu0 0.0
    %3781 = vmatprep.subr.mxu0 0.0
    %3782 = vmatpush1.msra.mxu0 0.0
    %3783 = vmatprep.subr.mxu0 0.0
    %3784 = vmatpush1.msra.mxu0 0.0
    %3785 = vmatprep.subr.mxu0 0.0
    %3786 = vmatpush1.msra.mxu0 0.0
    %3787 = vmatprep.subr.mxu0 0.0
    %3788 = vmatpush1.msra.mxu0 0.0
    %3789 = vmatprep.subr.mxu0 0.0
    %3790 = vmatpush1.msra.mxu0 0.0
    %3791 = vmatprep.subr.mxu0 0.0
    %3792 = vmatpush1.msra.mxu0 0.0
    %3793 = vmatprep.subr.mxu0 0.0
    %3794 = vmatpush1.msra.mxu0 0.0
    %3795 = vmatprep.subr.mxu0 0.0
    %3796 = vmatpush1.msra.mxu0 0.0
    %3797 = vmatprep.subr.mxu0 0.0
    %3798 = vmatpush1.msra.mxu0 0.0
    %3799 = vmatprep.mubr.f32.mxu0 0.0
    %3800 = vmatmul.mubr.f32.gmra.mrb[0].mxu0 %v3632
    %v3801 = vpop.f32.mrb[0].mxu0
    %v3802 = vadd.f32 %v3732, %v3801
    %v3803 = vpop.f32.mrb[0].mxu0
    %3804 = vdwg.mxu0
    %v3805 = vld [vmem:[%s16] sm:$0xff]
    %v3806 = vld [vmem:[%s16 + $0x8] sm:$0xff]
    %v3807 = vld [vmem:[%s16 + $0x10] sm:$0xff]
    %v3808 = vld [vmem:[%s16 + $0x18] sm:$0xff]
    %3809 = vmatprep.subr.mxu0 0.0
    %3810 = vmatpush1.msra.mxu0 %v3805
    %3811 = vmatprep.subr.mxu0 0.0
    %3812 = vmatpush1.msra.mxu0 %v3806
    %3813 = vmatprep.subr.mxu0 0.0
    %3814 = vmatpush1.msra.mxu0 %v3807
    %3815 = vmatprep.subr.mxu0 0.0
    %3816 = vmatpush1.msra.mxu0 %v3808
    %3817 = vmatprep.subr.mxu0 0.0
    %3818 = vmatpush1.msra.mxu0 0.0
    %3819 = vmatprep.subr.mxu0 0.0
    %3820 = vmatpush1.msra.mxu0 0.0
    %3821 = vmatprep.subr.mxu0 0.0
    %3822 = vmatpush1.msra.mxu0 0.0
    %3823 = vmatprep.subr.mxu0 0.0
    %3824 = vmatpush1.msra.mxu0 0.0
    %3825 = vmatprep.subr.mxu0 0.0
    %3826 = vmatpush1.msra.mxu0 0.0
    %3827 = vmatprep.subr.mxu0 0.0
    %3828 = vmatpush1.msra.mxu0 0.0
    %3829 = vmatprep.subr.mxu0 0.0
    %3830 = vmatpush1.msra.mxu0 0.0
    %3831 = vmatprep.subr.mxu0 0.0
    %3832 = vmatpush1.msra.mxu0 0.0
    %3833 = vmatprep.subr.mxu0 0.0
    %3834 = vmatpush1.msra.mxu0 0.0
    %3835 = vmatprep.subr.mxu0 0.0
    %3836 = vmatpush1.msra.mxu0 0.0
    %3837 = vmatprep.subr.mxu0 0.0
    %3838 = vmatpush1.msra.mxu0 0.0
    %3839 = vmatprep.subr.mxu0 0.0
    %3840 = vmatpush1.msra.mxu0 0.0
    %3841 = vmatprep.subr.mxu0 0.0
    %3842 = vmatpush1.msra.mxu0 0.0
    %3843 = vmatprep.subr.mxu0 0.0
    %3844 = vmatpush1.msra.mxu0 0.0
    %3845 = vmatprep.subr.mxu0 0.0
    %3846 = vmatpush1.msra.mxu0 0.0
    %3847 = vmatprep.subr.mxu0 0.0
    %3848 = vmatpush1.msra.mxu0 0.0
    %3849 = vmatprep.subr.mxu0 0.0
    %3850 = vmatpush1.msra.mxu0 0.0
    %3851 = vmatprep.subr.mxu0 0.0
    %3852 = vmatpush1.msra.mxu0 0.0
    %3853 = vmatprep.subr.mxu0 0.0
    %3854 = vmatpush1.msra.mxu0 0.0
    %3855 = vmatprep.subr.mxu0 0.0
    %3856 = vmatpush1.msra.mxu0 0.0
    %3857 = vmatprep.subr.mxu0 0.0
    %3858 = vmatpush1.msra.mxu0 0.0
    %3859 = vmatprep.subr.mxu0 0.0
    %3860 = vmatpush1.msra.mxu0 0.0
    %3861 = vmatprep.subr.mxu0 0.0
    %3862 = vmatpush1.msra.mxu0 0.0
    %3863 = vmatprep.subr.mxu0 0.0
    %3864 = vmatpush1.msra.mxu0 0.0
    %3865 = vmatprep.subr.mxu0 0.0
    %3866 = vmatpush1.msra.mxu0 0.0
    %3867 = vmatprep.subr.mxu0 0.0
    %3868 = vmatpush1.msra.mxu0 0.0
    %3869 = vmatprep.subr.mxu0 0.0
    %3870 = vmatpush1.msra.mxu0 0.0
    %3871 = vmatprep.subr.mxu0 0.0
    %3872 = vmatpush1.msra.mxu0 0.0
    %3873 = vmatprep.mubr.f32.mxu0 0.0
    %3874 = vmatmul.mubr.f32.gmra.mrb[0].mxu0 %v3243
    %v3875 = vpop.f32.mrb[0].mxu0
    %v3876 = vadd.f32 0.0, %v3875
    %v3877 = vpop.f32.mrb[0].mxu0
    %3878 = vdwg.mxu0
    %v3879 = vadd.f32 %v3802, %v3876
    %v3880 = vld [vmem:[%s17] sm:$0x1]
    %v3882 = vlaneseq
    %v3883 = vshrl.u32 %v3882, 7
    %v3884 = vsub.s32 0, %v3883
    %v3885 = vrot.slane %v3880, %v3884
    %v3887 = vadd.f32 %v3879, %v3885
    %s3888 = scalar_lea.vmem %s19, 16
    %3889 = vst [vmem:[%s3888] sm:$0xff] %v3887
    %3890 = vmax.xlane.f32.xlu0 %v3887
    %v3891 = vpop.xlane.xlu0 %3890
    %vm3892 = vcmp.eq.f32.partialorder %v3887, %v3891
    %v3893 = vsel %vm3892, %v381, 128
    %v3894 = vand.u32 %v3893, 65535
    %v3895 = vshra.s32 %v3893, 16
    %v3896 = vcvt.s32.f32 %v3894
    %v3897 = vcvt.s32.f32 %v3895
    %3898 = vmin.xlane.f32.xlu0 %v3897
    %v3899 = vpop.xlane.xlu0 %3898
    %vm3900 = vcmp.eq.f32.partialorder %v3897, %v3899
    %v3901 = vsel %vm3900, %v3896, inf
    %3902 = vmin.xlane.f32.xlu0 %v3901
    %v3903 = vpop.xlane.xlu0 %3902
    %v3904 = vcvt.f32.s32 %v3903
    %v3905 = vcvt.f32.s32 %v3899
    %v3906 = vshll.u32 %v3905, 16
    %v3907 = vadd.s32 %v3906, %v3904
    %vm3908 = vcmp.eq.s32.totalorder %v381, %v3907
    %v3909 = vsel %vm3908, 1, 0
    %v3910 = vcvt.s32.f32 %v3909
    %v3911 = vld [vmem:[%s18] sm:$0xff]
    %v3912 = vld [vmem:[%s18 + $0x8] sm:$0xff]
    %v3913 = vld [vmem:[%s18 + $0x10] sm:$0xff]
    %v3914 = vld [vmem:[%s18 + $0x18] sm:$0xff]
    %v3915 = vld [vmem:[%s18 + $0x20] sm:$0xff]
    %v3916 = vld [vmem:[%s18 + $0x28] sm:$0xff]
    %v3917 = vld [vmem:[%s18 + $0x30] sm:$0xff]
    %v3918 = vld [vmem:[%s18 + $0x38] sm:$0xff]
    %v3919 = vld [vmem:[%s18 + $0x40] sm:$0xff]
    %v3920 = vld [vmem:[%s18 + $0x48] sm:$0xff]
    %v3921 = vld [vmem:[%s18 + $0x50] sm:$0xff]
    %v3922 = vld [vmem:[%s18 + $0x58] sm:$0xff]
    %v3923 = vld [vmem:[%s18 + $0x60] sm:$0xff]
    %v3924 = vld [vmem:[%s18 + $0x68] sm:$0xff]
    %v3925 = vld [vmem:[%s18 + $0x70] sm:$0xff]
    %v3926 = vld [vmem:[%s18 + $0x78] sm:$0xff]
    %3927 = vmatprep.subr.mxu0 0.0
    %3928 = vmatpush1.msra.mxu0 %v3911
    %3929 = vmatprep.subr.mxu0 0.0
    %3930 = vmatpush1.msra.mxu0 %v3912
    %3931 = vmatprep.subr.mxu0 0.0
    %3932 = vmatpush1.msra.mxu0 %v3913
    %3933 = vmatprep.subr.mxu0 0.0
    %3934 = vmatpush1.msra.mxu0 %v3914
    %3935 = vmatprep.subr.mxu0 0.0
    %3936 = vmatpush1.msra.mxu0 %v3915
    %3937 = vmatprep.subr.mxu0 0.0
    %3938 = vmatpush1.msra.mxu0 %v3916
    %3939 = vmatprep.subr.mxu0 0.0
    %3940 = vmatpush1.msra.mxu0 %v3917
    %3941 = vmatprep.subr.mxu0 0.0
    %3942 = vmatpush1.msra.mxu0 %v3918
    %3943 = vmatprep.subr.mxu0 0.0
    %3944 = vmatpush1.msra.mxu0 %v3919
    %3945 = vmatprep.subr.mxu0 0.0
    %3946 = vmatpush1.msra.mxu0 %v3920
    %3947 = vmatprep.subr.mxu0 0.0
    %3948 = vmatpush1.msra.mxu0 %v3921
    %3949 = vmatprep.subr.mxu0 0.0
    %3950 = vmatpush1.msra.mxu0 %v3922
    %3951 = vmatprep.subr.mxu0 0.0
    %3952 = vmatpush1.msra.mxu0 %v3923
    %3953 = vmatprep.subr.mxu0 0.0
    %3954 = vmatpush1.msra.mxu0 %v3924
    %3955 = vmatprep.subr.mxu0 0.0
    %3956 = vmatpush1.msra.mxu0 %v3925
    %3957 = vmatprep.subr.mxu0 0.0
    %3958 = vmatpush1.msra.mxu0 %v3926
    %3959 = vmatprep.subr.mxu0 0.0
    %3960 = vmatpush1.msra.mxu0 0.0
    %3961 = vmatprep.subr.mxu0 0.0
    %3962 = vmatpush1.msra.mxu0 0.0
    %3963 = vmatprep.subr.mxu0 0.0
    %3964 = vmatpush1.msra.mxu0 0.0
    %3965 = vmatprep.subr.mxu0 0.0
    %3966 = vmatpush1.msra.mxu0 0.0
    %3967 = vmatprep.subr.mxu0 0.0
    %3968 = vmatpush1.msra.mxu0 0.0
    %3969 = vmatprep.subr.mxu0 0.0
    %3970 = vmatpush1.msra.mxu0 0.0
    %3971 = vmatprep.subr.mxu0 0.0
    %3972 = vmatpush1.msra.mxu0 0.0
    %3973 = vmatprep.subr.mxu0 0.0
    %3974 = vmatpush1.msra.mxu0 0.0
    %3975 = vmatprep.subr.mxu0 0.0
    %3976 = vmatpush1.msra.mxu0 0.0
    %3977 = vmatprep.subr.mxu0 0.0
    %3978 = vmatpush1.msra.mxu0 0.0
    %3979 = vmatprep.subr.mxu0 0.0
    %3980 = vmatpush1.msra.mxu0 0.0
    %3981 = vmatprep.subr.mxu0 0.0
    %3982 = vmatpush1.msra.mxu0 0.0
    %3983 = vmatprep.subr.mxu0 0.0
    %3984 = vmatpush1.msra.mxu0 0.0
    %3985 = vmatprep.subr.mxu0 0.0
    %3986 = vmatpush1.msra.mxu0 0.0
    %3987 = vmatprep.subr.mxu0 0.0
    %3988 = vmatpush1.msra.mxu0 0.0
    %3989 = vmatprep.subr.mxu0 0.0
    %3990 = vmatpush1.msra.mxu0 0.0
    %3991 = vmatprep.mubr.f32.mxu0 0.0
    %3992 = vmatmul.mubr.f32.gmra.mrb[0].mxu0 %v3910
    %v3993 = vpop.f32.mrb[0].mxu0
    %v3994 = vadd.f32 0.0, %v3993
    %v3995 = vpop.f32.mrb[0].mxu0
    %3996 = vdwg.mxu0
    %s3997 = sld [smem:[#allocation3 + $0x3]]
    %s3998 = scvt.s32.f32 %s3997
    %s3999 = scalar_lea.vmem %s1, 24
    %v4000 = vld [vmem:[%s3999] sm:$0xff]
    %v4001 = vstv %s3998
    %v4002 = vmul.f32 %v4001, %v4000
    %s4003 = ssub.f32 1.0, %s3998
    %v4004 = vstv %s4003
    %v4005 = vmul.f32 %v4004, %v3994
    %v4006 = vadd.f32 %v4002, %v4005
    %v4007 = vld [vmem:[%s5] sm:$0xff]
    %v4008 = vld [vmem:[%s5 + $0x8] sm:$0xff]
    %v4009 = vld [vmem:[%s5 + $0x10] sm:$0xff]
    %v4010 = vld [vmem:[%s5 + $0x18] sm:$0xff]
    %v4011 = vld [vmem:[%s5 + $0x20] sm:$0xff]
    %v4012 = vld [vmem:[%s5 + $0x28] sm:$0xff]
    %v4013 = vld [vmem:[%s5 + $0x30] sm:$0xff]
    %v4014 = vld [vmem:[%s5 + $0x38] sm:$0xff]
    %v4015 = vld [vmem:[%s5 + $0x40] sm:$0xff]
    %v4016 = vld [vmem:[%s5 + $0x48] sm:$0xff]
    %v4017 = vld [vmem:[%s5 + $0x50] sm:$0xff]
    %v4018 = vld [vmem:[%s5 + $0x58] sm:$0xff]
    %v4019 = vld [vmem:[%s5 + $0x60] sm:$0xff]
    %v4020 = vld [vmem:[%s5 + $0x68] sm:$0xff]
    %v4021 = vld [vmem:[%s5 + $0x70] sm:$0xff]
    %v4022 = vld [vmem:[%s5 + $0x78] sm:$0xff]
    %4023 = vmatprep.subr.mxu0 0.0
    %4024 = vmatpush1.msra.mxu0 %v4007
    %4025 = vmatprep.subr.mxu0 0.0
    %4026 = vmatpush1.msra.mxu0 %v4008
    %4027 = vmatprep.subr.mxu0 0.0
    %4028 = vmatpush1.msra.mxu0 %v4009
    %4029 = vmatprep.subr.mxu0 0.0
    %4030 = vmatpush1.msra.mxu0 %v4010
    %4031 = vmatprep.subr.mxu0 0.0
    %4032 = vmatpush1.msra.mxu0 %v4011
    %4033 = vmatprep.subr.mxu0 0.0
    %4034 = vmatpush1.msra.mxu0 %v4012
    %4035 = vmatprep.subr.mxu0 0.0
    %4036 = vmatpush1.msra.mxu0 %v4013
    %4037 = vmatprep.subr.mxu0 0.0
    %4038 = vmatpush1.msra.mxu0 %v4014
    %4039 = vmatprep.subr.mxu0 0.0
    %4040 = vmatpush1.msra.mxu0 %v4015
    %4041 = vmatprep.subr.mxu0 0.0
    %4042 = vmatpush1.msra.mxu0 %v4016
    %4043 = vmatprep.subr.mxu0 0.0
    %4044 = vmatpush1.msra.mxu0 %v4017
    %4045 = vmatprep.subr.mxu0 0.0
    %4046 = vmatpush1.msra.mxu0 %v4018
    %4047 = vmatprep.subr.mxu0 0.0
    %4048 = vmatpush1.msra.mxu0 %v4019
    %4049 = vmatprep.subr.mxu0 0.0
    %4050 = vmatpush1.msra.mxu0 %v4020
    %4051 = vmatprep.subr.mxu0 0.0
    %4052 = vmatpush1.msra.mxu0 %v4021
    %4053 = vmatprep.subr.mxu0 0.0
    %4054 = vmatpush1.msra.mxu0 %v4022
    %4055 = vmatprep.subr.mxu0 0.0
    %4056 = vmatpush1.msra.mxu0 0.0
    %4057 = vmatprep.subr.mxu0 0.0
    %4058 = vmatpush1.msra.mxu0 0.0
    %4059 = vmatprep.subr.mxu0 0.0
    %4060 = vmatpush1.msra.mxu0 0.0
    %4061 = vmatprep.subr.mxu0 0.0
    %4062 = vmatpush1.msra.mxu0 0.0
    %4063 = vmatprep.subr.mxu0 0.0
    %4064 = vmatpush1.msra.mxu0 0.0
    %4065 = vmatprep.subr.mxu0 0.0
    %4066 = vmatpush1.msra.mxu0 0.0
    %4067 = vmatprep.subr.mxu0 0.0
    %4068 = vmatpush1.msra.mxu0 0.0
    %4069 = vmatprep.subr.mxu0 0.0
    %4070 = vmatpush1.msra.mxu0 0.0
    %4071 = vmatprep.subr.mxu0 0.0
    %4072 = vmatpush1.msra.mxu0 0.0
    %4073 = vmatprep.subr.mxu0 0.0
    %4074 = vmatpush1.msra.mxu0 0.0
    %4075 = vmatprep.subr.mxu0 0.0
    %4076 = vmatpush1.msra.mxu0 0.0
    %4077 = vmatprep.subr.mxu0 0.0
    %4078 = vmatpush1.msra.mxu0 0.0
    %4079 = vmatprep.subr.mxu0 0.0
    %4080 = vmatpush1.msra.mxu0 0.0
    %4081 = vmatprep.subr.mxu0 0.0
    %4082 = vmatpush1.msra.mxu0 0.0
    %4083 = vmatprep.subr.mxu0 0.0
    %4084 = vmatpush1.msra.mxu0 0.0
    %4085 = vmatprep.subr.mxu0 0.0
    %4086 = vmatpush1.msra.mxu0 0.0
    %4087 = vmatprep.mubr.f32.mxu0 0.0
    %4088 = vmatmul.mubr.f32.gmra.mrb[0].mxu0 %v3632
    %v4089 = vpop.f32.mrb[0].mxu0
    %v4090 = vadd.f32 0.0, %v4089
    %v4091 = vpop.f32.mrb[0].mxu0
    %4092 = vdwg.mxu0
    %v4093 = vld [vmem:[#allocation2] sm:$0xff]
    %v4094 = vld [vmem:[#allocation2 + $0x8] sm:$0xff]
    %v4095 = vld [vmem:[#allocation2 + $0x10] sm:$0xff]
    %v4096 = vld [vmem:[#allocation2 + $0x18] sm:$0xff]
    %v4097 = vld [vmem:[#allocation2 + $0x20] sm:$0xff]
    %v4098 = vld [vmem:[#allocation2 + $0x28] sm:$0xff]
    %v4099 = vld [vmem:[#allocation2 + $0x30] sm:$0xff]
    %v4100 = vld [vmem:[#allocation2 + $0x38] sm:$0xff]
    %v4101 = vadd.f32 %v4090, %v4093
    %v4102 = vadd.f32 %v4090, %v4094
    %v4103 = vadd.f32 %v4090, %v4095
    %v4104 = vadd.f32 %v4090, %v4096
    %v4105 = vadd.f32 %v4090, %v4097
    %v4106 = vadd.f32 %v4090, %v4098
    %v4107 = vadd.f32 %v4090, %v4099
    %v4108 = vadd.f32 %v4090, %v4100
    %v4109 = vtanh.pop %v4101
    %v4110 = vtanh.pop %v4102
    %v4111 = vtanh.pop %v4103
    %v4112 = vtanh.pop %v4104
    %v4113 = vtanh.pop %v4105
    %v4114 = vtanh.pop %v4106
    %v4115 = vtanh.pop %v4107
    %v4116 = vtanh.pop %v4108
    %v4117 = vld [vmem:[%s8] sm:$0x1]
    %v4119 = vlaneseq
    %v4120 = vshrl.u32 %v4119, 7
    %v4121 = vsub.s32 0, %v4120
    %v4122 = vrot.slane %v4117, %v4121
    %v4124 = vmul.f32 %v4109, %v4122
    %v4125 = vmul.f32 %v4110, %v4122
    %v4126 = vmul.f32 %v4111, %v4122
    %v4127 = vmul.f32 %v4112, %v4122
    %v4128 = vmul.f32 %v4113, %v4122
    %v4129 = vmul.f32 %v4114, %v4122
    %v4130 = vmul.f32 %v4115, %v4122
    %v4131 = vmul.f32 %v4116, %v4122
    %4132 = vadd.xlane.f32.xlu0 %v4124
    %v4133 = vpop.xlane.xlu0 %4132
    %4134 = vadd.xlane.f32.xlu0 %v4125
    %v4135 = vpop.xlane.xlu0 %4134
    %4136 = vadd.xlane.f32.xlu0 %v4126
    %v4137 = vpop.xlane.xlu0 %4136
    %4138 = vadd.xlane.f32.xlu0 %v4127
    %v4139 = vpop.xlane.xlu0 %4138
    %4140 = vadd.xlane.f32.xlu0 %v4128
    %v4141 = vpop.xlane.xlu0 %4140
    %4142 = vadd.xlane.f32.xlu0 %v4129
    %v4143 = vpop.xlane.xlu0 %4142
    %4144 = vadd.xlane.f32.xlu0 %v4130
    %v4145 = vpop.xlane.xlu0 %4144
    %4146 = vadd.xlane.f32.xlu0 %v4131
    %v4147 = vpop.xlane.xlu0 %4146
    %v4148 = vld [vmem:[%s4] sm:$0xff]
    %vm4149 = vcmp.gt.f32.partialorder %v4148, 0.5
    %v4158 = vlaneseq
    %v4159 = vshrl.u32 %v4158, 7
    %v4160 = vsub.s32 %v381, %v4159
    %v4161 = vrot.slane %v4133, %v4160
    %v4162 = vlaneseq
    %v4163 = vshrl.u32 %v4162, 7
    %v4164 = vsub.s32 %v381, %v4163
    %v4165 = vrot.slane %v4135, %v4164
    %v4166 = vlaneseq
    %v4167 = vshrl.u32 %v4166, 7
    %v4168 = vsub.s32 %v381, %v4167
    %v4169 = vrot.slane %v4137, %v4168
    %v4170 = vlaneseq
    %v4171 = vshrl.u32 %v4170, 7
    %v4172 = vsub.s32 %v381, %v4171
    %v4173 = vrot.slane %v4139, %v4172
    %v4174 = vlaneseq
    %v4175 = vshrl.u32 %v4174, 7
    %v4176 = vsub.s32 %v381, %v4175
    %v4177 = vrot.slane %v4141, %v4176
    %v4178 = vlaneseq
    %v4179 = vshrl.u32 %v4178, 7
    %v4180 = vsub.s32 %v381, %v4179
    %v4181 = vrot.slane %v4143, %v4180
    %v4182 = vlaneseq
    %v4183 = vshrl.u32 %v4182, 7
    %v4184 = vsub.s32 %v381, %v4183
    %v4185 = vrot.slane %v4145, %v4184
    %v4186 = vlaneseq
    %v4187 = vshrl.u32 %v4186, 7
    %v4188 = vsub.s32 %v381, %v4187
    %v4189 = vrot.slane %v4147, %v4188
    %v4190 = vsel %vm414, %v4165, %v4161
    %v4191 = vsel %vm416, %v4169, %v4190
    %v4192 = vsel %vm418, %v4173, %v4191
    %v4193 = vsel %vm420, %v4177, %v4192
    %v4194 = vsel %vm422, %v4181, %v4193
    %v4195 = vsel %vm424, %v4185, %v4194
    %v4196 = vsel %vm426, %v4189, %v4195
    %v4198 = vsel %vm4149, %v4196, -1e+10
    %v4199 = vsel %vm430, %v4198, -inf
    %v4200 = vrot.slane %v4199, 4
    %v4201 = vmax.f32 %v4199, %v4200
    %v4202 = vrot.slane %v4201, 2
    %v4203 = vmax.f32 %v4201, %v4202
    %v4204 = vrot.slane %v4203, 1
    %v4205 = vmax.f32 %v4203, %v4204
    %v4206 = vsub.f32 %v4198, %v4205
    %v4207 = vmul.f32 %v4206, 1.442695
    %v4208 = vpow.pop %v4207
    %v4209 = vsel %vm430, %v4208, 0.0
    %v4210 = vrot.slane %v4209, 4
    %v4211 = vadd.f32 %v4209, %v4210
    %v4212 = vrot.slane %v4211, 2
    %v4213 = vadd.f32 %v4211, %v4212
    %v4214 = vrot.slane %v4213, 1
    %v4215 = vadd.f32 %v4213, %v4214
    %v4216 = vrcp.pop %v4215
    %v4217 = vmul.f32 %v4208, %v4216
    %v4218 = vlaneseq
    %v4219 = vshrl.u32 %v4218, 7
    %v4220 = vsub.s32 0, %v4219
    %v4221 = vrot.slane %v4217, %v4220
    %4223 = vbcast.lane.b32.xlu0 %v4221, 256
    %v4224 = vpop.permute.xlu0 %4223
    %v4225 = vlaneseq
    %v4226 = vshrl.u32 %v4225, 7
    %v4227 = vsub.s32 1, %v4226
    %v4228 = vrot.slane %v4217, %v4227
    %4230 = vbcast.lane.b32.xlu0 %v4228, 256
    %v4231 = vpop.permute.xlu0 %4230
    %v4232 = vlaneseq
    %v4233 = vshrl.u32 %v4232, 7
    %v4234 = vsub.s32 2, %v4233
    %v4235 = vrot.slane %v4217, %v4234
    %4237 = vbcast.lane.b32.xlu0 %v4235, 256
    %v4238 = vpop.permute.xlu0 %4237
    %v4239 = vlaneseq
    %v4240 = vshrl.u32 %v4239, 7
    %v4241 = vsub.s32 3, %v4240
    %v4242 = vrot.slane %v4217, %v4241
    %4244 = vbcast.lane.b32.xlu0 %v4242, 256
    %v4245 = vpop.permute.xlu0 %4244
    %v4246 = vlaneseq
    %v4247 = vshrl.u32 %v4246, 7
    %v4248 = vsub.s32 4, %v4247
    %v4249 = vrot.slane %v4217, %v4248
    %4251 = vbcast.lane.b32.xlu0 %v4249, 256
    %v4252 = vpop.permute.xlu0 %4251
    %v4253 = vlaneseq
    %v4254 = vshrl.u32 %v4253, 7
    %v4255 = vsub.s32 5, %v4254
    %v4256 = vrot.slane %v4217, %v4255
    %4258 = vbcast.lane.b32.xlu0 %v4256, 256
    %v4259 = vpop.permute.xlu0 %4258
    %v4260 = vlaneseq
    %v4261 = vshrl.u32 %v4260, 7
    %v4262 = vsub.s32 6, %v4261
    %v4263 = vrot.slane %v4217, %v4262
    %4265 = vbcast.lane.b32.xlu0 %v4263, 256
    %v4266 = vpop.permute.xlu0 %4265
    %v4267 = vlaneseq
    %v4268 = vshrl.u32 %v4267, 7
    %v4269 = vsub.s32 7, %v4268
    %v4270 = vrot.slane %v4217, %v4269
    %4272 = vbcast.lane.b32.xlu0 %v4270, 256
    %v4273 = vpop.permute.xlu0 %4272
    %v4274 = vld [vmem:[%s3] sm:$0xff]
    %v4275 = vld [vmem:[%s3 + $0x8] sm:$0xff]
    %v4276 = vld [vmem:[%s3 + $0x10] sm:$0xff]
    %v4277 = vld [vmem:[%s3 + $0x18] sm:$0xff]
    %v4278 = vld [vmem:[%s3 + $0x20] sm:$0xff]
    %v4279 = vld [vmem:[%s3 + $0x28] sm:$0xff]
    %v4280 = vld [vmem:[%s3 + $0x30] sm:$0xff]
    %v4281 = vld [vmem:[%s3 + $0x38] sm:$0xff]
    %v4282 = vmul.f32 %v4224, %v4274
    %v4283 = vmul.f32 %v4231, %v4275
    %v4284 = vmul.f32 %v4238, %v4276
    %v4285 = vmul.f32 %v4245, %v4277
    %v4286 = vmul.f32 %v4252, %v4278
    %v4287 = vmul.f32 %v4259, %v4279
    %v4288 = vmul.f32 %v4266, %v4280
    %v4289 = vmul.f32 %v4273, %v4281
    %v4290 = vadd.f32 %v4282, %v4283
    %v4291 = vadd.f32 %v4290, %v4284
    %v4292 = vadd.f32 %v4291, %v4285
    %v4293 = vadd.f32 %v4292, %v4286
    %v4294 = vadd.f32 %v4293, %v4287
    %v4295 = vadd.f32 %v4294, %v4288
    %v4296 = vadd.f32 %v4295, %v4289
    %v4297 = vld [vmem:[%s9] sm:$0xff]
    %v4298 = vld [vmem:[%s9 + $0x8] sm:$0xff]
    %v4299 = vld [vmem:[%s9 + $0x10] sm:$0xff]
    %v4300 = vld [vmem:[%s9 + $0x18] sm:$0xff]
    %v4301 = vld [vmem:[%s9 + $0x20] sm:$0xff]
    %v4302 = vld [vmem:[%s9 + $0x28] sm:$0xff]
    %v4303 = vld [vmem:[%s9 + $0x30] sm:$0xff]
    %v4304 = vld [vmem:[%s9 + $0x38] sm:$0xff]
    %v4305 = vld [vmem:[%s9 + $0x40] sm:$0xff]
    %v4306 = vld [vmem:[%s9 + $0x48] sm:$0xff]
    %v4307 = vld [vmem:[%s9 + $0x50] sm:$0xff]
    %v4308 = vld [vmem:[%s9 + $0x58] sm:$0xff]
    %v4309 = vld [vmem:[%s10] sm:$0xff]
    %v4310 = vld [vmem:[%s10 + $0x8] sm:$0xff]
    %v4311 = vld [vmem:[%s10 + $0x10] sm:$0xff]
    %v4312 = vld [vmem:[%s10 + $0x18] sm:$0xff]
    %v4313 = vld [vmem:[%s10 + $0x20] sm:$0xff]
    %v4314 = vld [vmem:[%s10 + $0x28] sm:$0xff]
    %v4315 = vld [vmem:[%s10 + $0x30] sm:$0xff]
    %v4316 = vld [vmem:[%s10 + $0x38] sm:$0xff]
    %v4317 = vld [vmem:[%s10 + $0x40] sm:$0xff]
    %v4318 = vld [vmem:[%s10 + $0x48] sm:$0xff]
    %v4319 = vld [vmem:[%s10 + $0x50] sm:$0xff]
    %v4320 = vld [vmem:[%s10 + $0x58] sm:$0xff]
    %v4321 = vld [vmem:[%s10 + $0x60] sm:$0xff]
    %v4322 = vld [vmem:[%s10 + $0x68] sm:$0xff]
    %v4323 = vld [vmem:[%s10 + $0x70] sm:$0xff]
    %v4324 = vld [vmem:[%s10 + $0x78] sm:$0xff]
    %v4325 = vld [vmem:[%s10 + $0x80] sm:$0xff]
    %v4326 = vld [vmem:[%s10 + $0x88] sm:$0xff]
    %v4327 = vld [vmem:[%s10 + $0x90] sm:$0xff]
    %v4328 = vld [vmem:[%s10 + $0x98] sm:$0xff]
    %v4329 = vld [vmem:[%s10 + $0xa0] sm:$0xff]
    %v4330 = vld [vmem:[%s10 + $0xa8] sm:$0xff]
    %v4331 = vld [vmem:[%s10 + $0xb0] sm:$0xff]
    %v4332 = vld [vmem:[%s10 + $0xb8] sm:$0xff]
    %v4333 = vld [vmem:[%s10 + $0xc0] sm:$0xff]
    %v4334 = vld [vmem:[%s10 + $0xc8] sm:$0xff]
    %v4335 = vld [vmem:[%s10 + $0xd0] sm:$0xff]
    %v4336 = vld [vmem:[%s10 + $0xd8] sm:$0xff]
    %v4337 = vld [vmem:[%s10 + $0xe0] sm:$0xff]
    %v4338 = vld [vmem:[%s10 + $0xe8] sm:$0xff]
    %v4339 = vld [vmem:[%s10 + $0xf0] sm:$0xff]
    %v4340 = vld [vmem:[%s10 + $0xf8] sm:$0xff]
    %v4341 = vld [vmem:[%s10 + $0x100] sm:$0xff]
    %v4342 = vld [vmem:[%s10 + $0x108] sm:$0xff]
    %v4343 = vld [vmem:[%s10 + $0x110] sm:$0xff]
    %v4344 = vld [vmem:[%s10 + $0x118] sm:$0xff]
    %v4345 = vld [vmem:[%s10 + $0x120] sm:$0xff]
    %v4346 = vld [vmem:[%s10 + $0x128] sm:$0xff]
    %v4347 = vld [vmem:[%s10 + $0x130] sm:$0xff]
    %v4348 = vld [vmem:[%s10 + $0x138] sm:$0xff]
    %v4349 = vld [vmem:[%s10 + $0x140] sm:$0xff]
    %v4350 = vld [vmem:[%s10 + $0x148] sm:$0xff]
    %v4351 = vld [vmem:[%s10 + $0x150] sm:$0xff]
    %v4352 = vld [vmem:[%s10 + $0x158] sm:$0xff]
    %v4353 = vld [vmem:[%s10 + $0x160] sm:$0xff]
    %v4354 = vld [vmem:[%s10 + $0x168] sm:$0xff]
    %v4355 = vld [vmem:[%s10 + $0x170] sm:$0xff]
    %v4356 = vld [vmem:[%s10 + $0x178] sm:$0xff]
    %4357 = vmatprep.subr.mxu0 %v4310
    %4358 = vmatpush1.msra.mxu0 %v4309
    %4359 = vmatprep.subr.mxu0 %v4313
    %4360 = vmatpush1.msra.mxu0 %v4312
    %4361 = vmatprep.subr.mxu0 %v4316
    %4362 = vmatpush1.msra.mxu0 %v4315
    %4363 = vmatprep.subr.mxu0 %v4319
    %4364 = vmatpush1.msra.mxu0 %v4318
    %4365 = vmatprep.subr.mxu0 %v4322
    %4366 = vmatpush1.msra.mxu0 %v4321
    %4367 = vmatprep.subr.mxu0 %v4325
    %4368 = vmatpush1.msra.mxu0 %v4324
    %4369 = vmatprep.subr.mxu0 %v4328
    %4370 = vmatpush1.msra.mxu0 %v4327
    %4371 = vmatprep.subr.mxu0 %v4331
    %4372 = vmatpush1.msra.mxu0 %v4330
    %4373 = vmatprep.subr.mxu0 %v4334
    %4374 = vmatpush1.msra.mxu0 %v4333
    %4375 = vmatprep.subr.mxu0 %v4337
    %4376 = vmatpush1.msra.mxu0 %v4336
    %4377 = vmatprep.subr.mxu0 %v4340
    %4378 = vmatpush1.msra.mxu0 %v4339
    %4379 = vmatprep.subr.mxu0 %v4343
    %4380 = vmatpush1.msra.mxu0 %v4342
    %4381 = vmatprep.subr.mxu0 %v4346
    %4382 = vmatpush1.msra.mxu0 %v4345
    %4383 = vmatprep.subr.mxu0 %v4349
    %4384 = vmatpush1.msra.mxu0 %v4348
    %4385 = vmatprep.subr.mxu0 %v4352
    %4386 = vmatpush1.msra.mxu0 %v4351
    %4387 = vmatprep.subr.mxu0 %v4355
    %4388 = vmatpush1.msra.mxu0 %v4354
    %4389 = vmatprep.subr.mxu0 0.0
    %4390 = vmatpush1.msra.mxu0 0.0
    %4391 = vmatprep.subr.mxu0 0.0
    %4392 = vmatpush1.msra.mxu0 0.0
    %4393 = vmatprep.subr.mxu0 0.0
    %4394 = vmatpush1.msra.mxu0 0.0
    %4395 = vmatprep.subr.mxu0 0.0
    %4396 = vmatpush1.msra.mxu0 0.0
    %4397 = vmatprep.subr.mxu0 0.0
    %4398 = vmatpush1.msra.mxu0 0.0
    %4399 = vmatprep.subr.mxu0 0.0
    %4400 = vmatpush1.msra.mxu0 0.0
    %4401 = vmatprep.subr.mxu0 0.0
    %4402 = vmatpush1.msra.mxu0 0.0
    %4403 = vmatprep.subr.mxu0 0.0
    %4404 = vmatpush1.msra.mxu0 0.0
    %4405 = vmatprep.subr.mxu0 0.0
    %4406 = vmatpush1.msra.mxu0 0.0
    %4407 = vmatprep.subr.mxu0 0.0
    %4408 = vmatpush1.msra.mxu0 0.0
    %4409 = vmatprep.subr.mxu0 0.0
    %4410 = vmatpush1.msra.mxu0 0.0
    %4411 = vmatprep.subr.mxu0 0.0
    %4412 = vmatpush1.msra.mxu0 0.0
    %4413 = vmatprep.subr.mxu0 0.0
    %4414 = vmatpush1.msra.mxu0 0.0
    %4415 = vmatprep.subr.mxu0 0.0
    %4416 = vmatpush1.msra.mxu0 0.0
    %4417 = vmatprep.subr.mxu0 0.0
    %4418 = vmatpush1.msra.mxu0 0.0
    %4419 = vmatprep.subr.mxu0 0.0
    %4420 = vmatpush1.msra.mxu0 0.0
    %4421 = vmatprep.mubr.f32.mxu0 0.0
    %4422 = vmatmul.mubr.f32.gmra.mrb[0].mxu0 %v4296
    %v4423 = vpop.f32.mrb[0].mxu0
    %v4424 = vadd.f32 0.0, %v4423
    %v4425 = vpop.f32.mrb[0].mxu0
    %v4426 = vadd.f32 0.0, %v4425
    %4427 = vdwg.mxu0
    %4428 = vmatprep.subr.mxu0 0.0
    %4429 = vmatpush1.msra.mxu0 %v4311
    %4430 = vmatprep.subr.mxu0 0.0
    %4431 = vmatpush1.msra.mxu0 %v4314
    %4432 = vmatprep.subr.mxu0 0.0
    %4433 = vmatpush1.msra.mxu0 %v4317
    %4434 = vmatprep.subr.mxu0 0.0
    %4435 = vmatpush1.msra.mxu0 %v4320
    %4436 = vmatprep.subr.mxu0 0.0
    %4437 = vmatpush1.msra.mxu0 %v4323
    %4438 = vmatprep.subr.mxu0 0.0
    %4439 = vmatpush1.msra.mxu0 %v4326
    %4440 = vmatprep.subr.mxu0 0.0
    %4441 = vmatpush1.msra.mxu0 %v4329
    %4442 = vmatprep.subr.mxu0 0.0
    %4443 = vmatpush1.msra.mxu0 %v4332
    %4444 = vmatprep.subr.mxu0 0.0
    %4445 = vmatpush1.msra.mxu0 %v4335
    %4446 = vmatprep.subr.mxu0 0.0
    %4447 = vmatpush1.msra.mxu0 %v4338
    %4448 = vmatprep.subr.mxu0 0.0
    %4449 = vmatpush1.msra.mxu0 %v4341
    %4450 = vmatprep.subr.mxu0 0.0
    %4451 = vmatpush1.msra.mxu0 %v4344
    %4452 = vmatprep.subr.mxu0 0.0
    %4453 = vmatpush1.msra.mxu0 %v4347
    %4454 = vmatprep.subr.mxu0 0.0
    %4455 = vmatpush1.msra.mxu0 %v4350
    %4456 = vmatprep.subr.mxu0 0.0
    %4457 = vmatpush1.msra.mxu0 %v4353
    %4458 = vmatprep.subr.mxu0 0.0
    %4459 = vmatpush1.msra.mxu0 %v4356
    %4460 = vmatprep.subr.mxu0 0.0
    %4461 = vmatpush1.msra.mxu0 0.0
    %4462 = vmatprep.subr.mxu0 0.0
    %4463 = vmatpush1.msra.mxu0 0.0
    %4464 = vmatprep.subr.mxu0 0.0
    %4465 = vmatpush1.msra.mxu0 0.0
    %4466 = vmatprep.subr.mxu0 0.0
    %4467 = vmatpush1.msra.mxu0 0.0
    %4468 = vmatprep.subr.mxu0 0.0
    %4469 = vmatpush1.msra.mxu0 0.0
    %4470 = vmatprep.subr.mxu0 0.0
    %4471 = vmatpush1.msra.mxu0 0.0
    %4472 = vmatprep.subr.mxu0 0.0
    %4473 = vmatpush1.msra.mxu0 0.0
    %4474 = vmatprep.subr.mxu0 0.0
    %4475 = vmatpush1.msra.mxu0 0.0
    %4476 = vmatprep.subr.mxu0 0.0
    %4477 = vmatpush1.msra.mxu0 0.0
    %4478 = vmatprep.subr.mxu0 0.0
    %4479 = vmatpush1.msra.mxu0 0.0
    %4480 = vmatprep.subr.mxu0 0.0
    %4481 = vmatpush1.msra.mxu0 0.0
    %4482 = vmatprep.subr.mxu0 0.0
    %4483 = vmatpush1.msra.mxu0 0.0
    %4484 = vmatprep.subr.mxu0 0.0
    %4485 = vmatpush1.msra.mxu0 0.0
    %4486 = vmatprep.subr.mxu0 0.0
    %4487 = vmatpush1.msra.mxu0 0.0
    %4488 = vmatprep.subr.mxu0 0.0
    %4489 = vmatpush1.msra.mxu0 0.0
    %4490 = vmatprep.subr.mxu0 0.0
    %4491 = vmatpush1.msra.mxu0 0.0
    %4492 = vmatprep.mubr.f32.mxu0 0.0
    %4493 = vmatmul.mubr.f32.gmra.mrb[0].mxu0 %v4296
    %v4494 = vpop.f32.mrb[0].mxu0
    %v4495 = vadd.f32 0.0, %v4494
    %v4496 = vpop.f32.mrb[0].mxu0
    %4497 = vdwg.mxu0
    %v4499 = vsel %vm730, %v4006, 0
    %4501 = vmatprep.subr.mxu0 %v4298
    %4502 = vmatpush1.msra.mxu0 %v4297
    %4503 = vmatprep.subr.mxu0 %v4301
    %4504 = vmatpush1.msra.mxu0 %v4300
    %4505 = vmatprep.subr.mxu0 %v4304
    %4506 = vmatpush1.msra.mxu0 %v4303
    %4507 = vmatprep.subr.mxu0 %v4307
    %4508 = vmatpush1.msra.mxu0 %v4306
    %4509 = vmatprep.subr.mxu0 0.0
    %4510 = vmatpush1.msra.mxu0 0.0
    %4511 = vmatprep.subr.mxu0 0.0
    %4512 = vmatpush1.msra.mxu0 0.0
    %4513 = vmatprep.subr.mxu0 0.0
    %4514 = vmatpush1.msra.mxu0 0.0
    %4515 = vmatprep.subr.mxu0 0.0
    %4516 = vmatpush1.msra.mxu0 0.0
    %4517 = vmatprep.subr.mxu0 0.0
    %4518 = vmatpush1.msra.mxu0 0.0
    %4519 = vmatprep.subr.mxu0 0.0
    %4520 = vmatpush1.msra.mxu0 0.0
    %4521 = vmatprep.subr.mxu0 0.0
    %4522 = vmatpush1.msra.mxu0 0.0
    %4523 = vmatprep.subr.mxu0 0.0
    %4524 = vmatpush1.msra.mxu0 0.0
    %4525 = vmatprep.subr.mxu0 0.0
    %4526 = vmatpush1.msra.mxu0 0.0
    %4527 = vmatprep.subr.mxu0 0.0
    %4528 = vmatpush1.msra.mxu0 0.0
    %4529 = vmatprep.subr.mxu0 0.0
    %4530 = vmatpush1.msra.mxu0 0.0
    %4531 = vmatprep.subr.mxu0 0.0
    %4532 = vmatpush1.msra.mxu0 0.0
    %4533 = vmatprep.subr.mxu0 0.0
    %4534 = vmatpush1.msra.mxu0 0.0
    %4535 = vmatprep.subr.mxu0 0.0
    %4536 = vmatpush1.msra.mxu0 0.0
    %4537 = vmatprep.subr.mxu0 0.0
    %4538 = vmatpush1.msra.mxu0 0.0
    %4539 = vmatprep.subr.mxu0 0.0
    %4540 = vmatpush1.msra.mxu0 0.0
    %4541 = vmatprep.subr.mxu0 0.0
    %4542 = vmatpush1.msra.mxu0 0.0
    %4543 = vmatprep.subr.mxu0 0.0
    %4544 = vmatpush1.msra.mxu0 0.0
    %4545 = vmatprep.subr.mxu0 0.0
    %4546 = vmatpush1.msra.mxu0 0.0
    %4547 = vmatprep.subr.mxu0 0.0
    %4548 = vmatpush1.msra.mxu0 0.0
    %4549 = vmatprep.subr.mxu0 0.0
    %4550 = vmatpush1.msra.mxu0 0.0
    %4551 = vmatprep.subr.mxu0 0.0
    %4552 = vmatpush1.msra.mxu0 0.0
    %4553 = vmatprep.subr.mxu0 0.0
    %4554 = vmatpush1.msra.mxu0 0.0
    %4555 = vmatprep.subr.mxu0 0.0
    %4556 = vmatpush1.msra.mxu0 0.0
    %4557 = vmatprep.subr.mxu0 0.0
    %4558 = vmatpush1.msra.mxu0 0.0
    %4559 = vmatprep.subr.mxu0 0.0
    %4560 = vmatpush1.msra.mxu0 0.0
    %4561 = vmatprep.subr.mxu0 0.0
    %4562 = vmatpush1.msra.mxu0 0.0
    %4563 = vmatprep.subr.mxu0 0.0
    %4564 = vmatpush1.msra.mxu0 0.0
    %4565 = vmatprep.mubr.f32.mxu0 0.0
    %4566 = vmatmul.mubr.f32.gmra.mrb[0].mxu0 %v4499
    %v4567 = vpop.f32.mrb[0].mxu0
    %v4568 = vadd.f32 %v4424, %v4567
    %v4569 = vpop.f32.mrb[0].mxu0
    %v4570 = vadd.f32 %v4426, %v4569
    %4571 = vdwg.mxu0
    %4572 = vmatprep.subr.mxu0 0.0
    %4573 = vmatpush1.msra.mxu0 %v4299
    %4574 = vmatprep.subr.mxu0 0.0
    %4575 = vmatpush1.msra.mxu0 %v4302
    %4576 = vmatprep.subr.mxu0 0.0
    %4577 = vmatpush1.msra.mxu0 %v4305
    %4578 = vmatprep.subr.mxu0 0.0
    %4579 = vmatpush1.msra.mxu0 %v4308
    %4580 = vmatprep.subr.mxu0 0.0
    %4581 = vmatpush1.msra.mxu0 0.0
    %4582 = vmatprep.subr.mxu0 0.0
    %4583 = vmatpush1.msra.mxu0 0.0
    %4584 = vmatprep.subr.mxu0 0.0
    %4585 = vmatpush1.msra.mxu0 0.0
    %4586 = vmatprep.subr.mxu0 0.0
    %4587 = vmatpush1.msra.mxu0 0.0
    %4588 = vmatprep.subr.mxu0 0.0
    %4589 = vmatpush1.msra.mxu0 0.0
    %4590 = vmatprep.subr.mxu0 0.0
    %4591 = vmatpush1.msra.mxu0 0.0
    %4592 = vmatprep.subr.mxu0 0.0
    %4593 = vmatpush1.msra.mxu0 0.0
    %4594 = vmatprep.subr.mxu0 0.0
    %4595 = vmatpush1.msra.mxu0 0.0
    %4596 = vmatprep.subr.mxu0 0.0
    %4597 = vmatpush1.msra.mxu0 0.0
    %4598 = vmatprep.subr.mxu0 0.0
    %4599 = vmatpush1.msra.mxu0 0.0
    %4600 = vmatprep.subr.mxu0 0.0
    %4601 = vmatpush1.msra.mxu0 0.0
    %4602 = vmatprep.subr.mxu0 0.0
    %4603 = vmatpush1.msra.mxu0 0.0
    %4604 = vmatprep.subr.mxu0 0.0
    %4605 = vmatpush1.msra.mxu0 0.0
    %4606 = vmatprep.subr.mxu0 0.0
    %4607 = vmatpush1.msra.mxu0 0.0
    %4608 = vmatprep.subr.mxu0 0.0
    %4609 = vmatpush1.msra.mxu0 0.0
    %4610 = vmatprep.subr.mxu0 0.0
    %4611 = vmatpush1.msra.mxu0 0.0
    %4612 = vmatprep.subr.mxu0 0.0
    %4613 = vmatpush1.msra.mxu0 0.0
    %4614 = vmatprep.subr.mxu0 0.0
    %4615 = vmatpush1.msra.mxu0 0.0
    %4616 = vmatprep.subr.mxu0 0.0
    %4617 = vmatpush1.msra.mxu0 0.0
    %4618 = vmatprep.subr.mxu0 0.0
    %4619 = vmatpush1.msra.mxu0 0.0
    %4620 = vmatprep.subr.mxu0 0.0
    %4621 = vmatpush1.msra.mxu0 0.0
    %4622 = vmatprep.subr.mxu0 0.0
    %4623 = vmatpush1.msra.mxu0 0.0
    %4624 = vmatprep.subr.mxu0 0.0
    %4625 = vmatpush1.msra.mxu0 0.0
    %4626 = vmatprep.subr.mxu0 0.0
    %4627 = vmatpush1.msra.mxu0 0.0
    %4628 = vmatprep.subr.mxu0 0.0
    %4629 = vmatpush1.msra.mxu0 0.0
    %4630 = vmatprep.subr.mxu0 0.0
    %4631 = vmatpush1.msra.mxu0 0.0
    %4632 = vmatprep.subr.mxu0 0.0
    %4633 = vmatpush1.msra.mxu0 0.0
    %4634 = vmatprep.subr.mxu0 0.0
    %4635 = vmatpush1.msra.mxu0 0.0
    %4636 = vmatprep.mubr.f32.mxu0 0.0
    %4637 = vmatmul.mubr.f32.gmra.mrb[0].mxu0 %v4499
    %v4638 = vpop.f32.mrb[0].mxu0
    %v4639 = vadd.f32 %v4495, %v4638
    %v4640 = vpop.f32.mrb[0].mxu0
    %4641 = vdwg.mxu0
    %v4642 = vld [vmem:[%s12] sm:$0x7]
    %v4644 = vlaneseq
    %v4645 = vshrl.u32 %v4644, 7
    %v4646 = vsub.s32 0, %v4645
    %v4647 = vrot.slane %v4642, %v4646
    %v4648 = vlaneseq
    %v4649 = vshrl.u32 %v4648, 7
    %v4650 = vsub.s32 1, %v4649
    %v4651 = vrot.slane %v4642, %v4650
    %v4652 = vlaneseq
    %v4653 = vshrl.u32 %v4652, 7
    %v4654 = vsub.s32 2, %v4653
    %v4655 = vrot.slane %v4642, %v4654
    %v4659 = vadd.f32 %v4568, %v4647
    %v4660 = vadd.f32 %v4570, %v4651
    %v4661 = vadd.f32 %v4639, %v4655
    %v4662 = vld [vmem:[%s11] sm:$0xff]
    %v4663 = vld [vmem:[%s11 + $0x8] sm:$0xff]
    %v4664 = vld [vmem:[%s11 + $0x10] sm:$0xff]
    %v4665 = vld [vmem:[%s11 + $0x18] sm:$0xff]
    %v4666 = vld [vmem:[%s11 + $0x20] sm:$0xff]
    %v4667 = vld [vmem:[%s11 + $0x28] sm:$0xff]
    %v4668 = vld [vmem:[%s11 + $0x30] sm:$0xff]
    %v4669 = vld [vmem:[%s11 + $0x38] sm:$0xff]
    %v4670 = vld [vmem:[%s11 + $0x40] sm:$0xff]
    %v4671 = vld [vmem:[%s11 + $0x48] sm:$0xff]
    %v4672 = vld [vmem:[%s11 + $0x50] sm:$0xff]
    %v4673 = vld [vmem:[%s11 + $0x58] sm:$0xff]
    %v4674 = vld [vmem:[%s11 + $0x60] sm:$0xff]
    %v4675 = vld [vmem:[%s11 + $0x68] sm:$0xff]
    %v4676 = vld [vmem:[%s11 + $0x70] sm:$0xff]
    %v4677 = vld [vmem:[%s11 + $0x78] sm:$0xff]
    %v4678 = vld [vmem:[%s11 + $0x80] sm:$0xff]
    %v4679 = vld [vmem:[%s11 + $0x88] sm:$0xff]
    %v4680 = vld [vmem:[%s11 + $0x90] sm:$0xff]
    %v4681 = vld [vmem:[%s11 + $0x98] sm:$0xff]
    %v4682 = vld [vmem:[%s11 + $0xa0] sm:$0xff]
    %v4683 = vld [vmem:[%s11 + $0xa8] sm:$0xff]
    %v4684 = vld [vmem:[%s11 + $0xb0] sm:$0xff]
    %v4685 = vld [vmem:[%s11 + $0xb8] sm:$0xff]
    %v4686 = vld [vmem:[%s11 + $0xc0] sm:$0xff]
    %v4687 = vld [vmem:[%s11 + $0xc8] sm:$0xff]
    %v4688 = vld [vmem:[%s11 + $0xd0] sm:$0xff]
    %v4689 = vld [vmem:[%s11 + $0xd8] sm:$0xff]
    %v4690 = vld [vmem:[%s11 + $0xe0] sm:$0xff]
    %v4691 = vld [vmem:[%s11 + $0xe8] sm:$0xff]
    %v4692 = vld [vmem:[%s11 + $0xf0] sm:$0xff]
    %v4693 = vld [vmem:[%s11 + $0xf8] sm:$0xff]
    %v4694 = vld [vmem:[%s11 + $0x100] sm:$0xff]
    %v4695 = vld [vmem:[%s11 + $0x108] sm:$0xff]
    %v4696 = vld [vmem:[%s11 + $0x110] sm:$0xff]
    %v4697 = vld [vmem:[%s11 + $0x118] sm:$0xff]
    %v4698 = vld [vmem:[%s11 + $0x120] sm:$0xff]
    %v4699 = vld [vmem:[%s11 + $0x128] sm:$0xff]
    %v4700 = vld [vmem:[%s11 + $0x130] sm:$0xff]
    %v4701 = vld [vmem:[%s11 + $0x138] sm:$0xff]
    %v4702 = vld [vmem:[%s11 + $0x140] sm:$0xff]
    %v4703 = vld [vmem:[%s11 + $0x148] sm:$0xff]
    %v4704 = vld [vmem:[%s11 + $0x150] sm:$0xff]
    %v4705 = vld [vmem:[%s11 + $0x158] sm:$0xff]
    %v4706 = vld [vmem:[%s11 + $0x160] sm:$0xff]
    %v4707 = vld [vmem:[%s11 + $0x168] sm:$0xff]
    %v4708 = vld [vmem:[%s11 + $0x170] sm:$0xff]
    %v4709 = vld [vmem:[%s11 + $0x178] sm:$0xff]
    %v4710 = vld [vmem:[%s13] sm:$0x7]
    %v4712 = vlaneseq
    %v4713 = vshrl.u32 %v4712, 7
    %v4714 = vsub.s32 0, %v4713
    %v4715 = vrot.slane %v4710, %v4714
    %v4716 = vlaneseq
    %v4717 = vshrl.u32 %v4716, 7
    %v4718 = vsub.s32 1, %v4717
    %v4719 = vrot.slane %v4710, %v4718
    %v4720 = vlaneseq
    %v4721 = vshrl.u32 %v4720, 7
    %v4722 = vsub.s32 2, %v4721
    %v4723 = vrot.slane %v4710, %v4722
    %4727 = vmatprep.subr.mxu0 %v4663
    %4728 = vmatpush1.msra.mxu0 %v4662
    %4729 = vmatprep.subr.mxu0 %v4666
    %4730 = vmatpush1.msra.mxu0 %v4665
    %4731 = vmatprep.subr.mxu0 %v4669
    %4732 = vmatpush1.msra.mxu0 %v4668
    %4733 = vmatprep.subr.mxu0 %v4672
    %4734 = vmatpush1.msra.mxu0 %v4671
    %4735 = vmatprep.subr.mxu0 %v4675
    %4736 = vmatpush1.msra.mxu0 %v4674
    %4737 = vmatprep.subr.mxu0 %v4678
    %4738 = vmatpush1.msra.mxu0 %v4677
    %4739 = vmatprep.subr.mxu0 %v4681
    %4740 = vmatpush1.msra.mxu0 %v4680
    %4741 = vmatprep.subr.mxu0 %v4684
    %4742 = vmatpush1.msra.mxu0 %v4683
    %4743 = vmatprep.subr.mxu0 %v4687
    %4744 = vmatpush1.msra.mxu0 %v4686
    %4745 = vmatprep.subr.mxu0 %v4690
    %4746 = vmatpush1.msra.mxu0 %v4689
    %4747 = vmatprep.subr.mxu0 %v4693
    %4748 = vmatpush1.msra.mxu0 %v4692
    %4749 = vmatprep.subr.mxu0 %v4696
    %4750 = vmatpush1.msra.mxu0 %v4695
    %4751 = vmatprep.subr.mxu0 %v4699
    %4752 = vmatpush1.msra.mxu0 %v4698
    %4753 = vmatprep.subr.mxu0 %v4702
    %4754 = vmatpush1.msra.mxu0 %v4701
    %4755 = vmatprep.subr.mxu0 %v4705
    %4756 = vmatpush1.msra.mxu0 %v4704
    %4757 = vmatprep.subr.mxu0 %v4708
    %4758 = vmatpush1.msra.mxu0 %v4707
    %4759 = vmatprep.subr.mxu0 0.0
    %4760 = vmatpush1.msra.mxu0 0.0
    %4761 = vmatprep.subr.mxu0 0.0
    %4762 = vmatpush1.msra.mxu0 0.0
    %4763 = vmatprep.subr.mxu0 0.0
    %4764 = vmatpush1.msra.mxu0 0.0
    %4765 = vmatprep.subr.mxu0 0.0
    %4766 = vmatpush1.msra.mxu0 0.0
    %4767 = vmatprep.subr.mxu0 0.0
    %4768 = vmatpush1.msra.mxu0 0.0
    %4769 = vmatprep.subr.mxu0 0.0
    %4770 = vmatpush1.msra.mxu0 0.0
    %4771 = vmatprep.subr.mxu0 0.0
    %4772 = vmatpush1.msra.mxu0 0.0
    %4773 = vmatprep.subr.mxu0 0.0
    %4774 = vmatpush1.msra.mxu0 0.0
    %4775 = vmatprep.subr.mxu0 0.0
    %4776 = vmatpush1.msra.mxu0 0.0
    %4777 = vmatprep.subr.mxu0 0.0
    %4778 = vmatpush1.msra.mxu0 0.0
    %4779 = vmatprep.subr.mxu0 0.0
    %4780 = vmatpush1.msra.mxu0 0.0
    %4781 = vmatprep.subr.mxu0 0.0
    %4782 = vmatpush1.msra.mxu0 0.0
    %4783 = vmatprep.subr.mxu0 0.0
    %4784 = vmatpush1.msra.mxu0 0.0
    %4785 = vmatprep.subr.mxu0 0.0
    %4786 = vmatpush1.msra.mxu0 0.0
    %4787 = vmatprep.subr.mxu0 0.0
    %4788 = vmatpush1.msra.mxu0 0.0
    %4789 = vmatprep.subr.mxu0 0.0
    %4790 = vmatpush1.msra.mxu0 0.0
    %4791 = vmatprep.mubr.f32.mxu0 0.0
    %4792 = vmatmul.mubr.f32.gmra.mrb[0].mxu0 %v3632
    %v4793 = vpop.f32.mrb[0].mxu0
    %v4794 = vadd.f32 %v4715, %v4793
    %v4795 = vpop.f32.mrb[0].mxu0
    %v4796 = vadd.f32 %v4719, %v4795
    %4797 = vdwg.mxu0
    %4798 = vmatprep.subr.mxu0 0.0
    %4799 = vmatpush1.msra.mxu0 %v4664
    %4800 = vmatprep.subr.mxu0 0.0
    %4801 = vmatpush1.msra.mxu0 %v4667
    %4802 = vmatprep.subr.mxu0 0.0
    %4803 = vmatpush1.msra.mxu0 %v4670
    %4804 = vmatprep.subr.mxu0 0.0
    %4805 = vmatpush1.msra.mxu0 %v4673
    %4806 = vmatprep.subr.mxu0 0.0
    %4807 = vmatpush1.msra.mxu0 %v4676
    %4808 = vmatprep.subr.mxu0 0.0
    %4809 = vmatpush1.msra.mxu0 %v4679
    %4810 = vmatprep.subr.mxu0 0.0
    %4811 = vmatpush1.msra.mxu0 %v4682
    %4812 = vmatprep.subr.mxu0 0.0
    %4813 = vmatpush1.msra.mxu0 %v4685
    %4814 = vmatprep.subr.mxu0 0.0
    %4815 = vmatpush1.msra.mxu0 %v4688
    %4816 = vmatprep.subr.mxu0 0.0
    %4817 = vmatpush1.msra.mxu0 %v4691
    %4818 = vmatprep.subr.mxu0 0.0
    %4819 = vmatpush1.msra.mxu0 %v4694
    %4820 = vmatprep.subr.mxu0 0.0
    %4821 = vmatpush1.msra.mxu0 %v4697
    %4822 = vmatprep.subr.mxu0 0.0
    %4823 = vmatpush1.msra.mxu0 %v4700
    %4824 = vmatprep.subr.mxu0 0.0
    %4825 = vmatpush1.msra.mxu0 %v4703
    %4826 = vmatprep.subr.mxu0 0.0
    %4827 = vmatpush1.msra.mxu0 %v4706
    %4828 = vmatprep.subr.mxu0 0.0
    %4829 = vmatpush1.msra.mxu0 %v4709
    %4830 = vmatprep.subr.mxu0 0.0
    %4831 = vmatpush1.msra.mxu0 0.0
    %4832 = vmatprep.subr.mxu0 0.0
    %4833 = vmatpush1.msra.mxu0 0.0
    %4834 = vmatprep.subr.mxu0 0.0
    %4835 = vmatpush1.msra.mxu0 0.0
    %4836 = vmatprep.subr.mxu0 0.0
    %4837 = vmatpush1.msra.mxu0 0.0
    %4838 = vmatprep.subr.mxu0 0.0
    %4839 = vmatpush1.msra.mxu0 0.0
    %4840 = vmatprep.subr.mxu0 0.0
    %4841 = vmatpush1.msra.mxu0 0.0
    %4842 = vmatprep.subr.mxu0 0.0
    %4843 = vmatpush1.msra.mxu0 0.0
    %4844 = vmatprep.subr.mxu0 0.0
    %4845 = vmatpush1.msra.mxu0 0.0
    %4846 = vmatprep.subr.mxu0 0.0
    %4847 = vmatpush1.msra.mxu0 0.0
    %4848 = vmatprep.subr.mxu0 0.0
    %4849 = vmatpush1.msra.mxu0 0.0
    %4850 = vmatprep.subr.mxu0 0.0
    %4851 = vmatpush1.msra.mxu0 0.0
    %4852 = vmatprep.subr.mxu0 0.0
    %4853 = vmatpush1.msra.mxu0 0.0
    %4854 = vmatprep.subr.mxu0 0.0
    %4855 = vmatpush1.msra.mxu0 0.0
    %4856 = vmatprep.subr.mxu0 0.0
    %4857 = vmatpush1.msra.mxu0 0.0
    %4858 = vmatprep.subr.mxu0 0.0
    %4859 = vmatpush1.msra.mxu0 0.0
    %4860 = vmatprep.subr.mxu0 0.0
    %4861 = vmatpush1.msra.mxu0 0.0
    %4862 = vmatprep.mubr.f32.mxu0 0.0
    %4863 = vmatmul.mubr.f32.gmra.mrb[0].mxu0 %v3632
    %v4864 = vpop.f32.mrb[0].mxu0
    %v4865 = vadd.f32 %v4723, %v4864
    %v4866 = vpop.f32.mrb[0].mxu0
    %4867 = vdwg.mxu0
    %v4868 = vadd.f32 %v4659, %v4794
    %v4869 = vxor.u32 %v4868, 2147483648
    %v4870 = vmul.f32 %v4869, 1.442695
    %v4871 = vpow.pop %v4870
    %v4872 = vadd.f32 %v4871, 1.0
    %v4873 = vrcp.pop %v4872
    %v4874 = vmul.f32 1.0, %v4873
    %v4875 = vadd.f32 %v4660, %v4796
    %v4876 = vxor.u32 %v4875, 2147483648
    %v4877 = vmul.f32 %v4876, 1.442695
    %v4878 = vpow.pop %v4877
    %v4879 = vadd.f32 %v4878, 1.0
    %v4880 = vrcp.pop %v4879
    %v4881 = vmul.f32 1.0, %v4880
    %v4882 = vmul.f32 %v4874, %v4865
    %v4883 = vadd.f32 %v4661, %v4882
    %v4884 = vtanh.pop %v4883
    %v4885 = vsub.f32 1.0, %v4881
    %v4886 = vmul.f32 %v4885, %v4884
    %v4887 = vmul.f32 %v4881, %v3632
    %v4888 = vadd.f32 %v4886, %v4887
    %v4889 = vld [vmem:[%s14] sm:$0xff]
    %v4890 = vld [vmem:[%s14 + $0x8] sm:$0xff]
    %v4891 = vld [vmem:[%s14 + $0x10] sm:$0xff]
    %v4892 = vld [vmem:[%s14 + $0x18] sm:$0xff]
    %v4893 = vld [vmem:[%s14 + $0x20] sm:$0xff]
    %v4894 = vld [vmem:[%s14 + $0x28] sm:$0xff]
    %v4895 = vld [vmem:[%s14 + $0x30] sm:$0xff]
    %v4896 = vld [vmem:[%s14 + $0x38] sm:$0xff]
    %v4897 = vld [vmem:[%s14 + $0x40] sm:$0xff]
    %v4898 = vld [vmem:[%s14 + $0x48] sm:$0xff]
    %v4899 = vld [vmem:[%s14 + $0x50] sm:$0xff]
    %v4900 = vld [vmem:[%s14 + $0x58] sm:$0xff]
    %v4901 = vld [vmem:[%s14 + $0x60] sm:$0xff]
    %v4902 = vld [vmem:[%s14 + $0x68] sm:$0xff]
    %v4903 = vld [vmem:[%s14 + $0x70] sm:$0xff]
    %v4904 = vld [vmem:[%s14 + $0x78] sm:$0xff]
    %v4905 = vld [vmem:[%s15] sm:$0xff]
    %v4906 = vld [vmem:[%s15 + $0x8] sm:$0xff]
    %v4907 = vld [vmem:[%s15 + $0x10] sm:$0xff]
    %v4908 = vld [vmem:[%s15 + $0x18] sm:$0xff]
    %v4909 = vld [vmem:[%s15 + $0x20] sm:$0xff]
    %v4910 = vld [vmem:[%s15 + $0x28] sm:$0xff]
    %v4911 = vld [vmem:[%s15 + $0x30] sm:$0xff]
    %v4912 = vld [vmem:[%s15 + $0x38] sm:$0xff]
    %v4913 = vld [vmem:[%s15 + $0x40] sm:$0xff]
    %v4914 = vld [vmem:[%s15 + $0x48] sm:$0xff]
    %v4915 = vld [vmem:[%s15 + $0x50] sm:$0xff]
    %v4916 = vld [vmem:[%s15 + $0x58] sm:$0xff]
    %v4917 = vld [vmem:[%s15 + $0x60] sm:$0xff]
    %v4918 = vld [vmem:[%s15 + $0x68] sm:$0xff]
    %v4919 = vld [vmem:[%s15 + $0x70] sm:$0xff]
    %v4920 = vld [vmem:[%s15 + $0x78] sm:$0xff]
    %4921 = vmatprep.subr.mxu0 0.0
    %4922 = vmatpush1.msra.mxu0 %v4905
    %4923 = vmatprep.subr.mxu0 0.0
    %4924 = vmatpush1.msra.mxu0 %v4906
    %4925 = vmatprep.subr.mxu0 0.0
    %4926 = vmatpush1.msra.mxu0 %v4907
    %4927 = vmatprep.subr.mxu0 0.0
    %4928 = vmatpush1.msra.mxu0 %v4908
    %4929 = vmatprep.subr.mxu0 0.0
    %4930 = vmatpush1.msra.mxu0 %v4909
    %4931 = vmatprep.subr.mxu0 0.0
    %4932 = vmatpush1.msra.mxu0 %v4910
    %4933 = vmatprep.subr.mxu0 0.0
    %4934 = vmatpush1.msra.mxu0 %v4911
    %4935 = vmatprep.subr.mxu0 0.0
    %4936 = vmatpush1.msra.mxu0 %v4912
    %4937 = vmatprep.subr.mxu0 0.0
    %4938 = vmatpush1.msra.mxu0 %v4913
    %4939 = vmatprep.subr.mxu0 0.0
    %4940 = vmatpush1.msra.mxu0 %v4914
    %4941 = vmatprep.subr.mxu0 0.0
    %4942 = vmatpush1.msra.mxu0 %v4915
    %4943 = vmatprep.subr.mxu0 0.0
    %4944 = vmatpush1.msra.mxu0 %v4916
    %4945 = vmatprep.subr.mxu0 0.0
    %4946 = vmatpush1.msra.mxu0 %v4917
    %4947 = vmatprep.subr.mxu0 0.0
    %4948 = vmatpush1.msra.mxu0 %v4918
    %4949 = vmatprep.subr.mxu0 0.0
    %4950 = vmatpush1.msra.mxu0 %v4919
    %4951 = vmatprep.subr.mxu0 0.0
    %4952 = vmatpush1.msra.mxu0 %v4920
    %4953 = vmatprep.subr.mxu0 0.0
    %4954 = vmatpush1.msra.mxu0 0.0
    %4955 = vmatprep.subr.mxu0 0.0
    %4956 = vmatpush1.msra.mxu0 0.0
    %4957 = vmatprep.subr.mxu0 0.0
    %4958 = vmatpush1.msra.mxu0 0.0
    %4959 = vmatprep.subr.mxu0 0.0
    %4960 = vmatpush1.msra.mxu0 0.0
    %4961 = vmatprep.subr.mxu0 0.0
    %4962 = vmatpush1.msra.mxu0 0.0
    %4963 = vmatprep.subr.mxu0 0.0
    %4964 = vmatpush1.msra.mxu0 0.0
    %4965 = vmatprep.subr.mxu0 0.0
    %4966 = vmatpush1.msra.mxu0 0.0
    %4967 = vmatprep.subr.mxu0 0.0
    %4968 = vmatpush1.msra.mxu0 0.0
    %4969 = vmatprep.subr.mxu0 0.0
    %4970 = vmatpush1.msra.mxu0 0.0
    %4971 = vmatprep.subr.mxu0 0.0
    %4972 = vmatpush1.msra.mxu0 0.0
    %4973 = vmatprep.subr.mxu0 0.0
    %4974 = vmatpush1.msra.mxu0 0.0
    %4975 = vmatprep.subr.mxu0 0.0
    %4976 = vmatpush1.msra.mxu0 0.0
    %4977 = vmatprep.subr.mxu0 0.0
    %4978 = vmatpush1.msra.mxu0 0.0
    %4979 = vmatprep.subr.mxu0 0.0
    %4980 = vmatpush1.msra.mxu0 0.0
    %4981 = vmatprep.subr.mxu0 0.0
    %4982 = vmatpush1.msra.mxu0 0.0
    %4983 = vmatprep.subr.mxu0 0.0
    %4984 = vmatpush1.msra.mxu0 0.0
    %4985 = vmatprep.mubr.f32.mxu0 0.0
    %4986 = vmatmul.mubr.f32.gmra.mrb[0].mxu0 %v4296
    %v4987 = vpop.f32.mrb[0].mxu0
    %v4988 = vadd.f32 0.0, %v4987
    %v4989 = vpop.f32.mrb[0].mxu0
    %4990 = vdwg.mxu0
    %4991 = vmatprep.subr.mxu0 0.0
    %4992 = vmatpush1.msra.mxu0 %v4889
    %4993 = vmatprep.subr.mxu0 0.0
    %4994 = vmatpush1.msra.mxu0 %v4890
    %4995 = vmatprep.subr.mxu0 0.0
    %4996 = vmatpush1.msra.mxu0 %v4891
    %4997 = vmatprep.subr.mxu0 0.0
    %4998 = vmatpush1.msra.mxu0 %v4892
    %4999 = vmatprep.subr.mxu0 0.0
    %5000 = vmatpush1.msra.mxu0 %v4893
    %5001 = vmatprep.subr.mxu0 0.0
    %5002 = vmatpush1.msra.mxu0 %v4894
    %5003 = vmatprep.subr.mxu0 0.0
    %5004 = vmatpush1.msra.mxu0 %v4895
    %5005 = vmatprep.subr.mxu0 0.0
    %5006 = vmatpush1.msra.mxu0 %v4896
    %5007 = vmatprep.subr.mxu0 0.0
    %5008 = vmatpush1.msra.mxu0 %v4897
    %5009 = vmatprep.subr.mxu0 0.0
    %5010 = vmatpush1.msra.mxu0 %v4898
    %5011 = vmatprep.subr.mxu0 0.0
    %5012 = vmatpush1.msra.mxu0 %v4899
    %5013 = vmatprep.subr.mxu0 0.0
    %5014 = vmatpush1.msra.mxu0 %v4900
    %5015 = vmatprep.subr.mxu0 0.0
    %5016 = vmatpush1.msra.mxu0 %v4901
    %5017 = vmatprep.subr.mxu0 0.0
    %5018 = vmatpush1.msra.mxu0 %v4902
    %5019 = vmatprep.subr.mxu0 0.0
    %5020 = vmatpush1.msra.mxu0 %v4903
    %5021 = vmatprep.subr.mxu0 0.0
    %5022 = vmatpush1.msra.mxu0 %v4904
    %5023 = vmatprep.subr.mxu0 0.0
    %5024 = vmatpush1.msra.mxu0 0.0
    %5025 = vmatprep.subr.mxu0 0.0
    %5026 = vmatpush1.msra.mxu0 0.0
    %5027 = vmatprep.subr.mxu0 0.0
    %5028 = vmatpush1.msra.mxu0 0.0
    %5029 = vmatprep.subr.mxu0 0.0
    %5030 = vmatpush1.msra.mxu0 0.0
    %5031 = vmatprep.subr.mxu0 0.0
    %5032 = vmatpush1.msra.mxu0 0.0
    %5033 = vmatprep.subr.mxu0 0.0
    %5034 = vmatpush1.msra.mxu0 0.0
    %5035 = vmatprep.subr.mxu0 0.0
    %5036 = vmatpush1.msra.mxu0 0.0
    %5037 = vmatprep.subr.mxu0 0.0
    %5038 = vmatpush1.msra.mxu0 0.0
    %5039 = vmatprep.subr.mxu0 0.0
    %5040 = vmatpush1.msra.mxu0 0.0
    %5041 = vmatprep.subr.mxu0 0.0
    %5042 = vmatpush1.msra.mxu0 0.0
    %5043 = vmatprep.subr.mxu0 0.0
    %5044 = vmatpush1.msra.mxu0 0.0
    %5045 = vmatprep.subr.mxu0 0.0
    %5046 = vmatpush1.msra.mxu0 0.0
    %5047 = vmatprep.subr.mxu0 0.0
    %5048 = vmatpush1.msra.mxu0 0.0
    %5049 = vmatprep.subr.mxu0 0.0
    %5050 = vmatpush1.msra.mxu0 0.0
    %5051 = vmatprep.subr.mxu0 0.0
    %5052 = vmatpush1.msra.mxu0 0.0
    %5053 = vmatprep.subr.mxu0 0.0
    %5054 = vmatpush1.msra.mxu0 0.0
    %5055 = vmatprep.mubr.f32.mxu0 0.0
    %5056 = vmatmul.mubr.f32.gmra.mrb[0].mxu0 %v4888
    %v5057 = vpop.f32.mrb[0].mxu0
    %v5058 = vadd.f32 %v4988, %v5057
    %v5059 = vpop.f32.mrb[0].mxu0
    %5060 = vdwg.mxu0
    %v5061 = vld [vmem:[%s16] sm:$0xff]
    %v5062 = vld [vmem:[%s16 + $0x8] sm:$0xff]
    %v5063 = vld [vmem:[%s16 + $0x10] sm:$0xff]
    %v5064 = vld [vmem:[%s16 + $0x18] sm:$0xff]
    %5065 = vmatprep.subr.mxu0 0.0
    %5066 = vmatpush1.msra.mxu0 %v5061
    %5067 = vmatprep.subr.mxu0 0.0
    %5068 = vmatpush1.msra.mxu0 %v5062
    %5069 = vmatprep.subr.mxu0 0.0
    %5070 = vmatpush1.msra.mxu0 %v5063
    %5071 = vmatprep.subr.mxu0 0.0
    %5072 = vmatpush1.msra.mxu0 %v5064
    %5073 = vmatprep.subr.mxu0 0.0
    %5074 = vmatpush1.msra.mxu0 0.0
    %5075 = vmatprep.subr.mxu0 0.0
    %5076 = vmatpush1.msra.mxu0 0.0
    %5077 = vmatprep.subr.mxu0 0.0
    %5078 = vmatpush1.msra.mxu0 0.0
    %5079 = vmatprep.subr.mxu0 0.0
    %5080 = vmatpush1.msra.mxu0 0.0
    %5081 = vmatprep.subr.mxu0 0.0
    %5082 = vmatpush1.msra.mxu0 0.0
    %5083 = vmatprep.subr.mxu0 0.0
    %5084 = vmatpush1.msra.mxu0 0.0
    %5085 = vmatprep.subr.mxu0 0.0
    %5086 = vmatpush1.msra.mxu0 0.0
    %5087 = vmatprep.subr.mxu0 0.0
    %5088 = vmatpush1.msra.mxu0 0.0
    %5089 = vmatprep.subr.mxu0 0.0
    %5090 = vmatpush1.msra.mxu0 0.0
    %5091 = vmatprep.subr.mxu0 0.0
    %5092 = vmatpush1.msra.mxu0 0.0
    %5093 = vmatprep.subr.mxu0 0.0
    %5094 = vmatpush1.msra.mxu0 0.0
    %5095 = vmatprep.subr.mxu0 0.0
    %5096 = vmatpush1.msra.mxu0 0.0
    %5097 = vmatprep.subr.mxu0 0.0
    %5098 = vmatpush1.msra.mxu0 0.0
    %5099 = vmatprep.subr.mxu0 0.0
    %5100 = vmatpush1.msra.mxu0 0.0
    %5101 = vmatprep.subr.mxu0 0.0
    %5102 = vmatpush1.msra.mxu0 0.0
    %5103 = vmatprep.subr.mxu0 0.0
    %5104 = vmatpush1.msra.mxu0 0.0
    %5105 = vmatprep.subr.mxu0 0.0
    %5106 = vmatpush1.msra.mxu0 0.0
    %5107 = vmatprep.subr.mxu0 0.0
    %5108 = vmatpush1.msra.mxu0 0.0
    %5109 = vmatprep.subr.mxu0 0.0
    %5110 = vmatpush1.msra.mxu0 0.0
    %5111 = vmatprep.subr.mxu0 0.0
    %5112 = vmatpush1.msra.mxu0 0.0
    %5113 = vmatprep.subr.mxu0 0.0
    %5114 = vmatpush1.msra.mxu0 0.0
    %5115 = vmatprep.subr.mxu0 0.0
    %5116 = vmatpush1.msra.mxu0 0.0
    %5117 = vmatprep.subr.mxu0 0.0
    %5118 = vmatpush1.msra.mxu0 0.0
    %5119 = vmatprep.subr.mxu0 0.0
    %5120 = vmatpush1.msra.mxu0 0.0
    %5121 = vmatprep.subr.mxu0 0.0
    %5122 = vmatpush1.msra.mxu0 0.0
    %5123 = vmatprep.subr.mxu0 0.0
    %5124 = vmatpush1.msra.mxu0 0.0
    %5125 = vmatprep.subr.mxu0 0.0
    %5126 = vmatpush1.msra.mxu0 0.0
    %5127 = vmatprep.subr.mxu0 0.0
    %5128 = vmatpush1.msra.mxu0 0.0
    %5129 = vmatprep.mubr.f32.mxu0 0.0
    %5130 = vmatmul.mubr.f32.gmra.mrb[0].mxu0 %v4499
    %v5131 = vpop.f32.mrb[0].mxu0
    %v5132 = vadd.f32 0.0, %v5131
    %v5133 = vpop.f32.mrb[0].mxu0
    %5134 = vdwg.mxu0
    %v5135 = vadd.f32 %v5058, %v5132
    %v5136 = vld [vmem:[%s17] sm:$0x1]
    %v5138 = vlaneseq
    %v5139 = vshrl.u32 %v5138, 7
    %v5140 = vsub.s32 0, %v5139
    %v5141 = vrot.slane %v5136, %v5140
    %v5143 = vadd.f32 %v5135, %v5141
    %s5144 = scalar_lea.vmem %s19, 24
    %5145 = vst [vmem:[%s5144] sm:$0xff] %v5143
    %5146 = vmax.xlane.f32.xlu0 %v5143
    %v5147 = vpop.xlane.xlu0 %5146
    %vm5148 = vcmp.eq.f32.partialorder %v5143, %v5147
    %v5149 = vsel %vm5148, %v381, 128
    %v5150 = vand.u32 %v5149, 65535
    %v5151 = vshra.s32 %v5149, 16
    %v5152 = vcvt.s32.f32 %v5150
    %v5153 = vcvt.s32.f32 %v5151
    %5154 = vmin.xlane.f32.xlu0 %v5153
    %v5155 = vpop.xlane.xlu0 %5154
    %vm5156 = vcmp.eq.f32.partialorder %v5153, %v5155
    %v5157 = vsel %vm5156, %v5152, inf
    %5158 = vmin.xlane.f32.xlu0 %v5157
    %v5159 = vpop.xlane.xlu0 %5158
    %v5160 = vcvt.f32.s32 %v5159
    %v5161 = vcvt.f32.s32 %v5155
    %v5162 = vshll.u32 %v5161, 16
    %v5163 = vadd.s32 %v5162, %v5160
    %vm5164 = vcmp.eq.s32.totalorder %v381, %v5163
    %v5165 = vsel %vm5164, 1, 0
    %v5166 = vcvt.s32.f32 %v5165
    %v5167 = vld [vmem:[%s18] sm:$0xff]
    %v5168 = vld [vmem:[%s18 + $0x8] sm:$0xff]
    %v5169 = vld [vmem:[%s18 + $0x10] sm:$0xff]
    %v5170 = vld [vmem:[%s18 + $0x18] sm:$0xff]
    %v5171 = vld [vmem:[%s18 + $0x20] sm:$0xff]
    %v5172 = vld [vmem:[%s18 + $0x28] sm:$0xff]
    %v5173 = vld [vmem:[%s18 + $0x30] sm:$0xff]
    %v5174 = vld [vmem:[%s18 + $0x38] sm:$0xff]
    %v5175 = vld [vmem:[%s18 + $0x40] sm:$0xff]
    %v5176 = vld [vmem:[%s18 + $0x48] sm:$0xff]
    %v5177 = vld [vmem:[%s18 + $0x50] sm:$0xff]
    %v5178 = vld [vmem:[%s18 + $0x58] sm:$0xff]
    %v5179 = vld [vmem:[%s18 + $0x60] sm:$0xff]
    %v5180 = vld [vmem:[%s18 + $0x68] sm:$0xff]
    %v5181 = vld [vmem:[%s18 + $0x70] sm:$0xff]
    %v5182 = vld [vmem:[%s18 + $0x78] sm:$0xff]
    %5183 = vmatprep.subr.mxu0 0.0
    %5184 = vmatpush1.msra.mxu0 %v5167
    %5185 = vmatprep.subr.mxu0 0.0
    %5186 = vmatpush1.msra.mxu0 %v5168
    %5187 = vmatprep.subr.mxu0 0.0
    %5188 = vmatpush1.msra.mxu0 %v5169
    %5189 = vmatprep.subr.mxu0 0.0
    %5190 = vmatpush1.msra.mxu0 %v5170
    %5191 = vmatprep.subr.mxu0 0.0
    %5192 = vmatpush1.msra.mxu0 %v5171
    %5193 = vmatprep.subr.mxu0 0.0
    %5194 = vmatpush1.msra.mxu0 %v5172
    %5195 = vmatprep.subr.mxu0 0.0
    %5196 = vmatpush1.msra.mxu0 %v5173
    %5197 = vmatprep.subr.mxu0 0.0
    %5198 = vmatpush1.msra.mxu0 %v5174
    %5199 = vmatprep.subr.mxu0 0.0
    %5200 = vmatpush1.msra.mxu0 %v5175
    %5201 = vmatprep.subr.mxu0 0.0
    %5202 = vmatpush1.msra.mxu0 %v5176
    %5203 = vmatprep.subr.mxu0 0.0
    %5204 = vmatpush1.msra.mxu0 %v5177
    %5205 = vmatprep.subr.mxu0 0.0
    %5206 = vmatpush1.msra.mxu0 %v5178
    %5207 = vmatprep.subr.mxu0 0.0
    %5208 = vmatpush1.msra.mxu0 %v5179
    %5209 = vmatprep.subr.mxu0 0.0
    %5210 = vmatpush1.msra.mxu0 %v5180
    %5211 = vmatprep.subr.mxu0 0.0
    %5212 = vmatpush1.msra.mxu0 %v5181
    %5213 = vmatprep.subr.mxu0 0.0
    %5214 = vmatpush1.msra.mxu0 %v5182
    %5215 = vmatprep.subr.mxu0 0.0
    %5216 = vmatpush1.msra.mxu0 0.0
    %5217 = vmatprep.subr.mxu0 0.0
    %5218 = vmatpush1.msra.mxu0 0.0
    %5219 = vmatprep.subr.mxu0 0.0
    %5220 = vmatpush1.msra.mxu0 0.0
    %5221 = vmatprep.subr.mxu0 0.0
    %5222 = vmatpush1.msra.mxu0 0.0
    %5223 = vmatprep.subr.mxu0 0.0
    %5224 = vmatpush1.msra.mxu0 0.0
    %5225 = vmatprep.subr.mxu0 0.0
    %5226 = vmatpush1.msra.mxu0 0.0
    %5227 = vmatprep.subr.mxu0 0.0
    %5228 = vmatpush1.msra.mxu0 0.0
    %5229 = vmatprep.subr.mxu0 0.0
    %5230 = vmatpush1.msra.mxu0 0.0
    %5231 = vmatprep.subr.mxu0 0.0
    %5232 = vmatpush1.msra.mxu0 0.0
    %5233 = vmatprep.subr.mxu0 0.0
    %5234 = vmatpush1.msra.mxu0 0.0
    %5235 = vmatprep.subr.mxu0 0.0
    %5236 = vmatpush1.msra.mxu0 0.0
    %5237 = vmatprep.subr.mxu0 0.0
    %5238 = vmatpush1.msra.mxu0 0.0
    %5239 = vmatprep.subr.mxu0 0.0
    %5240 = vmatpush1.msra.mxu0 0.0
    %5241 = vmatprep.subr.mxu0 0.0
    %5242 = vmatpush1.msra.mxu0 0.0
    %5243 = vmatprep.subr.mxu0 0.0
    %5244 = vmatpush1.msra.mxu0 0.0
    %5245 = vmatprep.subr.mxu0 0.0
    %5246 = vmatpush1.msra.mxu0 0.0
    %5247 = vmatprep.mubr.f32.mxu0 0.0
    %5248 = vmatmul.mubr.f32.gmra.mrb[0].mxu0 %v5166
    %v5249 = vpop.f32.mrb[0].mxu0
    %v5250 = vadd.f32 0.0, %v5249
    %v5251 = vpop.f32.mrb[0].mxu0
    %5252 = vdwg.mxu0
    %s5253 = sld [smem:[#allocation3 + $0x4]]
    %s5254 = scvt.s32.f32 %s5253
    %s5255 = scalar_lea.vmem %s1, 32
    %v5256 = vld [vmem:[%s5255] sm:$0xff]
    %v5257 = vstv %s5254
    %v5258 = vmul.f32 %v5257, %v5256
    %s5259 = ssub.f32 1.0, %s5254
    %v5260 = vstv %s5259
    %v5261 = vmul.f32 %v5260, %v5250
    %v5262 = vadd.f32 %v5258, %v5261
    %v5263 = vld [vmem:[%s5] sm:$0xff]
    %v5264 = vld [vmem:[%s5 + $0x8] sm:$0xff]
    %v5265 = vld [vmem:[%s5 + $0x10] sm:$0xff]
    %v5266 = vld [vmem:[%s5 + $0x18] sm:$0xff]
    %v5267 = vld [vmem:[%s5 + $0x20] sm:$0xff]
    %v5268 = vld [vmem:[%s5 + $0x28] sm:$0xff]
    %v5269 = vld [vmem:[%s5 + $0x30] sm:$0xff]
    %v5270 = vld [vmem:[%s5 + $0x38] sm:$0xff]
    %v5271 = vld [vmem:[%s5 + $0x40] sm:$0xff]
    %v5272 = vld [vmem:[%s5 + $0x48] sm:$0xff]
    %v5273 = vld [vmem:[%s5 + $0x50] sm:$0xff]
    %v5274 = vld [vmem:[%s5 + $0x58] sm:$0xff]
    %v5275 = vld [vmem:[%s5 + $0x60] sm:$0xff]
    %v5276 = vld [vmem:[%s5 + $0x68] sm:$0xff]
    %v5277 = vld [vmem:[%s5 + $0x70] sm:$0xff]
    %v5278 = vld [vmem:[%s5 + $0x78] sm:$0xff]
    %5279 = vmatprep.subr.mxu0 0.0
    %5280 = vmatpush1.msra.mxu0 %v5263
    %5281 = vmatprep.subr.mxu0 0.0
    %5282 = vmatpush1.msra.mxu0 %v5264
    %5283 = vmatprep.subr.mxu0 0.0
    %5284 = vmatpush1.msra.mxu0 %v5265
    %5285 = vmatprep.subr.mxu0 0.0
    %5286 = vmatpush1.msra.mxu0 %v5266
    %5287 = vmatprep.subr.mxu0 0.0
    %5288 = vmatpush1.msra.mxu0 %v5267
    %5289 = vmatprep.subr.mxu0 0.0
    %5290 = vmatpush1.msra.mxu0 %v5268
    %5291 = vmatprep.subr.mxu0 0.0
    %5292 = vmatpush1.msra.mxu0 %v5269
    %5293 = vmatprep.subr.mxu0 0.0
    %5294 = vmatpush1.msra.mxu0 %v5270
    %5295 = vmatprep.subr.mxu0 0.0
    %5296 = vmatpush1.msra.mxu0 %v5271
    %5297 = vmatprep.subr.mxu0 0.0
    %5298 = vmatpush1.msra.mxu0 %v5272
    %5299 = vmatprep.subr.mxu0 0.0
    %5300 = vmatpush1.msra.mxu0 %v5273
    %5301 = vmatprep.subr.mxu0 0.0
    %5302 = vmatpush1.msra.mxu0 %v5274
    %5303 = vmatprep.subr.mxu0 0.0
    %5304 = vmatpush1.msra.mxu0 %v5275
    %5305 = vmatprep.subr.mxu0 0.0
    %5306 = vmatpush1.msra.mxu0 %v5276
    %5307 = vmatprep.subr.mxu0 0.0
    %5308 = vmatpush1.msra.mxu0 %v5277
    %5309 = vmatprep.subr.mxu0 0.0
    %5310 = vmatpush1.msra.mxu0 %v5278
    %5311 = vmatprep.subr.mxu0 0.0
    %5312 = vmatpush1.msra.mxu0 0.0
    %5313 = vmatprep.subr.mxu0 0.0
    %5314 = vmatpush1.msra.mxu0 0.0
    %5315 = vmatprep.subr.mxu0 0.0
    %5316 = vmatpush1.msra.mxu0 0.0
    %5317 = vmatprep.subr.mxu0 0.0
    %5318 = vmatpush1.msra.mxu0 0.0
    %5319 = vmatprep.subr.mxu0 0.0
    %5320 = vmatpush1.msra.mxu0 0.0
    %5321 = vmatprep.subr.mxu0 0.0
    %5322 = vmatpush1.msra.mxu0 0.0
    %5323 = vmatprep.subr.mxu0 0.0
    %5324 = vmatpush1.msra.mxu0 0.0
    %5325 = vmatprep.subr.mxu0 0.0
    %5326 = vmatpush1.msra.mxu0 0.0
    %5327 = vmatprep.subr.mxu0 0.0
    %5328 = vmatpush1.msra.mxu0 0.0
    %5329 = vmatprep.subr.mxu0 0.0
    %5330 = vmatpush1.msra.mxu0 0.0
    %5331 = vmatprep.subr.mxu0 0.0
    %5332 = vmatpush1.msra.mxu0 0.0
    %5333 = vmatprep.subr.mxu0 0.0
    %5334 = vmatpush1.msra.mxu0 0.0
    %5335 = vmatprep.subr.mxu0 0.0
    %5336 = vmatpush1.msra.mxu0 0.0
    %5337 = vmatprep.subr.mxu0 0.0
    %5338 = vmatpush1.msra.mxu0 0.0
    %5339 = vmatprep.subr.mxu0 0.0
    %5340 = vmatpush1.msra.mxu0 0.0
    %5341 = vmatprep.subr.mxu0 0.0
    %5342 = vmatpush1.msra.mxu0 0.0
    %5343 = vmatprep.mubr.f32.mxu0 0.0
    %5344 = vmatmul.mubr.f32.gmra.mrb[0].mxu0 %v4888
    %v5345 = vpop.f32.mrb[0].mxu0
    %v5346 = vadd.f32 0.0, %v5345
    %v5347 = vpop.f32.mrb[0].mxu0
    %5348 = vdwg.mxu0
    %v5349 = vld [vmem:[#allocation2] sm:$0xff]
    %v5350 = vld [vmem:[#allocation2 + $0x8] sm:$0xff]
    %v5351 = vld [vmem:[#allocation2 + $0x10] sm:$0xff]
    %v5352 = vld [vmem:[#allocation2 + $0x18] sm:$0xff]
    %v5353 = vld [vmem:[#allocation2 + $0x20] sm:$0xff]
    %v5354 = vld [vmem:[#allocation2 + $0x28] sm:$0xff]
    %v5355 = vld [vmem:[#allocation2 + $0x30] sm:$0xff]
    %v5356 = vld [vmem:[#allocation2 + $0x38] sm:$0xff]
    %v5357 = vadd.f32 %v5346, %v5349
    %v5358 = vadd.f32 %v5346, %v5350
    %v5359 = vadd.f32 %v5346, %v5351
    %v5360 = vadd.f32 %v5346, %v5352
    %v5361 = vadd.f32 %v5346, %v5353
    %v5362 = vadd.f32 %v5346, %v5354
    %v5363 = vadd.f32 %v5346, %v5355
    %v5364 = vadd.f32 %v5346, %v5356
    %v5365 = vtanh.pop %v5357
    %v5366 = vtanh.pop %v5358
    %v5367 = vtanh.pop %v5359
    %v5368 = vtanh.pop %v5360
    %v5369 = vtanh.pop %v5361
    %v5370 = vtanh.pop %v5362
    %v5371 = vtanh.pop %v5363
    %v5372 = vtanh.pop %v5364
    %v5373 = vld [vmem:[%s8] sm:$0x1]
    %v5375 = vlaneseq
    %v5376 = vshrl.u32 %v5375, 7
    %v5377 = vsub.s32 0, %v5376
    %v5378 = vrot.slane %v5373, %v5377
    %v5380 = vmul.f32 %v5365, %v5378
    %v5381 = vmul.f32 %v5366, %v5378
    %v5382 = vmul.f32 %v5367, %v5378
    %v5383 = vmul.f32 %v5368, %v5378
    %v5384 = vmul.f32 %v5369, %v5378
    %v5385 = vmul.f32 %v5370, %v5378
    %v5386 = vmul.f32 %v5371, %v5378
    %v5387 = vmul.f32 %v5372, %v5378
    %5388 = vadd.xlane.f32.xlu0 %v5380
    %v5389 = vpop.xlane.xlu0 %5388
    %5390 = vadd.xlane.f32.xlu0 %v5381
    %v5391 = vpop.xlane.xlu0 %5390
    %5392 = vadd.xlane.f32.xlu0 %v5382
    %v5393 = vpop.xlane.xlu0 %5392
    %5394 = vadd.xlane.f32.xlu0 %v5383
    %v5395 = vpop.xlane.xlu0 %5394
    %5396 = vadd.xlane.f32.xlu0 %v5384
    %v5397 = vpop.xlane.xlu0 %5396
    %5398 = vadd.xlane.f32.xlu0 %v5385
    %v5399 = vpop.xlane.xlu0 %5398
    %5400 = vadd.xlane.f32.xlu0 %v5386
    %v5401 = vpop.xlane.xlu0 %5400
    %5402 = vadd.xlane.f32.xlu0 %v5387
    %v5403 = vpop.xlane.xlu0 %5402
    %v5404 = vld [vmem:[%s4] sm:$0xff]
    %vm5405 = vcmp.gt.f32.partialorder %v5404, 0.5
    %v5414 = vlaneseq
    %v5415 = vshrl.u32 %v5414, 7
    %v5416 = vsub.s32 %v381, %v5415
    %v5417 = vrot.slane %v5389, %v5416
    %v5418 = vlaneseq
    %v5419 = vshrl.u32 %v5418, 7
    %v5420 = vsub.s32 %v381, %v5419
    %v5421 = vrot.slane %v5391, %v5420
    %v5422 = vlaneseq
    %v5423 = vshrl.u32 %v5422, 7
    %v5424 = vsub.s32 %v381, %v5423
    %v5425 = vrot.slane %v5393, %v5424
    %v5426 = vlaneseq
    %v5427 = vshrl.u32 %v5426, 7
    %v5428 = vsub.s32 %v381, %v5427
    %v5429 = vrot.slane %v5395, %v5428
    %v5430 = vlaneseq
    %v5431 = vshrl.u32 %v5430, 7
    %v5432 = vsub.s32 %v381, %v5431
    %v5433 = vrot.slane %v5397, %v5432
    %v5434 = vlaneseq
    %v5435 = vshrl.u32 %v5434, 7
    %v5436 = vsub.s32 %v381, %v5435
    %v5437 = vrot.slane %v5399, %v5436
    %v5438 = vlaneseq
    %v5439 = vshrl.u32 %v5438, 7
    %v5440 = vsub.s32 %v381, %v5439
    %v5441 = vrot.slane %v5401, %v5440
    %v5442 = vlaneseq
    %v5443 = vshrl.u32 %v5442, 7
    %v5444 = vsub.s32 %v381, %v5443
    %v5445 = vrot.slane %v5403, %v5444
    %v5446 = vsel %vm414, %v5421, %v5417
    %v5447 = vsel %vm416, %v5425, %v5446
    %v5448 = vsel %vm418, %v5429, %v5447
    %v5449 = vsel %vm420, %v5433, %v5448
    %v5450 = vsel %vm422, %v5437, %v5449
    %v5451 = vsel %vm424, %v5441, %v5450
    %v5452 = vsel %vm426, %v5445, %v5451
    %v5454 = vsel %vm5405, %v5452, -1e+10
    %v5455 = vsel %vm430, %v5454, -inf
    %v5456 = vrot.slane %v5455, 4
    %v5457 = vmax.f32 %v5455, %v5456
    %v5458 = vrot.slane %v5457, 2
    %v5459 = vmax.f32 %v5457, %v5458
    %v5460 = vrot.slane %v5459, 1
    %v5461 = vmax.f32 %v5459, %v5460
    %v5462 = vsub.f32 %v5454, %v5461
    %v5463 = vmul.f32 %v5462, 1.442695
    %v5464 = vpow.pop %v5463
    %v5465 = vsel %vm430, %v5464, 0.0
    %v5466 = vrot.slane %v5465, 4
    %v5467 = vadd.f32 %v5465, %v5466
    %v5468 = vrot.slane %v5467, 2
    %v5469 = vadd.f32 %v5467, %v5468
    %v5470 = vrot.slane %v5469, 1
    %v5471 = vadd.f32 %v5469, %v5470
    %v5472 = vrcp.pop %v5471
    %v5473 = vmul.f32 %v5464, %v5472
    %v5474 = vlaneseq
    %v5475 = vshrl.u32 %v5474, 7
    %v5476 = vsub.s32 0, %v5475
    %v5477 = vrot.slane %v5473, %v5476
    %5479 = vbcast.lane.b32.xlu0 %v5477, 256
    %v5480 = vpop.permute.xlu0 %5479
    %v5481 = vlaneseq
    %v5482 = vshrl.u32 %v5481, 7
    %v5483 = vsub.s32 1, %v5482
    %v5484 = vrot.slane %v5473, %v5483
    %5486 = vbcast.lane.b32.xlu0 %v5484, 256
    %v5487 = vpop.permute.xlu0 %5486
    %v5488 = vlaneseq
    %v5489 = vshrl.u32 %v5488, 7
    %v5490 = vsub.s32 2, %v5489
    %v5491 = vrot.slane %v5473, %v5490
    %5493 = vbcast.lane.b32.xlu0 %v5491, 256
    %v5494 = vpop.permute.xlu0 %5493
    %v5495 = vlaneseq
    %v5496 = vshrl.u32 %v5495, 7
    %v5497 = vsub.s32 3, %v5496
    %v5498 = vrot.slane %v5473, %v5497
    %5500 = vbcast.lane.b32.xlu0 %v5498, 256
    %v5501 = vpop.permute.xlu0 %5500
    %v5502 = vlaneseq
    %v5503 = vshrl.u32 %v5502, 7
    %v5504 = vsub.s32 4, %v5503
    %v5505 = vrot.slane %v5473, %v5504
    %5507 = vbcast.lane.b32.xlu0 %v5505, 256
    %v5508 = vpop.permute.xlu0 %5507
    %v5509 = vlaneseq
    %v5510 = vshrl.u32 %v5509, 7
    %v5511 = vsub.s32 5, %v5510
    %v5512 = vrot.slane %v5473, %v5511
    %5514 = vbcast.lane.b32.xlu0 %v5512, 256
    %v5515 = vpop.permute.xlu0 %5514
    %v5516 = vlaneseq
    %v5517 = vshrl.u32 %v5516, 7
    %v5518 = vsub.s32 6, %v5517
    %v5519 = vrot.slane %v5473, %v5518
    %5521 = vbcast.lane.b32.xlu0 %v5519, 256
    %v5522 = vpop.permute.xlu0 %5521
    %v5523 = vlaneseq
    %v5524 = vshrl.u32 %v5523, 7
    %v5525 = vsub.s32 7, %v5524
    %v5526 = vrot.slane %v5473, %v5525
    %5528 = vbcast.lane.b32.xlu0 %v5526, 256
    %v5529 = vpop.permute.xlu0 %5528
    %v5530 = vld [vmem:[%s3] sm:$0xff]
    %v5531 = vld [vmem:[%s3 + $0x8] sm:$0xff]
    %v5532 = vld [vmem:[%s3 + $0x10] sm:$0xff]
    %v5533 = vld [vmem:[%s3 + $0x18] sm:$0xff]
    %v5534 = vld [vmem:[%s3 + $0x20] sm:$0xff]
    %v5535 = vld [vmem:[%s3 + $0x28] sm:$0xff]
    %v5536 = vld [vmem:[%s3 + $0x30] sm:$0xff]
    %v5537 = vld [vmem:[%s3 + $0x38] sm:$0xff]
    %v5538 = vmul.f32 %v5480, %v5530
    %v5539 = vmul.f32 %v5487, %v5531
    %v5540 = vmul.f32 %v5494, %v5532
    %v5541 = vmul.f32 %v5501, %v5533
    %v5542 = vmul.f32 %v5508, %v5534
    %v5543 = vmul.f32 %v5515, %v5535
    %v5544 = vmul.f32 %v5522, %v5536
    %v5545 = vmul.f32 %v5529, %v5537
    %v5546 = vadd.f32 %v5538, %v5539
    %v5547 = vadd.f32 %v5546, %v5540
    %v5548 = vadd.f32 %v5547, %v5541
    %v5549 = vadd.f32 %v5548, %v5542
    %v5550 = vadd.f32 %v5549, %v5543
    %v5551 = vadd.f32 %v5550, %v5544
    %v5552 = vadd.f32 %v5551, %v5545
    %v5553 = vld [vmem:[%s9] sm:$0xff]
    %v5554 = vld [vmem:[%s9 + $0x8] sm:$0xff]
    %v5555 = vld [vmem:[%s9 + $0x10] sm:$0xff]
    %v5556 = vld [vmem:[%s9 + $0x18] sm:$0xff]
    %v5557 = vld [vmem:[%s9 + $0x20] sm:$0xff]
    %v5558 = vld [vmem:[%s9 + $0x28] sm:$0xff]
    %v5559 = vld [vmem:[%s9 + $0x30] sm:$0xff]
    %v5560 = vld [vmem:[%s9 + $0x38] sm:$0xff]
    %v5561 = vld [vmem:[%s9 + $0x40] sm:$0xff]
    %v5562 = vld [vmem:[%s9 + $0x48] sm:$0xff]
    %v5563 = vld [vmem:[%s9 + $0x50] sm:$0xff]
    %v5564 = vld [vmem:[%s9 + $0x58] sm:$0xff]
    %v5565 = vld [vmem:[%s10] sm:$0xff]
    %v5566 = vld [vmem:[%s10 + $0x8] sm:$0xff]
    %v5567 = vld [vmem:[%s10 + $0x10] sm:$0xff]
    %v5568 = vld [vmem:[%s10 + $0x18] sm:$0xff]
    %v5569 = vld [vmem:[%s10 + $0x20] sm:$0xff]
    %v5570 = vld [vmem:[%s10 + $0x28] sm:$0xff]
    %v5571 = vld [vmem:[%s10 + $0x30] sm:$0xff]
    %v5572 = vld [vmem:[%s10 + $0x38] sm:$0xff]
    %v5573 = vld [vmem:[%s10 + $0x40] sm:$0xff]
    %v5574 = vld [vmem:[%s10 + $0x48] sm:$0xff]
    %v5575 = vld [vmem:[%s10 + $0x50] sm:$0xff]
    %v5576 = vld [vmem:[%s10 + $0x58] sm:$0xff]
    %v5577 = vld [vmem:[%s10 + $0x60] sm:$0xff]
    %v5578 = vld [vmem:[%s10 + $0x68] sm:$0xff]
    %v5579 = vld [vmem:[%s10 + $0x70] sm:$0xff]
    %v5580 = vld [vmem:[%s10 + $0x78] sm:$0xff]
    %v5581 = vld [vmem:[%s10 + $0x80] sm:$0xff]
    %v5582 = vld [vmem:[%s10 + $0x88] sm:$0xff]
    %v5583 = vld [vmem:[%s10 + $0x90] sm:$0xff]
    %v5584 = vld [vmem:[%s10 + $0x98] sm:$0xff]
    %v5585 = vld [vmem:[%s10 + $0xa0] sm:$0xff]
    %v5586 = vld [vmem:[%s10 + $0xa8] sm:$0xff]
    %v5587 = vld [vmem:[%s10 + $0xb0] sm:$0xff]
    %v5588 = vld [vmem:[%s10 + $0xb8] sm:$0xff]
    %v5589 = vld [vmem:[%s10 + $0xc0] sm:$0xff]
    %v5590 = vld [vmem:[%s10 + $0xc8] sm:$0xff]
    %v5591 = vld [vmem:[%s10 + $0xd0] sm:$0xff]
    %v5592 = vld [vmem:[%s10 + $0xd8] sm:$0xff]
    %v5593 = vld [vmem:[%s10 + $0xe0] sm:$0xff]
    %v5594 = vld [vmem:[%s10 + $0xe8] sm:$0xff]
    %v5595 = vld [vmem:[%s10 + $0xf0] sm:$0xff]
    %v5596 = vld [vmem:[%s10 + $0xf8] sm:$0xff]
    %v5597 = vld [vmem:[%s10 + $0x100] sm:$0xff]
    %v5598 = vld [vmem:[%s10 + $0x108] sm:$0xff]
    %v5599 = vld [vmem:[%s10 + $0x110] sm:$0xff]
    %v5600 = vld [vmem:[%s10 + $0x118] sm:$0xff]
    %v5601 = vld [vmem:[%s10 + $0x120] sm:$0xff]
    %v5602 = vld [vmem:[%s10 + $0x128] sm:$0xff]
    %v5603 = vld [vmem:[%s10 + $0x130] sm:$0xff]
    %v5604 = vld [vmem:[%s10 + $0x138] sm:$0xff]
    %v5605 = vld [vmem:[%s10 + $0x140] sm:$0xff]
    %v5606 = vld [vmem:[%s10 + $0x148] sm:$0xff]
    %v5607 = vld [vmem:[%s10 + $0x150] sm:$0xff]
    %v5608 = vld [vmem:[%s10 + $0x158] sm:$0xff]
    %v5609 = vld [vmem:[%s10 + $0x160] sm:$0xff]
    %v5610 = vld [vmem:[%s10 + $0x168] sm:$0xff]
    %v5611 = vld [vmem:[%s10 + $0x170] sm:$0xff]
    %v5612 = vld [vmem:[%s10 + $0x178] sm:$0xff]
    %5613 = vmatprep.subr.mxu0 %v5566
    %5614 = vmatpush1.msra.mxu0 %v5565
    %5615 = vmatprep.subr.mxu0 %v5569
    %5616 = vmatpush1.msra.mxu0 %v5568
    %5617 = vmatprep.subr.mxu0 %v5572
    %5618 = vmatpush1.msra.mxu0 %v5571
    %5619 = vmatprep.subr.mxu0 %v5575
    %5620 = vmatpush1.msra.mxu0 %v5574
    %5621 = vmatprep.subr.mxu0 %v5578
    %5622 = vmatpush1.msra.mxu0 %v5577
    %5623 = vmatprep.subr.mxu0 %v5581
    %5624 = vmatpush1.msra.mxu0 %v5580
    %5625 = vmatprep.subr.mxu0 %v5584
    %5626 = vmatpush1.msra.mxu0 %v5583
    %5627 = vmatprep.subr.mxu0 %v5587
    %5628 = vmatpush1.msra.mxu0 %v5586
    %5629 = vmatprep.subr.mxu0 %v5590
    %5630 = vmatpush1.msra.mxu0 %v5589
    %5631 = vmatprep.subr.mxu0 %v5593
    %5632 = vmatpush1.msra.mxu0 %v5592
    %5633 = vmatprep.subr.mxu0 %v5596
    %5634 = vmatpush1.msra.mxu0 %v5595
    %5635 = vmatprep.subr.mxu0 %v5599
    %5636 = vmatpush1.msra.mxu0 %v5598
    %5637 = vmatprep.subr.mxu0 %v5602
    %5638 = vmatpush1.msra.mxu0 %v5601
    %5639 = vmatprep.subr.mxu0 %v5605
    %5640 = vmatpush1.msra.mxu0 %v5604
    %5641 = vmatprep.subr.mxu0 %v5608
    %5642 = vmatpush1.msra.mxu0 %v5607
    %5643 = vmatprep.subr.mxu0 %v5611
    %5644 = vmatpush1.msra.mxu0 %v5610
    %5645 = vmatprep.subr.mxu0 0.0
    %5646 = vmatpush1.msra.mxu0 0.0
    %5647 = vmatprep.subr.mxu0 0.0
    %5648 = vmatpush1.msra.mxu0 0.0
    %5649 = vmatprep.subr.mxu0 0.0
    %5650 = vmatpush1.msra.mxu0 0.0
    %5651 = vmatprep.subr.mxu0 0.0
    %5652 = vmatpush1.msra.mxu0 0.0
    %5653 = vmatprep.subr.mxu0 0.0
    %5654 = vmatpush1.msra.mxu0 0.0
    %5655 = vmatprep.subr.mxu0 0.0
    %5656 = vmatpush1.msra.mxu0 0.0
    %5657 = vmatprep.subr.mxu0 0.0
    %5658 = vmatpush1.msra.mxu0 0.0
    %5659 = vmatprep.subr.mxu0 0.0
    %5660 = vmatpush1.msra.mxu0 0.0
    %5661 = vmatprep.subr.mxu0 0.0
    %5662 = vmatpush1.msra.mxu0 0.0
    %5663 = vmatprep.subr.mxu0 0.0
    %5664 = vmatpush1.msra.mxu0 0.0
    %5665 = vmatprep.subr.mxu0 0.0
    %5666 = vmatpush1.msra.mxu0 0.0
    %5667 = vmatprep.subr.mxu0 0.0
    %5668 = vmatpush1.msra.mxu0 0.0
    %5669 = vmatprep.subr.mxu0 0.0
    %5670 = vmatpush1.msra.mxu0 0.0
    %5671 = vmatprep.subr.mxu0 0.0
    %5672 = vmatpush1.msra.mxu0 0.0
    %5673 = vmatprep.subr.mxu0 0.0
    %5674 = vmatpush1.msra.mxu0 0.0
    %5675 = vmatprep.subr.mxu0 0.0
    %5676 = vmatpush1.msra.mxu0 0.0
    %5677 = vmatprep.mubr.f32.mxu0 0.0
    %5678 = vmatmul.mubr.f32.gmra.mrb[0].mxu0 %v5552
    %v5679 = vpop.f32.mrb[0].mxu0
    %v5680 = vadd.f32 0.0, %v5679
    %v5681 = vpop.f32.mrb[0].mxu0
    %v5682 = vadd.f32 0.0, %v5681
    %5683 = vdwg.mxu0
    %5684 = vmatprep.subr.mxu0 0.0
    %5685 = vmatpush1.msra.mxu0 %v5567
    %5686 = vmatprep.subr.mxu0 0.0
    %5687 = vmatpush1.msra.mxu0 %v5570
    %5688 = vmatprep.subr.mxu0 0.0
    %5689 = vmatpush1.msra.mxu0 %v5573
    %5690 = vmatprep.subr.mxu0 0.0
    %5691 = vmatpush1.msra.mxu0 %v5576
    %5692 = vmatprep.subr.mxu0 0.0
    %5693 = vmatpush1.msra.mxu0 %v5579
    %5694 = vmatprep.subr.mxu0 0.0
    %5695 = vmatpush1.msra.mxu0 %v5582
    %5696 = vmatprep.subr.mxu0 0.0
    %5697 = vmatpush1.msra.mxu0 %v5585
    %5698 = vmatprep.subr.mxu0 0.0
    %5699 = vmatpush1.msra.mxu0 %v5588
    %5700 = vmatprep.subr.mxu0 0.0
    %5701 = vmatpush1.msra.mxu0 %v5591
    %5702 = vmatprep.subr.mxu0 0.0
    %5703 = vmatpush1.msra.mxu0 %v5594
    %5704 = vmatprep.subr.mxu0 0.0
    %5705 = vmatpush1.msra.mxu0 %v5597
    %5706 = vmatprep.subr.mxu0 0.0
    %5707 = vmatpush1.msra.mxu0 %v5600
    %5708 = vmatprep.subr.mxu0 0.0
    %5709 = vmatpush1.msra.mxu0 %v5603
    %5710 = vmatprep.subr.mxu0 0.0
    %5711 = vmatpush1.msra.mxu0 %v5606
    %5712 = vmatprep.subr.mxu0 0.0
    %5713 = vmatpush1.msra.mxu0 %v5609
    %5714 = vmatprep.subr.mxu0 0.0
    %5715 = vmatpush1.msra.mxu0 %v5612
    %5716 = vmatprep.subr.mxu0 0.0
    %5717 = vmatpush1.msra.mxu0 0.0
    %5718 = vmatprep.subr.mxu0 0.0
    %5719 = vmatpush1.msra.mxu0 0.0
    %5720 = vmatprep.subr.mxu0 0.0
    %5721 = vmatpush1.msra.mxu0 0.0
    %5722 = vmatprep.subr.mxu0 0.0
    %5723 = vmatpush1.msra.mxu0 0.0
    %5724 = vmatprep.subr.mxu0 0.0
    %5725 = vmatpush1.msra.mxu0 0.0
    %5726 = vmatprep.subr.mxu0 0.0
    %5727 = vmatpush1.msra.mxu0 0.0
    %5728 = vmatprep.subr.mxu0 0.0
    %5729 = vmatpush1.msra.mxu0 0.0
    %5730 = vmatprep.subr.mxu0 0.0
    %5731 = vmatpush1.msra.mxu0 0.0
    %5732 = vmatprep.subr.mxu0 0.0
    %5733 = vmatpush1.msra.mxu0 0.0
    %5734 = vmatprep.subr.mxu0 0.0
    %5735 = vmatpush1.msra.mxu0 0.0
    %5736 = vmatprep.subr.mxu0 0.0
    %5737 = vmatpush1.msra.mxu0 0.0
    %5738 = vmatprep.subr.mxu0 0.0
    %5739 = vmatpush1.msra.mxu0 0.0
    %5740 = vmatprep.subr.mxu0 0.0
    %5741 = vmatpush1.msra.mxu0 0.0
    %5742 = vmatprep.subr.mxu0 0.0
    %5743 = vmatpush1.msra.mxu0 0.0
    %5744 = vmatprep.subr.mxu0 0.0
    %5745 = vmatpush1.msra.mxu0 0.0
    %5746 = vmatprep.subr.mxu0 0.0
    %5747 = vmatpush1.msra.mxu0 0.0
    %5748 = vmatprep.mubr.f32.mxu0 0.0
    %5749 = vmatmul.mubr.f32.gmra.mrb[0].mxu0 %v5552
    %v5750 = vpop.f32.mrb[0].mxu0
    %v5751 = vadd.f32 0.0, %v5750
    %v5752 = vpop.f32.mrb[0].mxu0
    %5753 = vdwg.mxu0
    %v5755 = vsel %vm730, %v5262, 0
    %5757 = vmatprep.subr.mxu0 %v5554
    %5758 = vmatpush1.msra.mxu0 %v5553
    %5759 = vmatprep.subr.mxu0 %v5557
    %5760 = vmatpush1.msra.mxu0 %v5556
    %5761 = vmatprep.subr.mxu0 %v5560
    %5762 = vmatpush1.msra.mxu0 %v5559
    %5763 = vmatprep.subr.mxu0 %v5563
    %5764 = vmatpush1.msra.mxu0 %v5562
    %5765 = vmatprep.subr.mxu0 0.0
    %5766 = vmatpush1.msra.mxu0 0.0
    %5767 = vmatprep.subr.mxu0 0.0
    %5768 = vmatpush1.msra.mxu0 0.0
    %5769 = vmatprep.subr.mxu0 0.0
    %5770 = vmatpush1.msra.mxu0 0.0
    %5771 = vmatprep.subr.mxu0 0.0
    %5772 = vmatpush1.msra.mxu0 0.0
    %5773 = vmatprep.subr.mxu0 0.0
    %5774 = vmatpush1.msra.mxu0 0.0
    %5775 = vmatprep.subr.mxu0 0.0
    %5776 = vmatpush1.msra.mxu0 0.0
    %5777 = vmatprep.subr.mxu0 0.0
    %5778 = vmatpush1.msra.mxu0 0.0
    %5779 = vmatprep.subr.mxu0 0.0
    %5780 = vmatpush1.msra.mxu0 0.0
    %5781 = vmatprep.subr.mxu0 0.0
    %5782 = vmatpush1.msra.mxu0 0.0
    %5783 = vmatprep.subr.mxu0 0.0
    %5784 = vmatpush1.msra.mxu0 0.0
    %5785 = vmatprep.subr.mxu0 0.0
    %5786 = vmatpush1.msra.mxu0 0.0
    %5787 = vmatprep.subr.mxu0 0.0
    %5788 = vmatpush1.msra.mxu0 0.0
    %5789 = vmatprep.subr.mxu0 0.0
    %5790 = vmatpush1.msra.mxu0 0.0
    %5791 = vmatprep.subr.mxu0 0.0
    %5792 = vmatpush1.msra.mxu0 0.0
    %5793 = vmatprep.subr.mxu0 0.0
    %5794 = vmatpush1.msra.mxu0 0.0
    %5795 = vmatprep.subr.mxu0 0.0
    %5796 = vmatpush1.msra.mxu0 0.0
    %5797 = vmatprep.subr.mxu0 0.0
    %5798 = vmatpush1.msra.mxu0 0.0
    %5799 = vmatprep.subr.mxu0 0.0
    %5800 = vmatpush1.msra.mxu0 0.0
    %5801 = vmatprep.subr.mxu0 0.0
    %5802 = vmatpush1.msra.mxu0 0.0
    %5803 = vmatprep.subr.mxu0 0.0
    %5804 = vmatpush1.msra.mxu0 0.0
    %5805 = vmatprep.subr.mxu0 0.0
    %5806 = vmatpush1.msra.mxu0 0.0
    %5807 = vmatprep.subr.mxu0 0.0
    %5808 = vmatpush1.msra.mxu0 0.0
    %5809 = vmatprep.subr.mxu0 0.0
    %5810 = vmatpush1.msra.mxu0 0.0
    %5811 = vmatprep.subr.mxu0 0.0
    %5812 = vmatpush1.msra.mxu0 0.0
    %5813 = vmatprep.subr.mxu0 0.0
    %5814 = vmatpush1.msra.mxu0 0.0
    %5815 = vmatprep.subr.mxu0 0.0
    %5816 = vmatpush1.msra.mxu0 0.0
    %5817 = vmatprep.subr.mxu0 0.0
    %5818 = vmatpush1.msra.mxu0 0.0
    %5819 = vmatprep.subr.mxu0 0.0
    %5820 = vmatpush1.msra.mxu0 0.0
    %5821 = vmatprep.mubr.f32.mxu0 0.0
    %5822 = vmatmul.mubr.f32.gmra.mrb[0].mxu0 %v5755
    %v5823 = vpop.f32.mrb[0].mxu0
    %v5824 = vadd.f32 %v5680, %v5823
    %v5825 = vpop.f32.mrb[0].mxu0
    %v5826 = vadd.f32 %v5682, %v5825
    %5827 = vdwg.mxu0
    %5828 = vmatprep.subr.mxu0 0.0
    %5829 = vmatpush1.msra.mxu0 %v5555
    %5830 = vmatprep.subr.mxu0 0.0
    %5831 = vmatpush1.msra.mxu0 %v5558
    %5832 = vmatprep.subr.mxu0 0.0
    %5833 = vmatpush1.msra.mxu0 %v5561
    %5834 = vmatprep.subr.mxu0 0.0
    %5835 = vmatpush1.msra.mxu0 %v5564
    %5836 = vmatprep.subr.mxu0 0.0
    %5837 = vmatpush1.msra.mxu0 0.0
    %5838 = vmatprep.subr.mxu0 0.0
    %5839 = vmatpush1.msra.mxu0 0.0
    %5840 = vmatprep.subr.mxu0 0.0
    %5841 = vmatpush1.msra.mxu0 0.0
    %5842 = vmatprep.subr.mxu0 0.0
    %5843 = vmatpush1.msra.mxu0 0.0
    %5844 = vmatprep.subr.mxu0 0.0
    %5845 = vmatpush1.msra.mxu0 0.0
    %5846 = vmatprep.subr.mxu0 0.0
    %5847 = vmatpush1.msra.mxu0 0.0
    %5848 = vmatprep.subr.mxu0 0.0
    %5849 = vmatpush1.msra.mxu0 0.0
    %5850 = vmatprep.subr.mxu0 0.0
    %5851 = vmatpush1.msra.mxu0 0.0
    %5852 = vmatprep.subr.mxu0 0.0
    %5853 = vmatpush1.msra.mxu0 0.0
    %5854 = vmatprep.subr.mxu0 0.0
    %5855 = vmatpush1.msra.mxu0 0.0
    %5856 = vmatprep.subr.mxu0 0.0
    %5857 = vmatpush1.msra.mxu0 0.0
    %5858 = vmatprep.subr.mxu0 0.0
    %5859 = vmatpush1.msra.mxu0 0.0
    %5860 = vmatprep.subr.mxu0 0.0
    %5861 = vmatpush1.msra.mxu0 0.0
    %5862 = vmatprep.subr.mxu0 0.0
    %5863 = vmatpush1.msra.mxu0 0.0
    %5864 = vmatprep.subr.mxu0 0.0
    %5865 = vmatpush1.msra.mxu0 0.0
    %5866 = vmatprep.subr.mxu0 0.0
    %5867 = vmatpush1.msra.mxu0 0.0
    %5868 = vmatprep.subr.mxu0 0.0
    %5869 = vmatpush1.msra.mxu0 0.0
    %5870 = vmatprep.subr.mxu0 0.0
    %5871 = vmatpush1.msra.mxu0 0.0
    %5872 = vmatprep.subr.mxu0 0.0
    %5873 = vmatpush1.msra.mxu0 0.0
    %5874 = vmatprep.subr.mxu0 0.0
    %5875 = vmatpush1.msra.mxu0 0.0
    %5876 = vmatprep.subr.mxu0 0.0
    %5877 = vmatpush1.msra.mxu0 0.0
    %5878 = vmatprep.subr.mxu0 0.0
    %5879 = vmatpush1.msra.mxu0 0.0
    %5880 = vmatprep.subr.mxu0 0.0
    %5881 = vmatpush1.msra.mxu0 0.0
    %5882 = vmatprep.subr.mxu0 0.0
    %5883 = vmatpush1.msra.mxu0 0.0
    %5884 = vmatprep.subr.mxu0 0.0
    %5885 = vmatpush1.msra.mxu0 0.0
    %5886 = vmatprep.subr.mxu0 0.0
    %5887 = vmatpush1.msra.mxu0 0.0
    %5888 = vmatprep.subr.mxu0 0.0
    %5889 = vmatpush1.msra.mxu0 0.0
    %5890 = vmatprep.subr.mxu0 0.0
    %5891 = vmatpush1.msra.mxu0 0.0
    %5892 = vmatprep.mubr.f32.mxu0 0.0
    %5893 = vmatmul.mubr.f32.gmra.mrb[0].mxu0 %v5755
    %v5894 = vpop.f32.mrb[0].mxu0
    %v5895 = vadd.f32 %v5751, %v5894
    %v5896 = vpop.f32.mrb[0].mxu0
    %5897 = vdwg.mxu0
    %v5898 = vld [vmem:[%s12] sm:$0x7]
    %v5900 = vlaneseq
    %v5901 = vshrl.u32 %v5900, 7
    %v5902 = vsub.s32 0, %v5901
    %v5903 = vrot.slane %v5898, %v5902
    %v5904 = vlaneseq
    %v5905 = vshrl.u32 %v5904, 7
    %v5906 = vsub.s32 1, %v5905
    %v5907 = vrot.slane %v5898, %v5906
    %v5908 = vlaneseq
    %v5909 = vshrl.u32 %v5908, 7
    %v5910 = vsub.s32 2, %v5909
    %v5911 = vrot.slane %v5898, %v5910
    %v5915 = vadd.f32 %v5824, %v5903
    %v5916 = vadd.f32 %v5826, %v5907
    %v5917 = vadd.f32 %v5895, %v5911
    %v5918 = vld [vmem:[%s11] sm:$0xff]
    %v5919 = vld [vmem:[%s11 + $0x8] sm:$0xff]
    %v5920 = vld [vmem:[%s11 + $0x10] sm:$0xff]
    %v5921 = vld [vmem:[%s11 + $0x18] sm:$0xff]
    %v5922 = vld [vmem:[%s11 + $0x20] sm:$0xff]
    %v5923 = vld [vmem:[%s11 + $0x28] sm:$0xff]
    %v5924 = vld [vmem:[%s11 + $0x30] sm:$0xff]
    %v5925 = vld [vmem:[%s11 + $0x38] sm:$0xff]
    %v5926 = vld [vmem:[%s11 + $0x40] sm:$0xff]
    %v5927 = vld [vmem:[%s11 + $0x48] sm:$0xff]
    %v5928 = vld [vmem:[%s11 + $0x50] sm:$0xff]
    %v5929 = vld [vmem:[%s11 + $0x58] sm:$0xff]
    %v5930 = vld [vmem:[%s11 + $0x60] sm:$0xff]
    %v5931 = vld [vmem:[%s11 + $0x68] sm:$0xff]
    %v5932 = vld [vmem:[%s11 + $0x70] sm:$0xff]
    %v5933 = vld [vmem:[%s11 + $0x78] sm:$0xff]
    %v5934 = vld [vmem:[%s11 + $0x80] sm:$0xff]
    %v5935 = vld [vmem:[%s11 + $0x88] sm:$0xff]
    %v5936 = vld [vmem:[%s11 + $0x90] sm:$0xff]
    %v5937 = vld [vmem:[%s11 + $0x98] sm:$0xff]
    %v5938 = vld [vmem:[%s11 + $0xa0] sm:$0xff]
    %v5939 = vld [vmem:[%s11 + $0xa8] sm:$0xff]
    %v5940 = vld [vmem:[%s11 + $0xb0] sm:$0xff]
    %v5941 = vld [vmem:[%s11 + $0xb8] sm:$0xff]
    %v5942 = vld [vmem:[%s11 + $0xc0] sm:$0xff]
    %v5943 = vld [vmem:[%s11 + $0xc8] sm:$0xff]
    %v5944 = vld [vmem:[%s11 + $0xd0] sm:$0xff]
    %v5945 = vld [vmem:[%s11 + $0xd8] sm:$0xff]
    %v5946 = vld [vmem:[%s11 + $0xe0] sm:$0xff]
    %v5947 = vld [vmem:[%s11 + $0xe8] sm:$0xff]
    %v5948 = vld [vmem:[%s11 + $0xf0] sm:$0xff]
    %v5949 = vld [vmem:[%s11 + $0xf8] sm:$0xff]
    %v5950 = vld [vmem:[%s11 + $0x100] sm:$0xff]
    %v5951 = vld [vmem:[%s11 + $0x108] sm:$0xff]
    %v5952 = vld [vmem:[%s11 + $0x110] sm:$0xff]
    %v5953 = vld [vmem:[%s11 + $0x118] sm:$0xff]
    %v5954 = vld [vmem:[%s11 + $0x120] sm:$0xff]
    %v5955 = vld [vmem:[%s11 + $0x128] sm:$0xff]
    %v5956 = vld [vmem:[%s11 + $0x130] sm:$0xff]
    %v5957 = vld [vmem:[%s11 + $0x138] sm:$0xff]
    %v5958 = vld [vmem:[%s11 + $0x140] sm:$0xff]
    %v5959 = vld [vmem:[%s11 + $0x148] sm:$0xff]
    %v5960 = vld [vmem:[%s11 + $0x150] sm:$0xff]
    %v5961 = vld [vmem:[%s11 + $0x158] sm:$0xff]
    %v5962 = vld [vmem:[%s11 + $0x160] sm:$0xff]
    %v5963 = vld [vmem:[%s11 + $0x168] sm:$0xff]
    %v5964 = vld [vmem:[%s11 + $0x170] sm:$0xff]
    %v5965 = vld [vmem:[%s11 + $0x178] sm:$0xff]
    %v5966 = vld [vmem:[%s13] sm:$0x7]
    %v5968 = vlaneseq
    %v5969 = vshrl.u32 %v5968, 7
    %v5970 = vsub.s32 0, %v5969
    %v5971 = vrot.slane %v5966, %v5970
    %v5972 = vlaneseq
    %v5973 = vshrl.u32 %v5972, 7
    %v5974 = vsub.s32 1, %v5973
    %v5975 = vrot.slane %v5966, %v5974
    %v5976 = vlaneseq
    %v5977 = vshrl.u32 %v5976, 7
    %v5978 = vsub.s32 2, %v5977
    %v5979 = vrot.slane %v5966, %v5978
    %5983 = vmatprep.subr.mxu0 %v5919
    %5984 = vmatpush1.msra.mxu0 %v5918
    %5985 = vmatprep.subr.mxu0 %v5922
    %5986 = vmatpush1.msra.mxu0 %v5921
    %5987 = vmatprep.subr.mxu0 %v5925
    %5988 = vmatpush1.msra.mxu0 %v5924
    %5989 = vmatprep.subr.mxu0 %v5928
    %5990 = vmatpush1.msra.mxu0 %v5927
    %5991 = vmatprep.subr.mxu0 %v5931
    %5992 = vmatpush1.msra.mxu0 %v5930
    %5993 = vmatprep.subr.mxu0 %v5934
    %5994 = vmatpush1.msra.mxu0 %v5933
    %5995 = vmatprep.subr.mxu0 %v5937
    %5996 = vmatpush1.msra.mxu0 %v5936
    %5997 = vmatprep.subr.mxu0 %v5940
    %5998 = vmatpush1.msra.mxu0 %v5939
    %5999 = vmatprep.subr.mxu0 %v5943
    %6000 = vmatpush1.msra.mxu0 %v5942
    %6001 = vmatprep.subr.mxu0 %v5946
    %6002 = vmatpush1.msra.mxu0 %v5945
    %6003 = vmatprep.subr.mxu0 %v5949
    %6004 = vmatpush1.msra.mxu0 %v5948
    %6005 = vmatprep.subr.mxu0 %v5952
    %6006 = vmatpush1.msra.mxu0 %v5951
    %6007 = vmatprep.subr.mxu0 %v5955
    %6008 = vmatpush1.msra.mxu0 %v5954
    %6009 = vmatprep.subr.mxu0 %v5958
    %6010 = vmatpush1.msra.mxu0 %v5957
    %6011 = vmatprep.subr.mxu0 %v5961
    %6012 = vmatpush1.msra.mxu0 %v5960
    %6013 = vmatprep.subr.mxu0 %v5964
    %6014 = vmatpush1.msra.mxu0 %v5963
    %6015 = vmatprep.subr.mxu0 0.0
    %6016 = vmatpush1.msra.mxu0 0.0
    %6017 = vmatprep.subr.mxu0 0.0
    %6018 = vmatpush1.msra.mxu0 0.0
    %6019 = vmatprep.subr.mxu0 0.0
    %6020 = vmatpush1.msra.mxu0 0.0
    %6021 = vmatprep.subr.mxu0 0.0
    %6022 = vmatpush1.msra.mxu0 0.0
    %6023 = vmatprep.subr.mxu0 0.0
    %6024 = vmatpush1.msra.mxu0 0.0
    %6025 = vmatprep.subr.mxu0 0.0
    %6026 = vmatpush1.msra.mxu0 0.0
    %6027 = vmatprep.subr.mxu0 0.0
    %6028 = vmatpush1.msra.mxu0 0.0
    %6029 = vmatprep.subr.mxu0 0.0
    %6030 = vmatpush1.msra.mxu0 0.0
    %6031 = vmatprep.subr.mxu0 0.0
    %6032 = vmatpush1.msra.mxu0 0.0
    %6033 = vmatprep.subr.mxu0 0.0
    %6034 = vmatpush1.msra.mxu0 0.0
    %6035 = vmatprep.subr.mxu0 0.0
    %6036 = vmatpush1.msra.mxu0 0.0
    %6037 = vmatprep.subr.mxu0 0.0
    %6038 = vmatpush1.msra.mxu0 0.0
    %6039 = vmatprep.subr.mxu0 0.0
    %6040 = vmatpush1.msra.mxu0 0.0
    %6041 = vmatprep.subr.mxu0 0.0
    %6042 = vmatpush1.msra.mxu0 0.0
    %6043 = vmatprep.subr.mxu0 0.0
    %6044 = vmatpush1.msra.mxu0 0.0
    %6045 = vmatprep.subr.mxu0 0.0
    %6046 = vmatpush1.msra.mxu0 0.0
    %6047 = vmatprep.mubr.f32.mxu0 0.0
    %6048 = vmatmul.mubr.f32.gmra.mrb[0].mxu0 %v4888
    %v6049 = vpop.f32.mrb[0].mxu0
    %v6050 = vadd.f32 %v5971, %v6049
    %v6051 = vpop.f32.mrb[0].mxu0
    %v6052 = vadd.f32 %v5975, %v6051
    %6053 = vdwg.mxu0
    %6054 = vmatprep.subr.mxu0 0.0
    %6055 = vmatpush1.msra.mxu0 %v5920
    %6056 = vmatprep.subr.mxu0 0.0
    %6057 = vmatpush1.msra.mxu0 %v5923
    %6058 = vmatprep.subr.mxu0 0.0
    %6059 = vmatpush1.msra.mxu0 %v5926
    %6060 = vmatprep.subr.mxu0 0.0
    %6061 = vmatpush1.msra.mxu0 %v5929
    %6062 = vmatprep.subr.mxu0 0.0
    %6063 = vmatpush1.msra.mxu0 %v5932
    %6064 = vmatprep.subr.mxu0 0.0
    %6065 = vmatpush1.msra.mxu0 %v5935
    %6066 = vmatprep.subr.mxu0 0.0
    %6067 = vmatpush1.msra.mxu0 %v5938
    %6068 = vmatprep.subr.mxu0 0.0
    %6069 = vmatpush1.msra.mxu0 %v5941
    %6070 = vmatprep.subr.mxu0 0.0
    %6071 = vmatpush1.msra.mxu0 %v5944
    %6072 = vmatprep.subr.mxu0 0.0
    %6073 = vmatpush1.msra.mxu0 %v5947
    %6074 = vmatprep.subr.mxu0 0.0
    %6075 = vmatpush1.msra.mxu0 %v5950
    %6076 = vmatprep.subr.mxu0 0.0
    %6077 = vmatpush1.msra.mxu0 %v5953
    %6078 = vmatprep.subr.mxu0 0.0
    %6079 = vmatpush1.msra.mxu0 %v5956
    %6080 = vmatprep.subr.mxu0 0.0
    %6081 = vmatpush1.msra.mxu0 %v5959
    %6082 = vmatprep.subr.mxu0 0.0
    %6083 = vmatpush1.msra.mxu0 %v5962
    %6084 = vmatprep.subr.mxu0 0.0
    %6085 = vmatpush1.msra.mxu0 %v5965
    %6086 = vmatprep.subr.mxu0 0.0
    %6087 = vmatpush1.msra.mxu0 0.0
    %6088 = vmatprep.subr.mxu0 0.0
    %6089 = vmatpush1.msra.mxu0 0.0
    %6090 = vmatprep.subr.mxu0 0.0
    %6091 = vmatpush1.msra.mxu0 0.0
    %6092 = vmatprep.subr.mxu0 0.0
    %6093 = vmatpush1.msra.mxu0 0.0
    %6094 = vmatprep.subr.mxu0 0.0
    %6095 = vmatpush1.msra.mxu0 0.0
    %6096 = vmatprep.subr.mxu0 0.0
    %6097 = vmatpush1.msra.mxu0 0.0
    %6098 = vmatprep.subr.mxu0 0.0
    %6099 = vmatpush1.msra.mxu0 0.0
    %6100 = vmatprep.subr.mxu0 0.0
    %6101 = vmatpush1.msra.mxu0 0.0
    %6102 = vmatprep.subr.mxu0 0.0
    %6103 = vmatpush1.msra.mxu0 0.0
    %6104 = vmatprep.subr.mxu0 0.0
    %6105 = vmatpush1.msra.mxu0 0.0
    %6106 = vmatprep.subr.mxu0 0.0
    %6107 = vmatpush1.msra.mxu0 0.0
    %6108 = vmatprep.subr.mxu0 0.0
    %6109 = vmatpush1.msra.mxu0 0.0
    %6110 = vmatprep.subr.mxu0 0.0
    %6111 = vmatpush1.msra.mxu0 0.0
    %6112 = vmatprep.subr.mxu0 0.0
    %6113 = vmatpush1.msra.mxu0 0.0
    %6114 = vmatprep.subr.mxu0 0.0
    %6115 = vmatpush1.msra.mxu0 0.0
    %6116 = vmatprep.subr.mxu0 0.0
    %6117 = vmatpush1.msra.mxu0 0.0
    %6118 = vmatprep.mubr.f32.mxu0 0.0
    %6119 = vmatmul.mubr.f32.gmra.mrb[0].mxu0 %v4888
    %v6120 = vpop.f32.mrb[0].mxu0
    %v6121 = vadd.f32 %v5979, %v6120
    %v6122 = vpop.f32.mrb[0].mxu0
    %6123 = vdwg.mxu0
    %v6124 = vadd.f32 %v5915, %v6050
    %v6125 = vxor.u32 %v6124, 2147483648
    %v6126 = vmul.f32 %v6125, 1.442695
    %v6127 = vpow.pop %v6126
    %v6128 = vadd.f32 %v6127, 1.0
    %v6129 = vrcp.pop %v6128
    %v6130 = vmul.f32 1.0, %v6129
    %v6131 = vadd.f32 %v5916, %v6052
    %v6132 = vxor.u32 %v6131, 2147483648
    %v6133 = vmul.f32 %v6132, 1.442695
    %v6134 = vpow.pop %v6133
    %v6135 = vadd.f32 %v6134, 1.0
    %v6136 = vrcp.pop %v6135
    %v6137 = vmul.f32 1.0, %v6136
    %v6138 = vmul.f32 %v6130, %v6121
    %v6139 = vadd.f32 %v5917, %v6138
    %v6140 = vtanh.pop %v6139
    %v6141 = vsub.f32 1.0, %v6137
    %v6142 = vmul.f32 %v6141, %v6140
    %v6143 = vmul.f32 %v6137, %v4888
    %v6144 = vadd.f32 %v6142, %v6143
    %v6145 = vld [vmem:[%s14] sm:$0xff]
    %v6146 = vld [vmem:[%s14 + $0x8] sm:$0xff]
    %v6147 = vld [vmem:[%s14 + $0x10] sm:$0xff]
    %v6148 = vld [vmem:[%s14 + $0x18] sm:$0xff]
    %v6149 = vld [vmem:[%s14 + $0x20] sm:$0xff]
    %v6150 = vld [vmem:[%s14 + $0x28] sm:$0xff]
    %v6151 = vld [vmem:[%s14 + $0x30] sm:$0xff]
    %v6152 = vld [vmem:[%s14 + $0x38] sm:$0xff]
    %v6153 = vld [vmem:[%s14 + $0x40] sm:$0xff]
    %v6154 = vld [vmem:[%s14 + $0x48] sm:$0xff]
    %v6155 = vld [vmem:[%s14 + $0x50] sm:$0xff]
    %v6156 = vld [vmem:[%s14 + $0x58] sm:$0xff]
    %v6157 = vld [vmem:[%s14 + $0x60] sm:$0xff]
    %v6158 = vld [vmem:[%s14 + $0x68] sm:$0xff]
    %v6159 = vld [vmem:[%s14 + $0x70] sm:$0xff]
    %v6160 = vld [vmem:[%s14 + $0x78] sm:$0xff]
    %v6161 = vld [vmem:[%s15] sm:$0xff]
    %v6162 = vld [vmem:[%s15 + $0x8] sm:$0xff]
    %v6163 = vld [vmem:[%s15 + $0x10] sm:$0xff]
    %v6164 = vld [vmem:[%s15 + $0x18] sm:$0xff]
    %v6165 = vld [vmem:[%s15 + $0x20] sm:$0xff]
    %v6166 = vld [vmem:[%s15 + $0x28] sm:$0xff]
    %v6167 = vld [vmem:[%s15 + $0x30] sm:$0xff]
    %v6168 = vld [vmem:[%s15 + $0x38] sm:$0xff]
    %v6169 = vld [vmem:[%s15 + $0x40] sm:$0xff]
    %v6170 = vld [vmem:[%s15 + $0x48] sm:$0xff]
    %v6171 = vld [vmem:[%s15 + $0x50] sm:$0xff]
    %v6172 = vld [vmem:[%s15 + $0x58] sm:$0xff]
    %v6173 = vld [vmem:[%s15 + $0x60] sm:$0xff]
    %v6174 = vld [vmem:[%s15 + $0x68] sm:$0xff]
    %v6175 = vld [vmem:[%s15 + $0x70] sm:$0xff]
    %v6176 = vld [vmem:[%s15 + $0x78] sm:$0xff]
    %6177 = vmatprep.subr.mxu0 0.0
    %6178 = vmatpush1.msra.mxu0 %v6161
    %6179 = vmatprep.subr.mxu0 0.0
    %6180 = vmatpush1.msra.mxu0 %v6162
    %6181 = vmatprep.subr.mxu0 0.0
    %6182 = vmatpush1.msra.mxu0 %v6163
    %6183 = vmatprep.subr.mxu0 0.0
    %6184 = vmatpush1.msra.mxu0 %v6164
    %6185 = vmatprep.subr.mxu0 0.0
    %6186 = vmatpush1.msra.mxu0 %v6165
    %6187 = vmatprep.subr.mxu0 0.0
    %6188 = vmatpush1.msra.mxu0 %v6166
    %6189 = vmatprep.subr.mxu0 0.0
    %6190 = vmatpush1.msra.mxu0 %v6167
    %6191 = vmatprep.subr.mxu0 0.0
    %6192 = vmatpush1.msra.mxu0 %v6168
    %6193 = vmatprep.subr.mxu0 0.0
    %6194 = vmatpush1.msra.mxu0 %v6169
    %6195 = vmatprep.subr.mxu0 0.0
    %6196 = vmatpush1.msra.mxu0 %v6170
    %6197 = vmatprep.subr.mxu0 0.0
    %6198 = vmatpush1.msra.mxu0 %v6171
    %6199 = vmatprep.subr.mxu0 0.0
    %6200 = vmatpush1.msra.mxu0 %v6172
    %6201 = vmatprep.subr.mxu0 0.0
    %6202 = vmatpush1.msra.mxu0 %v6173
    %6203 = vmatprep.subr.mxu0 0.0
    %6204 = vmatpush1.msra.mxu0 %v6174
    %6205 = vmatprep.subr.mxu0 0.0
    %6206 = vmatpush1.msra.mxu0 %v6175
    %6207 = vmatprep.subr.mxu0 0.0
    %6208 = vmatpush1.msra.mxu0 %v6176
    %6209 = vmatprep.subr.mxu0 0.0
    %6210 = vmatpush1.msra.mxu0 0.0
    %6211 = vmatprep.subr.mxu0 0.0
    %6212 = vmatpush1.msra.mxu0 0.0
    %6213 = vmatprep.subr.mxu0 0.0
    %6214 = vmatpush1.msra.mxu0 0.0
    %6215 = vmatprep.subr.mxu0 0.0
    %6216 = vmatpush1.msra.mxu0 0.0
    %6217 = vmatprep.subr.mxu0 0.0
    %6218 = vmatpush1.msra.mxu0 0.0
    %6219 = vmatprep.subr.mxu0 0.0
    %6220 = vmatpush1.msra.mxu0 0.0
    %6221 = vmatprep.subr.mxu0 0.0
    %6222 = vmatpush1.msra.mxu0 0.0
    %6223 = vmatprep.subr.mxu0 0.0
    %6224 = vmatpush1.msra.mxu0 0.0
    %6225 = vmatprep.subr.mxu0 0.0
    %6226 = vmatpush1.msra.mxu0 0.0
    %6227 = vmatprep.subr.mxu0 0.0
    %6228 = vmatpush1.msra.mxu0 0.0
    %6229 = vmatprep.subr.mxu0 0.0
    %6230 = vmatpush1.msra.mxu0 0.0
    %6231 = vmatprep.subr.mxu0 0.0
    %6232 = vmatpush1.msra.mxu0 0.0
    %6233 = vmatprep.subr.mxu0 0.0
    %6234 = vmatpush1.msra.mxu0 0.0
    %6235 = vmatprep.subr.mxu0 0.0
    %6236 = vmatpush1.msra.mxu0 0.0
    %6237 = vmatprep.subr.mxu0 0.0
    %6238 = vmatpush1.msra.mxu0 0.0
    %6239 = vmatprep.subr.mxu0 0.0
    %6240 = vmatpush1.msra.mxu0 0.0
    %6241 = vmatprep.mubr.f32.mxu0 0.0
    %6242 = vmatmul.mubr.f32.gmra.mrb[0].mxu0 %v5552
    %v6243 = vpop.f32.mrb[0].mxu0
    %v6244 = vadd.f32 0.0, %v6243
    %v6245 = vpop.f32.mrb[0].mxu0
    %6246 = vdwg.mxu0
    %6247 = vmatprep.subr.mxu0 0.0
    %6248 = vmatpush1.msra.mxu0 %v6145
    %6249 = vmatprep.subr.mxu0 0.0
    %6250 = vmatpush1.msra.mxu0 %v6146
    %6251 = vmatprep.subr.mxu0 0.0
    %6252 = vmatpush1.msra.mxu0 %v6147
    %6253 = vmatprep.subr.mxu0 0.0
    %6254 = vmatpush1.msra.mxu0 %v6148
    %6255 = vmatprep.subr.mxu0 0.0
    %6256 = vmatpush1.msra.mxu0 %v6149
    %6257 = vmatprep.subr.mxu0 0.0
    %6258 = vmatpush1.msra.mxu0 %v6150
    %6259 = vmatprep.subr.mxu0 0.0
    %6260 = vmatpush1.msra.mxu0 %v6151
    %6261 = vmatprep.subr.mxu0 0.0
    %6262 = vmatpush1.msra.mxu0 %v6152
    %6263 = vmatprep.subr.mxu0 0.0
    %6264 = vmatpush1.msra.mxu0 %v6153
    %6265 = vmatprep.subr.mxu0 0.0
    %6266 = vmatpush1.msra.mxu0 %v6154
    %6267 = vmatprep.subr.mxu0 0.0
    %6268 = vmatpush1.msra.mxu0 %v6155
    %6269 = vmatprep.subr.mxu0 0.0
    %6270 = vmatpush1.msra.mxu0 %v6156
    %6271 = vmatprep.subr.mxu0 0.0
    %6272 = vmatpush1.msra.mxu0 %v6157
    %6273 = vmatprep.subr.mxu0 0.0
    %6274 = vmatpush1.msra.mxu0 %v6158
    %6275 = vmatprep.subr.mxu0 0.0
    %6276 = vmatpush1.msra.mxu0 %v6159
    %6277 = vmatprep.subr.mxu0 0.0
    %6278 = vmatpush1.msra.mxu0 %v6160
    %6279 = vmatprep.subr.mxu0 0.0
    %6280 = vmatpush1.msra.mxu0 0.0
    %6281 = vmatprep.subr.mxu0 0.0
    %6282 = vmatpush1.msra.mxu0 0.0
    %6283 = vmatprep.subr.mxu0 0.0
    %6284 = vmatpush1.msra.mxu0 0.0
    %6285 = vmatprep.subr.mxu0 0.0
    %6286 = vmatpush1.msra.mxu0 0.0
    %6287 = vmatprep.subr.mxu0 0.0
    %6288 = vmatpush1.msra.mxu0 0.0
    %6289 = vmatprep.subr.mxu0 0.0
    %6290 = vmatpush1.msra.mxu0 0.0
    %6291 = vmatprep.subr.mxu0 0.0
    %6292 = vmatpush1.msra.mxu0 0.0
    %6293 = vmatprep.subr.mxu0 0.0
    %6294 = vmatpush1.msra.mxu0 0.0
    %6295 = vmatprep.subr.mxu0 0.0
    %6296 = vmatpush1.msra.mxu0 0.0
    %6297 = vmatprep.subr.mxu0 0.0
    %6298 = vmatpush1.msra.mxu0 0.0
    %6299 = vmatprep.subr.mxu0 0.0
    %6300 = vmatpush1.msra.mxu0 0.0
    %6301 = vmatprep.subr.mxu0 0.0
    %6302 = vmatpush1.msra.mxu0 0.0
    %6303 = vmatprep.subr.mxu0 0.0
    %6304 = vmatpush1.msra.mxu0 0.0
    %6305 = vmatprep.subr.mxu0 0.0
    %6306 = vmatpush1.msra.mxu0 0.0
    %6307 = vmatprep.subr.mxu0 0.0
    %6308 = vmatpush1.msra.mxu0 0.0
    %6309 = vmatprep.subr.mxu0 0.0
    %6310 = vmatpush1.msra.mxu0 0.0
    %6311 = vmatprep.mubr.f32.mxu0 0.0
    %6312 = vmatmul.mubr.f32.gmra.mrb[0].mxu0 %v6144
    %v6313 = vpop.f32.mrb[0].mxu0
    %v6314 = vadd.f32 %v6244, %v6313
    %v6315 = vpop.f32.mrb[0].mxu0
    %6316 = vdwg.mxu0
    %v6317 = vld [vmem:[%s16] sm:$0xff]
    %v6318 = vld [vmem:[%s16 + $0x8] sm:$0xff]
    %v6319 = vld [vmem:[%s16 + $0x10] sm:$0xff]
    %v6320 = vld [vmem:[%s16 + $0x18] sm:$0xff]
    %6321 = vmatprep.subr.mxu0 0.0
    %6322 = vmatpush1.msra.mxu0 %v6317
    %6323 = vmatprep.subr.mxu0 0.0
    %6324 = vmatpush1.msra.mxu0 %v6318
    %6325 = vmatprep.subr.mxu0 0.0
    %6326 = vmatpush1.msra.mxu0 %v6319
    %6327 = vmatprep.subr.mxu0 0.0
    %6328 = vmatpush1.msra.mxu0 %v6320
    %6329 = vmatprep.subr.mxu0 0.0
    %6330 = vmatpush1.msra.mxu0 0.0
    %6331 = vmatprep.subr.mxu0 0.0
    %6332 = vmatpush1.msra.mxu0 0.0
    %6333 = vmatprep.subr.mxu0 0.0
    %6334 = vmatpush1.msra.mxu0 0.0
    %6335 = vmatprep.subr.mxu0 0.0
    %6336 = vmatpush1.msra.mxu0 0.0
    %6337 = vmatprep.subr.mxu0 0.0
    %6338 = vmatpush1.msra.mxu0 0.0
    %6339 = vmatprep.subr.mxu0 0.0
    %6340 = vmatpush1.msra.mxu0 0.0
    %6341 = vmatprep.subr.mxu0 0.0
    %6342 = vmatpush1.msra.mxu0 0.0
    %6343 = vmatprep.subr.mxu0 0.0
    %6344 = vmatpush1.msra.mxu0 0.0
    %6345 = vmatprep.subr.mxu0 0.0
    %6346 = vmatpush1.msra.mxu0 0.0
    %6347 = vmatprep.subr.mxu0 0.0
    %6348 = vmatpush1.msra.mxu0 0.0
    %6349 = vmatprep.subr.mxu0 0.0
    %6350 = vmatpush1.msra.mxu0 0.0
    %6351 = vmatprep.subr.mxu0 0.0
    %6352 = vmatpush1.msra.mxu0 0.0
    %6353 = vmatprep.subr.mxu0 0.0
    %6354 = vmatpush1.msra.mxu0 0.0
    %6355 = vmatprep.subr.mxu0 0.0
    %6356 = vmatpush1.msra.mxu0 0.0
    %6357 = vmatprep.subr.mxu0 0.0
    %6358 = vmatpush1.msra.mxu0 0.0
    %6359 = vmatprep.subr.mxu0 0.0
    %6360 = vmatpush1.msra.mxu0 0.0
    %6361 = vmatprep.subr.mxu0 0.0
    %6362 = vmatpush1.msra.mxu0 0.0
    %6363 = vmatprep.subr.mxu0 0.0
    %6364 = vmatpush1.msra.mxu0 0.0
    %6365 = vmatprep.subr.mxu0 0.0
    %6366 = vmatpush1.msra.mxu0 0.0
    %6367 = vmatprep.subr.mxu0 0.0
    %6368 = vmatpush1.msra.mxu0 0.0
    %6369 = vmatprep.subr.mxu0 0.0
    %6370 = vmatpush1.msra.mxu0 0.0
    %6371 = vmatprep.subr.mxu0 0.0
    %6372 = vmatpush1.msra.mxu0 0.0
    %6373 = vmatprep.subr.mxu0 0.0
    %6374 = vmatpush1.msra.mxu0 0.0
    %6375 = vmatprep.subr.mxu0 0.0
    %6376 = vmatpush1.msra.mxu0 0.0
    %6377 = vmatprep.subr.mxu0 0.0
    %6378 = vmatpush1.msra.mxu0 0.0
    %6379 = vmatprep.subr.mxu0 0.0
    %6380 = vmatpush1.msra.mxu0 0.0
    %6381 = vmatprep.subr.mxu0 0.0
    %6382 = vmatpush1.msra.mxu0 0.0
    %6383 = vmatprep.subr.mxu0 0.0
    %6384 = vmatpush1.msra.mxu0 0.0
    %6385 = vmatprep.mubr.f32.mxu0 0.0
    %6386 = vmatmul.mubr.f32.gmra.mrb[0].mxu0 %v5755
    %v6387 = vpop.f32.mrb[0].mxu0
    %v6388 = vadd.f32 0.0, %v6387
    %v6389 = vpop.f32.mrb[0].mxu0
    %6390 = vdwg.mxu0
    %v6391 = vadd.f32 %v6314, %v6388
    %v6392 = vld [vmem:[%s17] sm:$0x1]
    %v6394 = vlaneseq
    %v6395 = vshrl.u32 %v6394, 7
    %v6396 = vsub.s32 0, %v6395
    %v6397 = vrot.slane %v6392, %v6396
    %v6399 = vadd.f32 %v6391, %v6397
    %s6400 = scalar_lea.vmem %s19, 32
    %6401 = vst [vmem:[%s6400] sm:$0xff] %v6399
    // Predicated region
    $region82: #{_seq2seq_apply.3} parent=1 // pred_check
      _
    $region83: #{_seq2seq_apply.3} parent=1 // pred_check_branch
      %6403 = sbr.rel (0) target = $region85
    $region84: #{_seq2seq_apply.3} parent=1 // pred_region
      _
    $region85: #{_seq2seq_apply.3} parent=1 // pred_fallthru
      _
    // Predicated region
    $region86: #{_seq2seq_apply.3} parent=1 // pred_check
      _
    $region87: #{_seq2seq_apply.3} parent=1 // pred_check_branch
      %6405 = sbr.rel (0) target = $region89
    $region88: #{_seq2seq_apply.3} parent=1 // pred_region
      _
    $region89: #{_seq2seq_apply.3} parent=1 // pred_fallthru
      _
    %6406 = vsyncpa [#allocation4], 1

</llo_original>
